<compile_context>
chip_gen: v7x
topology: tpu7x:2x2x1
jax: 0.10.0
libtpu: 0.0.40
codegen_flags: <defaults>
</compile_context>

<pallas_src>
import jax
import jax.numpy as jnp
from jax.experimental import pallas as pl
from jax.experimental.pallas import tpu as pltpu

IN_DIM = 28 * 28        # 784
H1, H1P = 200, 256      # dense_enc1 / dense_dec2 width (padded to 256 lanes)
H2, H2P = 100, 128      # dense_enc2 / dense_dec1 width (padded to 128 lanes)
Z_DIM = 16

BATCH = 256             # rows per call


def vae_forward_kernel(x_ref, eps_ref,
                       w1_ref, b1_ref, w2_ref, b2_ref,
                       wmv_ref, bmv_ref,
                       wd1_ref, bd1_ref, wd2_ref, bd2_ref,
                       wd3_ref, bd3_ref,
                       xrec_ref, z_ref):
    def dense(a, w_ref, b_ref):
        # bf16 operands into the MXU, f32 accumulation, f32 bias add on the VPU
        return jnp.dot(a.astype(jnp.bfloat16), w_ref[...],
                       preferred_element_type=jnp.float32) + b_ref[...]

    x = x_ref[...]                                      # bf16 [rows, 784]

    # ---- encoder ----
    h = jnp.maximum(dense(x, w1_ref, b1_ref), 0.0)      # relu(dense_enc1)
    h = jnp.maximum(dense(h, w2_ref, b2_ref), 0.0)      # relu(dense_enc2)
    mv = dense(h, wmv_ref, bmv_ref)                     # fused mean|logvar head
    mean_blk = mv[:, :H2P]        # mean in lanes 0:16, zeros elsewhere
    logv_blk = mv[:, H2P:]        # logvar in lanes 0:16, zeros elsewhere

    # ---- reparameterization: z = mean + eps * exp(0.5 * logvar) ----
    # eps is zero-padded beyond Z_DIM, so padded lanes give 0 + 0*exp(0) = 0
    # and z stays a dense 128-lane slab (lane-dense store, zero padded rows
    # of wd1 keep the decoder numerics unchanged).
    z_blk = mean_blk + eps_ref[...] * jnp.exp(0.5 * logv_blk)
    z_ref[...] = z_blk

    # ---- decoder ----
    d = jnp.maximum(dense(z_blk, wd1_ref, bd1_ref), 0.0)   # relu(dense_dec1)
    d = jnp.maximum(dense(d, wd2_ref, bd2_ref), 0.0)       # relu(dense_dec2)
    logits = dense(d, wd3_ref, bd3_ref)                    # dense_dec3
    # sigmoid via EUP: exp + approximate reciprocal (vrcp) in the idle EUP slot
    xrec = pl.reciprocal(1.0 + jnp.exp(-logits), approx=True)
    xrec_ref[...] = xrec.astype(xrec_ref.dtype)


def _pick_schedule(batch):
    """(block_rows, dimension_semantics) per chip generation."""
    kind = jax.devices()[0].device_kind.lower()
    if "v7" in kind and batch % 2 == 0 and (batch // 2) % 8 == 0:
        # v7x: 2 TensorCores per chip -- keep 2 row blocks and make the
        # core split explicit so neither TC sits idle.
        return batch // 2, (pltpu.CORE_PARALLEL,)
    # v5e/v6e: single TensorCore -- one big row block, no per-step overhead.
    # (For much larger batches, scale block_rows to 512-1024 rather than
    #  adding grid steps; weights stay resident either way.)
    return batch, ("arbitrary",)


def vae_forward(x, eps, kparams):
    """x: [B, 784] f32, eps: [B, Z_DIM] f32, kparams: padded/bf16 kernel params.

    Returns (xrec bf16 [B, 784], z f32 [B, Z_DIM])."""
    B = x.shape[0]
    block_rows, dim_sem = _pick_schedule(B)
    assert B % block_rows == 0, "batch must be a multiple of the row block"

    # bf16 I/O: halves the dominant x / xrec HBM traffic (f32 accum in-kernel).
    x_bf = x.astype(jnp.bfloat16)
    # zero-pad eps to a full 128-lane block so z is lane-dense in the kernel.
    eps_pad = jnp.pad(eps, ((0, 0), (0, H2P - eps.shape[1])))

    def row_spec(feat):
        return pl.BlockSpec((block_rows, feat), lambda i: (i, 0))

    def const_spec(arr):
        # Full-array block with a constant block index -> weights stay resident
        # in VMEM across grid steps (no per-step re-DMA).
        return pl.BlockSpec(arr.shape, lambda i: (0, 0))

    in_specs = ([row_spec(IN_DIM), row_spec(H2P)]
                + [const_spec(p) for p in kparams])
    out_specs = (row_spec(IN_DIM), row_spec(H2P))

    xrec, z_pad = pl.pallas_call(
        vae_forward_kernel,
        grid=(B // block_rows,),
        in_specs=in_specs,
        out_specs=out_specs,
        out_shape=(
            jax.ShapeDtypeStruct((B, IN_DIM), jnp.bfloat16),
            jax.ShapeDtypeStruct((B, H2P), jnp.float32),
        ),
        compiler_params=pltpu.CompilerParams(dimension_semantics=dim_sem),
    )(x_bf, eps_pad, *kparams)
    return xrec, z_pad[:, :Z_DIM]


def init_linear(key, in_dim, out_dim):
    """Deterministic init mimicking nn.Linear default (uniform +/- 1/sqrt(fan_in)).
    Weight is returned already transposed to [in_dim, out_dim]."""
    kw, kb = jax.random.split(key)
    bound = 1.0 / jnp.sqrt(jnp.float32(in_dim))
    w = jax.random.uniform(kw, (in_dim, out_dim), jnp.float32, -bound, bound)
    b = jax.random.uniform(kb, (1, out_dim), jnp.float32, -bound, bound)
    return w, b


def make_params(key):
    keys = jax.random.split(key, 7)
    w1, b1 = init_linear(keys[0], IN_DIM, H1)     # dense_enc1
    w2, b2 = init_linear(keys[1], H1, H2)         # dense_enc2
    wm, bm = init_linear(keys[2], H2, Z_DIM)      # dense_encmean
    wv, bv = init_linear(keys[3], H2, Z_DIM)      # dense_encvar
    wd1, bd1 = init_linear(keys[4], Z_DIM, H2)    # dense_dec1
    wd2, bd2 = init_linear(keys[5], H2, H1)       # dense_dec2
    wd3, bd3 = init_linear(keys[6], H1, IN_DIM)   # dense_dec3
    f32_params = (w1, b1, w2, b2, wm, bm, wv, bv,
                  wd1, bd1, wd2, bd2, wd3, bd3)

    def pad2(a, rows, cols):
        return jnp.pad(a, ((0, rows - a.shape[0]), (0, cols - a.shape[1])))

    # Fuse the mean/var heads, each padded to its own 128-lane block so the
    # in-kernel slices are vreg-aligned: mv[:, 0:16]=mean, mv[:, 128:144]=logvar.
    wmv = jnp.concatenate([pad2(wm, H2P, H2P), pad2(wv, H2P, H2P)], axis=1)
    bmv = jnp.concatenate([pad2(bm, 1, H2P), pad2(bv, 1, H2P)], axis=1)

    # Zero-pad hidden dims to lane-friendly sizes; cast weights to bf16.
    kparams = (
        pad2(w1, IN_DIM, H1P).astype(jnp.bfloat16),  pad2(b1, 1, H1P),
        pad2(w2, H1P, H2P).astype(jnp.bfloat16),     pad2(b2, 1, H2P),
        wmv.astype(jnp.bfloat16),                    bmv,
        pad2(wd1, H2P, H2P).astype(jnp.bfloat16),    pad2(bd1, 1, H2P),
        pad2(wd2, H2P, H1P).astype(jnp.bfloat16),    pad2(bd2, 1, H1P),
        pad2(wd3, H1P, IN_DIM).astype(jnp.bfloat16), bd3,
    )
    return kparams, f32_params


def reference_forward_bf16(x_bf, eps_pad, kparams):
    """Pure-JAX reference with the exact same bf16 inputs/weights, f32 accum."""
    (w1, b1, w2, b2, wmv, bmv, wd1, bd1, wd2, bd2, wd3, bd3) = kparams

    def dense(a, w, b):
        return jnp.dot(a.astype(jnp.bfloat16), w,
                       preferred_element_type=jnp.float32) + b

    h = jax.nn.relu(dense(x_bf, w1, b1))
    h = jax.nn.relu(dense(h, w2, b2))
    mv = dense(h, wmv, bmv)
    mean_blk, logv_blk = mv[:, :H2P], mv[:, H2P:]
    z_blk = mean_blk + eps_pad * jnp.exp(0.5 * logv_blk)
    d = jax.nn.relu(dense(z_blk, wd1, bd1))
    d = jax.nn.relu(dense(d, wd2, bd2))
    xrec = jax.nn.sigmoid(dense(d, wd3, bd3))
    return xrec, z_blk[:, :Z_DIM]


def reference_forward_f32(x, eps, params):
    """Full-precision reference on the original (unpadded, unfused) weights."""
    (w1, b1, w2, b2, wm, bm, wv, bv,
     wd1, bd1, wd2, bd2, wd3, bd3) = params
    h = jax.nn.relu(x @ w1 + b1)
    h = jax.nn.relu(h @ w2 + b2)
    mean = h @ wm + bm
    logvar = h @ wv + bv
    z = mean + eps * jnp.exp(0.5 * logvar)
    d = jax.nn.relu(z @ wd1 + bd1)
    d = jax.nn.relu(d @ wd2 + bd2)
    xrec = jax.nn.sigmoid(d @ wd3 + bd3)
    return xrec, z


if __name__ == "__main__":
    root = jax.random.PRNGKey(0)
    k_params, k_x, k_eps = jax.random.split(root, 3)

    kparams, f32_params = make_params(k_params)
    # input acts like a flattened MNIST batch in [0, 1]
    x = jax.random.uniform(k_x, (BATCH, IN_DIM), jnp.float32, 0.0, 1.0)
    eps = jax.random.normal(k_eps, (BATCH, Z_DIM), jnp.float32)

    fwd = jax.jit(lambda xx, ee: vae_forward(xx, ee, kparams))
    xrec, z = jax.block_until_ready(fwd(x, eps))

    assert xrec.shape == (BATCH, IN_DIM) and xrec.dtype == jnp.bfloat16
    assert z.shape == (BATCH, Z_DIM) and z.dtype == jnp.float32

    # strict check vs a bf16-consistent JAX reference (same bf16 x / weights);
    # tolerance covers bf16 output rounding + the approximate reciprocal.
    x_bf = x.astype(jnp.bfloat16)
    eps_pad = jnp.pad(eps, ((0, 0), (0, H2P - Z_DIM)))
    xrec_b, z_b = reference_forward_bf16(x_bf, eps_pad, kparams)
    assert jnp.allclose(xrec.astype(jnp.float32), xrec_b, atol=2e-2, rtol=2e-2)
    assert jnp.allclose(z, z_b, atol=1e-3, rtol=1e-3)

    # loose sanity check vs the full-f32 unpadded reference (bf16 rounding only)
    xrec_f, z_f = reference_forward_f32(x, eps, f32_params)
    assert jnp.allclose(xrec.astype(jnp.float32), xrec_f, atol=1e-1)
    assert jnp.allclose(z, z_f, atol=1e-1)

    print("KERNEL_OK")
</pallas_src>

<mosaic_0001>
module attributes {stable_mosaic.version = 11 : i64} {
  func.func @vae_forward_kernel(%arg0: i32, %arg1: memref<256x784xbf16, #tpu.memory_space<vmem>>, %arg2: memref<256x128xf32, #tpu.memory_space<vmem>>, %arg3: memref<784x256xbf16, #tpu.memory_space<vmem>>, %arg4: memref<1x256xf32, #tpu.memory_space<vmem>>, %arg5: memref<256x128xbf16, #tpu.memory_space<vmem>>, %arg6: memref<1x128xf32, #tpu.memory_space<vmem>>, %arg7: memref<128x256xbf16, #tpu.memory_space<vmem>>, %arg8: memref<1x256xf32, #tpu.memory_space<vmem>>, %arg9: memref<128x128xbf16, #tpu.memory_space<vmem>>, %arg10: memref<1x128xf32, #tpu.memory_space<vmem>>, %arg11: memref<128x256xbf16, #tpu.memory_space<vmem>>, %arg12: memref<1x256xf32, #tpu.memory_space<vmem>>, %arg13: memref<256x784xbf16, #tpu.memory_space<vmem>>, %arg14: memref<1x784xf32, #tpu.memory_space<vmem>>, %arg15: memref<256x784xbf16, #tpu.memory_space<vmem>>, %arg16: memref<256x128xf32, #tpu.memory_space<vmem>>) attributes {dimension_semantics = [#tpu.dimension_semantics<arbitrary>], iteration_bounds = array<i64: 1>, scalar_prefetch = 0 : i64, scratch_operands = 0 : i64, tpu.core_type = #tpu.core_type<tc>, window_params = [{transform_indices = @transform_0, window_bounds = array<i64: 256, 784>}, {transform_indices = @transform_1, window_bounds = array<i64: 256, 128>}, {pipeline_mode = #tpu.pipeline_mode<synchronous>, transform_indices = @transform_2, window_bounds = array<i64: 784, 256>}, {pipeline_mode = #tpu.pipeline_mode<synchronous>, transform_indices = @transform_3, window_bounds = array<i64: 1, 256>}, {pipeline_mode = #tpu.pipeline_mode<synchronous>, transform_indices = @transform_4, window_bounds = array<i64: 256, 128>}, {pipeline_mode = #tpu.pipeline_mode<synchronous>, transform_indices = @transform_5, window_bounds = array<i64: 1, 128>}, {pipeline_mode = #tpu.pipeline_mode<synchronous>, transform_indices = @transform_6, window_bounds = array<i64: 128, 256>}, {pipeline_mode = #tpu.pipeline_mode<synchronous>, transform_indices = @transform_7, window_bounds = array<i64: 1, 256>}, {pipeline_mode = #tpu.pipeline_mode<synchronous>, transform_indices = @transform_8, window_bounds = array<i64: 128, 128>}, {pipeline_mode = #tpu.pipeline_mode<synchronous>, transform_indices = @transform_9, window_bounds = array<i64: 1, 128>}, {pipeline_mode = #tpu.pipeline_mode<synchronous>, transform_indices = @transform_10, window_bounds = array<i64: 128, 256>}, {pipeline_mode = #tpu.pipeline_mode<synchronous>, transform_indices = @transform_11, window_bounds = array<i64: 1, 256>}, {pipeline_mode = #tpu.pipeline_mode<synchronous>, transform_indices = @transform_12, window_bounds = array<i64: 256, 784>}, {pipeline_mode = #tpu.pipeline_mode<synchronous>, transform_indices = @transform_13, window_bounds = array<i64: 1, 784>}, {transform_indices = @transform_14, window_bounds = array<i64: 256, 784>}, {transform_indices = @transform_15, window_bounds = array<i64: 256, 128>}]} {
    %c0 = arith.constant 0 : index
    %c0_0 = arith.constant 0 : index
    %0 = vector.load %arg1[%c0, %c0_0] : memref<256x784xbf16, #tpu.memory_space<vmem>>, vector<256x784xbf16>
    %c0_1 = arith.constant 0 : index
    %c0_2 = arith.constant 0 : index
    %1 = vector.load %arg3[%c0_1, %c0_2] : memref<784x256xbf16, #tpu.memory_space<vmem>>, vector<784x256xbf16>
    %cst = arith.constant dense<0.000000e+00> : vector<256x256xf32>
    %2 = tpu.matmul %0, %1, %cst {dimension_numbers = #tpu.dot_dimension_numbers<[1], [0], [0], [1], [0, 0, 1, 1], [], []>} : vector<256x784xbf16>, vector<784x256xbf16>, vector<256x256xf32> -> vector<256x256xf32>
    %c0_3 = arith.constant 0 : index
    %c0_4 = arith.constant 0 : index
    %3 = vector.load %arg4[%c0_3, %c0_4] : memref<1x256xf32, #tpu.memory_space<vmem>>, vector<1x256xf32>
    %4 = vector.broadcast %3 : vector<1x256xf32> to vector<256x256xf32>
    %5 = arith.addf %2, %4 : vector<256x256xf32>
    %cst_5 = arith.constant 0.000000e+00 : f32
    %6 = vector.broadcast %cst_5 : f32 to vector<256x256xf32>
    %7 = arith.maximumf %5, %6 : vector<256x256xf32>
    %8 = arith.truncf %7 : vector<256x256xf32> to vector<256x256xbf16>
    %c0_6 = arith.constant 0 : index
    %c0_7 = arith.constant 0 : index
    %9 = vector.load %arg5[%c0_6, %c0_7] : memref<256x128xbf16, #tpu.memory_space<vmem>>, vector<256x128xbf16>
    %cst_8 = arith.constant dense<0.000000e+00> : vector<256x128xf32>
    %10 = tpu.matmul %8, %9, %cst_8 {dimension_numbers = #tpu.dot_dimension_numbers<[1], [0], [0], [1], [0, 0, 1, 1], [], []>} : vector<256x256xbf16>, vector<256x128xbf16>, vector<256x128xf32> -> vector<256x128xf32>
    %c0_9 = arith.constant 0 : index
    %c0_10 = arith.constant 0 : index
    %11 = vector.load %arg6[%c0_9, %c0_10] : memref<1x128xf32, #tpu.memory_space<vmem>>, vector<1x128xf32>
    %12 = vector.broadcast %11 : vector<1x128xf32> to vector<256x128xf32>
    %13 = arith.addf %10, %12 : vector<256x128xf32>
    %cst_11 = arith.constant 0.000000e+00 : f32
    %14 = vector.broadcast %cst_11 : f32 to vector<256x128xf32>
    %15 = arith.maximumf %13, %14 : vector<256x128xf32>
    %16 = arith.truncf %15 : vector<256x128xf32> to vector<256x128xbf16>
    %c0_12 = arith.constant 0 : index
    %c0_13 = arith.constant 0 : index
    %17 = vector.load %arg7[%c0_12, %c0_13] : memref<128x256xbf16, #tpu.memory_space<vmem>>, vector<128x256xbf16>
    %cst_14 = arith.constant dense<0.000000e+00> : vector<256x256xf32>
    %18 = tpu.matmul %16, %17, %cst_14 {dimension_numbers = #tpu.dot_dimension_numbers<[1], [0], [0], [1], [0, 0, 1, 1], [], []>} : vector<256x128xbf16>, vector<128x256xbf16>, vector<256x256xf32> -> vector<256x256xf32>
    %c0_15 = arith.constant 0 : index
    %c0_16 = arith.constant 0 : index
    %19 = vector.load %arg8[%c0_15, %c0_16] : memref<1x256xf32, #tpu.memory_space<vmem>>, vector<1x256xf32>
    %20 = vector.broadcast %19 : vector<1x256xf32> to vector<256x256xf32>
    %21 = arith.addf %18, %20 : vector<256x256xf32>
    %22 = vector.extract_strided_slice %21 {offsets = [0, 0], sizes = [256, 128], strides = [1, 1]} : vector<256x256xf32> to vector<256x128xf32>
    %23 = vector.extract_strided_slice %21 {offsets = [0, 128], sizes = [256, 128], strides = [1, 1]} : vector<256x256xf32> to vector<256x128xf32>
    %c0_17 = arith.constant 0 : index
    %c0_18 = arith.constant 0 : index
    %24 = vector.load %arg2[%c0_17, %c0_18] : memref<256x128xf32, #tpu.memory_space<vmem>>, vector<256x128xf32>
    %cst_19 = arith.constant 5.000000e-01 : f32
    %25 = vector.broadcast %cst_19 : f32 to vector<256x128xf32>
    %26 = arith.mulf %25, %23 : vector<256x128xf32>
    %27 = math.exp %26 : vector<256x128xf32>
    %28 = arith.mulf %24, %27 : vector<256x128xf32>
    %29 = arith.addf %22, %28 : vector<256x128xf32>
    %c0_20 = arith.constant 0 : index
    %c0_21 = arith.constant 0 : index
    %30 = vector.load %arg16[%c0_20, %c0_21] : memref<256x128xf32, #tpu.memory_space<vmem>>, vector<256x128xf32>
    tpu.vector_store %arg16[%c0_20, %c0_21], %29 {strides = array<i32>} : memref<256x128xf32, #tpu.memory_space<vmem>>, vector<256x128xf32>,
    %31 = arith.truncf %29 : vector<256x128xf32> to vector<256x128xbf16>
    %c0_22 = arith.constant 0 : index
    %c0_23 = arith.constant 0 : index
    %32 = vector.load %arg9[%c0_22, %c0_23] : memref<128x128xbf16, #tpu.memory_space<vmem>>, vector<128x128xbf16>
    %cst_24 = arith.constant dense<0.000000e+00> : vector<256x128xf32>
    %33 = tpu.matmul %31, %32, %cst_24 {dimension_numbers = #tpu.dot_dimension_numbers<[1], [0], [0], [1], [0, 0, 1, 1], [], []>} : vector<256x128xbf16>, vector<128x128xbf16>, vector<256x128xf32> -> vector<256x128xf32>
    %c0_25 = arith.constant 0 : index
    %c0_26 = arith.constant 0 : index
    %34 = vector.load %arg10[%c0_25, %c0_26] : memref<1x128xf32, #tpu.memory_space<vmem>>, vector<1x128xf32>
    %35 = vector.broadcast %34 : vector<1x128xf32> to vector<256x128xf32>
    %36 = arith.addf %33, %35 : vector<256x128xf32>
    %cst_27 = arith.constant 0.000000e+00 : f32
    %37 = vector.broadcast %cst_27 : f32 to vector<256x128xf32>
    %38 = arith.maximumf %36, %37 : vector<256x128xf32>
    %39 = arith.truncf %38 : vector<256x128xf32> to vector<256x128xbf16>
    %c0_28 = arith.constant 0 : index
    %c0_29 = arith.constant 0 : index
    %40 = vector.load %arg11[%c0_28, %c0_29] : memref<128x256xbf16, #tpu.memory_space<vmem>>, vector<128x256xbf16>
    %cst_30 = arith.constant dense<0.000000e+00> : vector<256x256xf32>
    %41 = tpu.matmul %39, %40, %cst_30 {dimension_numbers = #tpu.dot_dimension_numbers<[1], [0], [0], [1], [0, 0, 1, 1], [], []>} : vector<256x128xbf16>, vector<128x256xbf16>, vector<256x256xf32> -> vector<256x256xf32>
    %c0_31 = arith.constant 0 : index
    %c0_32 = arith.constant 0 : index
    %42 = vector.load %arg12[%c0_31, %c0_32] : memref<1x256xf32, #tpu.memory_space<vmem>>, vector<1x256xf32>
    %43 = vector.broadcast %42 : vector<1x256xf32> to vector<256x256xf32>
    %44 = arith.addf %41, %43 : vector<256x256xf32>
    %cst_33 = arith.constant 0.000000e+00 : f32
    %45 = vector.broadcast %cst_33 : f32 to vector<256x256xf32>
    %46 = arith.maximumf %44, %45 : vector<256x256xf32>
    %47 = arith.truncf %46 : vector<256x256xf32> to vector<256x256xbf16>
    %c0_34 = arith.constant 0 : index
    %c0_35 = arith.constant 0 : index
    %48 = vector.load %arg13[%c0_34, %c0_35] : memref<256x784xbf16, #tpu.memory_space<vmem>>, vector<256x784xbf16>
    %cst_36 = arith.constant dense<0.000000e+00> : vector<256x784xf32>
    %49 = tpu.matmul %47, %48, %cst_36 {dimension_numbers = #tpu.dot_dimension_numbers<[1], [0], [0], [1], [0, 0, 1, 1], [], []>} : vector<256x256xbf16>, vector<256x784xbf16>, vector<256x784xf32> -> vector<256x784xf32>
    %c0_37 = arith.constant 0 : index
    %c0_38 = arith.constant 0 : index
    %50 = vector.load %arg14[%c0_37, %c0_38] : memref<1x784xf32, #tpu.memory_space<vmem>>, vector<1x784xf32>
    %51 = vector.broadcast %50 : vector<1x784xf32> to vector<256x784xf32>
    %52 = arith.addf %49, %51 : vector<256x784xf32>
    %cst_39 = arith.constant 0.000000e+00 : f32
    %53 = vector.broadcast %cst_39 : f32 to vector<256x784xf32>
    %54 = arith.subf %53, %52 : vector<256x784xf32>
    %55 = math.exp %54 : vector<256x784xf32>
    %cst_40 = arith.constant 1.000000e+00 : f32
    %56 = vector.broadcast %cst_40 : f32 to vector<256x784xf32>
    %57 = arith.addf %56, %55 : vector<256x784xf32>
    %58 = tpu.reciprocal %57 {approx = true} : vector<256x784xf32> -> vector<256x784xf32>
    %59 = arith.truncf %58 : vector<256x784xf32> to vector<256x784xbf16>
    %c0_41 = arith.constant 0 : index
    %c0_42 = arith.constant 0 : index
    %60 = vector.load %arg15[%c0_41, %c0_42] : memref<256x784xbf16, #tpu.memory_space<vmem>>, vector<256x784xbf16>
    tpu.vector_store %arg15[%c0_41, %c0_42], %59 {strides = array<i32>} : memref<256x784xbf16, #tpu.memory_space<vmem>>, vector<256x784xbf16>,
    return
  }
  func.func @transform_0(%arg0: i32) -> (i32, i32) {
    %c0_i32 = arith.constant 0 : i32
    %c0_i32_0 = arith.constant 0 : i32
    return %arg0, %c0_i32 : i32, i32
  }
  func.func @transform_1(%arg0: i32) -> (i32, i32) {
    %c0_i32 = arith.constant 0 : i32
    %c0_i32_0 = arith.constant 0 : i32
    return %arg0, %c0_i32 : i32, i32
  }
  func.func @transform_2(%arg0: i32) -> (i32, i32) {
    %c0_i32 = arith.constant 0 : i32
    %c0_i32_0 = arith.constant 0 : i32
    %c0_i32_1 = arith.constant 0 : i32
    return %c0_i32, %c0_i32_0 : i32, i32
  }
  func.func @transform_3(%arg0: i32) -> (i32, i32) {
    %c0_i32 = arith.constant 0 : i32
    %c0_i32_0 = arith.constant 0 : i32
    %c0_i32_1 = arith.constant 0 : i32
    return %c0_i32, %c0_i32_0 : i32, i32
  }
  func.func @transform_4(%arg0: i32) -> (i32, i32) {
    %c0_i32 = arith.constant 0 : i32
    %c0_i32_0 = arith.constant 0 : i32
    %c0_i32_1 = arith.constant 0 : i32
    return %c0_i32, %c0_i32_0 : i32, i32
  }
  func.func @transform_5(%arg0: i32) -> (i32, i32) {
    %c0_i32 = arith.constant 0 : i32
    %c0_i32_0 = arith.constant 0 : i32
    %c0_i32_1 = arith.constant 0 : i32
    return %c0_i32, %c0_i32_0 : i32, i32
  }
  func.func @transform_6(%arg0: i32) -> (i32, i32) {
    %c0_i32 = arith.constant 0 : i32
    %c0_i32_0 = arith.constant 0 : i32
    %c0_i32_1 = arith.constant 0 : i32
    return %c0_i32, %c0_i32_0 : i32, i32
  }
  func.func @transform_7(%arg0: i32) -> (i32, i32) {
    %c0_i32 = arith.constant 0 : i32
    %c0_i32_0 = arith.constant 0 : i32
    %c0_i32_1 = arith.constant 0 : i32
    return %c0_i32, %c0_i32_0 : i32, i32
  }
  func.func @transform_8(%arg0: i32) -> (i32, i32) {
    %c0_i32 = arith.constant 0 : i32
    %c0_i32_0 = arith.constant 0 : i32
    %c0_i32_1 = arith.constant 0 : i32
    return %c0_i32, %c0_i32_0 : i32, i32
  }
  func.func @transform_9(%arg0: i32) -> (i32, i32) {
    %c0_i32 = arith.constant 0 : i32
    %c0_i32_0 = arith.constant 0 : i32
    %c0_i32_1 = arith.constant 0 : i32
    return %c0_i32, %c0_i32_0 : i32, i32
  }
  func.func @transform_10(%arg0: i32) -> (i32, i32) {
    %c0_i32 = arith.constant 0 : i32
    %c0_i32_0 = arith.constant 0 : i32
    %c0_i32_1 = arith.constant 0 : i32
    return %c0_i32, %c0_i32_0 : i32, i32
  }
  func.func @transform_11(%arg0: i32) -> (i32, i32) {
    %c0_i32 = arith.constant 0 : i32
    %c0_i32_0 = arith.constant 0 : i32
    %c0_i32_1 = arith.constant 0 : i32
    return %c0_i32, %c0_i32_0 : i32, i32
  }
  func.func @transform_12(%arg0: i32) -> (i32, i32) {
    %c0_i32 = arith.constant 0 : i32
    %c0_i32_0 = arith.constant 0 : i32
    %c0_i32_1 = arith.constant 0 : i32
    return %c0_i32, %c0_i32_0 : i32, i32
  }
  func.func @transform_13(%arg0: i32) -> (i32, i32) {
    %c0_i32 = arith.constant 0 : i32
    %c0_i32_0 = arith.constant 0 : i32
    %c0_i32_1 = arith.constant 0 : i32
    return %c0_i32, %c0_i32_0 : i32, i32
  }
  func.func @transform_14(%arg0: i32) -> (i32, i32) {
    %c0_i32 = arith.constant 0 : i32
    %c0_i32_0 = arith.constant 0 : i32
    return %arg0, %c0_i32 : i32, i32
  }
  func.func @transform_15(%arg0: i32) -> (i32, i32) {
    %c0_i32 = arith.constant 0 : i32
    %c0_i32_0 = arith.constant 0 : i32
    return %arg0, %c0_i32 : i32, i32
  }
}

</mosaic_0001>

<llo_original>
// kernel: _lambda_.1
$region0: #{_lambda_.1}
  #allocation0 [shape = 'u32[]', space=smem, size = 0x4, offset = 0x4, fixed_abs, tag = 'smem constant byte address 0x4 - core index']
  #allocation1 [shape = 'u32[144,128]{1,0:T(1,128)}', space=vmem, size = 0x12000, scoped, tag = 'internal scratch']
  %s0 = inlined_call_operand.vmem [shape: bf16[256,784], index: 0, kind: input, shape index: {}]
  %s1 = inlined_call_operand.vmem [shape: f32[256,128], index: 1, kind: input, shape index: {}]
  %s2 = inlined_call_operand.vmem [shape: bf16[784,256], index: 2, kind: input, shape index: {}]
  %s3 = inlined_call_operand.vmem [shape: f32[1,256], index: 3, kind: input, shape index: {}]
  %s4 = inlined_call_operand.vmem [shape: bf16[256,128], index: 4, kind: input, shape index: {}]
  %s5 = inlined_call_operand.vmem [shape: f32[1,128], index: 5, kind: input, shape index: {}]
  %s6 = inlined_call_operand.vmem [shape: bf16[128,256], index: 6, kind: input, shape index: {}]
  %s7 = inlined_call_operand.vmem [shape: f32[1,256], index: 7, kind: input, shape index: {}]
  %s8 = inlined_call_operand.vmem [shape: bf16[128,128], index: 8, kind: input, shape index: {}]
  %s9 = inlined_call_operand.vmem [shape: f32[1,128], index: 9, kind: input, shape index: {}]
  %s10 = inlined_call_operand.vmem [shape: bf16[128,256], index: 10, kind: input, shape index: {}]
  %s11 = inlined_call_operand.vmem [shape: f32[1,256], index: 11, kind: input, shape index: {}]
  %s12 = inlined_call_operand.vmem [shape: bf16[256,784], index: 12, kind: input, shape index: {}]
  %s13 = inlined_call_operand.vmem [shape: f32[1,784], index: 13, kind: input, shape index: {}]
  %s14 = inlined_call_operand.vmem [shape: bf16[256,784], index: 14, kind: output, shape index: {0}]
  %s15 = inlined_call_operand.vmem [shape: f32[256,128], index: 15, kind: output, shape index: {1}]
  %16 = xla_tuple %s14, %s15
  %s17 = sld [smem:[#allocation0]]
  $region74: #{_lambda_.1} parent=0
    _
  %s19 = ssub.s32 1, %s17
  %s20 = scalar_select 0, %s19, %s17
  // Predicated region
  $region2: #{_lambda_.1} parent=0 // pred_check
    _
  $region3: #{_lambda_.1} parent=0 // pred_check_branch
    %22 = sbr.rel (0) target = $region5
  $region4: #{_lambda_.1} parent=0 // pred_region
    _
  $region5: #{_lambda_.1} parent=0 // pred_fallthru
    _
  // Predicated region
  $region6: #{_lambda_.1} parent=0 // pred_check
    _
  $region7: #{_lambda_.1} parent=0 // pred_check_branch
    %24 = sbr.rel (0) target = $region9
  $region8: #{_lambda_.1} parent=0 // pred_region
    _
  $region9: #{_lambda_.1} parent=0 // pred_fallthru
    _
  // Predicated region
  $region10: #{_lambda_.1} parent=0 // pred_check
    _
  $region11: #{_lambda_.1} parent=0 // pred_check_branch
    %26 = sbr.rel (0) target = $region13
  $region12: #{_lambda_.1} parent=0 // pred_region
    _
  $region13: #{_lambda_.1} parent=0 // pred_fallthru
    _
  // Predicated region
  $region14: #{_lambda_.1} parent=0 // pred_check
    _
  $region15: #{_lambda_.1} parent=0 // pred_check_branch
    %28 = sbr.rel (0) target = $region17
  $region16: #{_lambda_.1} parent=0 // pred_region
    _
  $region17: #{_lambda_.1} parent=0 // pred_fallthru
    _
  // Predicated region
  $region18: #{_lambda_.1} parent=0 // pred_check
    _
  $region19: #{_lambda_.1} parent=0 // pred_check_branch
    %30 = sbr.rel (0) target = $region21
  $region20: #{_lambda_.1} parent=0 // pred_region
    _
  $region21: #{_lambda_.1} parent=0 // pred_fallthru
    _
  // Predicated region
  $region22: #{_lambda_.1} parent=0 // pred_check
    _
  $region23: #{_lambda_.1} parent=0 // pred_check_branch
    %32 = sbr.rel (0) target = $region25
  $region24: #{_lambda_.1} parent=0 // pred_region
    _
  $region25: #{_lambda_.1} parent=0 // pred_fallthru
    _
  // Predicated region
  $region26: #{_lambda_.1} parent=0 // pred_check
    _
  $region27: #{_lambda_.1} parent=0 // pred_check_branch
    %34 = sbr.rel (0) target = $region29
  $region28: #{_lambda_.1} parent=0 // pred_region
    _
  $region29: #{_lambda_.1} parent=0 // pred_fallthru
    _
  // Predicated region
  $region30: #{_lambda_.1} parent=0 // pred_check
    _
  $region31: #{_lambda_.1} parent=0 // pred_check_branch
    %36 = sbr.rel (0) target = $region33
  $region32: #{_lambda_.1} parent=0 // pred_region
    _
  $region33: #{_lambda_.1} parent=0 // pred_fallthru
    _
  // Predicated region
  $region34: #{_lambda_.1} parent=0 // pred_check
    _
  $region35: #{_lambda_.1} parent=0 // pred_check_branch
    %38 = sbr.rel (0) target = $region37
  $region36: #{_lambda_.1} parent=0 // pred_region
    _
  $region37: #{_lambda_.1} parent=0 // pred_fallthru
    _
  // Predicated region
  $region38: #{_lambda_.1} parent=0 // pred_check
    _
  $region39: #{_lambda_.1} parent=0 // pred_check_branch
    %40 = sbr.rel (0) target = $region41
  $region40: #{_lambda_.1} parent=0 // pred_region
    _
  $region41: #{_lambda_.1} parent=0 // pred_fallthru
    _
  // Predicated region
  $region42: #{_lambda_.1} parent=0 // pred_check
    _
  $region43: #{_lambda_.1} parent=0 // pred_check_branch
    %42 = sbr.rel (0) target = $region45
  $region44: #{_lambda_.1} parent=0 // pred_region
    _
  $region45: #{_lambda_.1} parent=0 // pred_fallthru
    _
  // Predicated region
  $region46: #{_lambda_.1} parent=0 // pred_check
    _
  $region47: #{_lambda_.1} parent=0 // pred_check_branch
    %44 = sbr.rel (0) target = $region49
  $region48: #{_lambda_.1} parent=0 // pred_region
    _
  $region49: #{_lambda_.1} parent=0 // pred_fallthru
    _
  // Predicated region
  $region50: #{_lambda_.1} parent=0 // pred_check
    _
  $region51: #{_lambda_.1} parent=0 // pred_check_branch
    %46 = sbr.rel (0) target = $region53
  $region52: #{_lambda_.1} parent=0 // pred_region
    _
  $region53: #{_lambda_.1} parent=0 // pred_fallthru
    _
  // Predicated region
  $region54: #{_lambda_.1} parent=0 // pred_check
    _
  $region55: #{_lambda_.1} parent=0 // pred_check_branch
    %48 = sbr.rel (0) target = $region57
  $region56: #{_lambda_.1} parent=0 // pred_region
    _
  $region57: #{_lambda_.1} parent=0 // pred_fallthru
    _
  %v50 = vld [vmem:[%s0] sm:$0xff]
  %v51 = vld [vmem:[%s0 + $0x8] sm:$0xff]
  %v52 = vld [vmem:[%s0 + $0x10] sm:$0xff]
  %v53 = vld [vmem:[%s0 + $0x18] sm:$0xf]
  %v54 = vld [vmem:[%s0 + $0x1c] sm:$0xff]
  %v55 = vld [vmem:[%s0 + $0x24] sm:$0xff]
  %v56 = vld [vmem:[%s0 + $0x2c] sm:$0xff]
  %v57 = vld [vmem:[%s0 + $0x34] sm:$0xf]
  %v58 = vld [vmem:[%s0 + $0x38] sm:$0xff]
  %v59 = vld [vmem:[%s0 + $0x40] sm:$0xff]
  %v60 = vld [vmem:[%s0 + $0x48] sm:$0xff]
  %v61 = vld [vmem:[%s0 + $0x50] sm:$0xf]
  %v62 = vld [vmem:[%s0 + $0x54] sm:$0xff]
  %v63 = vld [vmem:[%s0 + $0x5c] sm:$0xff]
  %v64 = vld [vmem:[%s0 + $0x64] sm:$0xff]
  %v65 = vld [vmem:[%s0 + $0x6c] sm:$0xf]
  %v66 = vld [vmem:[%s0 + $0x70] sm:$0xff]
  %v67 = vld [vmem:[%s0 + $0x78] sm:$0xff]
  %v68 = vld [vmem:[%s0 + $0x80] sm:$0xff]
  %v69 = vld [vmem:[%s0 + $0x88] sm:$0xf]
  %v70 = vld [vmem:[%s0 + $0x8c] sm:$0xff]
  %v71 = vld [vmem:[%s0 + $0x94] sm:$0xff]
  %v72 = vld [vmem:[%s0 + $0x9c] sm:$0xff]
  %v73 = vld [vmem:[%s0 + $0xa4] sm:$0xf]
  %v74 = vld [vmem:[%s0 + $0xa8] sm:$0xff]
  %v75 = vld [vmem:[%s0 + $0xb0] sm:$0xff]
  %v76 = vld [vmem:[%s0 + $0xb8] sm:$0xff]
  %v77 = vld [vmem:[%s0 + $0xc0] sm:$0xf]
  %v78 = vld [vmem:[%s0 + $0xc4] sm:$0xff]
  %v79 = vld [vmem:[%s0 + $0xcc] sm:$0xff]
  %v80 = vld [vmem:[%s0 + $0xd4] sm:$0xff]
  %v81 = vld [vmem:[%s0 + $0xdc] sm:$0xf]
  %v82 = vld [vmem:[%s0 + $0xe0] sm:$0xff]
  %v83 = vld [vmem:[%s0 + $0xe8] sm:$0xff]
  %v84 = vld [vmem:[%s0 + $0xf0] sm:$0xff]
  %v85 = vld [vmem:[%s0 + $0xf8] sm:$0xf]
  %v86 = vld [vmem:[%s0 + $0xfc] sm:$0xff]
  %v87 = vld [vmem:[%s0 + $0x104] sm:$0xff]
  %v88 = vld [vmem:[%s0 + $0x10c] sm:$0xff]
  %v89 = vld [vmem:[%s0 + $0x114] sm:$0xf]
  %v90 = vld [vmem:[%s0 + $0x118] sm:$0xff]
  %v91 = vld [vmem:[%s0 + $0x120] sm:$0xff]
  %v92 = vld [vmem:[%s0 + $0x128] sm:$0xff]
  %v93 = vld [vmem:[%s0 + $0x130] sm:$0xf]
  %v94 = vld [vmem:[%s0 + $0x134] sm:$0xff]
  %v95 = vld [vmem:[%s0 + $0x13c] sm:$0xff]
  %v96 = vld [vmem:[%s0 + $0x144] sm:$0xff]
  %v97 = vld [vmem:[%s0 + $0x14c] sm:$0xf]
  %v98 = vld [vmem:[%s0 + $0x150] sm:$0xff]
  %v99 = vld [vmem:[%s0 + $0x158] sm:$0xff]
  %v100 = vld [vmem:[%s0 + $0x160] sm:$0xff]
  %v101 = vld [vmem:[%s0 + $0x168] sm:$0xf]
  %v102 = vld [vmem:[%s0 + $0x16c] sm:$0xff]
  %v103 = vld [vmem:[%s0 + $0x174] sm:$0xff]
  %v104 = vld [vmem:[%s0 + $0x17c] sm:$0xff]
  %v105 = vld [vmem:[%s0 + $0x184] sm:$0xf]
  %v106 = vld [vmem:[%s0 + $0x188] sm:$0xff]
  %v107 = vld [vmem:[%s0 + $0x190] sm:$0xff]
  %v108 = vld [vmem:[%s0 + $0x198] sm:$0xff]
  %v109 = vld [vmem:[%s0 + $0x1a0] sm:$0xf]
  %v110 = vld [vmem:[%s0 + $0x1a4] sm:$0xff]
  %v111 = vld [vmem:[%s0 + $0x1ac] sm:$0xff]
  %v112 = vld [vmem:[%s0 + $0x1b4] sm:$0xff]
  %v113 = vld [vmem:[%s0 + $0x1bc] sm:$0xf]
  %v114 = vld [vmem:[%s0 + $0x1c0] sm:$0xff]
  %v115 = vld [vmem:[%s0 + $0x1c8] sm:$0xff]
  %v116 = vld [vmem:[%s0 + $0x1d0] sm:$0xff]
  %v117 = vld [vmem:[%s0 + $0x1d8] sm:$0xf]
  %v118 = vld [vmem:[%s0 + $0x1dc] sm:$0xff]
  %v119 = vld [vmem:[%s0 + $0x1e4] sm:$0xff]
  %v120 = vld [vmem:[%s0 + $0x1ec] sm:$0xff]
  %v121 = vld [vmem:[%s0 + $0x1f4] sm:$0xf]
  %v122 = vld [vmem:[%s0 + $0x1f8] sm:$0xff]
  %v123 = vld [vmem:[%s0 + $0x200] sm:$0xff]
  %v124 = vld [vmem:[%s0 + $0x208] sm:$0xff]
  %v125 = vld [vmem:[%s0 + $0x210] sm:$0xf]
  %v126 = vld [vmem:[%s0 + $0x214] sm:$0xff]
  %v127 = vld [vmem:[%s0 + $0x21c] sm:$0xff]
  %v128 = vld [vmem:[%s0 + $0x224] sm:$0xff]
  %v129 = vld [vmem:[%s0 + $0x22c] sm:$0xf]
  %v130 = vld [vmem:[%s0 + $0x230] sm:$0xff]
  %v131 = vld [vmem:[%s0 + $0x238] sm:$0xff]
  %v132 = vld [vmem:[%s0 + $0x240] sm:$0xff]
  %v133 = vld [vmem:[%s0 + $0x248] sm:$0xf]
  %v134 = vld [vmem:[%s0 + $0x24c] sm:$0xff]
  %v135 = vld [vmem:[%s0 + $0x254] sm:$0xff]
  %v136 = vld [vmem:[%s0 + $0x25c] sm:$0xff]
  %v137 = vld [vmem:[%s0 + $0x264] sm:$0xf]
  %v138 = vld [vmem:[%s0 + $0x268] sm:$0xff]
  %v139 = vld [vmem:[%s0 + $0x270] sm:$0xff]
  %v140 = vld [vmem:[%s0 + $0x278] sm:$0xff]
  %v141 = vld [vmem:[%s0 + $0x280] sm:$0xf]
  %v142 = vld [vmem:[%s0 + $0x284] sm:$0xff]
  %v143 = vld [vmem:[%s0 + $0x28c] sm:$0xff]
  %v144 = vld [vmem:[%s0 + $0x294] sm:$0xff]
  %v145 = vld [vmem:[%s0 + $0x29c] sm:$0xf]
  %v146 = vld [vmem:[%s0 + $0x2a0] sm:$0xff]
  %v147 = vld [vmem:[%s0 + $0x2a8] sm:$0xff]
  %v148 = vld [vmem:[%s0 + $0x2b0] sm:$0xff]
  %v149 = vld [vmem:[%s0 + $0x2b8] sm:$0xf]
  %v150 = vld [vmem:[%s0 + $0x2bc] sm:$0xff]
  %v151 = vld [vmem:[%s0 + $0x2c4] sm:$0xff]
  %v152 = vld [vmem:[%s0 + $0x2cc] sm:$0xff]
  %v153 = vld [vmem:[%s0 + $0x2d4] sm:$0xf]
  %v154 = vld [vmem:[%s0 + $0x2d8] sm:$0xff]
  %v155 = vld [vmem:[%s0 + $0x2e0] sm:$0xff]
  %v156 = vld [vmem:[%s0 + $0x2e8] sm:$0xff]
  %v157 = vld [vmem:[%s0 + $0x2f0] sm:$0xf]
  %v158 = vld [vmem:[%s0 + $0x2f4] sm:$0xff]
  %v159 = vld [vmem:[%s0 + $0x2fc] sm:$0xff]
  %v160 = vld [vmem:[%s0 + $0x304] sm:$0xff]
  %v161 = vld [vmem:[%s0 + $0x30c] sm:$0xf]
  %v162 = vld [vmem:[%s0 + $0x310] sm:$0xff]
  %v163 = vld [vmem:[%s0 + $0x318] sm:$0xff]
  %v164 = vld [vmem:[%s0 + $0x320] sm:$0xff]
  %v165 = vld [vmem:[%s0 + $0x328] sm:$0xf]
  %v166 = vld [vmem:[%s0 + $0x32c] sm:$0xff]
  %v167 = vld [vmem:[%s0 + $0x334] sm:$0xff]
  %v168 = vld [vmem:[%s0 + $0x33c] sm:$0xff]
  %v169 = vld [vmem:[%s0 + $0x344] sm:$0xf]
  %v170 = vld [vmem:[%s0 + $0x348] sm:$0xff]
  %v171 = vld [vmem:[%s0 + $0x350] sm:$0xff]
  %v172 = vld [vmem:[%s0 + $0x358] sm:$0xff]
  %v173 = vld [vmem:[%s0 + $0x360] sm:$0xf]
  %v174 = vld [vmem:[%s0 + $0x364] sm:$0xff]
  %v175 = vld [vmem:[%s0 + $0x36c] sm:$0xff]
  %v176 = vld [vmem:[%s0 + $0x374] sm:$0xff]
  %v177 = vld [vmem:[%s0 + $0x37c] sm:$0xf]
  %v178 = vld [vmem:[%s2] sm:$0xff]
  %v179 = vld [vmem:[%s2 + $0x8] sm:$0xff]
  %v180 = vld [vmem:[%s2 + $0x10] sm:$0xff]
  %v181 = vld [vmem:[%s2 + $0x18] sm:$0xff]
  %v182 = vld [vmem:[%s2 + $0x20] sm:$0xff]
  %v183 = vld [vmem:[%s2 + $0x28] sm:$0xff]
  %v184 = vld [vmem:[%s2 + $0x30] sm:$0xff]
  %v185 = vld [vmem:[%s2 + $0x38] sm:$0xff]
  %v186 = vld [vmem:[%s2 + $0x40] sm:$0xff]
  %v187 = vld [vmem:[%s2 + $0x48] sm:$0xff]
  %v188 = vld [vmem:[%s2 + $0x50] sm:$0xff]
  %v189 = vld [vmem:[%s2 + $0x58] sm:$0xff]
  %v190 = vld [vmem:[%s2 + $0x60] sm:$0xff]
  %v191 = vld [vmem:[%s2 + $0x68] sm:$0xff]
  %v192 = vld [vmem:[%s2 + $0x70] sm:$0xff]
  %v193 = vld [vmem:[%s2 + $0x78] sm:$0xff]
  %v194 = vld [vmem:[%s2 + $0x80] sm:$0xff]
  %v195 = vld [vmem:[%s2 + $0x88] sm:$0xff]
  %v196 = vld [vmem:[%s2 + $0x90] sm:$0xff]
  %v197 = vld [vmem:[%s2 + $0x98] sm:$0xff]
  %v198 = vld [vmem:[%s2 + $0xa0] sm:$0xff]
  %v199 = vld [vmem:[%s2 + $0xa8] sm:$0xff]
  %v200 = vld [vmem:[%s2 + $0xb0] sm:$0xff]
  %v201 = vld [vmem:[%s2 + $0xb8] sm:$0xff]
  %v202 = vld [vmem:[%s2 + $0xc0] sm:$0xff]
  %v203 = vld [vmem:[%s2 + $0xc8] sm:$0xff]
  %v204 = vld [vmem:[%s2 + $0xd0] sm:$0xff]
  %v205 = vld [vmem:[%s2 + $0xd8] sm:$0xff]
  %v206 = vld [vmem:[%s2 + $0xe0] sm:$0xff]
  %v207 = vld [vmem:[%s2 + $0xe8] sm:$0xff]
  %v208 = vld [vmem:[%s2 + $0xf0] sm:$0xff]
  %v209 = vld [vmem:[%s2 + $0xf8] sm:$0xff]
  %v210 = vld [vmem:[%s2 + $0x100] sm:$0xff]
  %v211 = vld [vmem:[%s2 + $0x108] sm:$0xff]
  %v212 = vld [vmem:[%s2 + $0x110] sm:$0xff]
  %v213 = vld [vmem:[%s2 + $0x118] sm:$0xff]
  %v214 = vld [vmem:[%s2 + $0x120] sm:$0xff]
  %v215 = vld [vmem:[%s2 + $0x128] sm:$0xff]
  %v216 = vld [vmem:[%s2 + $0x130] sm:$0xff]
  %v217 = vld [vmem:[%s2 + $0x138] sm:$0xff]
  %v218 = vld [vmem:[%s2 + $0x140] sm:$0xff]
  %v219 = vld [vmem:[%s2 + $0x148] sm:$0xff]
  %v220 = vld [vmem:[%s2 + $0x150] sm:$0xff]
  %v221 = vld [vmem:[%s2 + $0x158] sm:$0xff]
  %v222 = vld [vmem:[%s2 + $0x160] sm:$0xff]
  %v223 = vld [vmem:[%s2 + $0x168] sm:$0xff]
  %v224 = vld [vmem:[%s2 + $0x170] sm:$0xff]
  %v225 = vld [vmem:[%s2 + $0x178] sm:$0xff]
  %v226 = vld [vmem:[%s2 + $0x180] sm:$0xff]
  %v227 = vld [vmem:[%s2 + $0x188] sm:$0xff]
  %v228 = vld [vmem:[%s2 + $0x190] sm:$0xff]
  %v229 = vld [vmem:[%s2 + $0x198] sm:$0xff]
  %v230 = vld [vmem:[%s2 + $0x1a0] sm:$0xff]
  %v231 = vld [vmem:[%s2 + $0x1a8] sm:$0xff]
  %v232 = vld [vmem:[%s2 + $0x1b0] sm:$0xff]
  %v233 = vld [vmem:[%s2 + $0x1b8] sm:$0xff]
  %v234 = vld [vmem:[%s2 + $0x1c0] sm:$0xff]
  %v235 = vld [vmem:[%s2 + $0x1c8] sm:$0xff]
  %v236 = vld [vmem:[%s2 + $0x1d0] sm:$0xff]
  %v237 = vld [vmem:[%s2 + $0x1d8] sm:$0xff]
  %v238 = vld [vmem:[%s2 + $0x1e0] sm:$0xff]
  %v239 = vld [vmem:[%s2 + $0x1e8] sm:$0xff]
  %v240 = vld [vmem:[%s2 + $0x1f0] sm:$0xff]
  %v241 = vld [vmem:[%s2 + $0x1f8] sm:$0xff]
  %v242 = vld [vmem:[%s2 + $0x200] sm:$0xff]
  %v243 = vld [vmem:[%s2 + $0x208] sm:$0xff]
  %v244 = vld [vmem:[%s2 + $0x210] sm:$0xff]
  %v245 = vld [vmem:[%s2 + $0x218] sm:$0xff]
  %v246 = vld [vmem:[%s2 + $0x220] sm:$0xff]
  %v247 = vld [vmem:[%s2 + $0x228] sm:$0xff]
  %v248 = vld [vmem:[%s2 + $0x230] sm:$0xff]
  %v249 = vld [vmem:[%s2 + $0x238] sm:$0xff]
  %v250 = vld [vmem:[%s2 + $0x240] sm:$0xff]
  %v251 = vld [vmem:[%s2 + $0x248] sm:$0xff]
  %v252 = vld [vmem:[%s2 + $0x250] sm:$0xff]
  %v253 = vld [vmem:[%s2 + $0x258] sm:$0xff]
  %v254 = vld [vmem:[%s2 + $0x260] sm:$0xff]
  %v255 = vld [vmem:[%s2 + $0x268] sm:$0xff]
  %v256 = vld [vmem:[%s2 + $0x270] sm:$0xff]
  %v257 = vld [vmem:[%s2 + $0x278] sm:$0xff]
  %v258 = vld [vmem:[%s2 + $0x280] sm:$0xff]
  %v259 = vld [vmem:[%s2 + $0x288] sm:$0xff]
  %v260 = vld [vmem:[%s2 + $0x290] sm:$0xff]
  %v261 = vld [vmem:[%s2 + $0x298] sm:$0xff]
  %v262 = vld [vmem:[%s2 + $0x2a0] sm:$0xff]
  %v263 = vld [vmem:[%s2 + $0x2a8] sm:$0xff]
  %v264 = vld [vmem:[%s2 + $0x2b0] sm:$0xff]
  %v265 = vld [vmem:[%s2 + $0x2b8] sm:$0xff]
  %v266 = vld [vmem:[%s2 + $0x2c0] sm:$0xff]
  %v267 = vld [vmem:[%s2 + $0x2c8] sm:$0xff]
  %v268 = vld [vmem:[%s2 + $0x2d0] sm:$0xff]
  %v269 = vld [vmem:[%s2 + $0x2d8] sm:$0xff]
  %v270 = vld [vmem:[%s2 + $0x2e0] sm:$0xff]
  %v271 = vld [vmem:[%s2 + $0x2e8] sm:$0xff]
  %v272 = vld [vmem:[%s2 + $0x2f0] sm:$0xff]
  %v273 = vld [vmem:[%s2 + $0x2f8] sm:$0xff]
  %v274 = vld [vmem:[%s2 + $0x300] sm:$0xff]
  %v275 = vld [vmem:[%s2 + $0x308] sm:$0xff]
  %v276 = vld [vmem:[%s3] sm:$0x3]
  %v278 = vlaneseq
  %v279 = vshrl.u32 %v278, 7
  %v280 = vsub.s32 0, %v279
  %v281 = vrot.slane %v276, %v280
  %v282 = vlaneseq
  %v283 = vshrl.u32 %v282, 7
  %v284 = vsub.s32 1, %v283
  %v285 = vrot.slane %v276, %v284
  %v416 = vunpack.c.l.b16 %v50
  %v417 = vunpack.c.h.b16 %v50
  %v418 = vunpack.c.l.b16 %v51
  %v419 = vunpack.c.h.b16 %v51
  %v420 = vunpack.c.l.b16 %v52
  %v421 = vunpack.c.h.b16 %v52
  %v422 = vunpack.c.l.b16 %v53
  %v423 = vunpack.c.l.b16 %v54
  %v424 = vunpack.c.h.b16 %v54
  %v425 = vunpack.c.l.b16 %v55
  %v426 = vunpack.c.h.b16 %v55
  %v427 = vunpack.c.l.b16 %v56
  %v428 = vunpack.c.h.b16 %v56
  %v429 = vunpack.c.l.b16 %v57
  %v430 = vunpack.c.l.b16 %v58
  %v431 = vunpack.c.h.b16 %v58
  %v432 = vunpack.c.l.b16 %v59
  %v433 = vunpack.c.h.b16 %v59
  %v434 = vunpack.c.l.b16 %v60
  %v435 = vunpack.c.h.b16 %v60
  %v436 = vunpack.c.l.b16 %v61
  %v437 = vunpack.c.l.b16 %v62
  %v438 = vunpack.c.h.b16 %v62
  %v439 = vunpack.c.l.b16 %v63
  %v440 = vunpack.c.h.b16 %v63
  %v441 = vunpack.c.l.b16 %v64
  %v442 = vunpack.c.h.b16 %v64
  %v443 = vunpack.c.l.b16 %v65
  %v444 = vunpack.c.l.b16 %v66
  %v445 = vunpack.c.h.b16 %v66
  %v446 = vunpack.c.l.b16 %v67
  %v447 = vunpack.c.h.b16 %v67
  %v448 = vunpack.c.l.b16 %v68
  %v449 = vunpack.c.h.b16 %v68
  %v450 = vunpack.c.l.b16 %v69
  %v451 = vunpack.c.l.b16 %v70
  %v452 = vunpack.c.h.b16 %v70
  %v453 = vunpack.c.l.b16 %v71
  %v454 = vunpack.c.h.b16 %v71
  %v455 = vunpack.c.l.b16 %v72
  %v456 = vunpack.c.h.b16 %v72
  %v457 = vunpack.c.l.b16 %v73
  %v458 = vunpack.c.l.b16 %v74
  %v459 = vunpack.c.h.b16 %v74
  %v460 = vunpack.c.l.b16 %v75
  %v461 = vunpack.c.h.b16 %v75
  %v462 = vunpack.c.l.b16 %v76
  %v463 = vunpack.c.h.b16 %v76
  %v464 = vunpack.c.l.b16 %v77
  %v465 = vunpack.c.l.b16 %v78
  %v466 = vunpack.c.h.b16 %v78
  %v467 = vunpack.c.l.b16 %v79
  %v468 = vunpack.c.h.b16 %v79
  %v469 = vunpack.c.l.b16 %v80
  %v470 = vunpack.c.h.b16 %v80
  %v471 = vunpack.c.l.b16 %v81
  %v472 = vunpack.c.l.b16 %v82
  %v473 = vunpack.c.h.b16 %v82
  %v474 = vunpack.c.l.b16 %v83
  %v475 = vunpack.c.h.b16 %v83
  %v476 = vunpack.c.l.b16 %v84
  %v477 = vunpack.c.h.b16 %v84
  %v478 = vunpack.c.l.b16 %v85
  %v479 = vunpack.c.l.b16 %v86
  %v480 = vunpack.c.h.b16 %v86
  %v481 = vunpack.c.l.b16 %v87
  %v482 = vunpack.c.h.b16 %v87
  %v483 = vunpack.c.l.b16 %v88
  %v484 = vunpack.c.h.b16 %v88
  %v485 = vunpack.c.l.b16 %v89
  %v486 = vunpack.c.l.b16 %v90
  %v487 = vunpack.c.h.b16 %v90
  %v488 = vunpack.c.l.b16 %v91
  %v489 = vunpack.c.h.b16 %v91
  %v490 = vunpack.c.l.b16 %v92
  %v491 = vunpack.c.h.b16 %v92
  %v492 = vunpack.c.l.b16 %v93
  %v493 = vunpack.c.l.b16 %v94
  %v494 = vunpack.c.h.b16 %v94
  %v495 = vunpack.c.l.b16 %v95
  %v496 = vunpack.c.h.b16 %v95
  %v497 = vunpack.c.l.b16 %v96
  %v498 = vunpack.c.h.b16 %v96
  %v499 = vunpack.c.l.b16 %v97
  %v500 = vunpack.c.l.b16 %v98
  %v501 = vunpack.c.h.b16 %v98
  %v502 = vunpack.c.l.b16 %v99
  %v503 = vunpack.c.h.b16 %v99
  %v504 = vunpack.c.l.b16 %v100
  %v505 = vunpack.c.h.b16 %v100
  %v506 = vunpack.c.l.b16 %v101
  %v507 = vunpack.c.l.b16 %v102
  %v508 = vunpack.c.h.b16 %v102
  %v509 = vunpack.c.l.b16 %v103
  %v510 = vunpack.c.h.b16 %v103
  %v511 = vunpack.c.l.b16 %v104
  %v512 = vunpack.c.h.b16 %v104
  %v513 = vunpack.c.l.b16 %v105
  %v514 = vunpack.c.l.b16 %v106
  %v515 = vunpack.c.h.b16 %v106
  %v516 = vunpack.c.l.b16 %v107
  %v517 = vunpack.c.h.b16 %v107
  %v518 = vunpack.c.l.b16 %v108
  %v519 = vunpack.c.h.b16 %v108
  %v520 = vunpack.c.l.b16 %v109
  %v521 = vunpack.c.l.b16 %v110
  %v522 = vunpack.c.h.b16 %v110
  %v523 = vunpack.c.l.b16 %v111
  %v524 = vunpack.c.h.b16 %v111
  %v525 = vunpack.c.l.b16 %v112
  %v526 = vunpack.c.h.b16 %v112
  %v527 = vunpack.c.l.b16 %v113
  %v528 = vunpack.c.l.b16 %v114
  %v529 = vunpack.c.h.b16 %v114
  %v530 = vunpack.c.l.b16 %v115
  %v531 = vunpack.c.h.b16 %v115
  %v532 = vunpack.c.l.b16 %v116
  %v533 = vunpack.c.h.b16 %v116
  %v534 = vunpack.c.l.b16 %v117
  %v535 = vunpack.c.l.b16 %v118
  %v536 = vunpack.c.h.b16 %v118
  %v537 = vunpack.c.l.b16 %v119
  %v538 = vunpack.c.h.b16 %v119
  %v539 = vunpack.c.l.b16 %v120
  %v540 = vunpack.c.h.b16 %v120
  %v541 = vunpack.c.l.b16 %v121
  %v542 = vunpack.c.l.b16 %v122
  %v543 = vunpack.c.h.b16 %v122
  %v544 = vunpack.c.l.b16 %v123
  %v545 = vunpack.c.h.b16 %v123
  %v546 = vunpack.c.l.b16 %v124
  %v547 = vunpack.c.h.b16 %v124
  %v548 = vunpack.c.l.b16 %v125
  %v549 = vunpack.c.l.b16 %v126
  %v550 = vunpack.c.h.b16 %v126
  %v551 = vunpack.c.l.b16 %v127
  %v552 = vunpack.c.h.b16 %v127
  %v553 = vunpack.c.l.b16 %v128
  %v554 = vunpack.c.h.b16 %v128
  %v555 = vunpack.c.l.b16 %v129
  %v556 = vunpack.c.l.b16 %v130
  %v557 = vunpack.c.h.b16 %v130
  %v558 = vunpack.c.l.b16 %v131
  %v559 = vunpack.c.h.b16 %v131
  %v560 = vunpack.c.l.b16 %v132
  %v561 = vunpack.c.h.b16 %v132
  %v562 = vunpack.c.l.b16 %v133
  %v563 = vunpack.c.l.b16 %v134
  %v564 = vunpack.c.h.b16 %v134
  %v565 = vunpack.c.l.b16 %v135
  %v566 = vunpack.c.h.b16 %v135
  %v567 = vunpack.c.l.b16 %v136
  %v568 = vunpack.c.h.b16 %v136
  %v569 = vunpack.c.l.b16 %v137
  %v570 = vunpack.c.l.b16 %v138
  %v571 = vunpack.c.h.b16 %v138
  %v572 = vunpack.c.l.b16 %v139
  %v573 = vunpack.c.h.b16 %v139
  %v574 = vunpack.c.l.b16 %v140
  %v575 = vunpack.c.h.b16 %v140
  %v576 = vunpack.c.l.b16 %v141
  %v577 = vunpack.c.l.b16 %v142
  %v578 = vunpack.c.h.b16 %v142
  %v579 = vunpack.c.l.b16 %v143
  %v580 = vunpack.c.h.b16 %v143
  %v581 = vunpack.c.l.b16 %v144
  %v582 = vunpack.c.h.b16 %v144
  %v583 = vunpack.c.l.b16 %v145
  %v584 = vunpack.c.l.b16 %v146
  %v585 = vunpack.c.h.b16 %v146
  %v586 = vunpack.c.l.b16 %v147
  %v587 = vunpack.c.h.b16 %v147
  %v588 = vunpack.c.l.b16 %v148
  %v589 = vunpack.c.h.b16 %v148
  %v590 = vunpack.c.l.b16 %v149
  %v591 = vunpack.c.l.b16 %v150
  %v592 = vunpack.c.h.b16 %v150
  %v593 = vunpack.c.l.b16 %v151
  %v594 = vunpack.c.h.b16 %v151
  %v595 = vunpack.c.l.b16 %v152
  %v596 = vunpack.c.h.b16 %v152
  %v597 = vunpack.c.l.b16 %v153
  %v598 = vunpack.c.l.b16 %v154
  %v599 = vunpack.c.h.b16 %v154
  %v600 = vunpack.c.l.b16 %v155
  %v601 = vunpack.c.h.b16 %v155
  %v602 = vunpack.c.l.b16 %v156
  %v603 = vunpack.c.h.b16 %v156
  %v604 = vunpack.c.l.b16 %v157
  %v605 = vunpack.c.l.b16 %v158
  %v606 = vunpack.c.h.b16 %v158
  %v607 = vunpack.c.l.b16 %v159
  %v608 = vunpack.c.h.b16 %v159
  %v609 = vunpack.c.l.b16 %v160
  %v610 = vunpack.c.h.b16 %v160
  %v611 = vunpack.c.l.b16 %v161
  %v612 = vunpack.c.l.b16 %v162
  %v613 = vunpack.c.h.b16 %v162
  %v614 = vunpack.c.l.b16 %v163
  %v615 = vunpack.c.h.b16 %v163
  %v616 = vunpack.c.l.b16 %v164
  %v617 = vunpack.c.h.b16 %v164
  %v618 = vunpack.c.l.b16 %v165
  %v619 = vunpack.c.l.b16 %v166
  %v620 = vunpack.c.h.b16 %v166
  %v621 = vunpack.c.l.b16 %v167
  %v622 = vunpack.c.h.b16 %v167
  %v623 = vunpack.c.l.b16 %v168
  %v624 = vunpack.c.h.b16 %v168
  %v625 = vunpack.c.l.b16 %v169
  %v626 = vunpack.c.l.b16 %v170
  %v627 = vunpack.c.h.b16 %v170
  %v628 = vunpack.c.l.b16 %v171
  %v629 = vunpack.c.h.b16 %v171
  %v630 = vunpack.c.l.b16 %v172
  %v631 = vunpack.c.h.b16 %v172
  %v632 = vunpack.c.l.b16 %v173
  %v633 = vunpack.c.l.b16 %v174
  %v634 = vunpack.c.h.b16 %v174
  %v635 = vunpack.c.l.b16 %v175
  %v636 = vunpack.c.h.b16 %v175
  %v637 = vunpack.c.l.b16 %v176
  %v638 = vunpack.c.h.b16 %v176
  %v639 = vunpack.c.l.b16 %v177
  %v640 = vpack.c.b16 %v423, %v416
  %v641 = vpack.c.b16 %v424, %v417
  %v642 = vpack.c.b16 %v425, %v418
  %v643 = vpack.c.b16 %v426, %v419
  %v644 = vpack.c.b16 %v427, %v420
  %v645 = vpack.c.b16 %v428, %v421
  %v646 = vpack.c.b16 %v429, %v422
  %v647 = vpack.c.b16 %v437, %v430
  %v648 = vpack.c.b16 %v438, %v431
  %v649 = vpack.c.b16 %v439, %v432
  %v650 = vpack.c.b16 %v440, %v433
  %v651 = vpack.c.b16 %v441, %v434
  %v652 = vpack.c.b16 %v442, %v435
  %v653 = vpack.c.b16 %v443, %v436
  %v654 = vpack.c.b16 %v451, %v444
  %v655 = vpack.c.b16 %v452, %v445
  %v656 = vpack.c.b16 %v453, %v446
  %v657 = vpack.c.b16 %v454, %v447
  %v658 = vpack.c.b16 %v455, %v448
  %v659 = vpack.c.b16 %v456, %v449
  %v660 = vpack.c.b16 %v457, %v450
  %v661 = vpack.c.b16 %v465, %v458
  %v662 = vpack.c.b16 %v466, %v459
  %v663 = vpack.c.b16 %v467, %v460
  %v664 = vpack.c.b16 %v468, %v461
  %v665 = vpack.c.b16 %v469, %v462
  %v666 = vpack.c.b16 %v470, %v463
  %v667 = vpack.c.b16 %v471, %v464
  %v668 = vpack.c.b16 %v479, %v472
  %v669 = vpack.c.b16 %v480, %v473
  %v670 = vpack.c.b16 %v481, %v474
  %v671 = vpack.c.b16 %v482, %v475
  %v672 = vpack.c.b16 %v483, %v476
  %v673 = vpack.c.b16 %v484, %v477
  %v674 = vpack.c.b16 %v485, %v478
  %v675 = vpack.c.b16 %v493, %v486
  %v676 = vpack.c.b16 %v494, %v487
  %v677 = vpack.c.b16 %v495, %v488
  %v678 = vpack.c.b16 %v496, %v489
  %v679 = vpack.c.b16 %v497, %v490
  %v680 = vpack.c.b16 %v498, %v491
  %v681 = vpack.c.b16 %v499, %v492
  %v682 = vpack.c.b16 %v507, %v500
  %v683 = vpack.c.b16 %v508, %v501
  %v684 = vpack.c.b16 %v509, %v502
  %v685 = vpack.c.b16 %v510, %v503
  %v686 = vpack.c.b16 %v511, %v504
  %v687 = vpack.c.b16 %v512, %v505
  %v688 = vpack.c.b16 %v513, %v506
  %v689 = vpack.c.b16 %v521, %v514
  %v690 = vpack.c.b16 %v522, %v515
  %v691 = vpack.c.b16 %v523, %v516
  %v692 = vpack.c.b16 %v524, %v517
  %v693 = vpack.c.b16 %v525, %v518
  %v694 = vpack.c.b16 %v526, %v519
  %v695 = vpack.c.b16 %v527, %v520
  %v696 = vpack.c.b16 %v535, %v528
  %v697 = vpack.c.b16 %v536, %v529
  %v698 = vpack.c.b16 %v537, %v530
  %v699 = vpack.c.b16 %v538, %v531
  %v700 = vpack.c.b16 %v539, %v532
  %v701 = vpack.c.b16 %v540, %v533
  %v702 = vpack.c.b16 %v541, %v534
  %v703 = vpack.c.b16 %v549, %v542
  %v704 = vpack.c.b16 %v550, %v543
  %v705 = vpack.c.b16 %v551, %v544
  %v706 = vpack.c.b16 %v552, %v545
  %v707 = vpack.c.b16 %v553, %v546
  %v708 = vpack.c.b16 %v554, %v547
  %v709 = vpack.c.b16 %v555, %v548
  %v710 = vpack.c.b16 %v563, %v556
  %v711 = vpack.c.b16 %v564, %v557
  %v712 = vpack.c.b16 %v565, %v558
  %v713 = vpack.c.b16 %v566, %v559
  %v714 = vpack.c.b16 %v567, %v560
  %v715 = vpack.c.b16 %v568, %v561
  %v716 = vpack.c.b16 %v569, %v562
  %v717 = vpack.c.b16 %v577, %v570
  %v718 = vpack.c.b16 %v578, %v571
  %v719 = vpack.c.b16 %v579, %v572
  %v720 = vpack.c.b16 %v580, %v573
  %v721 = vpack.c.b16 %v581, %v574
  %v722 = vpack.c.b16 %v582, %v575
  %v723 = vpack.c.b16 %v583, %v576
  %v724 = vpack.c.b16 %v591, %v584
  %v725 = vpack.c.b16 %v592, %v585
  %v726 = vpack.c.b16 %v593, %v586
  %v727 = vpack.c.b16 %v594, %v587
  %v728 = vpack.c.b16 %v595, %v588
  %v729 = vpack.c.b16 %v596, %v589
  %v730 = vpack.c.b16 %v597, %v590
  %v731 = vpack.c.b16 %v605, %v598
  %v732 = vpack.c.b16 %v606, %v599
  %v733 = vpack.c.b16 %v607, %v600
  %v734 = vpack.c.b16 %v608, %v601
  %v735 = vpack.c.b16 %v609, %v602
  %v736 = vpack.c.b16 %v610, %v603
  %v737 = vpack.c.b16 %v611, %v604
  %v738 = vpack.c.b16 %v619, %v612
  %v739 = vpack.c.b16 %v620, %v613
  %v740 = vpack.c.b16 %v621, %v614
  %v741 = vpack.c.b16 %v622, %v615
  %v742 = vpack.c.b16 %v623, %v616
  %v743 = vpack.c.b16 %v624, %v617
  %v744 = vpack.c.b16 %v625, %v618
  %v745 = vpack.c.b16 %v633, %v626
  %v746 = vpack.c.b16 %v634, %v627
  %v747 = vpack.c.b16 %v635, %v628
  %v748 = vpack.c.b16 %v636, %v629
  %v749 = vpack.c.b16 %v637, %v630
  %v750 = vpack.c.b16 %v638, %v631
  %v751 = vpack.c.b16 %v639, %v632
  %v946 = vunpack.c.l.b16 %v178
  %v947 = vunpack.c.h.b16 %v178
  %v948 = vunpack.c.l.b16 %v179
  %v949 = vunpack.c.h.b16 %v179
  %v950 = vunpack.c.l.b16 %v180
  %v951 = vunpack.c.h.b16 %v180
  %v952 = vunpack.c.l.b16 %v181
  %v953 = vunpack.c.h.b16 %v181
  %v954 = vunpack.c.l.b16 %v182
  %v955 = vunpack.c.h.b16 %v182
  %v956 = vunpack.c.l.b16 %v183
  %v957 = vunpack.c.h.b16 %v183
  %v958 = vunpack.c.l.b16 %v184
  %v959 = vunpack.c.h.b16 %v184
  %v960 = vunpack.c.l.b16 %v185
  %v961 = vunpack.c.h.b16 %v185
  %v962 = vunpack.c.l.b16 %v186
  %v963 = vunpack.c.h.b16 %v186
  %v964 = vunpack.c.l.b16 %v187
  %v965 = vunpack.c.h.b16 %v187
  %v966 = vunpack.c.l.b16 %v188
  %v967 = vunpack.c.h.b16 %v188
  %v968 = vunpack.c.l.b16 %v189
  %v969 = vunpack.c.h.b16 %v189
  %v970 = vunpack.c.l.b16 %v190
  %v971 = vunpack.c.h.b16 %v190
  %v972 = vunpack.c.l.b16 %v191
  %v973 = vunpack.c.h.b16 %v191
  %v974 = vunpack.c.l.b16 %v192
  %v975 = vunpack.c.h.b16 %v192
  %v976 = vunpack.c.l.b16 %v193
  %v977 = vunpack.c.h.b16 %v193
  %v978 = vunpack.c.l.b16 %v194
  %v979 = vunpack.c.h.b16 %v194
  %v980 = vunpack.c.l.b16 %v195
  %v981 = vunpack.c.h.b16 %v195
  %v982 = vunpack.c.l.b16 %v196
  %v983 = vunpack.c.h.b16 %v196
  %v984 = vunpack.c.l.b16 %v197
  %v985 = vunpack.c.h.b16 %v197
  %v986 = vunpack.c.l.b16 %v198
  %v987 = vunpack.c.h.b16 %v198
  %v988 = vunpack.c.l.b16 %v199
  %v989 = vunpack.c.h.b16 %v199
  %v990 = vunpack.c.l.b16 %v200
  %v991 = vunpack.c.h.b16 %v200
  %v992 = vunpack.c.l.b16 %v201
  %v993 = vunpack.c.h.b16 %v201
  %v994 = vunpack.c.l.b16 %v202
  %v995 = vunpack.c.h.b16 %v202
  %v996 = vunpack.c.l.b16 %v203
  %v997 = vunpack.c.h.b16 %v203
  %v998 = vunpack.c.l.b16 %v204
  %v999 = vunpack.c.h.b16 %v204
  %v1000 = vunpack.c.l.b16 %v205
  %v1001 = vunpack.c.h.b16 %v205
  %v1002 = vunpack.c.l.b16 %v206
  %v1003 = vunpack.c.h.b16 %v206
  %v1004 = vunpack.c.l.b16 %v207
  %v1005 = vunpack.c.h.b16 %v207
  %v1006 = vunpack.c.l.b16 %v208
  %v1007 = vunpack.c.h.b16 %v208
  %v1008 = vunpack.c.l.b16 %v209
  %v1009 = vunpack.c.h.b16 %v209
  %v1010 = vunpack.c.l.b16 %v210
  %v1011 = vunpack.c.h.b16 %v210
  %v1012 = vunpack.c.l.b16 %v211
  %v1013 = vunpack.c.h.b16 %v211
  %v1014 = vunpack.c.l.b16 %v212
  %v1015 = vunpack.c.h.b16 %v212
  %v1016 = vunpack.c.l.b16 %v213
  %v1017 = vunpack.c.h.b16 %v213
  %v1018 = vunpack.c.l.b16 %v214
  %v1019 = vunpack.c.h.b16 %v214
  %v1020 = vunpack.c.l.b16 %v215
  %v1021 = vunpack.c.h.b16 %v215
  %v1022 = vunpack.c.l.b16 %v216
  %v1023 = vunpack.c.h.b16 %v216
  %v1024 = vunpack.c.l.b16 %v217
  %v1025 = vunpack.c.h.b16 %v217
  %v1026 = vunpack.c.l.b16 %v218
  %v1027 = vunpack.c.h.b16 %v218
  %v1028 = vunpack.c.l.b16 %v219
  %v1029 = vunpack.c.h.b16 %v219
  %v1030 = vunpack.c.l.b16 %v220
  %v1031 = vunpack.c.h.b16 %v220
  %v1032 = vunpack.c.l.b16 %v221
  %v1033 = vunpack.c.h.b16 %v221
  %v1034 = vunpack.c.l.b16 %v222
  %v1035 = vunpack.c.h.b16 %v222
  %v1036 = vunpack.c.l.b16 %v223
  %v1037 = vunpack.c.h.b16 %v223
  %v1038 = vunpack.c.l.b16 %v224
  %v1039 = vunpack.c.h.b16 %v224
  %v1040 = vunpack.c.l.b16 %v225
  %v1041 = vunpack.c.h.b16 %v225
  %v1042 = vunpack.c.l.b16 %v226
  %v1043 = vunpack.c.h.b16 %v226
  %v1044 = vunpack.c.l.b16 %v227
  %v1045 = vunpack.c.h.b16 %v227
  %v1046 = vunpack.c.l.b16 %v228
  %v1047 = vunpack.c.h.b16 %v228
  %v1048 = vunpack.c.l.b16 %v229
  %v1049 = vunpack.c.h.b16 %v229
  %v1050 = vunpack.c.l.b16 %v230
  %v1051 = vunpack.c.h.b16 %v230
  %v1052 = vunpack.c.l.b16 %v231
  %v1053 = vunpack.c.h.b16 %v231
  %v1054 = vunpack.c.l.b16 %v232
  %v1055 = vunpack.c.h.b16 %v232
  %v1056 = vunpack.c.l.b16 %v233
  %v1057 = vunpack.c.h.b16 %v233
  %v1058 = vunpack.c.l.b16 %v234
  %v1059 = vunpack.c.h.b16 %v234
  %v1060 = vunpack.c.l.b16 %v235
  %v1061 = vunpack.c.h.b16 %v235
  %v1062 = vunpack.c.l.b16 %v236
  %v1063 = vunpack.c.h.b16 %v236
  %v1064 = vunpack.c.l.b16 %v237
  %v1065 = vunpack.c.h.b16 %v237
  %v1066 = vunpack.c.l.b16 %v238
  %v1067 = vunpack.c.h.b16 %v238
  %v1068 = vunpack.c.l.b16 %v239
  %v1069 = vunpack.c.h.b16 %v239
  %v1070 = vunpack.c.l.b16 %v240
  %v1071 = vunpack.c.h.b16 %v240
  %v1072 = vunpack.c.l.b16 %v241
  %v1073 = vunpack.c.h.b16 %v241
  %v1074 = vunpack.c.l.b16 %v242
  %v1075 = vunpack.c.h.b16 %v242
  %v1076 = vunpack.c.l.b16 %v243
  %v1077 = vunpack.c.h.b16 %v243
  %v1078 = vunpack.c.l.b16 %v244
  %v1079 = vunpack.c.h.b16 %v244
  %v1080 = vunpack.c.l.b16 %v245
  %v1081 = vunpack.c.h.b16 %v245
  %v1082 = vunpack.c.l.b16 %v246
  %v1083 = vunpack.c.h.b16 %v246
  %v1084 = vunpack.c.l.b16 %v247
  %v1085 = vunpack.c.h.b16 %v247
  %v1086 = vunpack.c.l.b16 %v248
  %v1087 = vunpack.c.h.b16 %v248
  %v1088 = vunpack.c.l.b16 %v249
  %v1089 = vunpack.c.h.b16 %v249
  %v1090 = vunpack.c.l.b16 %v250
  %v1091 = vunpack.c.h.b16 %v250
  %v1092 = vunpack.c.l.b16 %v251
  %v1093 = vunpack.c.h.b16 %v251
  %v1094 = vunpack.c.l.b16 %v252
  %v1095 = vunpack.c.h.b16 %v252
  %v1096 = vunpack.c.l.b16 %v253
  %v1097 = vunpack.c.h.b16 %v253
  %v1098 = vunpack.c.l.b16 %v254
  %v1099 = vunpack.c.h.b16 %v254
  %v1100 = vunpack.c.l.b16 %v255
  %v1101 = vunpack.c.h.b16 %v255
  %v1102 = vunpack.c.l.b16 %v256
  %v1103 = vunpack.c.h.b16 %v256
  %v1104 = vunpack.c.l.b16 %v257
  %v1105 = vunpack.c.h.b16 %v257
  %v1106 = vunpack.c.l.b16 %v258
  %v1107 = vunpack.c.h.b16 %v258
  %v1108 = vunpack.c.l.b16 %v259
  %v1109 = vunpack.c.h.b16 %v259
  %v1110 = vunpack.c.l.b16 %v260
  %v1111 = vunpack.c.h.b16 %v260
  %v1112 = vunpack.c.l.b16 %v261
  %v1113 = vunpack.c.h.b16 %v261
  %v1114 = vunpack.c.l.b16 %v262
  %v1115 = vunpack.c.h.b16 %v262
  %v1116 = vunpack.c.l.b16 %v263
  %v1117 = vunpack.c.h.b16 %v263
  %v1118 = vunpack.c.l.b16 %v264
  %v1119 = vunpack.c.h.b16 %v264
  %v1120 = vunpack.c.l.b16 %v265
  %v1121 = vunpack.c.h.b16 %v265
  %v1122 = vunpack.c.l.b16 %v266
  %v1123 = vunpack.c.h.b16 %v266
  %v1124 = vunpack.c.l.b16 %v267
  %v1125 = vunpack.c.h.b16 %v267
  %v1126 = vunpack.c.l.b16 %v268
  %v1127 = vunpack.c.h.b16 %v268
  %v1128 = vunpack.c.l.b16 %v269
  %v1129 = vunpack.c.h.b16 %v269
  %v1130 = vunpack.c.l.b16 %v270
  %v1131 = vunpack.c.h.b16 %v270
  %v1132 = vunpack.c.l.b16 %v271
  %v1133 = vunpack.c.h.b16 %v271
  %v1134 = vunpack.c.l.b16 %v272
  %v1135 = vunpack.c.h.b16 %v272
  %v1136 = vunpack.c.l.b16 %v273
  %v1137 = vunpack.c.h.b16 %v273
  %v1138 = vunpack.c.l.b16 %v274
  %v1139 = vunpack.c.h.b16 %v274
  %v1140 = vunpack.c.l.b16 %v275
  %v1141 = vunpack.c.h.b16 %v275
  %v1142 = vpack.c.b16 %v948, %v946
  %v1143 = vpack.c.b16 %v949, %v947
  %v1144 = vpack.c.b16 %v952, %v950
  %v1145 = vpack.c.b16 %v953, %v951
  %v1146 = vpack.c.b16 %v956, %v954
  %v1147 = vpack.c.b16 %v957, %v955
  %v1148 = vpack.c.b16 %v960, %v958
  %v1149 = vpack.c.b16 %v961, %v959
  %v1150 = vpack.c.b16 %v964, %v962
  %v1151 = vpack.c.b16 %v965, %v963
  %v1152 = vpack.c.b16 %v968, %v966
  %v1153 = vpack.c.b16 %v969, %v967
  %v1154 = vpack.c.b16 %v972, %v970
  %v1155 = vpack.c.b16 %v973, %v971
  %v1156 = vpack.c.b16 %v976, %v974
  %v1157 = vpack.c.b16 %v977, %v975
  %v1158 = vpack.c.b16 %v980, %v978
  %v1159 = vpack.c.b16 %v981, %v979
  %v1160 = vpack.c.b16 %v984, %v982
  %v1161 = vpack.c.b16 %v985, %v983
  %v1162 = vpack.c.b16 %v988, %v986
  %v1163 = vpack.c.b16 %v989, %v987
  %v1164 = vpack.c.b16 %v992, %v990
  %v1165 = vpack.c.b16 %v993, %v991
  %v1166 = vpack.c.b16 %v996, %v994
  %v1167 = vpack.c.b16 %v997, %v995
  %v1168 = vpack.c.b16 %v1000, %v998
  %v1169 = vpack.c.b16 %v1001, %v999
  %v1170 = vpack.c.b16 %v1004, %v1002
  %v1171 = vpack.c.b16 %v1005, %v1003
  %v1172 = vpack.c.b16 %v1008, %v1006
  %v1173 = vpack.c.b16 %v1009, %v1007
  %v1174 = vpack.c.b16 %v1012, %v1010
  %v1175 = vpack.c.b16 %v1013, %v1011
  %v1176 = vpack.c.b16 %v1016, %v1014
  %v1177 = vpack.c.b16 %v1017, %v1015
  %v1178 = vpack.c.b16 %v1020, %v1018
  %v1179 = vpack.c.b16 %v1021, %v1019
  %v1180 = vpack.c.b16 %v1024, %v1022
  %v1181 = vpack.c.b16 %v1025, %v1023
  %v1182 = vpack.c.b16 %v1028, %v1026
  %v1183 = vpack.c.b16 %v1029, %v1027
  %v1184 = vpack.c.b16 %v1032, %v1030
  %v1185 = vpack.c.b16 %v1033, %v1031
  %v1186 = vpack.c.b16 %v1036, %v1034
  %v1187 = vpack.c.b16 %v1037, %v1035
  %v1188 = vpack.c.b16 %v1040, %v1038
  %v1189 = vpack.c.b16 %v1041, %v1039
  %v1190 = vpack.c.b16 %v1044, %v1042
  %v1191 = vpack.c.b16 %v1045, %v1043
  %v1192 = vpack.c.b16 %v1048, %v1046
  %v1193 = vpack.c.b16 %v1049, %v1047
  %v1194 = vpack.c.b16 %v1052, %v1050
  %v1195 = vpack.c.b16 %v1053, %v1051
  %v1196 = vpack.c.b16 %v1056, %v1054
  %v1197 = vpack.c.b16 %v1057, %v1055
  %v1198 = vpack.c.b16 %v1060, %v1058
  %v1199 = vpack.c.b16 %v1061, %v1059
  %v1200 = vpack.c.b16 %v1064, %v1062
  %v1201 = vpack.c.b16 %v1065, %v1063
  %v1202 = vpack.c.b16 %v1068, %v1066
  %v1203 = vpack.c.b16 %v1069, %v1067
  %v1204 = vpack.c.b16 %v1072, %v1070
  %v1205 = vpack.c.b16 %v1073, %v1071
  %v1206 = vpack.c.b16 %v1076, %v1074
  %v1207 = vpack.c.b16 %v1077, %v1075
  %v1208 = vpack.c.b16 %v1080, %v1078
  %v1209 = vpack.c.b16 %v1081, %v1079
  %v1210 = vpack.c.b16 %v1084, %v1082
  %v1211 = vpack.c.b16 %v1085, %v1083
  %v1212 = vpack.c.b16 %v1088, %v1086
  %v1213 = vpack.c.b16 %v1089, %v1087
  %v1214 = vpack.c.b16 %v1092, %v1090
  %v1215 = vpack.c.b16 %v1093, %v1091
  %v1216 = vpack.c.b16 %v1096, %v1094
  %v1217 = vpack.c.b16 %v1097, %v1095
  %v1218 = vpack.c.b16 %v1100, %v1098
  %v1219 = vpack.c.b16 %v1101, %v1099
  %v1220 = vpack.c.b16 %v1104, %v1102
  %v1221 = vpack.c.b16 %v1105, %v1103
  %v1222 = vpack.c.b16 %v1108, %v1106
  %v1223 = vpack.c.b16 %v1109, %v1107
  %v1224 = vpack.c.b16 %v1112, %v1110
  %v1225 = vpack.c.b16 %v1113, %v1111
  %v1226 = vpack.c.b16 %v1116, %v1114
  %v1227 = vpack.c.b16 %v1117, %v1115
  %v1228 = vpack.c.b16 %v1120, %v1118
  %v1229 = vpack.c.b16 %v1121, %v1119
  %v1230 = vpack.c.b16 %v1124, %v1122
  %v1231 = vpack.c.b16 %v1125, %v1123
  %v1232 = vpack.c.b16 %v1128, %v1126
  %v1233 = vpack.c.b16 %v1129, %v1127
  %v1234 = vpack.c.b16 %v1132, %v1130
  %v1235 = vpack.c.b16 %v1133, %v1131
  %v1236 = vpack.c.b16 %v1136, %v1134
  %v1237 = vpack.c.b16 %v1137, %v1135
  %v1238 = vpack.c.b16 %v1140, %v1138
  %v1239 = vpack.c.b16 %v1141, %v1139
  %vm1338 = vcmask 130048
  %v1340 = vsel %vm1338, %v646, 0
  %v1343 = vsel %vm1338, %v653, 0
  %v1346 = vsel %vm1338, %v660, 0
  %v1349 = vsel %vm1338, %v667, 0
  %v1352 = vsel %vm1338, %v674, 0
  %v1355 = vsel %vm1338, %v681, 0
  %v1358 = vsel %vm1338, %v688, 0
  %v1361 = vsel %vm1338, %v695, 0
  %v1364 = vsel %vm1338, %v702, 0
  %v1367 = vsel %vm1338, %v709, 0
  %v1370 = vsel %vm1338, %v716, 0
  %v1373 = vsel %vm1338, %v723, 0
  %v1376 = vsel %vm1338, %v730, 0
  %v1379 = vsel %vm1338, %v737, 0
  %v1382 = vsel %vm1338, %v744, 0
  %v1385 = vsel %vm1338, %v751, 0
  %1387 = vmatprep.subr.bf16.mxu0 %v1143
  %1388 = vmatpush1.bf16.msra.mxu0 %v1142
  %1389 = vmatprep.subr.bf16.mxu0 %v1145
  %1390 = vmatpush1.bf16.msra.mxu0 %v1144
  %1391 = vmatprep.subr.bf16.mxu0 %v1147
  %1392 = vmatpush1.bf16.msra.mxu0 %v1146
  %1393 = vmatprep.subr.bf16.mxu0 %v1149
  %1394 = vmatpush1.bf16.msra.mxu0 %v1148
  %1395 = vmatprep.subr.bf16.mxu0 %v1151
  %1396 = vmatpush1.bf16.msra.mxu0 %v1150
  %1397 = vmatprep.subr.bf16.mxu0 %v1153
  %1398 = vmatpush1.bf16.msra.mxu0 %v1152
  %1399 = vmatprep.subr.bf16.mxu0 %v1155
  %1400 = vmatpush1.bf16.msra.mxu0 %v1154
  %1401 = vmatprep.subr.bf16.mxu0 %v1157
  %1402 = vmatpush1.bf16.msra.mxu0 %v1156
  %1403 = vmatprep.subr.bf16.mxu0 %v1159
  %1404 = vmatpush1.bf16.msra.mxu0 %v1158
  %1405 = vmatprep.subr.bf16.mxu0 %v1161
  %1406 = vmatpush1.bf16.msra.mxu0 %v1160
  %1407 = vmatprep.subr.bf16.mxu0 %v1163
  %1408 = vmatpush1.bf16.msra.mxu0 %v1162
  %1409 = vmatprep.subr.bf16.mxu0 %v1165
  %1410 = vmatpush1.bf16.msra.mxu0 %v1164
  %1411 = vmatprep.subr.bf16.mxu0 %v1167
  %1412 = vmatpush1.bf16.msra.mxu0 %v1166
  %1413 = vmatprep.subr.bf16.mxu0 %v1169
  %1414 = vmatpush1.bf16.msra.mxu0 %v1168
  %1415 = vmatprep.subr.bf16.mxu0 %v1171
  %1416 = vmatpush1.bf16.msra.mxu0 %v1170
  %1417 = vmatprep.subr.bf16.mxu0 %v1173
  %1418 = vmatpush1.bf16.msra.mxu0 %v1172
  %1419 = vmatprep.mubr.bf16.mxu0 %v641
  %1420 = vmatmul.mubr.bf16.gmra.mrb[0].mxu0 %v640
  %v1421 = vpop.f32.mrb[0].mxu0
  %v1422 = vadd.f32 %v281, %v1421
  %v1423 = vpop.f32.mrb[0].mxu0
  %v1424 = vadd.f32 %v285, %v1423
  %v1425 = vpop.f32.mrb[0].mxu0
  %v1426 = vadd.f32 %v281, %v1425
  %v1427 = vpop.f32.mrb[0].mxu0
  %v1428 = vadd.f32 %v285, %v1427
  %1429 = vmatprep.mubr.bf16.mxu0 %v648
  %1430 = vmatmul.mubr.bf16.gmra.mrb[0].mxu0 %v647
  %v1431 = vpop.f32.mrb[0].mxu0
  %v1432 = vadd.f32 %v281, %v1431
  %v1433 = vpop.f32.mrb[0].mxu0
  %v1434 = vadd.f32 %v285, %v1433
  %v1435 = vpop.f32.mrb[0].mxu0
  %v1436 = vadd.f32 %v281, %v1435
  %v1437 = vpop.f32.mrb[0].mxu0
  %v1438 = vadd.f32 %v285, %v1437
  %1439 = vmatprep.mubr.bf16.mxu0 %v655
  %1440 = vmatmul.mubr.bf16.gmra.mrb[0].mxu0 %v654
  %v1441 = vpop.f32.mrb[0].mxu0
  %v1442 = vadd.f32 %v281, %v1441
  %v1443 = vpop.f32.mrb[0].mxu0
  %v1444 = vadd.f32 %v285, %v1443
  %v1445 = vpop.f32.mrb[0].mxu0
  %v1446 = vadd.f32 %v281, %v1445
  %v1447 = vpop.f32.mrb[0].mxu0
  %v1448 = vadd.f32 %v285, %v1447
  %1449 = vmatprep.mubr.bf16.mxu0 %v662
  %1450 = vmatmul.mubr.bf16.gmra.mrb[0].mxu0 %v661
  %v1451 = vpop.f32.mrb[0].mxu0
  %v1452 = vadd.f32 %v281, %v1451
  %v1453 = vpop.f32.mrb[0].mxu0
  %v1454 = vadd.f32 %v285, %v1453
  %v1455 = vpop.f32.mrb[0].mxu0
  %v1456 = vadd.f32 %v281, %v1455
  %v1457 = vpop.f32.mrb[0].mxu0
  %v1458 = vadd.f32 %v285, %v1457
  %1459 = vmatprep.mubr.bf16.mxu0 %v669
  %1460 = vmatmul.mubr.bf16.gmra.mrb[0].mxu0 %v668
  %v1461 = vpop.f32.mrb[0].mxu0
  %v1462 = vadd.f32 %v281, %v1461
  %v1463 = vpop.f32.mrb[0].mxu0
  %v1464 = vadd.f32 %v285, %v1463
  %v1465 = vpop.f32.mrb[0].mxu0
  %v1466 = vadd.f32 %v281, %v1465
  %v1467 = vpop.f32.mrb[0].mxu0
  %v1468 = vadd.f32 %v285, %v1467
  %1469 = vmatprep.mubr.bf16.mxu0 %v676
  %1470 = vmatmul.mubr.bf16.gmra.mrb[0].mxu0 %v675
  %v1471 = vpop.f32.mrb[0].mxu0
  %v1472 = vadd.f32 %v281, %v1471
  %v1473 = vpop.f32.mrb[0].mxu0
  %v1474 = vadd.f32 %v285, %v1473
  %v1475 = vpop.f32.mrb[0].mxu0
  %v1476 = vadd.f32 %v281, %v1475
  %v1477 = vpop.f32.mrb[0].mxu0
  %v1478 = vadd.f32 %v285, %v1477
  %1479 = vmatprep.mubr.bf16.mxu0 %v683
  %1480 = vmatmul.mubr.bf16.gmra.mrb[0].mxu0 %v682
  %v1481 = vpop.f32.mrb[0].mxu0
  %v1482 = vadd.f32 %v281, %v1481
  %v1483 = vpop.f32.mrb[0].mxu0
  %v1484 = vadd.f32 %v285, %v1483
  %v1485 = vpop.f32.mrb[0].mxu0
  %v1486 = vadd.f32 %v281, %v1485
  %v1487 = vpop.f32.mrb[0].mxu0
  %v1488 = vadd.f32 %v285, %v1487
  %1489 = vmatprep.mubr.bf16.mxu0 %v690
  %1490 = vmatmul.mubr.bf16.gmra.mrb[0].mxu0 %v689
  %v1491 = vpop.f32.mrb[0].mxu0
  %v1492 = vadd.f32 %v281, %v1491
  %v1493 = vpop.f32.mrb[0].mxu0
  %v1494 = vadd.f32 %v285, %v1493
  %v1495 = vpop.f32.mrb[0].mxu0
  %v1496 = vadd.f32 %v281, %v1495
  %v1497 = vpop.f32.mrb[0].mxu0
  %v1498 = vadd.f32 %v285, %v1497
  %1499 = vmatprep.mubr.bf16.mxu0 %v697
  %1500 = vmatmul.mubr.bf16.gmra.mrb[0].mxu0 %v696
  %v1501 = vpop.f32.mrb[0].mxu0
  %v1502 = vadd.f32 %v281, %v1501
  %v1503 = vpop.f32.mrb[0].mxu0
  %v1504 = vadd.f32 %v285, %v1503
  %v1505 = vpop.f32.mrb[0].mxu0
  %v1506 = vadd.f32 %v281, %v1505
  %v1507 = vpop.f32.mrb[0].mxu0
  %v1508 = vadd.f32 %v285, %v1507
  %1509 = vmatprep.mubr.bf16.mxu0 %v704
  %1510 = vmatmul.mubr.bf16.gmra.mrb[0].mxu0 %v703
  %v1511 = vpop.f32.mrb[0].mxu0
  %v1512 = vadd.f32 %v281, %v1511
  %v1513 = vpop.f32.mrb[0].mxu0
  %v1514 = vadd.f32 %v285, %v1513
  %v1515 = vpop.f32.mrb[0].mxu0
  %v1516 = vadd.f32 %v281, %v1515
  %v1517 = vpop.f32.mrb[0].mxu0
  %v1518 = vadd.f32 %v285, %v1517
  %1519 = vmatprep.mubr.bf16.mxu0 %v711
  %1520 = vmatmul.mubr.bf16.gmra.mrb[0].mxu0 %v710
  %v1521 = vpop.f32.mrb[0].mxu0
  %v1522 = vadd.f32 %v281, %v1521
  %v1523 = vpop.f32.mrb[0].mxu0
  %v1524 = vadd.f32 %v285, %v1523
  %v1525 = vpop.f32.mrb[0].mxu0
  %v1526 = vadd.f32 %v281, %v1525
  %v1527 = vpop.f32.mrb[0].mxu0
  %v1528 = vadd.f32 %v285, %v1527
  %1529 = vmatprep.mubr.bf16.mxu0 %v718
  %1530 = vmatmul.mubr.bf16.gmra.mrb[0].mxu0 %v717
  %v1531 = vpop.f32.mrb[0].mxu0
  %v1532 = vadd.f32 %v281, %v1531
  %v1533 = vpop.f32.mrb[0].mxu0
  %v1534 = vadd.f32 %v285, %v1533
  %v1535 = vpop.f32.mrb[0].mxu0
  %v1536 = vadd.f32 %v281, %v1535
  %v1537 = vpop.f32.mrb[0].mxu0
  %v1538 = vadd.f32 %v285, %v1537
  %1539 = vmatprep.mubr.bf16.mxu0 %v725
  %1540 = vmatmul.mubr.bf16.gmra.mrb[0].mxu0 %v724
  %v1541 = vpop.f32.mrb[0].mxu0
  %v1542 = vadd.f32 %v281, %v1541
  %v1543 = vpop.f32.mrb[0].mxu0
  %v1544 = vadd.f32 %v285, %v1543
  %v1545 = vpop.f32.mrb[0].mxu0
  %v1546 = vadd.f32 %v281, %v1545
  %v1547 = vpop.f32.mrb[0].mxu0
  %v1548 = vadd.f32 %v285, %v1547
  %1549 = vmatprep.mubr.bf16.mxu0 %v732
  %1550 = vmatmul.mubr.bf16.gmra.mrb[0].mxu0 %v731
  %v1551 = vpop.f32.mrb[0].mxu0
  %v1552 = vadd.f32 %v281, %v1551
  %v1553 = vpop.f32.mrb[0].mxu0
  %v1554 = vadd.f32 %v285, %v1553
  %v1555 = vpop.f32.mrb[0].mxu0
  %v1556 = vadd.f32 %v281, %v1555
  %v1557 = vpop.f32.mrb[0].mxu0
  %v1558 = vadd.f32 %v285, %v1557
  %1559 = vmatprep.mubr.bf16.mxu0 %v739
  %1560 = vmatmul.mubr.bf16.gmra.mrb[0].mxu0 %v738
  %v1561 = vpop.f32.mrb[0].mxu0
  %v1562 = vadd.f32 %v281, %v1561
  %v1563 = vpop.f32.mrb[0].mxu0
  %v1564 = vadd.f32 %v285, %v1563
  %v1565 = vpop.f32.mrb[0].mxu0
  %v1566 = vadd.f32 %v281, %v1565
  %v1567 = vpop.f32.mrb[0].mxu0
  %v1568 = vadd.f32 %v285, %v1567
  %1569 = vmatprep.mubr.bf16.mxu0 %v746
  %1570 = vmatmul.mubr.bf16.gmra.mrb[0].mxu0 %v745
  %v1571 = vpop.f32.mrb[0].mxu0
  %v1572 = vadd.f32 %v281, %v1571
  %v1573 = vpop.f32.mrb[0].mxu0
  %v1574 = vadd.f32 %v285, %v1573
  %v1575 = vpop.f32.mrb[0].mxu0
  %v1576 = vadd.f32 %v281, %v1575
  %v1577 = vpop.f32.mrb[0].mxu0
  %v1578 = vadd.f32 %v285, %v1577
  %1579 = vdwg.mxu0
  %1580 = vmatprep.subr.bf16.mxu0 %v1175
  %1581 = vmatpush1.bf16.msra.mxu0 %v1174
  %1582 = vmatprep.subr.bf16.mxu0 %v1177
  %1583 = vmatpush1.bf16.msra.mxu0 %v1176
  %1584 = vmatprep.subr.bf16.mxu0 %v1179
  %1585 = vmatpush1.bf16.msra.mxu0 %v1178
  %1586 = vmatprep.subr.bf16.mxu0 %v1181
  %1587 = vmatpush1.bf16.msra.mxu0 %v1180
  %1588 = vmatprep.subr.bf16.mxu0 %v1183
  %1589 = vmatpush1.bf16.msra.mxu0 %v1182
  %1590 = vmatprep.subr.bf16.mxu0 %v1185
  %1591 = vmatpush1.bf16.msra.mxu0 %v1184
  %1592 = vmatprep.subr.bf16.mxu0 %v1187
  %1593 = vmatpush1.bf16.msra.mxu0 %v1186
  %1594 = vmatprep.subr.bf16.mxu0 %v1189
  %1595 = vmatpush1.bf16.msra.mxu0 %v1188
  %1596 = vmatprep.subr.bf16.mxu0 %v1191
  %1597 = vmatpush1.bf16.msra.mxu0 %v1190
  %1598 = vmatprep.subr.bf16.mxu0 %v1193
  %1599 = vmatpush1.bf16.msra.mxu0 %v1192
  %1600 = vmatprep.subr.bf16.mxu0 %v1195
  %1601 = vmatpush1.bf16.msra.mxu0 %v1194
  %1602 = vmatprep.subr.bf16.mxu0 %v1197
  %1603 = vmatpush1.bf16.msra.mxu0 %v1196
  %1604 = vmatprep.subr.bf16.mxu0 %v1199
  %1605 = vmatpush1.bf16.msra.mxu0 %v1198
  %1606 = vmatprep.subr.bf16.mxu0 %v1201
  %1607 = vmatpush1.bf16.msra.mxu0 %v1200
  %1608 = vmatprep.subr.bf16.mxu0 %v1203
  %1609 = vmatpush1.bf16.msra.mxu0 %v1202
  %1610 = vmatprep.subr.bf16.mxu0 %v1205
  %1611 = vmatpush1.bf16.msra.mxu0 %v1204
  %1612 = vmatprep.mubr.bf16.mxu0 %v643
  %1613 = vmatmul.mubr.bf16.gmra.mrb[0].mxu0 %v642
  %v1614 = vpop.f32.mrb[0].mxu0
  %v1615 = vadd.f32 %v1422, %v1614
  %v1616 = vpop.f32.mrb[0].mxu0
  %v1617 = vadd.f32 %v1424, %v1616
  %v1618 = vpop.f32.mrb[0].mxu0
  %v1619 = vadd.f32 %v1426, %v1618
  %v1620 = vpop.f32.mrb[0].mxu0
  %v1621 = vadd.f32 %v1428, %v1620
  %1622 = vmatprep.mubr.bf16.mxu0 %v650
  %1623 = vmatmul.mubr.bf16.gmra.mrb[0].mxu0 %v649
  %v1624 = vpop.f32.mrb[0].mxu0
  %v1625 = vadd.f32 %v1432, %v1624
  %v1626 = vpop.f32.mrb[0].mxu0
  %v1627 = vadd.f32 %v1434, %v1626
  %v1628 = vpop.f32.mrb[0].mxu0
  %v1629 = vadd.f32 %v1436, %v1628
  %v1630 = vpop.f32.mrb[0].mxu0
  %v1631 = vadd.f32 %v1438, %v1630
  %1632 = vmatprep.mubr.bf16.mxu0 %v657
  %1633 = vmatmul.mubr.bf16.gmra.mrb[0].mxu0 %v656
  %v1634 = vpop.f32.mrb[0].mxu0
  %v1635 = vadd.f32 %v1442, %v1634
  %v1636 = vpop.f32.mrb[0].mxu0
  %v1637 = vadd.f32 %v1444, %v1636
  %v1638 = vpop.f32.mrb[0].mxu0
  %v1639 = vadd.f32 %v1446, %v1638
  %v1640 = vpop.f32.mrb[0].mxu0
  %v1641 = vadd.f32 %v1448, %v1640
  %1642 = vmatprep.mubr.bf16.mxu0 %v664
  %1643 = vmatmul.mubr.bf16.gmra.mrb[0].mxu0 %v663
  %v1644 = vpop.f32.mrb[0].mxu0
  %v1645 = vadd.f32 %v1452, %v1644
  %v1646 = vpop.f32.mrb[0].mxu0
  %v1647 = vadd.f32 %v1454, %v1646
  %v1648 = vpop.f32.mrb[0].mxu0
  %v1649 = vadd.f32 %v1456, %v1648
  %v1650 = vpop.f32.mrb[0].mxu0
  %v1651 = vadd.f32 %v1458, %v1650
  %1652 = vmatprep.mubr.bf16.mxu0 %v671
  %1653 = vmatmul.mubr.bf16.gmra.mrb[0].mxu0 %v670
  %v1654 = vpop.f32.mrb[0].mxu0
  %v1655 = vadd.f32 %v1462, %v1654
  %v1656 = vpop.f32.mrb[0].mxu0
  %v1657 = vadd.f32 %v1464, %v1656
  %v1658 = vpop.f32.mrb[0].mxu0
  %v1659 = vadd.f32 %v1466, %v1658
  %v1660 = vpop.f32.mrb[0].mxu0
  %v1661 = vadd.f32 %v1468, %v1660
  %1662 = vmatprep.mubr.bf16.mxu0 %v678
  %1663 = vmatmul.mubr.bf16.gmra.mrb[0].mxu0 %v677
  %v1664 = vpop.f32.mrb[0].mxu0
  %v1665 = vadd.f32 %v1472, %v1664
  %v1666 = vpop.f32.mrb[0].mxu0
  %v1667 = vadd.f32 %v1474, %v1666
  %v1668 = vpop.f32.mrb[0].mxu0
  %v1669 = vadd.f32 %v1476, %v1668
  %v1670 = vpop.f32.mrb[0].mxu0
  %v1671 = vadd.f32 %v1478, %v1670
  %1672 = vmatprep.mubr.bf16.mxu0 %v685
  %1673 = vmatmul.mubr.bf16.gmra.mrb[0].mxu0 %v684
  %v1674 = vpop.f32.mrb[0].mxu0
  %v1675 = vadd.f32 %v1482, %v1674
  %v1676 = vpop.f32.mrb[0].mxu0
  %v1677 = vadd.f32 %v1484, %v1676
  %v1678 = vpop.f32.mrb[0].mxu0
  %v1679 = vadd.f32 %v1486, %v1678
  %v1680 = vpop.f32.mrb[0].mxu0
  %v1681 = vadd.f32 %v1488, %v1680
  %1682 = vmatprep.mubr.bf16.mxu0 %v692
  %1683 = vmatmul.mubr.bf16.gmra.mrb[0].mxu0 %v691
  %v1684 = vpop.f32.mrb[0].mxu0
  %v1685 = vadd.f32 %v1492, %v1684
  %v1686 = vpop.f32.mrb[0].mxu0
  %v1687 = vadd.f32 %v1494, %v1686
  %v1688 = vpop.f32.mrb[0].mxu0
  %v1689 = vadd.f32 %v1496, %v1688
  %v1690 = vpop.f32.mrb[0].mxu0
  %v1691 = vadd.f32 %v1498, %v1690
  %1692 = vmatprep.mubr.bf16.mxu0 %v699
  %1693 = vmatmul.mubr.bf16.gmra.mrb[0].mxu0 %v698
  %v1694 = vpop.f32.mrb[0].mxu0
  %v1695 = vadd.f32 %v1502, %v1694
  %v1696 = vpop.f32.mrb[0].mxu0
  %v1697 = vadd.f32 %v1504, %v1696
  %v1698 = vpop.f32.mrb[0].mxu0
  %v1699 = vadd.f32 %v1506, %v1698
  %v1700 = vpop.f32.mrb[0].mxu0
  %v1701 = vadd.f32 %v1508, %v1700
  %1702 = vmatprep.mubr.bf16.mxu0 %v706
  %1703 = vmatmul.mubr.bf16.gmra.mrb[0].mxu0 %v705
  %v1704 = vpop.f32.mrb[0].mxu0
  %v1705 = vadd.f32 %v1512, %v1704
  %v1706 = vpop.f32.mrb[0].mxu0
  %v1707 = vadd.f32 %v1514, %v1706
  %v1708 = vpop.f32.mrb[0].mxu0
  %v1709 = vadd.f32 %v1516, %v1708
  %v1710 = vpop.f32.mrb[0].mxu0
  %v1711 = vadd.f32 %v1518, %v1710
  %1712 = vmatprep.mubr.bf16.mxu0 %v713
  %1713 = vmatmul.mubr.bf16.gmra.mrb[0].mxu0 %v712
  %v1714 = vpop.f32.mrb[0].mxu0
  %v1715 = vadd.f32 %v1522, %v1714
  %v1716 = vpop.f32.mrb[0].mxu0
  %v1717 = vadd.f32 %v1524, %v1716
  %v1718 = vpop.f32.mrb[0].mxu0
  %v1719 = vadd.f32 %v1526, %v1718
  %v1720 = vpop.f32.mrb[0].mxu0
  %v1721 = vadd.f32 %v1528, %v1720
  %1722 = vmatprep.mubr.bf16.mxu0 %v720
  %1723 = vmatmul.mubr.bf16.gmra.mrb[0].mxu0 %v719
  %v1724 = vpop.f32.mrb[0].mxu0
  %v1725 = vadd.f32 %v1532, %v1724
  %v1726 = vpop.f32.mrb[0].mxu0
  %v1727 = vadd.f32 %v1534, %v1726
  %v1728 = vpop.f32.mrb[0].mxu0
  %v1729 = vadd.f32 %v1536, %v1728
  %v1730 = vpop.f32.mrb[0].mxu0
  %v1731 = vadd.f32 %v1538, %v1730
  %1732 = vmatprep.mubr.bf16.mxu0 %v727
  %1733 = vmatmul.mubr.bf16.gmra.mrb[0].mxu0 %v726
  %v1734 = vpop.f32.mrb[0].mxu0
  %v1735 = vadd.f32 %v1542, %v1734
  %v1736 = vpop.f32.mrb[0].mxu0
  %v1737 = vadd.f32 %v1544, %v1736
  %v1738 = vpop.f32.mrb[0].mxu0
  %v1739 = vadd.f32 %v1546, %v1738
  %v1740 = vpop.f32.mrb[0].mxu0
  %v1741 = vadd.f32 %v1548, %v1740
  %1742 = vmatprep.mubr.bf16.mxu0 %v734
  %1743 = vmatmul.mubr.bf16.gmra.mrb[0].mxu0 %v733
  %v1744 = vpop.f32.mrb[0].mxu0
  %v1745 = vadd.f32 %v1552, %v1744
  %v1746 = vpop.f32.mrb[0].mxu0
  %v1747 = vadd.f32 %v1554, %v1746
  %v1748 = vpop.f32.mrb[0].mxu0
  %v1749 = vadd.f32 %v1556, %v1748
  %v1750 = vpop.f32.mrb[0].mxu0
  %v1751 = vadd.f32 %v1558, %v1750
  %1752 = vmatprep.mubr.bf16.mxu0 %v741
  %1753 = vmatmul.mubr.bf16.gmra.mrb[0].mxu0 %v740
  %v1754 = vpop.f32.mrb[0].mxu0
  %v1755 = vadd.f32 %v1562, %v1754
  %v1756 = vpop.f32.mrb[0].mxu0
  %v1757 = vadd.f32 %v1564, %v1756
  %v1758 = vpop.f32.mrb[0].mxu0
  %v1759 = vadd.f32 %v1566, %v1758
  %v1760 = vpop.f32.mrb[0].mxu0
  %v1761 = vadd.f32 %v1568, %v1760
  %1762 = vmatprep.mubr.bf16.mxu0 %v748
  %1763 = vmatmul.mubr.bf16.gmra.mrb[0].mxu0 %v747
  %v1764 = vpop.f32.mrb[0].mxu0
  %v1765 = vadd.f32 %v1572, %v1764
  %v1766 = vpop.f32.mrb[0].mxu0
  %v1767 = vadd.f32 %v1574, %v1766
  %v1768 = vpop.f32.mrb[0].mxu0
  %v1769 = vadd.f32 %v1576, %v1768
  %v1770 = vpop.f32.mrb[0].mxu0
  %v1771 = vadd.f32 %v1578, %v1770
  %1772 = vdwg.mxu0
  %1773 = vmatprep.subr.bf16.mxu0 %v1207
  %1774 = vmatpush1.bf16.msra.mxu0 %v1206
  %1775 = vmatprep.subr.bf16.mxu0 %v1209
  %1776 = vmatpush1.bf16.msra.mxu0 %v1208
  %1777 = vmatprep.subr.bf16.mxu0 %v1211
  %1778 = vmatpush1.bf16.msra.mxu0 %v1210
  %1779 = vmatprep.subr.bf16.mxu0 %v1213
  %1780 = vmatpush1.bf16.msra.mxu0 %v1212
  %1781 = vmatprep.subr.bf16.mxu0 %v1215
  %1782 = vmatpush1.bf16.msra.mxu0 %v1214
  %1783 = vmatprep.subr.bf16.mxu0 %v1217
  %1784 = vmatpush1.bf16.msra.mxu0 %v1216
  %1785 = vmatprep.subr.bf16.mxu0 %v1219
  %1786 = vmatpush1.bf16.msra.mxu0 %v1218
  %1787 = vmatprep.subr.bf16.mxu0 %v1221
  %1788 = vmatpush1.bf16.msra.mxu0 %v1220
  %1789 = vmatprep.subr.bf16.mxu0 %v1223
  %1790 = vmatpush1.bf16.msra.mxu0 %v1222
  %1791 = vmatprep.subr.bf16.mxu0 %v1225
  %1792 = vmatpush1.bf16.msra.mxu0 %v1224
  %1793 = vmatprep.subr.bf16.mxu0 %v1227
  %1794 = vmatpush1.bf16.msra.mxu0 %v1226
  %1795 = vmatprep.subr.bf16.mxu0 %v1229
  %1796 = vmatpush1.bf16.msra.mxu0 %v1228
  %1797 = vmatprep.subr.bf16.mxu0 %v1231
  %1798 = vmatpush1.bf16.msra.mxu0 %v1230
  %1799 = vmatprep.subr.bf16.mxu0 %v1233
  %1800 = vmatpush1.bf16.msra.mxu0 %v1232
  %1801 = vmatprep.subr.bf16.mxu0 %v1235
  %1802 = vmatpush1.bf16.msra.mxu0 %v1234
  %1803 = vmatprep.subr.bf16.mxu0 %v1237
  %1804 = vmatpush1.bf16.msra.mxu0 %v1236
  %1805 = vmatprep.mubr.bf16.mxu0 %v645
  %1806 = vmatmul.mubr.bf16.gmra.mrb[0].mxu0 %v644
  %v1807 = vpop.f32.mrb[0].mxu0
  %v1808 = vadd.f32 %v1615, %v1807
  %v1809 = vpop.f32.mrb[0].mxu0
  %v1810 = vadd.f32 %v1617, %v1809
  %v1811 = vpop.f32.mrb[0].mxu0
  %v1812 = vadd.f32 %v1619, %v1811
  %v1813 = vpop.f32.mrb[0].mxu0
  %v1814 = vadd.f32 %v1621, %v1813
  %1815 = vmatprep.mubr.bf16.mxu0 %v652
  %1816 = vmatmul.mubr.bf16.gmra.mrb[0].mxu0 %v651
  %v1817 = vpop.f32.mrb[0].mxu0
  %v1818 = vadd.f32 %v1625, %v1817
  %v1819 = vpop.f32.mrb[0].mxu0
  %v1820 = vadd.f32 %v1627, %v1819
  %v1821 = vpop.f32.mrb[0].mxu0
  %v1822 = vadd.f32 %v1629, %v1821
  %v1823 = vpop.f32.mrb[0].mxu0
  %v1824 = vadd.f32 %v1631, %v1823
  %1825 = vmatprep.mubr.bf16.mxu0 %v659
  %1826 = vmatmul.mubr.bf16.gmra.mrb[0].mxu0 %v658
  %v1827 = vpop.f32.mrb[0].mxu0
  %v1828 = vadd.f32 %v1635, %v1827
  %v1829 = vpop.f32.mrb[0].mxu0
  %v1830 = vadd.f32 %v1637, %v1829
  %v1831 = vpop.f32.mrb[0].mxu0
  %v1832 = vadd.f32 %v1639, %v1831
  %v1833 = vpop.f32.mrb[0].mxu0
  %v1834 = vadd.f32 %v1641, %v1833
  %1835 = vmatprep.mubr.bf16.mxu0 %v666
  %1836 = vmatmul.mubr.bf16.gmra.mrb[0].mxu0 %v665
  %v1837 = vpop.f32.mrb[0].mxu0
  %v1838 = vadd.f32 %v1645, %v1837
  %v1839 = vpop.f32.mrb[0].mxu0
  %v1840 = vadd.f32 %v1647, %v1839
  %v1841 = vpop.f32.mrb[0].mxu0
  %v1842 = vadd.f32 %v1649, %v1841
  %v1843 = vpop.f32.mrb[0].mxu0
  %v1844 = vadd.f32 %v1651, %v1843
  %1845 = vmatprep.mubr.bf16.mxu0 %v673
  %1846 = vmatmul.mubr.bf16.gmra.mrb[0].mxu0 %v672
  %v1847 = vpop.f32.mrb[0].mxu0
  %v1848 = vadd.f32 %v1655, %v1847
  %v1849 = vpop.f32.mrb[0].mxu0
  %v1850 = vadd.f32 %v1657, %v1849
  %v1851 = vpop.f32.mrb[0].mxu0
  %v1852 = vadd.f32 %v1659, %v1851
  %v1853 = vpop.f32.mrb[0].mxu0
  %v1854 = vadd.f32 %v1661, %v1853
  %1855 = vmatprep.mubr.bf16.mxu0 %v680
  %1856 = vmatmul.mubr.bf16.gmra.mrb[0].mxu0 %v679
  %v1857 = vpop.f32.mrb[0].mxu0
  %v1858 = vadd.f32 %v1665, %v1857
  %v1859 = vpop.f32.mrb[0].mxu0
  %v1860 = vadd.f32 %v1667, %v1859
  %v1861 = vpop.f32.mrb[0].mxu0
  %v1862 = vadd.f32 %v1669, %v1861
  %v1863 = vpop.f32.mrb[0].mxu0
  %v1864 = vadd.f32 %v1671, %v1863
  %1865 = vmatprep.mubr.bf16.mxu0 %v687
  %1866 = vmatmul.mubr.bf16.gmra.mrb[0].mxu0 %v686
  %v1867 = vpop.f32.mrb[0].mxu0
  %v1868 = vadd.f32 %v1675, %v1867
  %v1869 = vpop.f32.mrb[0].mxu0
  %v1870 = vadd.f32 %v1677, %v1869
  %v1871 = vpop.f32.mrb[0].mxu0
  %v1872 = vadd.f32 %v1679, %v1871
  %v1873 = vpop.f32.mrb[0].mxu0
  %v1874 = vadd.f32 %v1681, %v1873
  %1875 = vmatprep.mubr.bf16.mxu0 %v694
  %1876 = vmatmul.mubr.bf16.gmra.mrb[0].mxu0 %v693
  %v1877 = vpop.f32.mrb[0].mxu0
  %v1878 = vadd.f32 %v1685, %v1877
  %v1879 = vpop.f32.mrb[0].mxu0
  %v1880 = vadd.f32 %v1687, %v1879
  %v1881 = vpop.f32.mrb[0].mxu0
  %v1882 = vadd.f32 %v1689, %v1881
  %v1883 = vpop.f32.mrb[0].mxu0
  %v1884 = vadd.f32 %v1691, %v1883
  %1885 = vmatprep.mubr.bf16.mxu0 %v701
  %1886 = vmatmul.mubr.bf16.gmra.mrb[0].mxu0 %v700
  %v1887 = vpop.f32.mrb[0].mxu0
  %v1888 = vadd.f32 %v1695, %v1887
  %v1889 = vpop.f32.mrb[0].mxu0
  %v1890 = vadd.f32 %v1697, %v1889
  %v1891 = vpop.f32.mrb[0].mxu0
  %v1892 = vadd.f32 %v1699, %v1891
  %v1893 = vpop.f32.mrb[0].mxu0
  %v1894 = vadd.f32 %v1701, %v1893
  %1895 = vmatprep.mubr.bf16.mxu0 %v708
  %1896 = vmatmul.mubr.bf16.gmra.mrb[0].mxu0 %v707
  %v1897 = vpop.f32.mrb[0].mxu0
  %v1898 = vadd.f32 %v1705, %v1897
  %v1899 = vpop.f32.mrb[0].mxu0
  %v1900 = vadd.f32 %v1707, %v1899
  %v1901 = vpop.f32.mrb[0].mxu0
  %v1902 = vadd.f32 %v1709, %v1901
  %v1903 = vpop.f32.mrb[0].mxu0
  %v1904 = vadd.f32 %v1711, %v1903
  %1905 = vmatprep.mubr.bf16.mxu0 %v715
  %1906 = vmatmul.mubr.bf16.gmra.mrb[0].mxu0 %v714
  %v1907 = vpop.f32.mrb[0].mxu0
  %v1908 = vadd.f32 %v1715, %v1907
  %v1909 = vpop.f32.mrb[0].mxu0
  %v1910 = vadd.f32 %v1717, %v1909
  %v1911 = vpop.f32.mrb[0].mxu0
  %v1912 = vadd.f32 %v1719, %v1911
  %v1913 = vpop.f32.mrb[0].mxu0
  %v1914 = vadd.f32 %v1721, %v1913
  %1915 = vmatprep.mubr.bf16.mxu0 %v722
  %1916 = vmatmul.mubr.bf16.gmra.mrb[0].mxu0 %v721
  %v1917 = vpop.f32.mrb[0].mxu0
  %v1918 = vadd.f32 %v1725, %v1917
  %v1919 = vpop.f32.mrb[0].mxu0
  %v1920 = vadd.f32 %v1727, %v1919
  %v1921 = vpop.f32.mrb[0].mxu0
  %v1922 = vadd.f32 %v1729, %v1921
  %v1923 = vpop.f32.mrb[0].mxu0
  %v1924 = vadd.f32 %v1731, %v1923
  %1925 = vmatprep.mubr.bf16.mxu0 %v729
  %1926 = vmatmul.mubr.bf16.gmra.mrb[0].mxu0 %v728
  %v1927 = vpop.f32.mrb[0].mxu0
  %v1928 = vadd.f32 %v1735, %v1927
  %v1929 = vpop.f32.mrb[0].mxu0
  %v1930 = vadd.f32 %v1737, %v1929
  %v1931 = vpop.f32.mrb[0].mxu0
  %v1932 = vadd.f32 %v1739, %v1931
  %v1933 = vpop.f32.mrb[0].mxu0
  %v1934 = vadd.f32 %v1741, %v1933
  %1935 = vmatprep.mubr.bf16.mxu0 %v736
  %1936 = vmatmul.mubr.bf16.gmra.mrb[0].mxu0 %v735
  %v1937 = vpop.f32.mrb[0].mxu0
  %v1938 = vadd.f32 %v1745, %v1937
  %v1939 = vpop.f32.mrb[0].mxu0
  %v1940 = vadd.f32 %v1747, %v1939
  %v1941 = vpop.f32.mrb[0].mxu0
  %v1942 = vadd.f32 %v1749, %v1941
  %v1943 = vpop.f32.mrb[0].mxu0
  %v1944 = vadd.f32 %v1751, %v1943
  %1945 = vmatprep.mubr.bf16.mxu0 %v743
  %1946 = vmatmul.mubr.bf16.gmra.mrb[0].mxu0 %v742
  %v1947 = vpop.f32.mrb[0].mxu0
  %v1948 = vadd.f32 %v1755, %v1947
  %v1949 = vpop.f32.mrb[0].mxu0
  %v1950 = vadd.f32 %v1757, %v1949
  %v1951 = vpop.f32.mrb[0].mxu0
  %v1952 = vadd.f32 %v1759, %v1951
  %v1953 = vpop.f32.mrb[0].mxu0
  %v1954 = vadd.f32 %v1761, %v1953
  %1955 = vmatprep.mubr.bf16.mxu0 %v750
  %1956 = vmatmul.mubr.bf16.gmra.mrb[0].mxu0 %v749
  %v1957 = vpop.f32.mrb[0].mxu0
  %v1958 = vadd.f32 %v1765, %v1957
  %v1959 = vpop.f32.mrb[0].mxu0
  %v1960 = vadd.f32 %v1767, %v1959
  %v1961 = vpop.f32.mrb[0].mxu0
  %v1962 = vadd.f32 %v1769, %v1961
  %v1963 = vpop.f32.mrb[0].mxu0
  %v1964 = vadd.f32 %v1771, %v1963
  %1965 = vdwg.mxu0
  %1966 = vmatprep.subr.bf16.mxu0 %v1239
  %1967 = vmatpush1.bf16.msra.mxu0 %v1238
  %1968 = vmatprep.subr.bf16.mxu0 0
  %1969 = vmatpush1.bf16.msra.mxu0 0
  %1970 = vmatprep.subr.bf16.mxu0 0
  %1971 = vmatpush1.bf16.msra.mxu0 0
  %1972 = vmatprep.subr.bf16.mxu0 0
  %1973 = vmatpush1.bf16.msra.mxu0 0
  %1974 = vmatprep.subr.bf16.mxu0 0
  %1975 = vmatpush1.bf16.msra.mxu0 0
  %1976 = vmatprep.subr.bf16.mxu0 0
  %1977 = vmatpush1.bf16.msra.mxu0 0
  %1978 = vmatprep.subr.bf16.mxu0 0
  %1979 = vmatpush1.bf16.msra.mxu0 0
  %1980 = vmatprep.subr.bf16.mxu0 0
  %1981 = vmatpush1.bf16.msra.mxu0 0
  %1982 = vmatprep.subr.bf16.mxu0 0
  %1983 = vmatpush1.bf16.msra.mxu0 0
  %1984 = vmatprep.subr.bf16.mxu0 0
  %1985 = vmatpush1.bf16.msra.mxu0 0
  %1986 = vmatprep.subr.bf16.mxu0 0
  %1987 = vmatpush1.bf16.msra.mxu0 0
  %1988 = vmatprep.subr.bf16.mxu0 0
  %1989 = vmatpush1.bf16.msra.mxu0 0
  %1990 = vmatprep.subr.bf16.mxu0 0
  %1991 = vmatpush1.bf16.msra.mxu0 0
  %1992 = vmatprep.subr.bf16.mxu0 0
  %1993 = vmatpush1.bf16.msra.mxu0 0
  %1994 = vmatprep.subr.bf16.mxu0 0
  %1995 = vmatpush1.bf16.msra.mxu0 0
  %1996 = vmatprep.subr.bf16.mxu0 0
  %1997 = vmatpush1.bf16.msra.mxu0 0
  %1998 = vmatprep.mubr.bf16.mxu0 0
  %1999 = vmatmul.mubr.bf16.gmra.mrb[0].mxu0 %v1340
  %v2000 = vpop.f32.mrb[0].mxu0
  %v2001 = vadd.f32 %v1808, %v2000
  %v2002 = vpop.f32.mrb[0].mxu0
  %v2003 = vadd.f32 %v1810, %v2002
  %v2004 = vpop.f32.mrb[0].mxu0
  %v2005 = vadd.f32 %v1812, %v2004
  %v2006 = vpop.f32.mrb[0].mxu0
  %v2007 = vadd.f32 %v1814, %v2006
  %2008 = vmatprep.mubr.bf16.mxu0 0
  %2009 = vmatmul.mubr.bf16.gmra.mrb[0].mxu0 %v1343
  %v2010 = vpop.f32.mrb[0].mxu0
  %v2011 = vadd.f32 %v1818, %v2010
  %v2012 = vpop.f32.mrb[0].mxu0
  %v2013 = vadd.f32 %v1820, %v2012
  %v2014 = vpop.f32.mrb[0].mxu0
  %v2015 = vadd.f32 %v1822, %v2014
  %v2016 = vpop.f32.mrb[0].mxu0
  %v2017 = vadd.f32 %v1824, %v2016
  %2018 = vmatprep.mubr.bf16.mxu0 0
  %2019 = vmatmul.mubr.bf16.gmra.mrb[0].mxu0 %v1346
  %v2020 = vpop.f32.mrb[0].mxu0
  %v2021 = vadd.f32 %v1828, %v2020
  %v2022 = vpop.f32.mrb[0].mxu0
  %v2023 = vadd.f32 %v1830, %v2022
  %v2024 = vpop.f32.mrb[0].mxu0
  %v2025 = vadd.f32 %v1832, %v2024
  %v2026 = vpop.f32.mrb[0].mxu0
  %v2027 = vadd.f32 %v1834, %v2026
  %2028 = vmatprep.mubr.bf16.mxu0 0
  %2029 = vmatmul.mubr.bf16.gmra.mrb[0].mxu0 %v1349
  %v2030 = vpop.f32.mrb[0].mxu0
  %v2031 = vadd.f32 %v1838, %v2030
  %v2032 = vpop.f32.mrb[0].mxu0
  %v2033 = vadd.f32 %v1840, %v2032
  %v2034 = vpop.f32.mrb[0].mxu0
  %v2035 = vadd.f32 %v1842, %v2034
  %v2036 = vpop.f32.mrb[0].mxu0
  %v2037 = vadd.f32 %v1844, %v2036
  %2038 = vmatprep.mubr.bf16.mxu0 0
  %2039 = vmatmul.mubr.bf16.gmra.mrb[0].mxu0 %v1352
  %v2040 = vpop.f32.mrb[0].mxu0
  %v2041 = vadd.f32 %v1848, %v2040
  %v2042 = vpop.f32.mrb[0].mxu0
  %v2043 = vadd.f32 %v1850, %v2042
  %v2044 = vpop.f32.mrb[0].mxu0
  %v2045 = vadd.f32 %v1852, %v2044
  %v2046 = vpop.f32.mrb[0].mxu0
  %v2047 = vadd.f32 %v1854, %v2046
  %2048 = vmatprep.mubr.bf16.mxu0 0
  %2049 = vmatmul.mubr.bf16.gmra.mrb[0].mxu0 %v1355
  %v2050 = vpop.f32.mrb[0].mxu0
  %v2051 = vadd.f32 %v1858, %v2050
  %v2052 = vpop.f32.mrb[0].mxu0
  %v2053 = vadd.f32 %v1860, %v2052
  %v2054 = vpop.f32.mrb[0].mxu0
  %v2055 = vadd.f32 %v1862, %v2054
  %v2056 = vpop.f32.mrb[0].mxu0
  %v2057 = vadd.f32 %v1864, %v2056
  %2058 = vmatprep.mubr.bf16.mxu0 0
  %2059 = vmatmul.mubr.bf16.gmra.mrb[0].mxu0 %v1358
  %v2060 = vpop.f32.mrb[0].mxu0
  %v2061 = vadd.f32 %v1868, %v2060
  %v2062 = vpop.f32.mrb[0].mxu0
  %v2063 = vadd.f32 %v1870, %v2062
  %v2064 = vpop.f32.mrb[0].mxu0
  %v2065 = vadd.f32 %v1872, %v2064
  %v2066 = vpop.f32.mrb[0].mxu0
  %v2067 = vadd.f32 %v1874, %v2066
  %2068 = vmatprep.mubr.bf16.mxu0 0
  %2069 = vmatmul.mubr.bf16.gmra.mrb[0].mxu0 %v1361
  %v2070 = vpop.f32.mrb[0].mxu0
  %v2071 = vadd.f32 %v1878, %v2070
  %v2072 = vpop.f32.mrb[0].mxu0
  %v2073 = vadd.f32 %v1880, %v2072
  %v2074 = vpop.f32.mrb[0].mxu0
  %v2075 = vadd.f32 %v1882, %v2074
  %v2076 = vpop.f32.mrb[0].mxu0
  %v2077 = vadd.f32 %v1884, %v2076
  %2078 = vmatprep.mubr.bf16.mxu0 0
  %2079 = vmatmul.mubr.bf16.gmra.mrb[0].mxu0 %v1364
  %v2080 = vpop.f32.mrb[0].mxu0
  %v2081 = vadd.f32 %v1888, %v2080
  %v2082 = vpop.f32.mrb[0].mxu0
  %v2083 = vadd.f32 %v1890, %v2082
  %v2084 = vpop.f32.mrb[0].mxu0
  %v2085 = vadd.f32 %v1892, %v2084
  %v2086 = vpop.f32.mrb[0].mxu0
  %v2087 = vadd.f32 %v1894, %v2086
  %2088 = vmatprep.mubr.bf16.mxu0 0
  %2089 = vmatmul.mubr.bf16.gmra.mrb[0].mxu0 %v1367
  %v2090 = vpop.f32.mrb[0].mxu0
  %v2091 = vadd.f32 %v1898, %v2090
  %v2092 = vpop.f32.mrb[0].mxu0
  %v2093 = vadd.f32 %v1900, %v2092
  %v2094 = vpop.f32.mrb[0].mxu0
  %v2095 = vadd.f32 %v1902, %v2094
  %v2096 = vpop.f32.mrb[0].mxu0
  %v2097 = vadd.f32 %v1904, %v2096
  %2098 = vmatprep.mubr.bf16.mxu0 0
  %2099 = vmatmul.mubr.bf16.gmra.mrb[0].mxu0 %v1370
  %v2100 = vpop.f32.mrb[0].mxu0
  %v2101 = vadd.f32 %v1908, %v2100
  %v2102 = vpop.f32.mrb[0].mxu0
  %v2103 = vadd.f32 %v1910, %v2102
  %v2104 = vpop.f32.mrb[0].mxu0
  %v2105 = vadd.f32 %v1912, %v2104
  %v2106 = vpop.f32.mrb[0].mxu0
  %v2107 = vadd.f32 %v1914, %v2106
  %2108 = vmatprep.mubr.bf16.mxu0 0
  %2109 = vmatmul.mubr.bf16.gmra.mrb[0].mxu0 %v1373
  %v2110 = vpop.f32.mrb[0].mxu0
  %v2111 = vadd.f32 %v1918, %v2110
  %v2112 = vpop.f32.mrb[0].mxu0
  %v2113 = vadd.f32 %v1920, %v2112
  %v2114 = vpop.f32.mrb[0].mxu0
  %v2115 = vadd.f32 %v1922, %v2114
  %v2116 = vpop.f32.mrb[0].mxu0
  %v2117 = vadd.f32 %v1924, %v2116
  %2118 = vmatprep.mubr.bf16.mxu0 0
  %2119 = vmatmul.mubr.bf16.gmra.mrb[0].mxu0 %v1376
  %v2120 = vpop.f32.mrb[0].mxu0
  %v2121 = vadd.f32 %v1928, %v2120
  %v2122 = vpop.f32.mrb[0].mxu0
  %v2123 = vadd.f32 %v1930, %v2122
  %v2124 = vpop.f32.mrb[0].mxu0
  %v2125 = vadd.f32 %v1932, %v2124
  %v2126 = vpop.f32.mrb[0].mxu0
  %v2127 = vadd.f32 %v1934, %v2126
  %2128 = vmatprep.mubr.bf16.mxu0 0
  %2129 = vmatmul.mubr.bf16.gmra.mrb[0].mxu0 %v1379
  %v2130 = vpop.f32.mrb[0].mxu0
  %v2131 = vadd.f32 %v1938, %v2130
  %v2132 = vpop.f32.mrb[0].mxu0
  %v2133 = vadd.f32 %v1940, %v2132
  %v2134 = vpop.f32.mrb[0].mxu0
  %v2135 = vadd.f32 %v1942, %v2134
  %v2136 = vpop.f32.mrb[0].mxu0
  %v2137 = vadd.f32 %v1944, %v2136
  %2138 = vmatprep.mubr.bf16.mxu0 0
  %2139 = vmatmul.mubr.bf16.gmra.mrb[0].mxu0 %v1382
  %v2140 = vpop.f32.mrb[0].mxu0
  %v2141 = vadd.f32 %v1948, %v2140
  %v2142 = vpop.f32.mrb[0].mxu0
  %v2143 = vadd.f32 %v1950, %v2142
  %v2144 = vpop.f32.mrb[0].mxu0
  %v2145 = vadd.f32 %v1952, %v2144
  %v2146 = vpop.f32.mrb[0].mxu0
  %v2147 = vadd.f32 %v1954, %v2146
  %2148 = vmatprep.mubr.bf16.mxu0 0
  %2149 = vmatmul.mubr.bf16.gmra.mrb[0].mxu0 %v1385
  %v2150 = vpop.f32.mrb[0].mxu0
  %v2151 = vadd.f32 %v1958, %v2150
  %v2152 = vpop.f32.mrb[0].mxu0
  %v2153 = vadd.f32 %v1960, %v2152
  %v2154 = vpop.f32.mrb[0].mxu0
  %v2155 = vadd.f32 %v1962, %v2154
  %v2156 = vpop.f32.mrb[0].mxu0
  %v2157 = vadd.f32 %v1964, %v2156
  %2158 = vdwg.mxu0
  %v2159 = vmax.f32 %v2001, 0.0
  %v2160 = vmax.f32 %v2003, 0.0
  %v2161 = vmax.f32 %v2005, 0.0
  %v2162 = vmax.f32 %v2007, 0.0
  %v2163 = vmax.f32 %v2011, 0.0
  %v2164 = vmax.f32 %v2013, 0.0
  %v2165 = vmax.f32 %v2015, 0.0
  %v2166 = vmax.f32 %v2017, 0.0
  %v2167 = vmax.f32 %v2021, 0.0
  %v2168 = vmax.f32 %v2023, 0.0
  %v2169 = vmax.f32 %v2025, 0.0
  %v2170 = vmax.f32 %v2027, 0.0
  %v2171 = vmax.f32 %v2031, 0.0
  %v2172 = vmax.f32 %v2033, 0.0
  %v2173 = vmax.f32 %v2035, 0.0
  %v2174 = vmax.f32 %v2037, 0.0
  %v2175 = vmax.f32 %v2041, 0.0
  %v2176 = vmax.f32 %v2043, 0.0
  %v2177 = vmax.f32 %v2045, 0.0
  %v2178 = vmax.f32 %v2047, 0.0
  %v2179 = vmax.f32 %v2051, 0.0
  %v2180 = vmax.f32 %v2053, 0.0
  %v2181 = vmax.f32 %v2055, 0.0
  %v2182 = vmax.f32 %v2057, 0.0
  %v2183 = vmax.f32 %v2061, 0.0
  %v2184 = vmax.f32 %v2063, 0.0
  %v2185 = vmax.f32 %v2065, 0.0
  %v2186 = vmax.f32 %v2067, 0.0
  %v2187 = vmax.f32 %v2071, 0.0
  %v2188 = vmax.f32 %v2073, 0.0
  %v2189 = vmax.f32 %v2075, 0.0
  %v2190 = vmax.f32 %v2077, 0.0
  %v2191 = vmax.f32 %v2081, 0.0
  %v2192 = vmax.f32 %v2083, 0.0
  %v2193 = vmax.f32 %v2085, 0.0
  %v2194 = vmax.f32 %v2087, 0.0
  %v2195 = vmax.f32 %v2091, 0.0
  %v2196 = vmax.f32 %v2093, 0.0
  %v2197 = vmax.f32 %v2095, 0.0
  %v2198 = vmax.f32 %v2097, 0.0
  %v2199 = vmax.f32 %v2101, 0.0
  %v2200 = vmax.f32 %v2103, 0.0
  %v2201 = vmax.f32 %v2105, 0.0
  %v2202 = vmax.f32 %v2107, 0.0
  %v2203 = vmax.f32 %v2111, 0.0
  %v2204 = vmax.f32 %v2113, 0.0
  %v2205 = vmax.f32 %v2115, 0.0
  %v2206 = vmax.f32 %v2117, 0.0
  %v2207 = vmax.f32 %v2121, 0.0
  %v2208 = vmax.f32 %v2123, 0.0
  %v2209 = vmax.f32 %v2125, 0.0
  %v2210 = vmax.f32 %v2127, 0.0
  %v2211 = vmax.f32 %v2131, 0.0
  %v2212 = vmax.f32 %v2133, 0.0
  %v2213 = vmax.f32 %v2135, 0.0
  %v2214 = vmax.f32 %v2137, 0.0
  %v2215 = vmax.f32 %v2141, 0.0
  %v2216 = vmax.f32 %v2143, 0.0
  %v2217 = vmax.f32 %v2145, 0.0
  %v2218 = vmax.f32 %v2147, 0.0
  %v2219 = vmax.f32 %v2151, 0.0
  %v2220 = vmax.f32 %v2153, 0.0
  %v2221 = vmax.f32 %v2155, 0.0
  %v2222 = vmax.f32 %v2157, 0.0
  %v2223 = vpack.c.bf16 %v2161, %v2159
  %v2224 = vpack.c.bf16 %v2162, %v2160
  %v2225 = vpack.c.bf16 %v2165, %v2163
  %v2226 = vpack.c.bf16 %v2166, %v2164
  %v2227 = vpack.c.bf16 %v2169, %v2167
  %v2228 = vpack.c.bf16 %v2170, %v2168
  %v2229 = vpack.c.bf16 %v2173, %v2171
  %v2230 = vpack.c.bf16 %v2174, %v2172
  %v2231 = vpack.c.bf16 %v2177, %v2175
  %v2232 = vpack.c.bf16 %v2178, %v2176
  %v2233 = vpack.c.bf16 %v2181, %v2179
  %v2234 = vpack.c.bf16 %v2182, %v2180
  %v2235 = vpack.c.bf16 %v2185, %v2183
  %v2236 = vpack.c.bf16 %v2186, %v2184
  %v2237 = vpack.c.bf16 %v2189, %v2187
  %v2238 = vpack.c.bf16 %v2190, %v2188
  %v2239 = vpack.c.bf16 %v2193, %v2191
  %v2240 = vpack.c.bf16 %v2194, %v2192
  %v2241 = vpack.c.bf16 %v2197, %v2195
  %v2242 = vpack.c.bf16 %v2198, %v2196
  %v2243 = vpack.c.bf16 %v2201, %v2199
  %v2244 = vpack.c.bf16 %v2202, %v2200
  %v2245 = vpack.c.bf16 %v2205, %v2203
  %v2246 = vpack.c.bf16 %v2206, %v2204
  %v2247 = vpack.c.bf16 %v2209, %v2207
  %v2248 = vpack.c.bf16 %v2210, %v2208
  %v2249 = vpack.c.bf16 %v2213, %v2211
  %v2250 = vpack.c.bf16 %v2214, %v2212
  %v2251 = vpack.c.bf16 %v2217, %v2215
  %v2252 = vpack.c.bf16 %v2218, %v2216
  %v2253 = vpack.c.bf16 %v2221, %v2219
  %v2254 = vpack.c.bf16 %v2222, %v2220
  %v2255 = vld [vmem:[%s4] sm:$0xf]
  %v2256 = vld [vmem:[%s4 + $0x4] sm:$0xf]
  %v2257 = vld [vmem:[%s4 + $0x8] sm:$0xf]
  %v2258 = vld [vmem:[%s4 + $0xc] sm:$0xf]
  %v2259 = vld [vmem:[%s4 + $0x10] sm:$0xf]
  %v2260 = vld [vmem:[%s4 + $0x14] sm:$0xf]
  %v2261 = vld [vmem:[%s4 + $0x18] sm:$0xf]
  %v2262 = vld [vmem:[%s4 + $0x1c] sm:$0xf]
  %v2263 = vld [vmem:[%s4 + $0x20] sm:$0xf]
  %v2264 = vld [vmem:[%s4 + $0x24] sm:$0xf]
  %v2265 = vld [vmem:[%s4 + $0x28] sm:$0xf]
  %v2266 = vld [vmem:[%s4 + $0x2c] sm:$0xf]
  %v2267 = vld [vmem:[%s4 + $0x30] sm:$0xf]
  %v2268 = vld [vmem:[%s4 + $0x34] sm:$0xf]
  %v2269 = vld [vmem:[%s4 + $0x38] sm:$0xf]
  %v2270 = vld [vmem:[%s4 + $0x3c] sm:$0xf]
  %v2271 = vld [vmem:[%s4 + $0x40] sm:$0xf]
  %v2272 = vld [vmem:[%s4 + $0x44] sm:$0xf]
  %v2273 = vld [vmem:[%s4 + $0x48] sm:$0xf]
  %v2274 = vld [vmem:[%s4 + $0x4c] sm:$0xf]
  %v2275 = vld [vmem:[%s4 + $0x50] sm:$0xf]
  %v2276 = vld [vmem:[%s4 + $0x54] sm:$0xf]
  %v2277 = vld [vmem:[%s4 + $0x58] sm:$0xf]
  %v2278 = vld [vmem:[%s4 + $0x5c] sm:$0xf]
  %v2279 = vld [vmem:[%s4 + $0x60] sm:$0xf]
  %v2280 = vld [vmem:[%s4 + $0x64] sm:$0xf]
  %v2281 = vld [vmem:[%s4 + $0x68] sm:$0xf]
  %v2282 = vld [vmem:[%s4 + $0x6c] sm:$0xf]
  %v2283 = vld [vmem:[%s4 + $0x70] sm:$0xf]
  %v2284 = vld [vmem:[%s4 + $0x74] sm:$0xf]
  %v2285 = vld [vmem:[%s4 + $0x78] sm:$0xf]
  %v2286 = vld [vmem:[%s4 + $0x7c] sm:$0xf]
  %v2287 = vld [vmem:[%s5] sm:$0x1]
  %v2289 = vlaneseq
  %v2290 = vshrl.u32 %v2289, 7
  %v2291 = vsub.s32 0, %v2290
  %v2292 = vrot.slane %v2287, %v2291
  %v2326 = vunpack.c.l.b16 %v2255
  %v2327 = vunpack.c.l.b16 %v2256
  %v2328 = vunpack.c.l.b16 %v2257
  %v2329 = vunpack.c.l.b16 %v2258
  %v2330 = vunpack.c.l.b16 %v2259
  %v2331 = vunpack.c.l.b16 %v2260
  %v2332 = vunpack.c.l.b16 %v2261
  %v2333 = vunpack.c.l.b16 %v2262
  %v2334 = vunpack.c.l.b16 %v2263
  %v2335 = vunpack.c.l.b16 %v2264
  %v2336 = vunpack.c.l.b16 %v2265
  %v2337 = vunpack.c.l.b16 %v2266
  %v2338 = vunpack.c.l.b16 %v2267
  %v2339 = vunpack.c.l.b16 %v2268
  %v2340 = vunpack.c.l.b16 %v2269
  %v2341 = vunpack.c.l.b16 %v2270
  %v2342 = vunpack.c.l.b16 %v2271
  %v2343 = vunpack.c.l.b16 %v2272
  %v2344 = vunpack.c.l.b16 %v2273
  %v2345 = vunpack.c.l.b16 %v2274
  %v2346 = vunpack.c.l.b16 %v2275
  %v2347 = vunpack.c.l.b16 %v2276
  %v2348 = vunpack.c.l.b16 %v2277
  %v2349 = vunpack.c.l.b16 %v2278
  %v2350 = vunpack.c.l.b16 %v2279
  %v2351 = vunpack.c.l.b16 %v2280
  %v2352 = vunpack.c.l.b16 %v2281
  %v2353 = vunpack.c.l.b16 %v2282
  %v2354 = vunpack.c.l.b16 %v2283
  %v2355 = vunpack.c.l.b16 %v2284
  %v2356 = vunpack.c.l.b16 %v2285
  %v2357 = vunpack.c.l.b16 %v2286
  %v2358 = vpack.c.b16 %v2327, %v2326
  %v2359 = vpack.c.b16 %v2329, %v2328
  %v2360 = vpack.c.b16 %v2331, %v2330
  %v2361 = vpack.c.b16 %v2333, %v2332
  %v2362 = vpack.c.b16 %v2335, %v2334
  %v2363 = vpack.c.b16 %v2337, %v2336
  %v2364 = vpack.c.b16 %v2339, %v2338
  %v2365 = vpack.c.b16 %v2341, %v2340
  %v2366 = vpack.c.b16 %v2343, %v2342
  %v2367 = vpack.c.b16 %v2345, %v2344
  %v2368 = vpack.c.b16 %v2347, %v2346
  %v2369 = vpack.c.b16 %v2349, %v2348
  %v2370 = vpack.c.b16 %v2351, %v2350
  %v2371 = vpack.c.b16 %v2353, %v2352
  %v2372 = vpack.c.b16 %v2355, %v2354
  %v2373 = vpack.c.b16 %v2357, %v2356
  %2390 = vmatprep.subr.bf16.mxu0 0
  %2391 = vmatpush1.bf16.msra.mxu0 %v2358
  %2392 = vmatprep.subr.bf16.mxu0 0
  %2393 = vmatpush1.bf16.msra.mxu0 %v2359
  %2394 = vmatprep.subr.bf16.mxu0 0
  %2395 = vmatpush1.bf16.msra.mxu0 %v2360
  %2396 = vmatprep.subr.bf16.mxu0 0
  %2397 = vmatpush1.bf16.msra.mxu0 %v2361
  %2398 = vmatprep.subr.bf16.mxu0 0
  %2399 = vmatpush1.bf16.msra.mxu0 %v2362
  %2400 = vmatprep.subr.bf16.mxu0 0
  %2401 = vmatpush1.bf16.msra.mxu0 %v2363
  %2402 = vmatprep.subr.bf16.mxu0 0
  %2403 = vmatpush1.bf16.msra.mxu0 %v2364
  %2404 = vmatprep.subr.bf16.mxu0 0
  %2405 = vmatpush1.bf16.msra.mxu0 %v2365
  %2406 = vmatprep.subr.bf16.mxu0 0
  %2407 = vmatpush1.bf16.msra.mxu0 %v2366
  %2408 = vmatprep.subr.bf16.mxu0 0
  %2409 = vmatpush1.bf16.msra.mxu0 %v2367
  %2410 = vmatprep.subr.bf16.mxu0 0
  %2411 = vmatpush1.bf16.msra.mxu0 %v2368
  %2412 = vmatprep.subr.bf16.mxu0 0
  %2413 = vmatpush1.bf16.msra.mxu0 %v2369
  %2414 = vmatprep.subr.bf16.mxu0 0
  %2415 = vmatpush1.bf16.msra.mxu0 %v2370
  %2416 = vmatprep.subr.bf16.mxu0 0
  %2417 = vmatpush1.bf16.msra.mxu0 %v2371
  %2418 = vmatprep.subr.bf16.mxu0 0
  %2419 = vmatpush1.bf16.msra.mxu0 %v2372
  %2420 = vmatprep.subr.bf16.mxu0 0
  %2421 = vmatpush1.bf16.msra.mxu0 %v2373
  %2422 = vmatprep.mubr.bf16.mxu0 %v2224
  %2423 = vmatmul.mubr.bf16.gmra.mrb[0].mxu0 %v2223
  %v2424 = vpop.f32.mrb[0].mxu0
  %v2425 = vadd.f32 %v2292, %v2424
  %v2426 = vpop.f32.mrb[0].mxu0
  %v2427 = vpop.f32.mrb[0].mxu0
  %v2428 = vadd.f32 %v2292, %v2427
  %v2429 = vpop.f32.mrb[0].mxu0
  %2430 = vmatprep.mubr.bf16.mxu0 %v2226
  %2431 = vmatmul.mubr.bf16.gmra.mrb[0].mxu0 %v2225
  %v2432 = vpop.f32.mrb[0].mxu0
  %v2433 = vadd.f32 %v2292, %v2432
  %v2434 = vpop.f32.mrb[0].mxu0
  %v2435 = vpop.f32.mrb[0].mxu0
  %v2436 = vadd.f32 %v2292, %v2435
  %v2437 = vpop.f32.mrb[0].mxu0
  %2438 = vmatprep.mubr.bf16.mxu0 %v2228
  %2439 = vmatmul.mubr.bf16.gmra.mrb[0].mxu0 %v2227
  %v2440 = vpop.f32.mrb[0].mxu0
  %v2441 = vadd.f32 %v2292, %v2440
  %v2442 = vpop.f32.mrb[0].mxu0
  %v2443 = vpop.f32.mrb[0].mxu0
  %v2444 = vadd.f32 %v2292, %v2443
  %v2445 = vpop.f32.mrb[0].mxu0
  %2446 = vmatprep.mubr.bf16.mxu0 %v2230
  %2447 = vmatmul.mubr.bf16.gmra.mrb[0].mxu0 %v2229
  %v2448 = vpop.f32.mrb[0].mxu0
  %v2449 = vadd.f32 %v2292, %v2448
  %v2450 = vpop.f32.mrb[0].mxu0
  %v2451 = vpop.f32.mrb[0].mxu0
  %v2452 = vadd.f32 %v2292, %v2451
  %v2453 = vpop.f32.mrb[0].mxu0
  %2454 = vmatprep.mubr.bf16.mxu0 %v2232
  %2455 = vmatmul.mubr.bf16.gmra.mrb[0].mxu0 %v2231
  %v2456 = vpop.f32.mrb[0].mxu0
  %v2457 = vadd.f32 %v2292, %v2456
  %v2458 = vpop.f32.mrb[0].mxu0
  %v2459 = vpop.f32.mrb[0].mxu0
  %v2460 = vadd.f32 %v2292, %v2459
  %v2461 = vpop.f32.mrb[0].mxu0
  %2462 = vmatprep.mubr.bf16.mxu0 %v2234
  %2463 = vmatmul.mubr.bf16.gmra.mrb[0].mxu0 %v2233
  %v2464 = vpop.f32.mrb[0].mxu0
  %v2465 = vadd.f32 %v2292, %v2464
  %v2466 = vpop.f32.mrb[0].mxu0
  %v2467 = vpop.f32.mrb[0].mxu0
  %v2468 = vadd.f32 %v2292, %v2467
  %v2469 = vpop.f32.mrb[0].mxu0
  %2470 = vmatprep.mubr.bf16.mxu0 %v2236
  %2471 = vmatmul.mubr.bf16.gmra.mrb[0].mxu0 %v2235
  %v2472 = vpop.f32.mrb[0].mxu0
  %v2473 = vadd.f32 %v2292, %v2472
  %v2474 = vpop.f32.mrb[0].mxu0
  %v2475 = vpop.f32.mrb[0].mxu0
  %v2476 = vadd.f32 %v2292, %v2475
  %v2477 = vpop.f32.mrb[0].mxu0
  %2478 = vmatprep.mubr.bf16.mxu0 %v2238
  %2479 = vmatmul.mubr.bf16.gmra.mrb[0].mxu0 %v2237
  %v2480 = vpop.f32.mrb[0].mxu0
  %v2481 = vadd.f32 %v2292, %v2480
  %v2482 = vpop.f32.mrb[0].mxu0
  %v2483 = vpop.f32.mrb[0].mxu0
  %v2484 = vadd.f32 %v2292, %v2483
  %v2485 = vpop.f32.mrb[0].mxu0
  %2486 = vmatprep.mubr.bf16.mxu0 %v2240
  %2487 = vmatmul.mubr.bf16.gmra.mrb[0].mxu0 %v2239
  %v2488 = vpop.f32.mrb[0].mxu0
  %v2489 = vadd.f32 %v2292, %v2488
  %v2490 = vpop.f32.mrb[0].mxu0
  %v2491 = vpop.f32.mrb[0].mxu0
  %v2492 = vadd.f32 %v2292, %v2491
  %v2493 = vpop.f32.mrb[0].mxu0
  %2494 = vmatprep.mubr.bf16.mxu0 %v2242
  %2495 = vmatmul.mubr.bf16.gmra.mrb[0].mxu0 %v2241
  %v2496 = vpop.f32.mrb[0].mxu0
  %v2497 = vadd.f32 %v2292, %v2496
  %v2498 = vpop.f32.mrb[0].mxu0
  %v2499 = vpop.f32.mrb[0].mxu0
  %v2500 = vadd.f32 %v2292, %v2499
  %v2501 = vpop.f32.mrb[0].mxu0
  %2502 = vmatprep.mubr.bf16.mxu0 %v2244
  %2503 = vmatmul.mubr.bf16.gmra.mrb[0].mxu0 %v2243
  %v2504 = vpop.f32.mrb[0].mxu0
  %v2505 = vadd.f32 %v2292, %v2504
  %v2506 = vpop.f32.mrb[0].mxu0
  %v2507 = vpop.f32.mrb[0].mxu0
  %v2508 = vadd.f32 %v2292, %v2507
  %v2509 = vpop.f32.mrb[0].mxu0
  %2510 = vmatprep.mubr.bf16.mxu0 %v2246
  %2511 = vmatmul.mubr.bf16.gmra.mrb[0].mxu0 %v2245
  %v2512 = vpop.f32.mrb[0].mxu0
  %v2513 = vadd.f32 %v2292, %v2512
  %v2514 = vpop.f32.mrb[0].mxu0
  %v2515 = vpop.f32.mrb[0].mxu0
  %v2516 = vadd.f32 %v2292, %v2515
  %v2517 = vpop.f32.mrb[0].mxu0
  %2518 = vmatprep.mubr.bf16.mxu0 %v2248
  %2519 = vmatmul.mubr.bf16.gmra.mrb[0].mxu0 %v2247
  %v2520 = vpop.f32.mrb[0].mxu0
  %v2521 = vadd.f32 %v2292, %v2520
  %v2522 = vpop.f32.mrb[0].mxu0
  %v2523 = vpop.f32.mrb[0].mxu0
  %v2524 = vadd.f32 %v2292, %v2523
  %v2525 = vpop.f32.mrb[0].mxu0
  %2526 = vmatprep.mubr.bf16.mxu0 %v2250
  %2527 = vmatmul.mubr.bf16.gmra.mrb[0].mxu0 %v2249
  %v2528 = vpop.f32.mrb[0].mxu0
  %v2529 = vadd.f32 %v2292, %v2528
  %v2530 = vpop.f32.mrb[0].mxu0
  %v2531 = vpop.f32.mrb[0].mxu0
  %v2532 = vadd.f32 %v2292, %v2531
  %v2533 = vpop.f32.mrb[0].mxu0
  %2534 = vmatprep.mubr.bf16.mxu0 %v2252
  %2535 = vmatmul.mubr.bf16.gmra.mrb[0].mxu0 %v2251
  %v2536 = vpop.f32.mrb[0].mxu0
  %v2537 = vadd.f32 %v2292, %v2536
  %v2538 = vpop.f32.mrb[0].mxu0
  %v2539 = vpop.f32.mrb[0].mxu0
  %v2540 = vadd.f32 %v2292, %v2539
  %v2541 = vpop.f32.mrb[0].mxu0
  %2542 = vmatprep.mubr.bf16.mxu0 %v2254
  %2543 = vmatmul.mubr.bf16.gmra.mrb[0].mxu0 %v2253
  %v2544 = vpop.f32.mrb[0].mxu0
  %v2545 = vadd.f32 %v2292, %v2544
  %v2546 = vpop.f32.mrb[0].mxu0
  %v2547 = vpop.f32.mrb[0].mxu0
  %v2548 = vadd.f32 %v2292, %v2547
  %v2549 = vpop.f32.mrb[0].mxu0
  %2550 = vdwg.mxu0
  %v2551 = vmax.f32 %v2425, 0.0
  %v2552 = vmax.f32 %v2428, 0.0
  %v2553 = vmax.f32 %v2433, 0.0
  %v2554 = vmax.f32 %v2436, 0.0
  %v2555 = vmax.f32 %v2441, 0.0
  %v2556 = vmax.f32 %v2444, 0.0
  %v2557 = vmax.f32 %v2449, 0.0
  %v2558 = vmax.f32 %v2452, 0.0
  %v2559 = vmax.f32 %v2457, 0.0
  %v2560 = vmax.f32 %v2460, 0.0
  %v2561 = vmax.f32 %v2465, 0.0
  %v2562 = vmax.f32 %v2468, 0.0
  %v2563 = vmax.f32 %v2473, 0.0
  %v2564 = vmax.f32 %v2476, 0.0
  %v2565 = vmax.f32 %v2481, 0.0
  %v2566 = vmax.f32 %v2484, 0.0
  %v2567 = vmax.f32 %v2489, 0.0
  %v2568 = vmax.f32 %v2492, 0.0
  %v2569 = vmax.f32 %v2497, 0.0
  %v2570 = vmax.f32 %v2500, 0.0
  %v2571 = vmax.f32 %v2505, 0.0
  %v2572 = vmax.f32 %v2508, 0.0
  %v2573 = vmax.f32 %v2513, 0.0
  %v2574 = vmax.f32 %v2516, 0.0
  %v2575 = vmax.f32 %v2521, 0.0
  %v2576 = vmax.f32 %v2524, 0.0
  %v2577 = vmax.f32 %v2529, 0.0
  %v2578 = vmax.f32 %v2532, 0.0
  %v2579 = vmax.f32 %v2537, 0.0
  %v2580 = vmax.f32 %v2540, 0.0
  %v2581 = vmax.f32 %v2545, 0.0
  %v2582 = vmax.f32 %v2548, 0.0
  %v2583 = vpack.c.bf16 %v2552, %v2551
  %v2584 = vpack.c.bf16 %v2554, %v2553
  %v2585 = vpack.c.bf16 %v2556, %v2555
  %v2586 = vpack.c.bf16 %v2558, %v2557
  %v2587 = vpack.c.bf16 %v2560, %v2559
  %v2588 = vpack.c.bf16 %v2562, %v2561
  %v2589 = vpack.c.bf16 %v2564, %v2563
  %v2590 = vpack.c.bf16 %v2566, %v2565
  %v2591 = vpack.c.bf16 %v2568, %v2567
  %v2592 = vpack.c.bf16 %v2570, %v2569
  %v2593 = vpack.c.bf16 %v2572, %v2571
  %v2594 = vpack.c.bf16 %v2574, %v2573
  %v2595 = vpack.c.bf16 %v2576, %v2575
  %v2596 = vpack.c.bf16 %v2578, %v2577
  %v2597 = vpack.c.bf16 %v2580, %v2579
  %v2598 = vpack.c.bf16 %v2582, %v2581
  %v2599 = vld [vmem:[%s6] sm:$0xff]
  %v2600 = vld [vmem:[%s6 + $0x8] sm:$0xff]
  %v2601 = vld [vmem:[%s6 + $0x10] sm:$0xff]
  %v2602 = vld [vmem:[%s6 + $0x18] sm:$0xff]
  %v2603 = vld [vmem:[%s6 + $0x20] sm:$0xff]
  %v2604 = vld [vmem:[%s6 + $0x28] sm:$0xff]
  %v2605 = vld [vmem:[%s6 + $0x30] sm:$0xff]
  %v2606 = vld [vmem:[%s6 + $0x38] sm:$0xff]
  %v2607 = vld [vmem:[%s6 + $0x40] sm:$0xff]
  %v2608 = vld [vmem:[%s6 + $0x48] sm:$0xff]
  %v2609 = vld [vmem:[%s6 + $0x50] sm:$0xff]
  %v2610 = vld [vmem:[%s6 + $0x58] sm:$0xff]
  %v2611 = vld [vmem:[%s6 + $0x60] sm:$0xff]
  %v2612 = vld [vmem:[%s6 + $0x68] sm:$0xff]
  %v2613 = vld [vmem:[%s6 + $0x70] sm:$0xff]
  %v2614 = vld [vmem:[%s6 + $0x78] sm:$0xff]
  %v2615 = vld [vmem:[%s7] sm:$0x3]
  %v2617 = vlaneseq
  %v2618 = vshrl.u32 %v2617, 7
  %v2619 = vsub.s32 0, %v2618
  %v2620 = vrot.slane %v2615, %v2619
  %v2621 = vlaneseq
  %v2622 = vshrl.u32 %v2621, 7
  %v2623 = vsub.s32 1, %v2622
  %v2624 = vrot.slane %v2615, %v2623
  %v2643 = vunpack.c.l.b16 %v2599
  %v2644 = vunpack.c.h.b16 %v2599
  %v2645 = vunpack.c.l.b16 %v2600
  %v2646 = vunpack.c.h.b16 %v2600
  %v2647 = vunpack.c.l.b16 %v2601
  %v2648 = vunpack.c.h.b16 %v2601
  %v2649 = vunpack.c.l.b16 %v2602
  %v2650 = vunpack.c.h.b16 %v2602
  %v2651 = vunpack.c.l.b16 %v2603
  %v2652 = vunpack.c.h.b16 %v2603
  %v2653 = vunpack.c.l.b16 %v2604
  %v2654 = vunpack.c.h.b16 %v2604
  %v2655 = vunpack.c.l.b16 %v2605
  %v2656 = vunpack.c.h.b16 %v2605
  %v2657 = vunpack.c.l.b16 %v2606
  %v2658 = vunpack.c.h.b16 %v2606
  %v2659 = vunpack.c.l.b16 %v2607
  %v2660 = vunpack.c.h.b16 %v2607
  %v2661 = vunpack.c.l.b16 %v2608
  %v2662 = vunpack.c.h.b16 %v2608
  %v2663 = vunpack.c.l.b16 %v2609
  %v2664 = vunpack.c.h.b16 %v2609
  %v2665 = vunpack.c.l.b16 %v2610
  %v2666 = vunpack.c.h.b16 %v2610
  %v2667 = vunpack.c.l.b16 %v2611
  %v2668 = vunpack.c.h.b16 %v2611
  %v2669 = vunpack.c.l.b16 %v2612
  %v2670 = vunpack.c.h.b16 %v2612
  %v2671 = vunpack.c.l.b16 %v2613
  %v2672 = vunpack.c.h.b16 %v2613
  %v2673 = vunpack.c.l.b16 %v2614
  %v2674 = vunpack.c.h.b16 %v2614
  %v2675 = vpack.c.b16 %v2645, %v2643
  %v2676 = vpack.c.b16 %v2646, %v2644
  %v2677 = vpack.c.b16 %v2649, %v2647
  %v2678 = vpack.c.b16 %v2650, %v2648
  %v2679 = vpack.c.b16 %v2653, %v2651
  %v2680 = vpack.c.b16 %v2654, %v2652
  %v2681 = vpack.c.b16 %v2657, %v2655
  %v2682 = vpack.c.b16 %v2658, %v2656
  %v2683 = vpack.c.b16 %v2661, %v2659
  %v2684 = vpack.c.b16 %v2662, %v2660
  %v2685 = vpack.c.b16 %v2665, %v2663
  %v2686 = vpack.c.b16 %v2666, %v2664
  %v2687 = vpack.c.b16 %v2669, %v2667
  %v2688 = vpack.c.b16 %v2670, %v2668
  %v2689 = vpack.c.b16 %v2673, %v2671
  %v2690 = vpack.c.b16 %v2674, %v2672
  %2707 = vmatprep.subr.bf16.mxu0 %v2676
  %2708 = vmatpush1.bf16.msra.mxu0 %v2675
  %2709 = vmatprep.subr.bf16.mxu0 %v2678
  %2710 = vmatpush1.bf16.msra.mxu0 %v2677
  %2711 = vmatprep.subr.bf16.mxu0 %v2680
  %2712 = vmatpush1.bf16.msra.mxu0 %v2679
  %2713 = vmatprep.subr.bf16.mxu0 %v2682
  %2714 = vmatpush1.bf16.msra.mxu0 %v2681
  %2715 = vmatprep.subr.bf16.mxu0 %v2684
  %2716 = vmatpush1.bf16.msra.mxu0 %v2683
  %2717 = vmatprep.subr.bf16.mxu0 %v2686
  %2718 = vmatpush1.bf16.msra.mxu0 %v2685
  %2719 = vmatprep.subr.bf16.mxu0 %v2688
  %2720 = vmatpush1.bf16.msra.mxu0 %v2687
  %2721 = vmatprep.subr.bf16.mxu0 %v2690
  %2722 = vmatpush1.bf16.msra.mxu0 %v2689
  %2723 = vmatprep.subr.bf16.mxu0 0
  %2724 = vmatpush1.bf16.msra.mxu0 0
  %2725 = vmatprep.subr.bf16.mxu0 0
  %2726 = vmatpush1.bf16.msra.mxu0 0
  %2727 = vmatprep.subr.bf16.mxu0 0
  %2728 = vmatpush1.bf16.msra.mxu0 0
  %2729 = vmatprep.subr.bf16.mxu0 0
  %2730 = vmatpush1.bf16.msra.mxu0 0
  %2731 = vmatprep.subr.bf16.mxu0 0
  %2732 = vmatpush1.bf16.msra.mxu0 0
  %2733 = vmatprep.subr.bf16.mxu0 0
  %2734 = vmatpush1.bf16.msra.mxu0 0
  %2735 = vmatprep.subr.bf16.mxu0 0
  %2736 = vmatpush1.bf16.msra.mxu0 0
  %2737 = vmatprep.subr.bf16.mxu0 0
  %2738 = vmatpush1.bf16.msra.mxu0 0
  %2739 = vmatprep.mubr.bf16.mxu0 0
  %2740 = vmatmul.mubr.bf16.gmra.mrb[0].mxu0 %v2583
  %v2741 = vpop.f32.mrb[0].mxu0
  %v2742 = vadd.f32 %v2620, %v2741
  %v2743 = vpop.f32.mrb[0].mxu0
  %v2744 = vadd.f32 %v2624, %v2743
  %v2745 = vpop.f32.mrb[0].mxu0
  %v2746 = vadd.f32 %v2620, %v2745
  %v2747 = vpop.f32.mrb[0].mxu0
  %v2748 = vadd.f32 %v2624, %v2747
  %2749 = vmatprep.mubr.bf16.mxu0 0
  %2750 = vmatmul.mubr.bf16.gmra.mrb[0].mxu0 %v2584
  %v2751 = vpop.f32.mrb[0].mxu0
  %v2752 = vadd.f32 %v2620, %v2751
  %v2753 = vpop.f32.mrb[0].mxu0
  %v2754 = vadd.f32 %v2624, %v2753
  %v2755 = vpop.f32.mrb[0].mxu0
  %v2756 = vadd.f32 %v2620, %v2755
  %v2757 = vpop.f32.mrb[0].mxu0
  %v2758 = vadd.f32 %v2624, %v2757
  %2759 = vmatprep.mubr.bf16.mxu0 0
  %2760 = vmatmul.mubr.bf16.gmra.mrb[0].mxu0 %v2585
  %v2761 = vpop.f32.mrb[0].mxu0
  %v2762 = vadd.f32 %v2620, %v2761
  %v2763 = vpop.f32.mrb[0].mxu0
  %v2764 = vadd.f32 %v2624, %v2763
  %v2765 = vpop.f32.mrb[0].mxu0
  %v2766 = vadd.f32 %v2620, %v2765
  %v2767 = vpop.f32.mrb[0].mxu0
  %v2768 = vadd.f32 %v2624, %v2767
  %2769 = vmatprep.mubr.bf16.mxu0 0
  %2770 = vmatmul.mubr.bf16.gmra.mrb[0].mxu0 %v2586
  %v2771 = vpop.f32.mrb[0].mxu0
  %v2772 = vadd.f32 %v2620, %v2771
  %v2773 = vpop.f32.mrb[0].mxu0
  %v2774 = vadd.f32 %v2624, %v2773
  %v2775 = vpop.f32.mrb[0].mxu0
  %v2776 = vadd.f32 %v2620, %v2775
  %v2777 = vpop.f32.mrb[0].mxu0
  %v2778 = vadd.f32 %v2624, %v2777
  %2779 = vmatprep.mubr.bf16.mxu0 0
  %2780 = vmatmul.mubr.bf16.gmra.mrb[0].mxu0 %v2587
  %v2781 = vpop.f32.mrb[0].mxu0
  %v2782 = vadd.f32 %v2620, %v2781
  %v2783 = vpop.f32.mrb[0].mxu0
  %v2784 = vadd.f32 %v2624, %v2783
  %v2785 = vpop.f32.mrb[0].mxu0
  %v2786 = vadd.f32 %v2620, %v2785
  %v2787 = vpop.f32.mrb[0].mxu0
  %v2788 = vadd.f32 %v2624, %v2787
  %2789 = vmatprep.mubr.bf16.mxu0 0
  %2790 = vmatmul.mubr.bf16.gmra.mrb[0].mxu0 %v2588
  %v2791 = vpop.f32.mrb[0].mxu0
  %v2792 = vadd.f32 %v2620, %v2791
  %v2793 = vpop.f32.mrb[0].mxu0
  %v2794 = vadd.f32 %v2624, %v2793
  %v2795 = vpop.f32.mrb[0].mxu0
  %v2796 = vadd.f32 %v2620, %v2795
  %v2797 = vpop.f32.mrb[0].mxu0
  %v2798 = vadd.f32 %v2624, %v2797
  %2799 = vmatprep.mubr.bf16.mxu0 0
  %2800 = vmatmul.mubr.bf16.gmra.mrb[0].mxu0 %v2589
  %v2801 = vpop.f32.mrb[0].mxu0
  %v2802 = vadd.f32 %v2620, %v2801
  %v2803 = vpop.f32.mrb[0].mxu0
  %v2804 = vadd.f32 %v2624, %v2803
  %v2805 = vpop.f32.mrb[0].mxu0
  %v2806 = vadd.f32 %v2620, %v2805
  %v2807 = vpop.f32.mrb[0].mxu0
  %v2808 = vadd.f32 %v2624, %v2807
  %2809 = vmatprep.mubr.bf16.mxu0 0
  %2810 = vmatmul.mubr.bf16.gmra.mrb[0].mxu0 %v2590
  %v2811 = vpop.f32.mrb[0].mxu0
  %v2812 = vadd.f32 %v2620, %v2811
  %v2813 = vpop.f32.mrb[0].mxu0
  %v2814 = vadd.f32 %v2624, %v2813
  %v2815 = vpop.f32.mrb[0].mxu0
  %v2816 = vadd.f32 %v2620, %v2815
  %v2817 = vpop.f32.mrb[0].mxu0
  %v2818 = vadd.f32 %v2624, %v2817
  %2819 = vmatprep.mubr.bf16.mxu0 0
  %2820 = vmatmul.mubr.bf16.gmra.mrb[0].mxu0 %v2591
  %v2821 = vpop.f32.mrb[0].mxu0
  %v2822 = vadd.f32 %v2620, %v2821
  %v2823 = vpop.f32.mrb[0].mxu0
  %v2824 = vadd.f32 %v2624, %v2823
  %v2825 = vpop.f32.mrb[0].mxu0
  %v2826 = vadd.f32 %v2620, %v2825
  %v2827 = vpop.f32.mrb[0].mxu0
  %v2828 = vadd.f32 %v2624, %v2827
  %2829 = vmatprep.mubr.bf16.mxu0 0
  %2830 = vmatmul.mubr.bf16.gmra.mrb[0].mxu0 %v2592
  %v2831 = vpop.f32.mrb[0].mxu0
  %v2832 = vadd.f32 %v2620, %v2831
  %v2833 = vpop.f32.mrb[0].mxu0
  %v2834 = vadd.f32 %v2624, %v2833
  %v2835 = vpop.f32.mrb[0].mxu0
  %v2836 = vadd.f32 %v2620, %v2835
  %v2837 = vpop.f32.mrb[0].mxu0
  %v2838 = vadd.f32 %v2624, %v2837
  %2839 = vmatprep.mubr.bf16.mxu0 0
  %2840 = vmatmul.mubr.bf16.gmra.mrb[0].mxu0 %v2593
  %v2841 = vpop.f32.mrb[0].mxu0
  %v2842 = vadd.f32 %v2620, %v2841
  %v2843 = vpop.f32.mrb[0].mxu0
  %v2844 = vadd.f32 %v2624, %v2843
  %v2845 = vpop.f32.mrb[0].mxu0
  %v2846 = vadd.f32 %v2620, %v2845
  %v2847 = vpop.f32.mrb[0].mxu0
  %v2848 = vadd.f32 %v2624, %v2847
  %2849 = vmatprep.mubr.bf16.mxu0 0
  %2850 = vmatmul.mubr.bf16.gmra.mrb[0].mxu0 %v2594
  %v2851 = vpop.f32.mrb[0].mxu0
  %v2852 = vadd.f32 %v2620, %v2851
  %v2853 = vpop.f32.mrb[0].mxu0
  %v2854 = vadd.f32 %v2624, %v2853
  %v2855 = vpop.f32.mrb[0].mxu0
  %v2856 = vadd.f32 %v2620, %v2855
  %v2857 = vpop.f32.mrb[0].mxu0
  %v2858 = vadd.f32 %v2624, %v2857
  %2859 = vmatprep.mubr.bf16.mxu0 0
  %2860 = vmatmul.mubr.bf16.gmra.mrb[0].mxu0 %v2595
  %v2861 = vpop.f32.mrb[0].mxu0
  %v2862 = vadd.f32 %v2620, %v2861
  %v2863 = vpop.f32.mrb[0].mxu0
  %v2864 = vadd.f32 %v2624, %v2863
  %v2865 = vpop.f32.mrb[0].mxu0
  %v2866 = vadd.f32 %v2620, %v2865
  %v2867 = vpop.f32.mrb[0].mxu0
  %v2868 = vadd.f32 %v2624, %v2867
  %2869 = vmatprep.mubr.bf16.mxu0 0
  %2870 = vmatmul.mubr.bf16.gmra.mrb[0].mxu0 %v2596
  %v2871 = vpop.f32.mrb[0].mxu0
  %v2872 = vadd.f32 %v2620, %v2871
  %v2873 = vpop.f32.mrb[0].mxu0
  %v2874 = vadd.f32 %v2624, %v2873
  %v2875 = vpop.f32.mrb[0].mxu0
  %v2876 = vadd.f32 %v2620, %v2875
  %v2877 = vpop.f32.mrb[0].mxu0
  %v2878 = vadd.f32 %v2624, %v2877
  %2879 = vmatprep.mubr.bf16.mxu0 0
  %2880 = vmatmul.mubr.bf16.gmra.mrb[0].mxu0 %v2597
  %v2881 = vpop.f32.mrb[0].mxu0
  %v2882 = vadd.f32 %v2620, %v2881
  %v2883 = vpop.f32.mrb[0].mxu0
  %v2884 = vadd.f32 %v2624, %v2883
  %v2885 = vpop.f32.mrb[0].mxu0
  %v2886 = vadd.f32 %v2620, %v2885
  %v2887 = vpop.f32.mrb[0].mxu0
  %v2888 = vadd.f32 %v2624, %v2887
  %2889 = vmatprep.mubr.bf16.mxu0 0
  %2890 = vmatmul.mubr.bf16.gmra.mrb[0].mxu0 %v2598
  %v2891 = vpop.f32.mrb[0].mxu0
  %v2892 = vadd.f32 %v2620, %v2891
  %v2893 = vpop.f32.mrb[0].mxu0
  %v2894 = vadd.f32 %v2624, %v2893
  %v2895 = vpop.f32.mrb[0].mxu0
  %v2896 = vadd.f32 %v2620, %v2895
  %v2897 = vpop.f32.mrb[0].mxu0
  %v2898 = vadd.f32 %v2624, %v2897
  %2899 = vdwg.mxu0
  %v2900 = vld [vmem:[%s1] sm:$0xff]
  %v2901 = vld [vmem:[%s1 + $0x8] sm:$0xff]
  %v2902 = vld [vmem:[%s1 + $0x10] sm:$0xff]
  %v2903 = vld [vmem:[%s1 + $0x18] sm:$0xff]
  %v2904 = vld [vmem:[%s1 + $0x20] sm:$0xff]
  %v2905 = vld [vmem:[%s1 + $0x28] sm:$0xff]
  %v2906 = vld [vmem:[%s1 + $0x30] sm:$0xff]
  %v2907 = vld [vmem:[%s1 + $0x38] sm:$0xff]
  %v2908 = vld [vmem:[%s1 + $0x40] sm:$0xff]
  %v2909 = vld [vmem:[%s1 + $0x48] sm:$0xff]
  %v2910 = vld [vmem:[%s1 + $0x50] sm:$0xff]
  %v2911 = vld [vmem:[%s1 + $0x58] sm:$0xff]
  %v2912 = vld [vmem:[%s1 + $0x60] sm:$0xff]
  %v2913 = vld [vmem:[%s1 + $0x68] sm:$0xff]
  %v2914 = vld [vmem:[%s1 + $0x70] sm:$0xff]
  %v2915 = vld [vmem:[%s1 + $0x78] sm:$0xff]
  %v2916 = vld [vmem:[%s1 + $0x80] sm:$0xff]
  %v2917 = vld [vmem:[%s1 + $0x88] sm:$0xff]
  %v2918 = vld [vmem:[%s1 + $0x90] sm:$0xff]
  %v2919 = vld [vmem:[%s1 + $0x98] sm:$0xff]
  %v2920 = vld [vmem:[%s1 + $0xa0] sm:$0xff]
  %v2921 = vld [vmem:[%s1 + $0xa8] sm:$0xff]
  %v2922 = vld [vmem:[%s1 + $0xb0] sm:$0xff]
  %v2923 = vld [vmem:[%s1 + $0xb8] sm:$0xff]
  %v2924 = vld [vmem:[%s1 + $0xc0] sm:$0xff]
  %v2925 = vld [vmem:[%s1 + $0xc8] sm:$0xff]
  %v2926 = vld [vmem:[%s1 + $0xd0] sm:$0xff]
  %v2927 = vld [vmem:[%s1 + $0xd8] sm:$0xff]
  %v2928 = vld [vmem:[%s1 + $0xe0] sm:$0xff]
  %v2929 = vld [vmem:[%s1 + $0xe8] sm:$0xff]
  %v2930 = vld [vmem:[%s1 + $0xf0] sm:$0xff]
  %v2931 = vld [vmem:[%s1 + $0xf8] sm:$0xff]
  %v2932 = vmul.f32 %v2744, 0.5
  %v2933 = vmul.f32 %v2748, 0.5
  %v2934 = vmul.f32 %v2754, 0.5
  %v2935 = vmul.f32 %v2758, 0.5
  %v2936 = vmul.f32 %v2764, 0.5
  %v2937 = vmul.f32 %v2768, 0.5
  %v2938 = vmul.f32 %v2774, 0.5
  %v2939 = vmul.f32 %v2778, 0.5
  %v2940 = vmul.f32 %v2784, 0.5
  %v2941 = vmul.f32 %v2788, 0.5
  %v2942 = vmul.f32 %v2794, 0.5
  %v2943 = vmul.f32 %v2798, 0.5
  %v2944 = vmul.f32 %v2804, 0.5
  %v2945 = vmul.f32 %v2808, 0.5
  %v2946 = vmul.f32 %v2814, 0.5
  %v2947 = vmul.f32 %v2818, 0.5
  %v2948 = vmul.f32 %v2824, 0.5
  %v2949 = vmul.f32 %v2828, 0.5
  %v2950 = vmul.f32 %v2834, 0.5
  %v2951 = vmul.f32 %v2838, 0.5
  %v2952 = vmul.f32 %v2844, 0.5
  %v2953 = vmul.f32 %v2848, 0.5
  %v2954 = vmul.f32 %v2854, 0.5
  %v2955 = vmul.f32 %v2858, 0.5
  %v2956 = vmul.f32 %v2864, 0.5
  %v2957 = vmul.f32 %v2868, 0.5
  %v2958 = vmul.f32 %v2874, 0.5
  %v2959 = vmul.f32 %v2878, 0.5
  %v2960 = vmul.f32 %v2884, 0.5
  %v2961 = vmul.f32 %v2888, 0.5
  %v2962 = vmul.f32 %v2894, 0.5
  %v2963 = vmul.f32 %v2898, 0.5
  %v2964 = vmul.f32 %v2932, 1.442695
  %v2965 = vpow.pop %v2964
  %v2966 = vmul.f32 %v2933, 1.442695
  %v2967 = vpow.pop %v2966
  %v2968 = vmul.f32 %v2934, 1.442695
  %v2969 = vpow.pop %v2968
  %v2970 = vmul.f32 %v2935, 1.442695
  %v2971 = vpow.pop %v2970
  %v2972 = vmul.f32 %v2936, 1.442695
  %v2973 = vpow.pop %v2972
  %v2974 = vmul.f32 %v2937, 1.442695
  %v2975 = vpow.pop %v2974
  %v2976 = vmul.f32 %v2938, 1.442695
  %v2977 = vpow.pop %v2976
  %v2978 = vmul.f32 %v2939, 1.442695
  %v2979 = vpow.pop %v2978
  %v2980 = vmul.f32 %v2940, 1.442695
  %v2981 = vpow.pop %v2980
  %v2982 = vmul.f32 %v2941, 1.442695
  %v2983 = vpow.pop %v2982
  %v2984 = vmul.f32 %v2942, 1.442695
  %v2985 = vpow.pop %v2984
  %v2986 = vmul.f32 %v2943, 1.442695
  %v2987 = vpow.pop %v2986
  %v2988 = vmul.f32 %v2944, 1.442695
  %v2989 = vpow.pop %v2988
  %v2990 = vmul.f32 %v2945, 1.442695
  %v2991 = vpow.pop %v2990
  %v2992 = vmul.f32 %v2946, 1.442695
  %v2993 = vpow.pop %v2992
  %v2994 = vmul.f32 %v2947, 1.442695
  %v2995 = vpow.pop %v2994
  %v2996 = vmul.f32 %v2948, 1.442695
  %v2997 = vpow.pop %v2996
  %v2998 = vmul.f32 %v2949, 1.442695
  %v2999 = vpow.pop %v2998
  %v3000 = vmul.f32 %v2950, 1.442695
  %v3001 = vpow.pop %v3000
  %v3002 = vmul.f32 %v2951, 1.442695
  %v3003 = vpow.pop %v3002
  %v3004 = vmul.f32 %v2952, 1.442695
  %v3005 = vpow.pop %v3004
  %v3006 = vmul.f32 %v2953, 1.442695
  %v3007 = vpow.pop %v3006
  %v3008 = vmul.f32 %v2954, 1.442695
  %v3009 = vpow.pop %v3008
  %v3010 = vmul.f32 %v2955, 1.442695
  %v3011 = vpow.pop %v3010
  %v3012 = vmul.f32 %v2956, 1.442695
  %v3013 = vpow.pop %v3012
  %v3014 = vmul.f32 %v2957, 1.442695
  %v3015 = vpow.pop %v3014
  %v3016 = vmul.f32 %v2958, 1.442695
  %v3017 = vpow.pop %v3016
  %v3018 = vmul.f32 %v2959, 1.442695
  %v3019 = vpow.pop %v3018
  %v3020 = vmul.f32 %v2960, 1.442695
  %v3021 = vpow.pop %v3020
  %v3022 = vmul.f32 %v2961, 1.442695
  %v3023 = vpow.pop %v3022
  %v3024 = vmul.f32 %v2962, 1.442695
  %v3025 = vpow.pop %v3024
  %v3026 = vmul.f32 %v2963, 1.442695
  %v3027 = vpow.pop %v3026
  %v3028 = vmul.f32 %v2900, %v2965
  %v3029 = vmul.f32 %v2901, %v2967
  %v3030 = vmul.f32 %v2902, %v2969
  %v3031 = vmul.f32 %v2903, %v2971
  %v3032 = vmul.f32 %v2904, %v2973
  %v3033 = vmul.f32 %v2905, %v2975
  %v3034 = vmul.f32 %v2906, %v2977
  %v3035 = vmul.f32 %v2907, %v2979
  %v3036 = vmul.f32 %v2908, %v2981
  %v3037 = vmul.f32 %v2909, %v2983
  %v3038 = vmul.f32 %v2910, %v2985
  %v3039 = vmul.f32 %v2911, %v2987
  %v3040 = vmul.f32 %v2912, %v2989
  %v3041 = vmul.f32 %v2913, %v2991
  %v3042 = vmul.f32 %v2914, %v2993
  %v3043 = vmul.f32 %v2915, %v2995
  %v3044 = vmul.f32 %v2916, %v2997
  %v3045 = vmul.f32 %v2917, %v2999
  %v3046 = vmul.f32 %v2918, %v3001
  %v3047 = vmul.f32 %v2919, %v3003
  %v3048 = vmul.f32 %v2920, %v3005
  %v3049 = vmul.f32 %v2921, %v3007
  %v3050 = vmul.f32 %v2922, %v3009
  %v3051 = vmul.f32 %v2923, %v3011
  %v3052 = vmul.f32 %v2924, %v3013
  %v3053 = vmul.f32 %v2925, %v3015
  %v3054 = vmul.f32 %v2926, %v3017
  %v3055 = vmul.f32 %v2927, %v3019
  %v3056 = vmul.f32 %v2928, %v3021
  %v3057 = vmul.f32 %v2929, %v3023
  %v3058 = vmul.f32 %v2930, %v3025
  %v3059 = vmul.f32 %v2931, %v3027
  %v3060 = vadd.f32 %v2742, %v3028
  %v3061 = vadd.f32 %v2746, %v3029
  %v3062 = vadd.f32 %v2752, %v3030
  %v3063 = vadd.f32 %v2756, %v3031
  %v3064 = vadd.f32 %v2762, %v3032
  %v3065 = vadd.f32 %v2766, %v3033
  %v3066 = vadd.f32 %v2772, %v3034
  %v3067 = vadd.f32 %v2776, %v3035
  %v3068 = vadd.f32 %v2782, %v3036
  %v3069 = vadd.f32 %v2786, %v3037
  %v3070 = vadd.f32 %v2792, %v3038
  %v3071 = vadd.f32 %v2796, %v3039
  %v3072 = vadd.f32 %v2802, %v3040
  %v3073 = vadd.f32 %v2806, %v3041
  %v3074 = vadd.f32 %v2812, %v3042
  %v3075 = vadd.f32 %v2816, %v3043
  %v3076 = vadd.f32 %v2822, %v3044
  %v3077 = vadd.f32 %v2826, %v3045
  %v3078 = vadd.f32 %v2832, %v3046
  %v3079 = vadd.f32 %v2836, %v3047
  %v3080 = vadd.f32 %v2842, %v3048
  %v3081 = vadd.f32 %v2846, %v3049
  %v3082 = vadd.f32 %v2852, %v3050
  %v3083 = vadd.f32 %v2856, %v3051
  %v3084 = vadd.f32 %v2862, %v3052
  %v3085 = vadd.f32 %v2866, %v3053
  %v3086 = vadd.f32 %v2872, %v3054
  %v3087 = vadd.f32 %v2876, %v3055
  %v3088 = vadd.f32 %v2882, %v3056
  %v3089 = vadd.f32 %v2886, %v3057
  %v3090 = vadd.f32 %v2892, %v3058
  %v3091 = vadd.f32 %v2896, %v3059
  %3092 = vst [vmem:[%s15] sm:$0xff] %v3060
  %3093 = vst [vmem:[%s15 + $0x8] sm:$0xff] %v3061
  %3094 = vst [vmem:[%s15 + $0x10] sm:$0xff] %v3062
  %3095 = vst [vmem:[%s15 + $0x18] sm:$0xff] %v3063
  %3096 = vst [vmem:[%s15 + $0x20] sm:$0xff] %v3064
  %3097 = vst [vmem:[%s15 + $0x28] sm:$0xff] %v3065
  %3098 = vst [vmem:[%s15 + $0x30] sm:$0xff] %v3066
  %3099 = vst [vmem:[%s15 + $0x38] sm:$0xff] %v3067
  %3100 = vst [vmem:[%s15 + $0x40] sm:$0xff] %v3068
  %3101 = vst [vmem:[%s15 + $0x48] sm:$0xff] %v3069
  %3102 = vst [vmem:[%s15 + $0x50] sm:$0xff] %v3070
  %3103 = vst [vmem:[%s15 + $0x58] sm:$0xff] %v3071
  %3104 = vst [vmem:[%s15 + $0x60] sm:$0xff] %v3072
  %3105 = vst [vmem:[%s15 + $0x68] sm:$0xff] %v3073
  %3106 = vst [vmem:[%s15 + $0x70] sm:$0xff] %v3074
  %3107 = vst [vmem:[%s15 + $0x78] sm:$0xff] %v3075
  %3108 = vst [vmem:[%s15 + $0x80] sm:$0xff] %v3076
  %3109 = vst [vmem:[%s15 + $0x88] sm:$0xff] %v3077
  %3110 = vst [vmem:[%s15 + $0x90] sm:$0xff] %v3078
  %3111 = vst [vmem:[%s15 + $0x98] sm:$0xff] %v3079
  %3112 = vst [vmem:[%s15 + $0xa0] sm:$0xff] %v3080
  %3113 = vst [vmem:[%s15 + $0xa8] sm:$0xff] %v3081
  %3114 = vst [vmem:[%s15 + $0xb0] sm:$0xff] %v3082
  %3115 = vst [vmem:[%s15 + $0xb8] sm:$0xff] %v3083
  %3116 = vst [vmem:[%s15 + $0xc0] sm:$0xff] %v3084
  %3117 = vst [vmem:[%s15 + $0xc8] sm:$0xff] %v3085
  %3118 = vst [vmem:[%s15 + $0xd0] sm:$0xff] %v3086
  %3119 = vst [vmem:[%s15 + $0xd8] sm:$0xff] %v3087
  %3120 = vst [vmem:[%s15 + $0xe0] sm:$0xff] %v3088
  %3121 = vst [vmem:[%s15 + $0xe8] sm:$0xff] %v3089
  %3122 = vst [vmem:[%s15 + $0xf0] sm:$0xff] %v3090
  %3123 = vst [vmem:[%s15 + $0xf8] sm:$0xff] %v3091
  %v3124 = vpack.c.bf16 %v3061, %v3060
  %v3125 = vpack.c.bf16 %v3063, %v3062
  %v3126 = vpack.c.bf16 %v3065, %v3064
  %v3127 = vpack.c.bf16 %v3067, %v3066
  %v3128 = vpack.c.bf16 %v3069, %v3068
  %v3129 = vpack.c.bf16 %v3071, %v3070
  %v3130 = vpack.c.bf16 %v3073, %v3072
  %v3131 = vpack.c.bf16 %v3075, %v3074
  %v3132 = vpack.c.bf16 %v3077, %v3076
  %v3133 = vpack.c.bf16 %v3079, %v3078
  %v3134 = vpack.c.bf16 %v3081, %v3080
  %v3135 = vpack.c.bf16 %v3083, %v3082
  %v3136 = vpack.c.bf16 %v3085, %v3084
  %v3137 = vpack.c.bf16 %v3087, %v3086
  %v3138 = vpack.c.bf16 %v3089, %v3088
  %v3139 = vpack.c.bf16 %v3091, %v3090
  %v3140 = vld [vmem:[%s8] sm:$0xf]
  %v3141 = vld [vmem:[%s8 + $0x4] sm:$0xf]
  %v3142 = vld [vmem:[%s8 + $0x8] sm:$0xf]
  %v3143 = vld [vmem:[%s8 + $0xc] sm:$0xf]
  %v3144 = vld [vmem:[%s8 + $0x10] sm:$0xf]
  %v3145 = vld [vmem:[%s8 + $0x14] sm:$0xf]
  %v3146 = vld [vmem:[%s8 + $0x18] sm:$0xf]
  %v3147 = vld [vmem:[%s8 + $0x1c] sm:$0xf]
  %v3148 = vld [vmem:[%s8 + $0x20] sm:$0xf]
  %v3149 = vld [vmem:[%s8 + $0x24] sm:$0xf]
  %v3150 = vld [vmem:[%s8 + $0x28] sm:$0xf]
  %v3151 = vld [vmem:[%s8 + $0x2c] sm:$0xf]
  %v3152 = vld [vmem:[%s8 + $0x30] sm:$0xf]
  %v3153 = vld [vmem:[%s8 + $0x34] sm:$0xf]
  %v3154 = vld [vmem:[%s8 + $0x38] sm:$0xf]
  %v3155 = vld [vmem:[%s8 + $0x3c] sm:$0xf]
  %v3156 = vld [vmem:[%s9] sm:$0x1]
  %v3158 = vlaneseq
  %v3159 = vshrl.u32 %v3158, 7
  %v3160 = vsub.s32 0, %v3159
  %v3161 = vrot.slane %v3156, %v3160
  %v3179 = vunpack.c.l.b16 %v3140
  %v3180 = vunpack.c.l.b16 %v3141
  %v3181 = vunpack.c.l.b16 %v3142
  %v3182 = vunpack.c.l.b16 %v3143
  %v3183 = vunpack.c.l.b16 %v3144
  %v3184 = vunpack.c.l.b16 %v3145
  %v3185 = vunpack.c.l.b16 %v3146
  %v3186 = vunpack.c.l.b16 %v3147
  %v3187 = vunpack.c.l.b16 %v3148
  %v3188 = vunpack.c.l.b16 %v3149
  %v3189 = vunpack.c.l.b16 %v3150
  %v3190 = vunpack.c.l.b16 %v3151
  %v3191 = vunpack.c.l.b16 %v3152
  %v3192 = vunpack.c.l.b16 %v3153
  %v3193 = vunpack.c.l.b16 %v3154
  %v3194 = vunpack.c.l.b16 %v3155
  %v3195 = vpack.c.b16 %v3180, %v3179
  %v3196 = vpack.c.b16 %v3182, %v3181
  %v3197 = vpack.c.b16 %v3184, %v3183
  %v3198 = vpack.c.b16 %v3186, %v3185
  %v3199 = vpack.c.b16 %v3188, %v3187
  %v3200 = vpack.c.b16 %v3190, %v3189
  %v3201 = vpack.c.b16 %v3192, %v3191
  %v3202 = vpack.c.b16 %v3194, %v3193
  %3211 = vmatprep.subr.bf16.mxu0 0
  %3212 = vmatpush1.bf16.msra.mxu0 %v3195
  %3213 = vmatprep.subr.bf16.mxu0 0
  %3214 = vmatpush1.bf16.msra.mxu0 %v3196
  %3215 = vmatprep.subr.bf16.mxu0 0
  %3216 = vmatpush1.bf16.msra.mxu0 %v3197
  %3217 = vmatprep.subr.bf16.mxu0 0
  %3218 = vmatpush1.bf16.msra.mxu0 %v3198
  %3219 = vmatprep.subr.bf16.mxu0 0
  %3220 = vmatpush1.bf16.msra.mxu0 %v3199
  %3221 = vmatprep.subr.bf16.mxu0 0
  %3222 = vmatpush1.bf16.msra.mxu0 %v3200
  %3223 = vmatprep.subr.bf16.mxu0 0
  %3224 = vmatpush1.bf16.msra.mxu0 %v3201
  %3225 = vmatprep.subr.bf16.mxu0 0
  %3226 = vmatpush1.bf16.msra.mxu0 %v3202
  %3227 = vmatprep.subr.bf16.mxu0 0
  %3228 = vmatpush1.bf16.msra.mxu0 0
  %3229 = vmatprep.subr.bf16.mxu0 0
  %3230 = vmatpush1.bf16.msra.mxu0 0
  %3231 = vmatprep.subr.bf16.mxu0 0
  %3232 = vmatpush1.bf16.msra.mxu0 0
  %3233 = vmatprep.subr.bf16.mxu0 0
  %3234 = vmatpush1.bf16.msra.mxu0 0
  %3235 = vmatprep.subr.bf16.mxu0 0
  %3236 = vmatpush1.bf16.msra.mxu0 0
  %3237 = vmatprep.subr.bf16.mxu0 0
  %3238 = vmatpush1.bf16.msra.mxu0 0
  %3239 = vmatprep.subr.bf16.mxu0 0
  %3240 = vmatpush1.bf16.msra.mxu0 0
  %3241 = vmatprep.subr.bf16.mxu0 0
  %3242 = vmatpush1.bf16.msra.mxu0 0
  %3243 = vmatprep.mubr.bf16.mxu0 0
  %3244 = vmatmul.mubr.bf16.gmra.mrb[0].mxu0 %v3124
  %v3245 = vpop.f32.mrb[0].mxu0
  %v3246 = vadd.f32 %v3161, %v3245
  %v3247 = vpop.f32.mrb[0].mxu0
  %v3248 = vpop.f32.mrb[0].mxu0
  %v3249 = vadd.f32 %v3161, %v3248
  %v3250 = vpop.f32.mrb[0].mxu0
  %3251 = vmatprep.mubr.bf16.mxu0 0
  %3252 = vmatmul.mubr.bf16.gmra.mrb[0].mxu0 %v3125
  %v3253 = vpop.f32.mrb[0].mxu0
  %v3254 = vadd.f32 %v3161, %v3253
  %v3255 = vpop.f32.mrb[0].mxu0
  %v3256 = vpop.f32.mrb[0].mxu0
  %v3257 = vadd.f32 %v3161, %v3256
  %v3258 = vpop.f32.mrb[0].mxu0
  %3259 = vmatprep.mubr.bf16.mxu0 0
  %3260 = vmatmul.mubr.bf16.gmra.mrb[0].mxu0 %v3126
  %v3261 = vpop.f32.mrb[0].mxu0
  %v3262 = vadd.f32 %v3161, %v3261
  %v3263 = vpop.f32.mrb[0].mxu0
  %v3264 = vpop.f32.mrb[0].mxu0
  %v3265 = vadd.f32 %v3161, %v3264
  %v3266 = vpop.f32.mrb[0].mxu0
  %3267 = vmatprep.mubr.bf16.mxu0 0
  %3268 = vmatmul.mubr.bf16.gmra.mrb[0].mxu0 %v3127
  %v3269 = vpop.f32.mrb[0].mxu0
  %v3270 = vadd.f32 %v3161, %v3269
  %v3271 = vpop.f32.mrb[0].mxu0
  %v3272 = vpop.f32.mrb[0].mxu0
  %v3273 = vadd.f32 %v3161, %v3272
  %v3274 = vpop.f32.mrb[0].mxu0
  %3275 = vmatprep.mubr.bf16.mxu0 0
  %3276 = vmatmul.mubr.bf16.gmra.mrb[0].mxu0 %v3128
  %v3277 = vpop.f32.mrb[0].mxu0
  %v3278 = vadd.f32 %v3161, %v3277
  %v3279 = vpop.f32.mrb[0].mxu0
  %v3280 = vpop.f32.mrb[0].mxu0
  %v3281 = vadd.f32 %v3161, %v3280
  %v3282 = vpop.f32.mrb[0].mxu0
  %3283 = vmatprep.mubr.bf16.mxu0 0
  %3284 = vmatmul.mubr.bf16.gmra.mrb[0].mxu0 %v3129
  %v3285 = vpop.f32.mrb[0].mxu0
  %v3286 = vadd.f32 %v3161, %v3285
  %v3287 = vpop.f32.mrb[0].mxu0
  %v3288 = vpop.f32.mrb[0].mxu0
  %v3289 = vadd.f32 %v3161, %v3288
  %v3290 = vpop.f32.mrb[0].mxu0
  %3291 = vmatprep.mubr.bf16.mxu0 0
  %3292 = vmatmul.mubr.bf16.gmra.mrb[0].mxu0 %v3130
  %v3293 = vpop.f32.mrb[0].mxu0
  %v3294 = vadd.f32 %v3161, %v3293
  %v3295 = vpop.f32.mrb[0].mxu0
  %v3296 = vpop.f32.mrb[0].mxu0
  %v3297 = vadd.f32 %v3161, %v3296
  %v3298 = vpop.f32.mrb[0].mxu0
  %3299 = vmatprep.mubr.bf16.mxu0 0
  %3300 = vmatmul.mubr.bf16.gmra.mrb[0].mxu0 %v3131
  %v3301 = vpop.f32.mrb[0].mxu0
  %v3302 = vadd.f32 %v3161, %v3301
  %v3303 = vpop.f32.mrb[0].mxu0
  %v3304 = vpop.f32.mrb[0].mxu0
  %v3305 = vadd.f32 %v3161, %v3304
  %v3306 = vpop.f32.mrb[0].mxu0
  %3307 = vmatprep.mubr.bf16.mxu0 0
  %3308 = vmatmul.mubr.bf16.gmra.mrb[0].mxu0 %v3132
  %v3309 = vpop.f32.mrb[0].mxu0
  %v3310 = vadd.f32 %v3161, %v3309
  %v3311 = vpop.f32.mrb[0].mxu0
  %v3312 = vpop.f32.mrb[0].mxu0
  %v3313 = vadd.f32 %v3161, %v3312
  %v3314 = vpop.f32.mrb[0].mxu0
  %3315 = vmatprep.mubr.bf16.mxu0 0
  %3316 = vmatmul.mubr.bf16.gmra.mrb[0].mxu0 %v3133
  %v3317 = vpop.f32.mrb[0].mxu0
  %v3318 = vadd.f32 %v3161, %v3317
  %v3319 = vpop.f32.mrb[0].mxu0
  %v3320 = vpop.f32.mrb[0].mxu0
  %v3321 = vadd.f32 %v3161, %v3320
  %v3322 = vpop.f32.mrb[0].mxu0
  %3323 = vmatprep.mubr.bf16.mxu0 0
  %3324 = vmatmul.mubr.bf16.gmra.mrb[0].mxu0 %v3134
  %v3325 = vpop.f32.mrb[0].mxu0
  %v3326 = vadd.f32 %v3161, %v3325
  %v3327 = vpop.f32.mrb[0].mxu0
  %v3328 = vpop.f32.mrb[0].mxu0
  %v3329 = vadd.f32 %v3161, %v3328
  %v3330 = vpop.f32.mrb[0].mxu0
  %3331 = vmatprep.mubr.bf16.mxu0 0
  %3332 = vmatmul.mubr.bf16.gmra.mrb[0].mxu0 %v3135
  %v3333 = vpop.f32.mrb[0].mxu0
  %v3334 = vadd.f32 %v3161, %v3333
  %v3335 = vpop.f32.mrb[0].mxu0
  %v3336 = vpop.f32.mrb[0].mxu0
  %v3337 = vadd.f32 %v3161, %v3336
  %v3338 = vpop.f32.mrb[0].mxu0
  %3339 = vmatprep.mubr.bf16.mxu0 0
  %3340 = vmatmul.mubr.bf16.gmra.mrb[0].mxu0 %v3136
  %v3341 = vpop.f32.mrb[0].mxu0
  %v3342 = vadd.f32 %v3161, %v3341
  %v3343 = vpop.f32.mrb[0].mxu0
  %v3344 = vpop.f32.mrb[0].mxu0
  %v3345 = vadd.f32 %v3161, %v3344
  %v3346 = vpop.f32.mrb[0].mxu0
  %3347 = vmatprep.mubr.bf16.mxu0 0
  %3348 = vmatmul.mubr.bf16.gmra.mrb[0].mxu0 %v3137
  %v3349 = vpop.f32.mrb[0].mxu0
  %v3350 = vadd.f32 %v3161, %v3349
  %v3351 = vpop.f32.mrb[0].mxu0
  %v3352 = vpop.f32.mrb[0].mxu0
  %v3353 = vadd.f32 %v3161, %v3352
  %v3354 = vpop.f32.mrb[0].mxu0
  %3355 = vmatprep.mubr.bf16.mxu0 0
  %3356 = vmatmul.mubr.bf16.gmra.mrb[0].mxu0 %v3138
  %v3357 = vpop.f32.mrb[0].mxu0
  %v3358 = vadd.f32 %v3161, %v3357
  %v3359 = vpop.f32.mrb[0].mxu0
  %v3360 = vpop.f32.mrb[0].mxu0
  %v3361 = vadd.f32 %v3161, %v3360
  %v3362 = vpop.f32.mrb[0].mxu0
  %3363 = vmatprep.mubr.bf16.mxu0 0
  %3364 = vmatmul.mubr.bf16.gmra.mrb[0].mxu0 %v3139
  %v3365 = vpop.f32.mrb[0].mxu0
  %v3366 = vadd.f32 %v3161, %v3365
  %v3367 = vpop.f32.mrb[0].mxu0
  %v3368 = vpop.f32.mrb[0].mxu0
  %v3369 = vadd.f32 %v3161, %v3368
  %v3370 = vpop.f32.mrb[0].mxu0
  %3371 = vdwg.mxu0
  %v3372 = vmax.f32 %v3246, 0.0
  %v3373 = vmax.f32 %v3249, 0.0
  %v3374 = vmax.f32 %v3254, 0.0
  %v3375 = vmax.f32 %v3257, 0.0
  %v3376 = vmax.f32 %v3262, 0.0
  %v3377 = vmax.f32 %v3265, 0.0
  %v3378 = vmax.f32 %v3270, 0.0
  %v3379 = vmax.f32 %v3273, 0.0
  %v3380 = vmax.f32 %v3278, 0.0
  %v3381 = vmax.f32 %v3281, 0.0
  %v3382 = vmax.f32 %v3286, 0.0
  %v3383 = vmax.f32 %v3289, 0.0
  %v3384 = vmax.f32 %v3294, 0.0
  %v3385 = vmax.f32 %v3297, 0.0
  %v3386 = vmax.f32 %v3302, 0.0
  %v3387 = vmax.f32 %v3305, 0.0
  %v3388 = vmax.f32 %v3310, 0.0
  %v3389 = vmax.f32 %v3313, 0.0
  %v3390 = vmax.f32 %v3318, 0.0
  %v3391 = vmax.f32 %v3321, 0.0
  %v3392 = vmax.f32 %v3326, 0.0
  %v3393 = vmax.f32 %v3329, 0.0
  %v3394 = vmax.f32 %v3334, 0.0
  %v3395 = vmax.f32 %v3337, 0.0
  %v3396 = vmax.f32 %v3342, 0.0
  %v3397 = vmax.f32 %v3345, 0.0
  %v3398 = vmax.f32 %v3350, 0.0
  %v3399 = vmax.f32 %v3353, 0.0
  %v3400 = vmax.f32 %v3358, 0.0
  %v3401 = vmax.f32 %v3361, 0.0
  %v3402 = vmax.f32 %v3366, 0.0
  %v3403 = vmax.f32 %v3369, 0.0
  %v3404 = vpack.c.bf16 %v3373, %v3372
  %v3405 = vpack.c.bf16 %v3375, %v3374
  %v3406 = vpack.c.bf16 %v3377, %v3376
  %v3407 = vpack.c.bf16 %v3379, %v3378
  %v3408 = vpack.c.bf16 %v3381, %v3380
  %v3409 = vpack.c.bf16 %v3383, %v3382
  %v3410 = vpack.c.bf16 %v3385, %v3384
  %v3411 = vpack.c.bf16 %v3387, %v3386
  %v3412 = vpack.c.bf16 %v3389, %v3388
  %v3413 = vpack.c.bf16 %v3391, %v3390
  %v3414 = vpack.c.bf16 %v3393, %v3392
  %v3415 = vpack.c.bf16 %v3395, %v3394
  %v3416 = vpack.c.bf16 %v3397, %v3396
  %v3417 = vpack.c.bf16 %v3399, %v3398
  %v3418 = vpack.c.bf16 %v3401, %v3400
  %v3419 = vpack.c.bf16 %v3403, %v3402
  %v3420 = vld [vmem:[%s10] sm:$0xff]
  %v3421 = vld [vmem:[%s10 + $0x8] sm:$0xff]
  %v3422 = vld [vmem:[%s10 + $0x10] sm:$0xff]
  %v3423 = vld [vmem:[%s10 + $0x18] sm:$0xff]
  %v3424 = vld [vmem:[%s10 + $0x20] sm:$0xff]
  %v3425 = vld [vmem:[%s10 + $0x28] sm:$0xff]
  %v3426 = vld [vmem:[%s10 + $0x30] sm:$0xff]
  %v3427 = vld [vmem:[%s10 + $0x38] sm:$0xff]
  %v3428 = vld [vmem:[%s10 + $0x40] sm:$0xff]
  %v3429 = vld [vmem:[%s10 + $0x48] sm:$0xff]
  %v3430 = vld [vmem:[%s10 + $0x50] sm:$0xff]
  %v3431 = vld [vmem:[%s10 + $0x58] sm:$0xff]
  %v3432 = vld [vmem:[%s10 + $0x60] sm:$0xff]
  %v3433 = vld [vmem:[%s10 + $0x68] sm:$0xff]
  %v3434 = vld [vmem:[%s10 + $0x70] sm:$0xff]
  %v3435 = vld [vmem:[%s10 + $0x78] sm:$0xff]
  %v3436 = vld [vmem:[%s11] sm:$0x3]
  %v3438 = vlaneseq
  %v3439 = vshrl.u32 %v3438, 7
  %v3440 = vsub.s32 0, %v3439
  %v3441 = vrot.slane %v3436, %v3440
  %v3442 = vlaneseq
  %v3443 = vshrl.u32 %v3442, 7
  %v3444 = vsub.s32 1, %v3443
  %v3445 = vrot.slane %v3436, %v3444
  %v3464 = vunpack.c.l.b16 %v3420
  %v3465 = vunpack.c.h.b16 %v3420
  %v3466 = vunpack.c.l.b16 %v3421
  %v3467 = vunpack.c.h.b16 %v3421
  %v3468 = vunpack.c.l.b16 %v3422
  %v3469 = vunpack.c.h.b16 %v3422
  %v3470 = vunpack.c.l.b16 %v3423
  %v3471 = vunpack.c.h.b16 %v3423
  %v3472 = vunpack.c.l.b16 %v3424
  %v3473 = vunpack.c.h.b16 %v3424
  %v3474 = vunpack.c.l.b16 %v3425
  %v3475 = vunpack.c.h.b16 %v3425
  %v3476 = vunpack.c.l.b16 %v3426
  %v3477 = vunpack.c.h.b16 %v3426
  %v3478 = vunpack.c.l.b16 %v3427
  %v3479 = vunpack.c.h.b16 %v3427
  %v3480 = vunpack.c.l.b16 %v3428
  %v3481 = vunpack.c.h.b16 %v3428
  %v3482 = vunpack.c.l.b16 %v3429
  %v3483 = vunpack.c.h.b16 %v3429
  %v3484 = vunpack.c.l.b16 %v3430
  %v3485 = vunpack.c.h.b16 %v3430
  %v3486 = vunpack.c.l.b16 %v3431
  %v3487 = vunpack.c.h.b16 %v3431
  %v3488 = vunpack.c.l.b16 %v3432
  %v3489 = vunpack.c.h.b16 %v3432
  %v3490 = vunpack.c.l.b16 %v3433
  %v3491 = vunpack.c.h.b16 %v3433
  %v3492 = vunpack.c.l.b16 %v3434
  %v3493 = vunpack.c.h.b16 %v3434
  %v3494 = vunpack.c.l.b16 %v3435
  %v3495 = vunpack.c.h.b16 %v3435
  %v3496 = vpack.c.b16 %v3466, %v3464
  %v3497 = vpack.c.b16 %v3467, %v3465
  %v3498 = vpack.c.b16 %v3470, %v3468
  %v3499 = vpack.c.b16 %v3471, %v3469
  %v3500 = vpack.c.b16 %v3474, %v3472
  %v3501 = vpack.c.b16 %v3475, %v3473
  %v3502 = vpack.c.b16 %v3478, %v3476
  %v3503 = vpack.c.b16 %v3479, %v3477
  %v3504 = vpack.c.b16 %v3482, %v3480
  %v3505 = vpack.c.b16 %v3483, %v3481
  %v3506 = vpack.c.b16 %v3486, %v3484
  %v3507 = vpack.c.b16 %v3487, %v3485
  %v3508 = vpack.c.b16 %v3490, %v3488
  %v3509 = vpack.c.b16 %v3491, %v3489
  %v3510 = vpack.c.b16 %v3494, %v3492
  %v3511 = vpack.c.b16 %v3495, %v3493
  %3528 = vmatprep.subr.bf16.mxu0 %v3497
  %3529 = vmatpush1.bf16.msra.mxu0 %v3496
  %3530 = vmatprep.subr.bf16.mxu0 %v3499
  %3531 = vmatpush1.bf16.msra.mxu0 %v3498
  %3532 = vmatprep.subr.bf16.mxu0 %v3501
  %3533 = vmatpush1.bf16.msra.mxu0 %v3500
  %3534 = vmatprep.subr.bf16.mxu0 %v3503
  %3535 = vmatpush1.bf16.msra.mxu0 %v3502
  %3536 = vmatprep.subr.bf16.mxu0 %v3505
  %3537 = vmatpush1.bf16.msra.mxu0 %v3504
  %3538 = vmatprep.subr.bf16.mxu0 %v3507
  %3539 = vmatpush1.bf16.msra.mxu0 %v3506
  %3540 = vmatprep.subr.bf16.mxu0 %v3509
  %3541 = vmatpush1.bf16.msra.mxu0 %v3508
  %3542 = vmatprep.subr.bf16.mxu0 %v3511
  %3543 = vmatpush1.bf16.msra.mxu0 %v3510
  %3544 = vmatprep.subr.bf16.mxu0 0
  %3545 = vmatpush1.bf16.msra.mxu0 0
  %3546 = vmatprep.subr.bf16.mxu0 0
  %3547 = vmatpush1.bf16.msra.mxu0 0
  %3548 = vmatprep.subr.bf16.mxu0 0
  %3549 = vmatpush1.bf16.msra.mxu0 0
  %3550 = vmatprep.subr.bf16.mxu0 0
  %3551 = vmatpush1.bf16.msra.mxu0 0
  %3552 = vmatprep.subr.bf16.mxu0 0
  %3553 = vmatpush1.bf16.msra.mxu0 0
  %3554 = vmatprep.subr.bf16.mxu0 0
  %3555 = vmatpush1.bf16.msra.mxu0 0
  %3556 = vmatprep.subr.bf16.mxu0 0
  %3557 = vmatpush1.bf16.msra.mxu0 0
  %3558 = vmatprep.subr.bf16.mxu0 0
  %3559 = vmatpush1.bf16.msra.mxu0 0
  %3560 = vmatprep.mubr.bf16.mxu0 0
  %3561 = vmatmul.mubr.bf16.gmra.mrb[0].mxu0 %v3404
  %v3562 = vpop.f32.mrb[0].mxu0
  %v3563 = vadd.f32 %v3441, %v3562
  %v3564 = vpop.f32.mrb[0].mxu0
  %v3565 = vadd.f32 %v3445, %v3564
  %v3566 = vpop.f32.mrb[0].mxu0
  %v3567 = vadd.f32 %v3441, %v3566
  %v3568 = vpop.f32.mrb[0].mxu0
  %v3569 = vadd.f32 %v3445, %v3568
  %3570 = vmatprep.mubr.bf16.mxu0 0
  %3571 = vmatmul.mubr.bf16.gmra.mrb[0].mxu0 %v3405
  %v3572 = vpop.f32.mrb[0].mxu0
  %v3573 = vadd.f32 %v3441, %v3572
  %v3574 = vpop.f32.mrb[0].mxu0
  %v3575 = vadd.f32 %v3445, %v3574
  %v3576 = vpop.f32.mrb[0].mxu0
  %v3577 = vadd.f32 %v3441, %v3576
  %v3578 = vpop.f32.mrb[0].mxu0
  %v3579 = vadd.f32 %v3445, %v3578
  %3580 = vmatprep.mubr.bf16.mxu0 0
  %3581 = vmatmul.mubr.bf16.gmra.mrb[0].mxu0 %v3406
  %v3582 = vpop.f32.mrb[0].mxu0
  %v3583 = vadd.f32 %v3441, %v3582
  %v3584 = vpop.f32.mrb[0].mxu0
  %v3585 = vadd.f32 %v3445, %v3584
  %v3586 = vpop.f32.mrb[0].mxu0
  %v3587 = vadd.f32 %v3441, %v3586
  %v3588 = vpop.f32.mrb[0].mxu0
  %v3589 = vadd.f32 %v3445, %v3588
  %3590 = vmatprep.mubr.bf16.mxu0 0
  %3591 = vmatmul.mubr.bf16.gmra.mrb[0].mxu0 %v3407
  %v3592 = vpop.f32.mrb[0].mxu0
  %v3593 = vadd.f32 %v3441, %v3592
  %v3594 = vpop.f32.mrb[0].mxu0
  %v3595 = vadd.f32 %v3445, %v3594
  %v3596 = vpop.f32.mrb[0].mxu0
  %v3597 = vadd.f32 %v3441, %v3596
  %v3598 = vpop.f32.mrb[0].mxu0
  %v3599 = vadd.f32 %v3445, %v3598
  %3600 = vmatprep.mubr.bf16.mxu0 0
  %3601 = vmatmul.mubr.bf16.gmra.mrb[0].mxu0 %v3408
  %v3602 = vpop.f32.mrb[0].mxu0
  %v3603 = vadd.f32 %v3441, %v3602
  %v3604 = vpop.f32.mrb[0].mxu0
  %v3605 = vadd.f32 %v3445, %v3604
  %v3606 = vpop.f32.mrb[0].mxu0
  %v3607 = vadd.f32 %v3441, %v3606
  %v3608 = vpop.f32.mrb[0].mxu0
  %v3609 = vadd.f32 %v3445, %v3608
  %3610 = vmatprep.mubr.bf16.mxu0 0
  %3611 = vmatmul.mubr.bf16.gmra.mrb[0].mxu0 %v3409
  %v3612 = vpop.f32.mrb[0].mxu0
  %v3613 = vadd.f32 %v3441, %v3612
  %v3614 = vpop.f32.mrb[0].mxu0
  %v3615 = vadd.f32 %v3445, %v3614
  %v3616 = vpop.f32.mrb[0].mxu0
  %v3617 = vadd.f32 %v3441, %v3616
  %v3618 = vpop.f32.mrb[0].mxu0
  %v3619 = vadd.f32 %v3445, %v3618
  %3620 = vmatprep.mubr.bf16.mxu0 0
  %3621 = vmatmul.mubr.bf16.gmra.mrb[0].mxu0 %v3410
  %v3622 = vpop.f32.mrb[0].mxu0
  %v3623 = vadd.f32 %v3441, %v3622
  %v3624 = vpop.f32.mrb[0].mxu0
  %v3625 = vadd.f32 %v3445, %v3624
  %v3626 = vpop.f32.mrb[0].mxu0
  %v3627 = vadd.f32 %v3441, %v3626
  %v3628 = vpop.f32.mrb[0].mxu0
  %v3629 = vadd.f32 %v3445, %v3628
  %3630 = vmatprep.mubr.bf16.mxu0 0
  %3631 = vmatmul.mubr.bf16.gmra.mrb[0].mxu0 %v3411
  %v3632 = vpop.f32.mrb[0].mxu0
  %v3633 = vadd.f32 %v3441, %v3632
  %v3634 = vpop.f32.mrb[0].mxu0
  %v3635 = vadd.f32 %v3445, %v3634
  %v3636 = vpop.f32.mrb[0].mxu0
  %v3637 = vadd.f32 %v3441, %v3636
  %v3638 = vpop.f32.mrb[0].mxu0
  %v3639 = vadd.f32 %v3445, %v3638
  %3640 = vmatprep.mubr.bf16.mxu0 0
  %3641 = vmatmul.mubr.bf16.gmra.mrb[0].mxu0 %v3412
  %v3642 = vpop.f32.mrb[0].mxu0
  %v3643 = vadd.f32 %v3441, %v3642
  %v3644 = vpop.f32.mrb[0].mxu0
  %v3645 = vadd.f32 %v3445, %v3644
  %v3646 = vpop.f32.mrb[0].mxu0
  %v3647 = vadd.f32 %v3441, %v3646
  %v3648 = vpop.f32.mrb[0].mxu0
  %v3649 = vadd.f32 %v3445, %v3648
  %3650 = vmatprep.mubr.bf16.mxu0 0
  %3651 = vmatmul.mubr.bf16.gmra.mrb[0].mxu0 %v3413
  %v3652 = vpop.f32.mrb[0].mxu0
  %v3653 = vadd.f32 %v3441, %v3652
  %v3654 = vpop.f32.mrb[0].mxu0
  %v3655 = vadd.f32 %v3445, %v3654
  %v3656 = vpop.f32.mrb[0].mxu0
  %v3657 = vadd.f32 %v3441, %v3656
  %v3658 = vpop.f32.mrb[0].mxu0
  %v3659 = vadd.f32 %v3445, %v3658
  %3660 = vmatprep.mubr.bf16.mxu0 0
  %3661 = vmatmul.mubr.bf16.gmra.mrb[0].mxu0 %v3414
  %v3662 = vpop.f32.mrb[0].mxu0
  %v3663 = vadd.f32 %v3441, %v3662
  %v3664 = vpop.f32.mrb[0].mxu0
  %v3665 = vadd.f32 %v3445, %v3664
  %v3666 = vpop.f32.mrb[0].mxu0
  %v3667 = vadd.f32 %v3441, %v3666
  %v3668 = vpop.f32.mrb[0].mxu0
  %v3669 = vadd.f32 %v3445, %v3668
  %3670 = vmatprep.mubr.bf16.mxu0 0
  %3671 = vmatmul.mubr.bf16.gmra.mrb[0].mxu0 %v3415
  %v3672 = vpop.f32.mrb[0].mxu0
  %v3673 = vadd.f32 %v3441, %v3672
  %v3674 = vpop.f32.mrb[0].mxu0
  %v3675 = vadd.f32 %v3445, %v3674
  %v3676 = vpop.f32.mrb[0].mxu0
  %v3677 = vadd.f32 %v3441, %v3676
  %v3678 = vpop.f32.mrb[0].mxu0
  %v3679 = vadd.f32 %v3445, %v3678
  %3680 = vmatprep.mubr.bf16.mxu0 0
  %3681 = vmatmul.mubr.bf16.gmra.mrb[0].mxu0 %v3416
  %v3682 = vpop.f32.mrb[0].mxu0
  %v3683 = vadd.f32 %v3441, %v3682
  %v3684 = vpop.f32.mrb[0].mxu0
  %v3685 = vadd.f32 %v3445, %v3684
  %v3686 = vpop.f32.mrb[0].mxu0
  %v3687 = vadd.f32 %v3441, %v3686
  %v3688 = vpop.f32.mrb[0].mxu0
  %v3689 = vadd.f32 %v3445, %v3688
  %3690 = vmatprep.mubr.bf16.mxu0 0
  %3691 = vmatmul.mubr.bf16.gmra.mrb[0].mxu0 %v3417
  %v3692 = vpop.f32.mrb[0].mxu0
  %v3693 = vadd.f32 %v3441, %v3692
  %v3694 = vpop.f32.mrb[0].mxu0
  %v3695 = vadd.f32 %v3445, %v3694
  %v3696 = vpop.f32.mrb[0].mxu0
  %v3697 = vadd.f32 %v3441, %v3696
  %v3698 = vpop.f32.mrb[0].mxu0
  %v3699 = vadd.f32 %v3445, %v3698
  %3700 = vmatprep.mubr.bf16.mxu0 0
  %3701 = vmatmul.mubr.bf16.gmra.mrb[0].mxu0 %v3418
  %v3702 = vpop.f32.mrb[0].mxu0
  %v3703 = vadd.f32 %v3441, %v3702
  %v3704 = vpop.f32.mrb[0].mxu0
  %v3705 = vadd.f32 %v3445, %v3704
  %v3706 = vpop.f32.mrb[0].mxu0
  %v3707 = vadd.f32 %v3441, %v3706
  %v3708 = vpop.f32.mrb[0].mxu0
  %v3709 = vadd.f32 %v3445, %v3708
  %3710 = vmatprep.mubr.bf16.mxu0 0
  %3711 = vmatmul.mubr.bf16.gmra.mrb[0].mxu0 %v3419
  %v3712 = vpop.f32.mrb[0].mxu0
  %v3713 = vadd.f32 %v3441, %v3712
  %v3714 = vpop.f32.mrb[0].mxu0
  %v3715 = vadd.f32 %v3445, %v3714
  %v3716 = vpop.f32.mrb[0].mxu0
  %v3717 = vadd.f32 %v3441, %v3716
  %v3718 = vpop.f32.mrb[0].mxu0
  %v3719 = vadd.f32 %v3445, %v3718
  %3720 = vdwg.mxu0
  %v3721 = vmax.f32 %v3563, 0.0
  %v3722 = vmax.f32 %v3565, 0.0
  %v3723 = vmax.f32 %v3567, 0.0
  %v3724 = vmax.f32 %v3569, 0.0
  %v3725 = vmax.f32 %v3573, 0.0
  %v3726 = vmax.f32 %v3575, 0.0
  %v3727 = vmax.f32 %v3577, 0.0
  %v3728 = vmax.f32 %v3579, 0.0
  %v3729 = vmax.f32 %v3583, 0.0
  %v3730 = vmax.f32 %v3585, 0.0
  %v3731 = vmax.f32 %v3587, 0.0
  %v3732 = vmax.f32 %v3589, 0.0
  %v3733 = vmax.f32 %v3593, 0.0
  %v3734 = vmax.f32 %v3595, 0.0
  %v3735 = vmax.f32 %v3597, 0.0
  %v3736 = vmax.f32 %v3599, 0.0
  %v3737 = vmax.f32 %v3603, 0.0
  %v3738 = vmax.f32 %v3605, 0.0
  %v3739 = vmax.f32 %v3607, 0.0
  %v3740 = vmax.f32 %v3609, 0.0
  %v3741 = vmax.f32 %v3613, 0.0
  %v3742 = vmax.f32 %v3615, 0.0
  %v3743 = vmax.f32 %v3617, 0.0
  %v3744 = vmax.f32 %v3619, 0.0
  %v3745 = vmax.f32 %v3623, 0.0
  %v3746 = vmax.f32 %v3625, 0.0
  %v3747 = vmax.f32 %v3627, 0.0
  %v3748 = vmax.f32 %v3629, 0.0
  %v3749 = vmax.f32 %v3633, 0.0
  %v3750 = vmax.f32 %v3635, 0.0
  %v3751 = vmax.f32 %v3637, 0.0
  %v3752 = vmax.f32 %v3639, 0.0
  %v3753 = vmax.f32 %v3643, 0.0
  %v3754 = vmax.f32 %v3645, 0.0
  %v3755 = vmax.f32 %v3647, 0.0
  %v3756 = vmax.f32 %v3649, 0.0
  %v3757 = vmax.f32 %v3653, 0.0
  %v3758 = vmax.f32 %v3655, 0.0
  %v3759 = vmax.f32 %v3657, 0.0
  %v3760 = vmax.f32 %v3659, 0.0
  %v3761 = vmax.f32 %v3663, 0.0
  %v3762 = vmax.f32 %v3665, 0.0
  %v3763 = vmax.f32 %v3667, 0.0
  %v3764 = vmax.f32 %v3669, 0.0
  %v3765 = vmax.f32 %v3673, 0.0
  %v3766 = vmax.f32 %v3675, 0.0
  %v3767 = vmax.f32 %v3677, 0.0
  %v3768 = vmax.f32 %v3679, 0.0
  %v3769 = vmax.f32 %v3683, 0.0
  %v3770 = vmax.f32 %v3685, 0.0
  %v3771 = vmax.f32 %v3687, 0.0
  %v3772 = vmax.f32 %v3689, 0.0
  %v3773 = vmax.f32 %v3693, 0.0
  %v3774 = vmax.f32 %v3695, 0.0
  %v3775 = vmax.f32 %v3697, 0.0
  %v3776 = vmax.f32 %v3699, 0.0
  %v3777 = vmax.f32 %v3703, 0.0
  %v3778 = vmax.f32 %v3705, 0.0
  %v3779 = vmax.f32 %v3707, 0.0
  %v3780 = vmax.f32 %v3709, 0.0
  %v3781 = vmax.f32 %v3713, 0.0
  %v3782 = vmax.f32 %v3715, 0.0
  %v3783 = vmax.f32 %v3717, 0.0
  %v3784 = vmax.f32 %v3719, 0.0
  %v3785 = vpack.c.bf16 %v3723, %v3721
  %v3786 = vpack.c.bf16 %v3724, %v3722
  %v3787 = vpack.c.bf16 %v3727, %v3725
  %v3788 = vpack.c.bf16 %v3728, %v3726
  %v3789 = vpack.c.bf16 %v3731, %v3729
  %v3790 = vpack.c.bf16 %v3732, %v3730
  %v3791 = vpack.c.bf16 %v3735, %v3733
  %v3792 = vpack.c.bf16 %v3736, %v3734
  %v3793 = vpack.c.bf16 %v3739, %v3737
  %v3794 = vpack.c.bf16 %v3740, %v3738
  %v3795 = vpack.c.bf16 %v3743, %v3741
  %v3796 = vpack.c.bf16 %v3744, %v3742
  %v3797 = vpack.c.bf16 %v3747, %v3745
  %v3798 = vpack.c.bf16 %v3748, %v3746
  %v3799 = vpack.c.bf16 %v3751, %v3749
  %v3800 = vpack.c.bf16 %v3752, %v3750
  %v3801 = vpack.c.bf16 %v3755, %v3753
  %v3802 = vpack.c.bf16 %v3756, %v3754
  %v3803 = vpack.c.bf16 %v3759, %v3757
  %v3804 = vpack.c.bf16 %v3760, %v3758
  %v3805 = vpack.c.bf16 %v3763, %v3761
  %v3806 = vpack.c.bf16 %v3764, %v3762
  %v3807 = vpack.c.bf16 %v3767, %v3765
  %v3808 = vpack.c.bf16 %v3768, %v3766
  %v3809 = vpack.c.bf16 %v3771, %v3769
  %v3810 = vpack.c.bf16 %v3772, %v3770
  %v3811 = vpack.c.bf16 %v3775, %v3773
  %v3812 = vpack.c.bf16 %v3776, %v3774
  %v3813 = vpack.c.bf16 %v3779, %v3777
  %v3814 = vpack.c.bf16 %v3780, %v3778
  %v3815 = vpack.c.bf16 %v3783, %v3781
  %v3816 = vpack.c.bf16 %v3784, %v3782
  %v3817 = vld [vmem:[%s12] sm:$0xff]
  %v3818 = vld [vmem:[%s12 + $0x8] sm:$0xff]
  %v3819 = vld [vmem:[%s12 + $0x10] sm:$0xff]
  %v3820 = vld [vmem:[%s12 + $0x18] sm:$0xf]
  %v3821 = vld [vmem:[%s12 + $0x1c] sm:$0xff]
  %v3822 = vld [vmem:[%s12 + $0x24] sm:$0xff]
  %v3823 = vld [vmem:[%s12 + $0x2c] sm:$0xff]
  %v3824 = vld [vmem:[%s12 + $0x34] sm:$0xf]
  %v3825 = vld [vmem:[%s12 + $0x38] sm:$0xff]
  %v3826 = vld [vmem:[%s12 + $0x40] sm:$0xff]
  %v3827 = vld [vmem:[%s12 + $0x48] sm:$0xff]
  %v3828 = vld [vmem:[%s12 + $0x50] sm:$0xf]
  %v3829 = vld [vmem:[%s12 + $0x54] sm:$0xff]
  %v3830 = vld [vmem:[%s12 + $0x5c] sm:$0xff]
  %v3831 = vld [vmem:[%s12 + $0x64] sm:$0xff]
  %v3832 = vld [vmem:[%s12 + $0x6c] sm:$0xf]
  %v3833 = vld [vmem:[%s12 + $0x70] sm:$0xff]
  %v3834 = vld [vmem:[%s12 + $0x78] sm:$0xff]
  %v3835 = vld [vmem:[%s12 + $0x80] sm:$0xff]
  %v3836 = vld [vmem:[%s12 + $0x88] sm:$0xf]
  %v3837 = vld [vmem:[%s12 + $0x8c] sm:$0xff]
  %v3838 = vld [vmem:[%s12 + $0x94] sm:$0xff]
  %v3839 = vld [vmem:[%s12 + $0x9c] sm:$0xff]
  %v3840 = vld [vmem:[%s12 + $0xa4] sm:$0xf]
  %v3841 = vld [vmem:[%s12 + $0xa8] sm:$0xff]
  %v3842 = vld [vmem:[%s12 + $0xb0] sm:$0xff]
  %v3843 = vld [vmem:[%s12 + $0xb8] sm:$0xff]
  %v3844 = vld [vmem:[%s12 + $0xc0] sm:$0xf]
  %v3845 = vld [vmem:[%s12 + $0xc4] sm:$0xff]
  %v3846 = vld [vmem:[%s12 + $0xcc] sm:$0xff]
  %v3847 = vld [vmem:[%s12 + $0xd4] sm:$0xff]
  %v3848 = vld [vmem:[%s12 + $0xdc] sm:$0xf]
  %v3849 = vld [vmem:[%s12 + $0xe0] sm:$0xff]
  %v3850 = vld [vmem:[%s12 + $0xe8] sm:$0xff]
  %v3851 = vld [vmem:[%s12 + $0xf0] sm:$0xff]
  %v3852 = vld [vmem:[%s12 + $0xf8] sm:$0xf]
  %v3853 = vld [vmem:[%s12 + $0xfc] sm:$0xff]
  %v3854 = vld [vmem:[%s12 + $0x104] sm:$0xff]
  %v3855 = vld [vmem:[%s12 + $0x10c] sm:$0xff]
  %v3856 = vld [vmem:[%s12 + $0x114] sm:$0xf]
  %v3857 = vld [vmem:[%s12 + $0x118] sm:$0xff]
  %v3858 = vld [vmem:[%s12 + $0x120] sm:$0xff]
  %v3859 = vld [vmem:[%s12 + $0x128] sm:$0xff]
  %v3860 = vld [vmem:[%s12 + $0x130] sm:$0xf]
  %v3861 = vld [vmem:[%s12 + $0x134] sm:$0xff]
  %v3862 = vld [vmem:[%s12 + $0x13c] sm:$0xff]
  %v3863 = vld [vmem:[%s12 + $0x144] sm:$0xff]
  %v3864 = vld [vmem:[%s12 + $0x14c] sm:$0xf]
  %v3865 = vld [vmem:[%s12 + $0x150] sm:$0xff]
  %v3866 = vld [vmem:[%s12 + $0x158] sm:$0xff]
  %v3867 = vld [vmem:[%s12 + $0x160] sm:$0xff]
  %v3868 = vld [vmem:[%s12 + $0x168] sm:$0xf]
  %v3869 = vld [vmem:[%s12 + $0x16c] sm:$0xff]
  %v3870 = vld [vmem:[%s12 + $0x174] sm:$0xff]
  %v3871 = vld [vmem:[%s12 + $0x17c] sm:$0xff]
  %v3872 = vld [vmem:[%s12 + $0x184] sm:$0xf]
  %v3873 = vld [vmem:[%s12 + $0x188] sm:$0xff]
  %v3874 = vld [vmem:[%s12 + $0x190] sm:$0xff]
  %v3875 = vld [vmem:[%s12 + $0x198] sm:$0xff]
  %v3876 = vld [vmem:[%s12 + $0x1a0] sm:$0xf]
  %v3877 = vld [vmem:[%s12 + $0x1a4] sm:$0xff]
  %v3878 = vld [vmem:[%s12 + $0x1ac] sm:$0xff]
  %v3879 = vld [vmem:[%s12 + $0x1b4] sm:$0xff]
  %v3880 = vld [vmem:[%s12 + $0x1bc] sm:$0xf]
  %v3881 = vld [vmem:[%s12 + $0x1c0] sm:$0xff]
  %v3882 = vld [vmem:[%s12 + $0x1c8] sm:$0xff]
  %v3883 = vld [vmem:[%s12 + $0x1d0] sm:$0xff]
  %v3884 = vld [vmem:[%s12 + $0x1d8] sm:$0xf]
  %v3885 = vld [vmem:[%s12 + $0x1dc] sm:$0xff]
  %v3886 = vld [vmem:[%s12 + $0x1e4] sm:$0xff]
  %v3887 = vld [vmem:[%s12 + $0x1ec] sm:$0xff]
  %v3888 = vld [vmem:[%s12 + $0x1f4] sm:$0xf]
  %v3889 = vld [vmem:[%s12 + $0x1f8] sm:$0xff]
  %v3890 = vld [vmem:[%s12 + $0x200] sm:$0xff]
  %v3891 = vld [vmem:[%s12 + $0x208] sm:$0xff]
  %v3892 = vld [vmem:[%s12 + $0x210] sm:$0xf]
  %v3893 = vld [vmem:[%s12 + $0x214] sm:$0xff]
  %v3894 = vld [vmem:[%s12 + $0x21c] sm:$0xff]
  %v3895 = vld [vmem:[%s12 + $0x224] sm:$0xff]
  %v3896 = vld [vmem:[%s12 + $0x22c] sm:$0xf]
  %v3897 = vld [vmem:[%s12 + $0x230] sm:$0xff]
  %v3898 = vld [vmem:[%s12 + $0x238] sm:$0xff]
  %v3899 = vld [vmem:[%s12 + $0x240] sm:$0xff]
  %v3900 = vld [vmem:[%s12 + $0x248] sm:$0xf]
  %v3901 = vld [vmem:[%s12 + $0x24c] sm:$0xff]
  %v3902 = vld [vmem:[%s12 + $0x254] sm:$0xff]
  %v3903 = vld [vmem:[%s12 + $0x25c] sm:$0xff]
  %v3904 = vld [vmem:[%s12 + $0x264] sm:$0xf]
  %v3905 = vld [vmem:[%s12 + $0x268] sm:$0xff]
  %v3906 = vld [vmem:[%s12 + $0x270] sm:$0xff]
  %v3907 = vld [vmem:[%s12 + $0x278] sm:$0xff]
  %v3908 = vld [vmem:[%s12 + $0x280] sm:$0xf]
  %v3909 = vld [vmem:[%s12 + $0x284] sm:$0xff]
  %v3910 = vld [vmem:[%s12 + $0x28c] sm:$0xff]
  %v3911 = vld [vmem:[%s12 + $0x294] sm:$0xff]
  %v3912 = vld [vmem:[%s12 + $0x29c] sm:$0xf]
  %v3913 = vld [vmem:[%s12 + $0x2a0] sm:$0xff]
  %v3914 = vld [vmem:[%s12 + $0x2a8] sm:$0xff]
  %v3915 = vld [vmem:[%s12 + $0x2b0] sm:$0xff]
  %v3916 = vld [vmem:[%s12 + $0x2b8] sm:$0xf]
  %v3917 = vld [vmem:[%s12 + $0x2bc] sm:$0xff]
  %v3918 = vld [vmem:[%s12 + $0x2c4] sm:$0xff]
  %v3919 = vld [vmem:[%s12 + $0x2cc] sm:$0xff]
  %v3920 = vld [vmem:[%s12 + $0x2d4] sm:$0xf]
  %v3921 = vld [vmem:[%s12 + $0x2d8] sm:$0xff]
  %v3922 = vld [vmem:[%s12 + $0x2e0] sm:$0xff]
  %v3923 = vld [vmem:[%s12 + $0x2e8] sm:$0xff]
  %v3924 = vld [vmem:[%s12 + $0x2f0] sm:$0xf]
  %v3925 = vld [vmem:[%s12 + $0x2f4] sm:$0xff]
  %v3926 = vld [vmem:[%s12 + $0x2fc] sm:$0xff]
  %v3927 = vld [vmem:[%s12 + $0x304] sm:$0xff]
  %v3928 = vld [vmem:[%s12 + $0x30c] sm:$0xf]
  %v3929 = vld [vmem:[%s12 + $0x310] sm:$0xff]
  %v3930 = vld [vmem:[%s12 + $0x318] sm:$0xff]
  %v3931 = vld [vmem:[%s12 + $0x320] sm:$0xff]
  %v3932 = vld [vmem:[%s12 + $0x328] sm:$0xf]
  %v3933 = vld [vmem:[%s12 + $0x32c] sm:$0xff]
  %v3934 = vld [vmem:[%s12 + $0x334] sm:$0xff]
  %v3935 = vld [vmem:[%s12 + $0x33c] sm:$0xff]
  %v3936 = vld [vmem:[%s12 + $0x344] sm:$0xf]
  %v3937 = vld [vmem:[%s12 + $0x348] sm:$0xff]
  %v3938 = vld [vmem:[%s12 + $0x350] sm:$0xff]
  %v3939 = vld [vmem:[%s12 + $0x358] sm:$0xff]
  %v3940 = vld [vmem:[%s12 + $0x360] sm:$0xf]
  %v3941 = vld [vmem:[%s12 + $0x364] sm:$0xff]
  %v3942 = vld [vmem:[%s12 + $0x36c] sm:$0xff]
  %v3943 = vld [vmem:[%s12 + $0x374] sm:$0xff]
  %v3944 = vld [vmem:[%s12 + $0x37c] sm:$0xf]
  %v3945 = vld [vmem:[%s13] sm:$0x7f]
  %v3947 = vlaneseq
  %v3948 = vshrl.u32 %v3947, 7
  %v3949 = vsub.s32 0, %v3948
  %v3950 = vrot.slane %v3945, %v3949
  %v3951 = vlaneseq
  %v3952 = vshrl.u32 %v3951, 7
  %v3953 = vsub.s32 1, %v3952
  %v3954 = vrot.slane %v3945, %v3953
  %v3955 = vlaneseq
  %v3956 = vshrl.u32 %v3955, 7
  %v3957 = vsub.s32 2, %v3956
  %v3958 = vrot.slane %v3945, %v3957
  %v3959 = vlaneseq
  %v3960 = vshrl.u32 %v3959, 7
  %v3961 = vsub.s32 3, %v3960
  %v3962 = vrot.slane %v3945, %v3961
  %v3963 = vlaneseq
  %v3964 = vshrl.u32 %v3963, 7
  %v3965 = vsub.s32 4, %v3964
  %v3966 = vrot.slane %v3945, %v3965
  %v3967 = vlaneseq
  %v3968 = vshrl.u32 %v3967, 7
  %v3969 = vsub.s32 5, %v3968
  %v3970 = vrot.slane %v3945, %v3969
  %v3971 = vlaneseq
  %v3972 = vshrl.u32 %v3971, 7
  %v3973 = vsub.s32 6, %v3972
  %v3974 = vrot.slane %v3945, %v3973
  %v4110 = vunpack.c.l.b16 %v3817
  %v4111 = vunpack.c.h.b16 %v3817
  %v4112 = vunpack.c.l.b16 %v3818
  %v4113 = vunpack.c.h.b16 %v3818
  %v4114 = vunpack.c.l.b16 %v3819
  %v4115 = vunpack.c.h.b16 %v3819
  %v4116 = vunpack.c.l.b16 %v3820
  %v4117 = vunpack.c.l.b16 %v3821
  %v4118 = vunpack.c.h.b16 %v3821
  %v4119 = vunpack.c.l.b16 %v3822
  %v4120 = vunpack.c.h.b16 %v3822
  %v4121 = vunpack.c.l.b16 %v3823
  %v4122 = vunpack.c.h.b16 %v3823
  %v4123 = vunpack.c.l.b16 %v3824
  %v4124 = vunpack.c.l.b16 %v3825
  %v4125 = vunpack.c.h.b16 %v3825
  %v4126 = vunpack.c.l.b16 %v3826
  %v4127 = vunpack.c.h.b16 %v3826
  %v4128 = vunpack.c.l.b16 %v3827
  %v4129 = vunpack.c.h.b16 %v3827
  %v4130 = vunpack.c.l.b16 %v3828
  %v4131 = vunpack.c.l.b16 %v3829
  %v4132 = vunpack.c.h.b16 %v3829
  %v4133 = vunpack.c.l.b16 %v3830
  %v4134 = vunpack.c.h.b16 %v3830
  %v4135 = vunpack.c.l.b16 %v3831
  %v4136 = vunpack.c.h.b16 %v3831
  %v4137 = vunpack.c.l.b16 %v3832
  %v4138 = vunpack.c.l.b16 %v3833
  %v4139 = vunpack.c.h.b16 %v3833
  %v4140 = vunpack.c.l.b16 %v3834
  %v4141 = vunpack.c.h.b16 %v3834
  %v4142 = vunpack.c.l.b16 %v3835
  %v4143 = vunpack.c.h.b16 %v3835
  %v4144 = vunpack.c.l.b16 %v3836
  %v4145 = vunpack.c.l.b16 %v3837
  %v4146 = vunpack.c.h.b16 %v3837
  %v4147 = vunpack.c.l.b16 %v3838
  %v4148 = vunpack.c.h.b16 %v3838
  %v4149 = vunpack.c.l.b16 %v3839
  %v4150 = vunpack.c.h.b16 %v3839
  %v4151 = vunpack.c.l.b16 %v3840
  %v4152 = vunpack.c.l.b16 %v3841
  %v4153 = vunpack.c.h.b16 %v3841
  %v4154 = vunpack.c.l.b16 %v3842
  %v4155 = vunpack.c.h.b16 %v3842
  %v4156 = vunpack.c.l.b16 %v3843
  %v4157 = vunpack.c.h.b16 %v3843
  %v4158 = vunpack.c.l.b16 %v3844
  %v4159 = vunpack.c.l.b16 %v3845
  %v4160 = vunpack.c.h.b16 %v3845
  %v4161 = vunpack.c.l.b16 %v3846
  %v4162 = vunpack.c.h.b16 %v3846
  %v4163 = vunpack.c.l.b16 %v3847
  %v4164 = vunpack.c.h.b16 %v3847
  %v4165 = vunpack.c.l.b16 %v3848
  %v4166 = vunpack.c.l.b16 %v3849
  %v4167 = vunpack.c.h.b16 %v3849
  %v4168 = vunpack.c.l.b16 %v3850
  %v4169 = vunpack.c.h.b16 %v3850
  %v4170 = vunpack.c.l.b16 %v3851
  %v4171 = vunpack.c.h.b16 %v3851
  %v4172 = vunpack.c.l.b16 %v3852
  %v4173 = vunpack.c.l.b16 %v3853
  %v4174 = vunpack.c.h.b16 %v3853
  %v4175 = vunpack.c.l.b16 %v3854
  %v4176 = vunpack.c.h.b16 %v3854
  %v4177 = vunpack.c.l.b16 %v3855
  %v4178 = vunpack.c.h.b16 %v3855
  %v4179 = vunpack.c.l.b16 %v3856
  %v4180 = vunpack.c.l.b16 %v3857
  %v4181 = vunpack.c.h.b16 %v3857
  %v4182 = vunpack.c.l.b16 %v3858
  %v4183 = vunpack.c.h.b16 %v3858
  %v4184 = vunpack.c.l.b16 %v3859
  %v4185 = vunpack.c.h.b16 %v3859
  %v4186 = vunpack.c.l.b16 %v3860
  %v4187 = vunpack.c.l.b16 %v3861
  %v4188 = vunpack.c.h.b16 %v3861
  %v4189 = vunpack.c.l.b16 %v3862
  %v4190 = vunpack.c.h.b16 %v3862
  %v4191 = vunpack.c.l.b16 %v3863
  %v4192 = vunpack.c.h.b16 %v3863
  %v4193 = vunpack.c.l.b16 %v3864
  %v4194 = vunpack.c.l.b16 %v3865
  %v4195 = vunpack.c.h.b16 %v3865
  %v4196 = vunpack.c.l.b16 %v3866
  %v4197 = vunpack.c.h.b16 %v3866
  %v4198 = vunpack.c.l.b16 %v3867
  %v4199 = vunpack.c.h.b16 %v3867
  %v4200 = vunpack.c.l.b16 %v3868
  %v4201 = vunpack.c.l.b16 %v3869
  %v4202 = vunpack.c.h.b16 %v3869
  %v4203 = vunpack.c.l.b16 %v3870
  %v4204 = vunpack.c.h.b16 %v3870
  %v4205 = vunpack.c.l.b16 %v3871
  %v4206 = vunpack.c.h.b16 %v3871
  %v4207 = vunpack.c.l.b16 %v3872
  %v4208 = vunpack.c.l.b16 %v3873
  %v4209 = vunpack.c.h.b16 %v3873
  %v4210 = vunpack.c.l.b16 %v3874
  %v4211 = vunpack.c.h.b16 %v3874
  %v4212 = vunpack.c.l.b16 %v3875
  %v4213 = vunpack.c.h.b16 %v3875
  %v4214 = vunpack.c.l.b16 %v3876
  %v4215 = vunpack.c.l.b16 %v3877
  %v4216 = vunpack.c.h.b16 %v3877
  %v4217 = vunpack.c.l.b16 %v3878
  %v4218 = vunpack.c.h.b16 %v3878
  %v4219 = vunpack.c.l.b16 %v3879
  %v4220 = vunpack.c.h.b16 %v3879
  %v4221 = vunpack.c.l.b16 %v3880
  %v4222 = vunpack.c.l.b16 %v3881
  %v4223 = vunpack.c.h.b16 %v3881
  %v4224 = vunpack.c.l.b16 %v3882
  %v4225 = vunpack.c.h.b16 %v3882
  %v4226 = vunpack.c.l.b16 %v3883
  %v4227 = vunpack.c.h.b16 %v3883
  %v4228 = vunpack.c.l.b16 %v3884
  %v4229 = vunpack.c.l.b16 %v3885
  %v4230 = vunpack.c.h.b16 %v3885
  %v4231 = vunpack.c.l.b16 %v3886
  %v4232 = vunpack.c.h.b16 %v3886
  %v4233 = vunpack.c.l.b16 %v3887
  %v4234 = vunpack.c.h.b16 %v3887
  %v4235 = vunpack.c.l.b16 %v3888
  %v4236 = vunpack.c.l.b16 %v3889
  %v4237 = vunpack.c.h.b16 %v3889
  %v4238 = vunpack.c.l.b16 %v3890
  %v4239 = vunpack.c.h.b16 %v3890
  %v4240 = vunpack.c.l.b16 %v3891
  %v4241 = vunpack.c.h.b16 %v3891
  %v4242 = vunpack.c.l.b16 %v3892
  %v4243 = vunpack.c.l.b16 %v3893
  %v4244 = vunpack.c.h.b16 %v3893
  %v4245 = vunpack.c.l.b16 %v3894
  %v4246 = vunpack.c.h.b16 %v3894
  %v4247 = vunpack.c.l.b16 %v3895
  %v4248 = vunpack.c.h.b16 %v3895
  %v4249 = vunpack.c.l.b16 %v3896
  %v4250 = vunpack.c.l.b16 %v3897
  %v4251 = vunpack.c.h.b16 %v3897
  %v4252 = vunpack.c.l.b16 %v3898
  %v4253 = vunpack.c.h.b16 %v3898
  %v4254 = vunpack.c.l.b16 %v3899
  %v4255 = vunpack.c.h.b16 %v3899
  %v4256 = vunpack.c.l.b16 %v3900
  %v4257 = vunpack.c.l.b16 %v3901
  %v4258 = vunpack.c.h.b16 %v3901
  %v4259 = vunpack.c.l.b16 %v3902
  %v4260 = vunpack.c.h.b16 %v3902
  %v4261 = vunpack.c.l.b16 %v3903
  %v4262 = vunpack.c.h.b16 %v3903
  %v4263 = vunpack.c.l.b16 %v3904
  %v4264 = vunpack.c.l.b16 %v3905
  %v4265 = vunpack.c.h.b16 %v3905
  %v4266 = vunpack.c.l.b16 %v3906
  %v4267 = vunpack.c.h.b16 %v3906
  %v4268 = vunpack.c.l.b16 %v3907
  %v4269 = vunpack.c.h.b16 %v3907
  %v4270 = vunpack.c.l.b16 %v3908
  %v4271 = vunpack.c.l.b16 %v3909
  %v4272 = vunpack.c.h.b16 %v3909
  %v4273 = vunpack.c.l.b16 %v3910
  %v4274 = vunpack.c.h.b16 %v3910
  %v4275 = vunpack.c.l.b16 %v3911
  %v4276 = vunpack.c.h.b16 %v3911
  %v4277 = vunpack.c.l.b16 %v3912
  %v4278 = vunpack.c.l.b16 %v3913
  %v4279 = vunpack.c.h.b16 %v3913
  %v4280 = vunpack.c.l.b16 %v3914
  %v4281 = vunpack.c.h.b16 %v3914
  %v4282 = vunpack.c.l.b16 %v3915
  %v4283 = vunpack.c.h.b16 %v3915
  %v4284 = vunpack.c.l.b16 %v3916
  %v4285 = vunpack.c.l.b16 %v3917
  %v4286 = vunpack.c.h.b16 %v3917
  %v4287 = vunpack.c.l.b16 %v3918
  %v4288 = vunpack.c.h.b16 %v3918
  %v4289 = vunpack.c.l.b16 %v3919
  %v4290 = vunpack.c.h.b16 %v3919
  %v4291 = vunpack.c.l.b16 %v3920
  %v4292 = vunpack.c.l.b16 %v3921
  %v4293 = vunpack.c.h.b16 %v3921
  %v4294 = vunpack.c.l.b16 %v3922
  %v4295 = vunpack.c.h.b16 %v3922
  %v4296 = vunpack.c.l.b16 %v3923
  %v4297 = vunpack.c.h.b16 %v3923
  %v4298 = vunpack.c.l.b16 %v3924
  %v4299 = vunpack.c.l.b16 %v3925
  %v4300 = vunpack.c.h.b16 %v3925
  %v4301 = vunpack.c.l.b16 %v3926
  %v4302 = vunpack.c.h.b16 %v3926
  %v4303 = vunpack.c.l.b16 %v3927
  %v4304 = vunpack.c.h.b16 %v3927
  %v4305 = vunpack.c.l.b16 %v3928
  %v4306 = vunpack.c.l.b16 %v3929
  %v4307 = vunpack.c.h.b16 %v3929
  %v4308 = vunpack.c.l.b16 %v3930
  %v4309 = vunpack.c.h.b16 %v3930
  %v4310 = vunpack.c.l.b16 %v3931
  %v4311 = vunpack.c.h.b16 %v3931
  %v4312 = vunpack.c.l.b16 %v3932
  %v4313 = vunpack.c.l.b16 %v3933
  %v4314 = vunpack.c.h.b16 %v3933
  %v4315 = vunpack.c.l.b16 %v3934
  %v4316 = vunpack.c.h.b16 %v3934
  %v4317 = vunpack.c.l.b16 %v3935
  %v4318 = vunpack.c.h.b16 %v3935
  %v4319 = vunpack.c.l.b16 %v3936
  %v4320 = vunpack.c.l.b16 %v3937
  %v4321 = vunpack.c.h.b16 %v3937
  %v4322 = vunpack.c.l.b16 %v3938
  %v4323 = vunpack.c.h.b16 %v3938
  %v4324 = vunpack.c.l.b16 %v3939
  %v4325 = vunpack.c.h.b16 %v3939
  %v4326 = vunpack.c.l.b16 %v3940
  %v4327 = vunpack.c.l.b16 %v3941
  %v4328 = vunpack.c.h.b16 %v3941
  %v4329 = vunpack.c.l.b16 %v3942
  %v4330 = vunpack.c.h.b16 %v3942
  %v4331 = vunpack.c.l.b16 %v3943
  %v4332 = vunpack.c.h.b16 %v3943
  %v4333 = vunpack.c.l.b16 %v3944
  %v4334 = vpack.c.b16 %v4117, %v4110
  %v4335 = vpack.c.b16 %v4118, %v4111
  %v4336 = vpack.c.b16 %v4119, %v4112
  %v4337 = vpack.c.b16 %v4120, %v4113
  %v4338 = vpack.c.b16 %v4121, %v4114
  %v4339 = vpack.c.b16 %v4122, %v4115
  %v4340 = vpack.c.b16 %v4123, %v4116
  %v4341 = vpack.c.b16 %v4131, %v4124
  %v4342 = vpack.c.b16 %v4132, %v4125
  %v4343 = vpack.c.b16 %v4133, %v4126
  %v4344 = vpack.c.b16 %v4134, %v4127
  %v4345 = vpack.c.b16 %v4135, %v4128
  %v4346 = vpack.c.b16 %v4136, %v4129
  %v4347 = vpack.c.b16 %v4137, %v4130
  %v4348 = vpack.c.b16 %v4145, %v4138
  %v4349 = vpack.c.b16 %v4146, %v4139
  %v4350 = vpack.c.b16 %v4147, %v4140
  %v4351 = vpack.c.b16 %v4148, %v4141
  %v4352 = vpack.c.b16 %v4149, %v4142
  %v4353 = vpack.c.b16 %v4150, %v4143
  %v4354 = vpack.c.b16 %v4151, %v4144
  %v4355 = vpack.c.b16 %v4159, %v4152
  %v4356 = vpack.c.b16 %v4160, %v4153
  %v4357 = vpack.c.b16 %v4161, %v4154
  %v4358 = vpack.c.b16 %v4162, %v4155
  %v4359 = vpack.c.b16 %v4163, %v4156
  %v4360 = vpack.c.b16 %v4164, %v4157
  %v4361 = vpack.c.b16 %v4165, %v4158
  %v4362 = vpack.c.b16 %v4173, %v4166
  %v4363 = vpack.c.b16 %v4174, %v4167
  %v4364 = vpack.c.b16 %v4175, %v4168
  %v4365 = vpack.c.b16 %v4176, %v4169
  %v4366 = vpack.c.b16 %v4177, %v4170
  %v4367 = vpack.c.b16 %v4178, %v4171
  %v4368 = vpack.c.b16 %v4179, %v4172
  %v4369 = vpack.c.b16 %v4187, %v4180
  %v4370 = vpack.c.b16 %v4188, %v4181
  %v4371 = vpack.c.b16 %v4189, %v4182
  %v4372 = vpack.c.b16 %v4190, %v4183
  %v4373 = vpack.c.b16 %v4191, %v4184
  %v4374 = vpack.c.b16 %v4192, %v4185
  %v4375 = vpack.c.b16 %v4193, %v4186
  %v4376 = vpack.c.b16 %v4201, %v4194
  %v4377 = vpack.c.b16 %v4202, %v4195
  %v4378 = vpack.c.b16 %v4203, %v4196
  %v4379 = vpack.c.b16 %v4204, %v4197
  %v4380 = vpack.c.b16 %v4205, %v4198
  %v4381 = vpack.c.b16 %v4206, %v4199
  %v4382 = vpack.c.b16 %v4207, %v4200
  %v4383 = vpack.c.b16 %v4215, %v4208
  %v4384 = vpack.c.b16 %v4216, %v4209
  %v4385 = vpack.c.b16 %v4217, %v4210
  %v4386 = vpack.c.b16 %v4218, %v4211
  %v4387 = vpack.c.b16 %v4219, %v4212
  %v4388 = vpack.c.b16 %v4220, %v4213
  %v4389 = vpack.c.b16 %v4221, %v4214
  %v4390 = vpack.c.b16 %v4229, %v4222
  %v4391 = vpack.c.b16 %v4230, %v4223
  %v4392 = vpack.c.b16 %v4231, %v4224
  %v4393 = vpack.c.b16 %v4232, %v4225
  %v4394 = vpack.c.b16 %v4233, %v4226
  %v4395 = vpack.c.b16 %v4234, %v4227
  %v4396 = vpack.c.b16 %v4235, %v4228
  %v4397 = vpack.c.b16 %v4243, %v4236
  %v4398 = vpack.c.b16 %v4244, %v4237
  %v4399 = vpack.c.b16 %v4245, %v4238
  %v4400 = vpack.c.b16 %v4246, %v4239
  %v4401 = vpack.c.b16 %v4247, %v4240
  %v4402 = vpack.c.b16 %v4248, %v4241
  %v4403 = vpack.c.b16 %v4249, %v4242
  %v4404 = vpack.c.b16 %v4257, %v4250
  %v4405 = vpack.c.b16 %v4258, %v4251
  %v4406 = vpack.c.b16 %v4259, %v4252
  %v4407 = vpack.c.b16 %v4260, %v4253
  %v4408 = vpack.c.b16 %v4261, %v4254
  %v4409 = vpack.c.b16 %v4262, %v4255
  %v4410 = vpack.c.b16 %v4263, %v4256
  %v4411 = vpack.c.b16 %v4271, %v4264
  %v4412 = vpack.c.b16 %v4272, %v4265
  %v4413 = vpack.c.b16 %v4273, %v4266
  %v4414 = vpack.c.b16 %v4274, %v4267
  %v4415 = vpack.c.b16 %v4275, %v4268
  %v4416 = vpack.c.b16 %v4276, %v4269
  %v4417 = vpack.c.b16 %v4277, %v4270
  %v4418 = vpack.c.b16 %v4285, %v4278
  %v4419 = vpack.c.b16 %v4286, %v4279
  %v4420 = vpack.c.b16 %v4287, %v4280
  %v4421 = vpack.c.b16 %v4288, %v4281
  %v4422 = vpack.c.b16 %v4289, %v4282
  %v4423 = vpack.c.b16 %v4290, %v4283
  %v4424 = vpack.c.b16 %v4291, %v4284
  %v4425 = vpack.c.b16 %v4299, %v4292
  %v4426 = vpack.c.b16 %v4300, %v4293
  %v4427 = vpack.c.b16 %v4301, %v4294
  %v4428 = vpack.c.b16 %v4302, %v4295
  %v4429 = vpack.c.b16 %v4303, %v4296
  %v4430 = vpack.c.b16 %v4304, %v4297
  %v4431 = vpack.c.b16 %v4305, %v4298
  %v4432 = vpack.c.b16 %v4313, %v4306
  %v4433 = vpack.c.b16 %v4314, %v4307
  %v4434 = vpack.c.b16 %v4315, %v4308
  %v4435 = vpack.c.b16 %v4316, %v4309
  %v4436 = vpack.c.b16 %v4317, %v4310
  %v4437 = vpack.c.b16 %v4318, %v4311
  %v4438 = vpack.c.b16 %v4319, %v4312
  %v4439 = vpack.c.b16 %v4327, %v4320
  %v4440 = vpack.c.b16 %v4328, %v4321
  %v4441 = vpack.c.b16 %v4329, %v4322
  %v4442 = vpack.c.b16 %v4330, %v4323
  %v4443 = vpack.c.b16 %v4331, %v4324
  %v4444 = vpack.c.b16 %v4332, %v4325
  %v4445 = vpack.c.b16 %v4333, %v4326
  %4558 = vmatprep.subr.bf16.mxu0 %v4335
  %4559 = vmatpush1.bf16.msra.mxu0 %v4334
  %4560 = vmatprep.subr.bf16.mxu0 %v4342
  %4561 = vmatpush1.bf16.msra.mxu0 %v4341
  %4562 = vmatprep.subr.bf16.mxu0 %v4349
  %4563 = vmatpush1.bf16.msra.mxu0 %v4348
  %4564 = vmatprep.subr.bf16.mxu0 %v4356
  %4565 = vmatpush1.bf16.msra.mxu0 %v4355
  %4566 = vmatprep.subr.bf16.mxu0 %v4363
  %4567 = vmatpush1.bf16.msra.mxu0 %v4362
  %4568 = vmatprep.subr.bf16.mxu0 %v4370
  %4569 = vmatpush1.bf16.msra.mxu0 %v4369
  %4570 = vmatprep.subr.bf16.mxu0 %v4377
  %4571 = vmatpush1.bf16.msra.mxu0 %v4376
  %4572 = vmatprep.subr.bf16.mxu0 %v4384
  %4573 = vmatpush1.bf16.msra.mxu0 %v4383
  %4574 = vmatprep.subr.bf16.mxu0 %v4391
  %4575 = vmatpush1.bf16.msra.mxu0 %v4390
  %4576 = vmatprep.subr.bf16.mxu0 %v4398
  %4577 = vmatpush1.bf16.msra.mxu0 %v4397
  %4578 = vmatprep.subr.bf16.mxu0 %v4405
  %4579 = vmatpush1.bf16.msra.mxu0 %v4404
  %4580 = vmatprep.subr.bf16.mxu0 %v4412
  %4581 = vmatpush1.bf16.msra.mxu0 %v4411
  %4582 = vmatprep.subr.bf16.mxu0 %v4419
  %4583 = vmatpush1.bf16.msra.mxu0 %v4418
  %4584 = vmatprep.subr.bf16.mxu0 %v4426
  %4585 = vmatpush1.bf16.msra.mxu0 %v4425
  %4586 = vmatprep.subr.bf16.mxu0 %v4433
  %4587 = vmatpush1.bf16.msra.mxu0 %v4432
  %4588 = vmatprep.subr.bf16.mxu0 %v4440
  %4589 = vmatpush1.bf16.msra.mxu0 %v4439
  %4590 = vmatprep.mubr.bf16.mxu0 %v3786
  %4591 = vmatmul.mubr.bf16.gmra.mrb[0].mxu0 %v3785
  %v4592 = vpop.f32.mrb[0].mxu0
  %v4593 = vadd.f32 %v3950, %v4592
  %v4594 = vpop.f32.mrb[0].mxu0
  %v4595 = vadd.f32 %v3954, %v4594
  %v4596 = vpop.f32.mrb[0].mxu0
  %v4597 = vadd.f32 %v3950, %v4596
  %v4598 = vpop.f32.mrb[0].mxu0
  %v4599 = vadd.f32 %v3954, %v4598
  %4600 = vmatprep.mubr.bf16.mxu0 %v3788
  %4601 = vmatmul.mubr.bf16.gmra.mrb[0].mxu0 %v3787
  %v4602 = vpop.f32.mrb[0].mxu0
  %v4603 = vadd.f32 %v3950, %v4602
  %v4604 = vpop.f32.mrb[0].mxu0
  %v4605 = vadd.f32 %v3954, %v4604
  %v4606 = vpop.f32.mrb[0].mxu0
  %v4607 = vadd.f32 %v3950, %v4606
  %v4608 = vpop.f32.mrb[0].mxu0
  %v4609 = vadd.f32 %v3954, %v4608
  %4610 = vmatprep.mubr.bf16.mxu0 %v3790
  %4611 = vmatmul.mubr.bf16.gmra.mrb[0].mxu0 %v3789
  %v4612 = vpop.f32.mrb[0].mxu0
  %v4613 = vadd.f32 %v3950, %v4612
  %v4614 = vpop.f32.mrb[0].mxu0
  %v4615 = vadd.f32 %v3954, %v4614
  %v4616 = vpop.f32.mrb[0].mxu0
  %v4617 = vadd.f32 %v3950, %v4616
  %v4618 = vpop.f32.mrb[0].mxu0
  %v4619 = vadd.f32 %v3954, %v4618
  %4620 = vmatprep.mubr.bf16.mxu0 %v3792
  %4621 = vmatmul.mubr.bf16.gmra.mrb[0].mxu0 %v3791
  %v4622 = vpop.f32.mrb[0].mxu0
  %v4623 = vadd.f32 %v3950, %v4622
  %v4624 = vpop.f32.mrb[0].mxu0
  %v4625 = vadd.f32 %v3954, %v4624
  %v4626 = vpop.f32.mrb[0].mxu0
  %v4627 = vadd.f32 %v3950, %v4626
  %v4628 = vpop.f32.mrb[0].mxu0
  %v4629 = vadd.f32 %v3954, %v4628
  %4630 = vmatprep.mubr.bf16.mxu0 %v3794
  %4631 = vmatmul.mubr.bf16.gmra.mrb[0].mxu0 %v3793
  %v4632 = vpop.f32.mrb[0].mxu0
  %v4633 = vadd.f32 %v3950, %v4632
  %v4634 = vpop.f32.mrb[0].mxu0
  %v4635 = vadd.f32 %v3954, %v4634
  %v4636 = vpop.f32.mrb[0].mxu0
  %v4637 = vadd.f32 %v3950, %v4636
  %v4638 = vpop.f32.mrb[0].mxu0
  %v4639 = vadd.f32 %v3954, %v4638
  %4640 = vmatprep.mubr.bf16.mxu0 %v3796
  %4641 = vmatmul.mubr.bf16.gmra.mrb[0].mxu0 %v3795
  %v4642 = vpop.f32.mrb[0].mxu0
  %v4643 = vadd.f32 %v3950, %v4642
  %v4644 = vpop.f32.mrb[0].mxu0
  %v4645 = vadd.f32 %v3954, %v4644
  %v4646 = vpop.f32.mrb[0].mxu0
  %v4647 = vadd.f32 %v3950, %v4646
  %v4648 = vpop.f32.mrb[0].mxu0
  %v4649 = vadd.f32 %v3954, %v4648
  %4650 = vmatprep.mubr.bf16.mxu0 %v3798
  %4651 = vmatmul.mubr.bf16.gmra.mrb[0].mxu0 %v3797
  %v4652 = vpop.f32.mrb[0].mxu0
  %v4653 = vadd.f32 %v3950, %v4652
  %v4654 = vpop.f32.mrb[0].mxu0
  %v4655 = vadd.f32 %v3954, %v4654
  %v4656 = vpop.f32.mrb[0].mxu0
  %v4657 = vadd.f32 %v3950, %v4656
  %v4658 = vpop.f32.mrb[0].mxu0
  %v4659 = vadd.f32 %v3954, %v4658
  %4660 = vmatprep.mubr.bf16.mxu0 %v3800
  %4661 = vmatmul.mubr.bf16.gmra.mrb[0].mxu0 %v3799
  %v4662 = vpop.f32.mrb[0].mxu0
  %v4663 = vadd.f32 %v3950, %v4662
  %v4664 = vpop.f32.mrb[0].mxu0
  %v4665 = vadd.f32 %v3954, %v4664
  %v4666 = vpop.f32.mrb[0].mxu0
  %v4667 = vadd.f32 %v3950, %v4666
  %v4668 = vpop.f32.mrb[0].mxu0
  %v4669 = vadd.f32 %v3954, %v4668
  %4670 = vmatprep.mubr.bf16.mxu0 %v3802
  %4671 = vmatmul.mubr.bf16.gmra.mrb[0].mxu0 %v3801
  %v4672 = vpop.f32.mrb[0].mxu0
  %v4673 = vadd.f32 %v3950, %v4672
  %v4674 = vpop.f32.mrb[0].mxu0
  %v4675 = vadd.f32 %v3954, %v4674
  %v4676 = vpop.f32.mrb[0].mxu0
  %v4677 = vadd.f32 %v3950, %v4676
  %v4678 = vpop.f32.mrb[0].mxu0
  %v4679 = vadd.f32 %v3954, %v4678
  %4680 = vmatprep.mubr.bf16.mxu0 %v3804
  %4681 = vmatmul.mubr.bf16.gmra.mrb[0].mxu0 %v3803
  %v4682 = vpop.f32.mrb[0].mxu0
  %v4683 = vadd.f32 %v3950, %v4682
  %v4684 = vpop.f32.mrb[0].mxu0
  %v4685 = vadd.f32 %v3954, %v4684
  %v4686 = vpop.f32.mrb[0].mxu0
  %v4687 = vadd.f32 %v3950, %v4686
  %v4688 = vpop.f32.mrb[0].mxu0
  %v4689 = vadd.f32 %v3954, %v4688
  %4690 = vmatprep.mubr.bf16.mxu0 %v3806
  %4691 = vmatmul.mubr.bf16.gmra.mrb[0].mxu0 %v3805
  %v4692 = vpop.f32.mrb[0].mxu0
  %v4693 = vadd.f32 %v3950, %v4692
  %v4694 = vpop.f32.mrb[0].mxu0
  %v4695 = vadd.f32 %v3954, %v4694
  %v4696 = vpop.f32.mrb[0].mxu0
  %v4697 = vadd.f32 %v3950, %v4696
  %v4698 = vpop.f32.mrb[0].mxu0
  %v4699 = vadd.f32 %v3954, %v4698
  %4700 = vmatprep.mubr.bf16.mxu0 %v3808
  %4701 = vmatmul.mubr.bf16.gmra.mrb[0].mxu0 %v3807
  %v4702 = vpop.f32.mrb[0].mxu0
  %v4703 = vadd.f32 %v3950, %v4702
  %v4704 = vpop.f32.mrb[0].mxu0
  %v4705 = vadd.f32 %v3954, %v4704
  %v4706 = vpop.f32.mrb[0].mxu0
  %v4707 = vadd.f32 %v3950, %v4706
  %v4708 = vpop.f32.mrb[0].mxu0
  %v4709 = vadd.f32 %v3954, %v4708
  %4710 = vmatprep.mubr.bf16.mxu0 %v3810
  %4711 = vmatmul.mubr.bf16.gmra.mrb[0].mxu0 %v3809
  %v4712 = vpop.f32.mrb[0].mxu0
  %v4713 = vadd.f32 %v3950, %v4712
  %v4714 = vpop.f32.mrb[0].mxu0
  %v4715 = vadd.f32 %v3954, %v4714
  %v4716 = vpop.f32.mrb[0].mxu0
  %v4717 = vadd.f32 %v3950, %v4716
  %v4718 = vpop.f32.mrb[0].mxu0
  %v4719 = vadd.f32 %v3954, %v4718
  %4720 = vmatprep.mubr.bf16.mxu0 %v3812
  %4721 = vmatmul.mubr.bf16.gmra.mrb[0].mxu0 %v3811
  %v4722 = vpop.f32.mrb[0].mxu0
  %v4723 = vadd.f32 %v3950, %v4722
  %v4724 = vpop.f32.mrb[0].mxu0
  %v4725 = vadd.f32 %v3954, %v4724
  %v4726 = vpop.f32.mrb[0].mxu0
  %v4727 = vadd.f32 %v3950, %v4726
  %v4728 = vpop.f32.mrb[0].mxu0
  %v4729 = vadd.f32 %v3954, %v4728
  %4730 = vmatprep.mubr.bf16.mxu0 %v3814
  %4731 = vmatmul.mubr.bf16.gmra.mrb[0].mxu0 %v3813
  %v4732 = vpop.f32.mrb[0].mxu0
  %v4733 = vadd.f32 %v3950, %v4732
  %v4734 = vpop.f32.mrb[0].mxu0
  %v4735 = vadd.f32 %v3954, %v4734
  %v4736 = vpop.f32.mrb[0].mxu0
  %v4737 = vadd.f32 %v3950, %v4736
  %v4738 = vpop.f32.mrb[0].mxu0
  %v4739 = vadd.f32 %v3954, %v4738
  %4740 = vmatprep.mubr.bf16.mxu0 %v3816
  %4741 = vmatmul.mubr.bf16.gmra.mrb[0].mxu0 %v3815
  %v4742 = vpop.f32.mrb[0].mxu0
  %v4743 = vadd.f32 %v3950, %v4742
  %v4744 = vpop.f32.mrb[0].mxu0
  %v4745 = vadd.f32 %v3954, %v4744
  %v4746 = vpop.f32.mrb[0].mxu0
  %v4747 = vadd.f32 %v3950, %v4746
  %v4748 = vpop.f32.mrb[0].mxu0
  %v4749 = vadd.f32 %v3954, %v4748
  %4750 = vdwg.mxu0
  %4751 = vmatprep.subr.bf16.mxu0 %v4337
  %4752 = vmatpush1.bf16.msra.mxu0 %v4336
  %4753 = vmatprep.subr.bf16.mxu0 %v4344
  %4754 = vmatpush1.bf16.msra.mxu0 %v4343
  %4755 = vmatprep.subr.bf16.mxu0 %v4351
  %4756 = vmatpush1.bf16.msra.mxu0 %v4350
  %4757 = vmatprep.subr.bf16.mxu0 %v4358
  %4758 = vmatpush1.bf16.msra.mxu0 %v4357
  %4759 = vmatprep.subr.bf16.mxu0 %v4365
  %4760 = vmatpush1.bf16.msra.mxu0 %v4364
  %4761 = vmatprep.subr.bf16.mxu0 %v4372
  %4762 = vmatpush1.bf16.msra.mxu0 %v4371
  %4763 = vmatprep.subr.bf16.mxu0 %v4379
  %4764 = vmatpush1.bf16.msra.mxu0 %v4378
  %4765 = vmatprep.subr.bf16.mxu0 %v4386
  %4766 = vmatpush1.bf16.msra.mxu0 %v4385
  %4767 = vmatprep.subr.bf16.mxu0 %v4393
  %4768 = vmatpush1.bf16.msra.mxu0 %v4392
  %4769 = vmatprep.subr.bf16.mxu0 %v4400
  %4770 = vmatpush1.bf16.msra.mxu0 %v4399
  %4771 = vmatprep.subr.bf16.mxu0 %v4407
  %4772 = vmatpush1.bf16.msra.mxu0 %v4406
  %4773 = vmatprep.subr.bf16.mxu0 %v4414
  %4774 = vmatpush1.bf16.msra.mxu0 %v4413
  %4775 = vmatprep.subr.bf16.mxu0 %v4421
  %4776 = vmatpush1.bf16.msra.mxu0 %v4420
  %4777 = vmatprep.subr.bf16.mxu0 %v4428
  %4778 = vmatpush1.bf16.msra.mxu0 %v4427
  %4779 = vmatprep.subr.bf16.mxu0 %v4435
  %4780 = vmatpush1.bf16.msra.mxu0 %v4434
  %4781 = vmatprep.subr.bf16.mxu0 %v4442
  %4782 = vmatpush1.bf16.msra.mxu0 %v4441
  %4783 = vmatprep.mubr.bf16.mxu0 %v3786
  %4784 = vmatmul.mubr.bf16.gmra.mrb[0].mxu0 %v3785
  %v4785 = vpop.f32.mrb[0].mxu0
  %v4786 = vadd.f32 %v3958, %v4785
  %v4787 = vpop.f32.mrb[0].mxu0
  %v4788 = vadd.f32 %v3962, %v4787
  %v4789 = vpop.f32.mrb[0].mxu0
  %v4790 = vadd.f32 %v3958, %v4789
  %v4791 = vpop.f32.mrb[0].mxu0
  %v4792 = vadd.f32 %v3962, %v4791
  %4793 = vmatprep.mubr.bf16.mxu0 %v3788
  %4794 = vmatmul.mubr.bf16.gmra.mrb[0].mxu0 %v3787
  %v4795 = vpop.f32.mrb[0].mxu0
  %v4796 = vadd.f32 %v3958, %v4795
  %v4797 = vpop.f32.mrb[0].mxu0
  %v4798 = vadd.f32 %v3962, %v4797
  %v4799 = vpop.f32.mrb[0].mxu0
  %v4800 = vadd.f32 %v3958, %v4799
  %v4801 = vpop.f32.mrb[0].mxu0
  %v4802 = vadd.f32 %v3962, %v4801
  %4803 = vmatprep.mubr.bf16.mxu0 %v3790
  %4804 = vmatmul.mubr.bf16.gmra.mrb[0].mxu0 %v3789
  %v4805 = vpop.f32.mrb[0].mxu0
  %v4806 = vadd.f32 %v3958, %v4805
  %v4807 = vpop.f32.mrb[0].mxu0
  %v4808 = vadd.f32 %v3962, %v4807
  %v4809 = vpop.f32.mrb[0].mxu0
  %v4810 = vadd.f32 %v3958, %v4809
  %v4811 = vpop.f32.mrb[0].mxu0
  %v4812 = vadd.f32 %v3962, %v4811
  %4813 = vmatprep.mubr.bf16.mxu0 %v3792
  %4814 = vmatmul.mubr.bf16.gmra.mrb[0].mxu0 %v3791
  %v4815 = vpop.f32.mrb[0].mxu0
  %v4816 = vadd.f32 %v3958, %v4815
  %v4817 = vpop.f32.mrb[0].mxu0
  %v4818 = vadd.f32 %v3962, %v4817
  %v4819 = vpop.f32.mrb[0].mxu0
  %v4820 = vadd.f32 %v3958, %v4819
  %v4821 = vpop.f32.mrb[0].mxu0
  %v4822 = vadd.f32 %v3962, %v4821
  %4823 = vmatprep.mubr.bf16.mxu0 %v3794
  %4824 = vmatmul.mubr.bf16.gmra.mrb[0].mxu0 %v3793
  %v4825 = vpop.f32.mrb[0].mxu0
  %v4826 = vadd.f32 %v3958, %v4825
  %v4827 = vpop.f32.mrb[0].mxu0
  %v4828 = vadd.f32 %v3962, %v4827
  %v4829 = vpop.f32.mrb[0].mxu0
  %v4830 = vadd.f32 %v3958, %v4829
  %v4831 = vpop.f32.mrb[0].mxu0
  %v4832 = vadd.f32 %v3962, %v4831
  %4833 = vmatprep.mubr.bf16.mxu0 %v3796
  %4834 = vmatmul.mubr.bf16.gmra.mrb[0].mxu0 %v3795
  %v4835 = vpop.f32.mrb[0].mxu0
  %v4836 = vadd.f32 %v3958, %v4835
  %v4837 = vpop.f32.mrb[0].mxu0
  %v4838 = vadd.f32 %v3962, %v4837
  %v4839 = vpop.f32.mrb[0].mxu0
  %v4840 = vadd.f32 %v3958, %v4839
  %v4841 = vpop.f32.mrb[0].mxu0
  %v4842 = vadd.f32 %v3962, %v4841
  %4843 = vmatprep.mubr.bf16.mxu0 %v3798
  %4844 = vmatmul.mubr.bf16.gmra.mrb[0].mxu0 %v3797
  %v4845 = vpop.f32.mrb[0].mxu0
  %v4846 = vadd.f32 %v3958, %v4845
  %v4847 = vpop.f32.mrb[0].mxu0
  %v4848 = vadd.f32 %v3962, %v4847
  %v4849 = vpop.f32.mrb[0].mxu0
  %v4850 = vadd.f32 %v3958, %v4849
  %v4851 = vpop.f32.mrb[0].mxu0
  %v4852 = vadd.f32 %v3962, %v4851
  %4853 = vmatprep.mubr.bf16.mxu0 %v3800
  %4854 = vmatmul.mubr.bf16.gmra.mrb[0].mxu0 %v3799
  %v4855 = vpop.f32.mrb[0].mxu0
  %v4856 = vadd.f32 %v3958, %v4855
  %v4857 = vpop.f32.mrb[0].mxu0
  %v4858 = vadd.f32 %v3962, %v4857
  %v4859 = vpop.f32.mrb[0].mxu0
  %v4860 = vadd.f32 %v3958, %v4859
  %v4861 = vpop.f32.mrb[0].mxu0
  %v4862 = vadd.f32 %v3962, %v4861
  %4863 = vmatprep.mubr.bf16.mxu0 %v3802
  %4864 = vmatmul.mubr.bf16.gmra.mrb[0].mxu0 %v3801
  %v4865 = vpop.f32.mrb[0].mxu0
  %v4866 = vadd.f32 %v3958, %v4865
  %v4867 = vpop.f32.mrb[0].mxu0
  %v4868 = vadd.f32 %v3962, %v4867
  %v4869 = vpop.f32.mrb[0].mxu0
  %v4870 = vadd.f32 %v3958, %v4869
  %v4871 = vpop.f32.mrb[0].mxu0
  %v4872 = vadd.f32 %v3962, %v4871
  %4873 = vmatprep.mubr.bf16.mxu0 %v3804
  %4874 = vmatmul.mubr.bf16.gmra.mrb[0].mxu0 %v3803
  %v4875 = vpop.f32.mrb[0].mxu0
  %v4876 = vadd.f32 %v3958, %v4875
  %v4877 = vpop.f32.mrb[0].mxu0
  %v4878 = vadd.f32 %v3962, %v4877
  %v4879 = vpop.f32.mrb[0].mxu0
  %v4880 = vadd.f32 %v3958, %v4879
  %v4881 = vpop.f32.mrb[0].mxu0
  %v4882 = vadd.f32 %v3962, %v4881
  %4883 = vmatprep.mubr.bf16.mxu0 %v3806
  %4884 = vmatmul.mubr.bf16.gmra.mrb[0].mxu0 %v3805
  %v4885 = vpop.f32.mrb[0].mxu0
  %v4886 = vadd.f32 %v3958, %v4885
  %v4887 = vpop.f32.mrb[0].mxu0
  %v4888 = vadd.f32 %v3962, %v4887
  %v4889 = vpop.f32.mrb[0].mxu0
  %v4890 = vadd.f32 %v3958, %v4889
  %v4891 = vpop.f32.mrb[0].mxu0
  %v4892 = vadd.f32 %v3962, %v4891
  %4893 = vmatprep.mubr.bf16.mxu0 %v3808
  %4894 = vmatmul.mubr.bf16.gmra.mrb[0].mxu0 %v3807
  %v4895 = vpop.f32.mrb[0].mxu0
  %v4896 = vadd.f32 %v3958, %v4895
  %v4897 = vpop.f32.mrb[0].mxu0
  %v4898 = vadd.f32 %v3962, %v4897
  %v4899 = vpop.f32.mrb[0].mxu0
  %v4900 = vadd.f32 %v3958, %v4899
  %v4901 = vpop.f32.mrb[0].mxu0
  %v4902 = vadd.f32 %v3962, %v4901
  %4903 = vmatprep.mubr.bf16.mxu0 %v3810
  %4904 = vmatmul.mubr.bf16.gmra.mrb[0].mxu0 %v3809
  %v4905 = vpop.f32.mrb[0].mxu0
  %v4906 = vadd.f32 %v3958, %v4905
  %v4907 = vpop.f32.mrb[0].mxu0
  %v4908 = vadd.f32 %v3962, %v4907
  %v4909 = vpop.f32.mrb[0].mxu0
  %v4910 = vadd.f32 %v3958, %v4909
  %v4911 = vpop.f32.mrb[0].mxu0
  %v4912 = vadd.f32 %v3962, %v4911
  %4913 = vmatprep.mubr.bf16.mxu0 %v3812
  %4914 = vmatmul.mubr.bf16.gmra.mrb[0].mxu0 %v3811
  %v4915 = vpop.f32.mrb[0].mxu0
  %v4916 = vadd.f32 %v3958, %v4915
  %v4917 = vpop.f32.mrb[0].mxu0
  %v4918 = vadd.f32 %v3962, %v4917
  %v4919 = vpop.f32.mrb[0].mxu0
  %v4920 = vadd.f32 %v3958, %v4919
  %v4921 = vpop.f32.mrb[0].mxu0
  %v4922 = vadd.f32 %v3962, %v4921
  %4923 = vmatprep.mubr.bf16.mxu0 %v3814
  %4924 = vmatmul.mubr.bf16.gmra.mrb[0].mxu0 %v3813
  %v4925 = vpop.f32.mrb[0].mxu0
  %v4926 = vadd.f32 %v3958, %v4925
  %v4927 = vpop.f32.mrb[0].mxu0
  %v4928 = vadd.f32 %v3962, %v4927
  %v4929 = vpop.f32.mrb[0].mxu0
  %v4930 = vadd.f32 %v3958, %v4929
  %v4931 = vpop.f32.mrb[0].mxu0
  %v4932 = vadd.f32 %v3962, %v4931
  %4933 = vmatprep.mubr.bf16.mxu0 %v3816
  %4934 = vmatmul.mubr.bf16.gmra.mrb[0].mxu0 %v3815
  %v4935 = vpop.f32.mrb[0].mxu0
  %v4936 = vadd.f32 %v3958, %v4935
  %v4937 = vpop.f32.mrb[0].mxu0
  %v4938 = vadd.f32 %v3962, %v4937
  %v4939 = vpop.f32.mrb[0].mxu0
  %v4940 = vadd.f32 %v3958, %v4939
  %v4941 = vpop.f32.mrb[0].mxu0
  %v4942 = vadd.f32 %v3962, %v4941
  %4943 = vdwg.mxu0
  %4944 = vmatprep.subr.bf16.mxu0 %v4339
  %4945 = vmatpush1.bf16.msra.mxu0 %v4338
  %4946 = vmatprep.subr.bf16.mxu0 %v4346
  %4947 = vmatpush1.bf16.msra.mxu0 %v4345
  %4948 = vmatprep.subr.bf16.mxu0 %v4353
  %4949 = vmatpush1.bf16.msra.mxu0 %v4352
  %4950 = vmatprep.subr.bf16.mxu0 %v4360
  %4951 = vmatpush1.bf16.msra.mxu0 %v4359
  %4952 = vmatprep.subr.bf16.mxu0 %v4367
  %4953 = vmatpush1.bf16.msra.mxu0 %v4366
  %4954 = vmatprep.subr.bf16.mxu0 %v4374
  %4955 = vmatpush1.bf16.msra.mxu0 %v4373
  %4956 = vmatprep.subr.bf16.mxu0 %v4381
  %4957 = vmatpush1.bf16.msra.mxu0 %v4380
  %4958 = vmatprep.subr.bf16.mxu0 %v4388
  %4959 = vmatpush1.bf16.msra.mxu0 %v4387
  %4960 = vmatprep.subr.bf16.mxu0 %v4395
  %4961 = vmatpush1.bf16.msra.mxu0 %v4394
  %4962 = vmatprep.subr.bf16.mxu0 %v4402
  %4963 = vmatpush1.bf16.msra.mxu0 %v4401
  %4964 = vmatprep.subr.bf16.mxu0 %v4409
  %4965 = vmatpush1.bf16.msra.mxu0 %v4408
  %4966 = vmatprep.subr.bf16.mxu0 %v4416
  %4967 = vmatpush1.bf16.msra.mxu0 %v4415
  %4968 = vmatprep.subr.bf16.mxu0 %v4423
  %4969 = vmatpush1.bf16.msra.mxu0 %v4422
  %4970 = vmatprep.subr.bf16.mxu0 %v4430
  %4971 = vmatpush1.bf16.msra.mxu0 %v4429
  %4972 = vmatprep.subr.bf16.mxu0 %v4437
  %4973 = vmatpush1.bf16.msra.mxu0 %v4436
  %4974 = vmatprep.subr.bf16.mxu0 %v4444
  %4975 = vmatpush1.bf16.msra.mxu0 %v4443
  %4976 = vmatprep.mubr.bf16.mxu0 %v3786
  %4977 = vmatmul.mubr.bf16.gmra.mrb[0].mxu0 %v3785
  %v4978 = vpop.f32.mrb[0].mxu0
  %v4979 = vadd.f32 %v3966, %v4978
  %v4980 = vpop.f32.mrb[0].mxu0
  %v4981 = vadd.f32 %v3970, %v4980
  %v4982 = vpop.f32.mrb[0].mxu0
  %v4983 = vadd.f32 %v3966, %v4982
  %v4984 = vpop.f32.mrb[0].mxu0
  %v4985 = vadd.f32 %v3970, %v4984
  %4986 = vmatprep.mubr.bf16.mxu0 %v3788
  %4987 = vmatmul.mubr.bf16.gmra.mrb[0].mxu0 %v3787
  %v4988 = vpop.f32.mrb[0].mxu0
  %v4989 = vadd.f32 %v3966, %v4988
  %v4990 = vpop.f32.mrb[0].mxu0
  %v4991 = vadd.f32 %v3970, %v4990
  %v4992 = vpop.f32.mrb[0].mxu0
  %v4993 = vadd.f32 %v3966, %v4992
  %v4994 = vpop.f32.mrb[0].mxu0
  %v4995 = vadd.f32 %v3970, %v4994
  %4996 = vmatprep.mubr.bf16.mxu0 %v3790
  %4997 = vmatmul.mubr.bf16.gmra.mrb[0].mxu0 %v3789
  %v4998 = vpop.f32.mrb[0].mxu0
  %v4999 = vadd.f32 %v3966, %v4998
  %v5000 = vpop.f32.mrb[0].mxu0
  %v5001 = vadd.f32 %v3970, %v5000
  %v5002 = vpop.f32.mrb[0].mxu0
  %v5003 = vadd.f32 %v3966, %v5002
  %v5004 = vpop.f32.mrb[0].mxu0
  %v5005 = vadd.f32 %v3970, %v5004
  %5006 = vmatprep.mubr.bf16.mxu0 %v3792
  %5007 = vmatmul.mubr.bf16.gmra.mrb[0].mxu0 %v3791
  %v5008 = vpop.f32.mrb[0].mxu0
  %v5009 = vadd.f32 %v3966, %v5008
  %v5010 = vpop.f32.mrb[0].mxu0
  %v5011 = vadd.f32 %v3970, %v5010
  %v5012 = vpop.f32.mrb[0].mxu0
  %v5013 = vadd.f32 %v3966, %v5012
  %v5014 = vpop.f32.mrb[0].mxu0
  %v5015 = vadd.f32 %v3970, %v5014
  %5016 = vmatprep.mubr.bf16.mxu0 %v3794
  %5017 = vmatmul.mubr.bf16.gmra.mrb[0].mxu0 %v3793
  %v5018 = vpop.f32.mrb[0].mxu0
  %v5019 = vadd.f32 %v3966, %v5018
  %v5020 = vpop.f32.mrb[0].mxu0
  %v5021 = vadd.f32 %v3970, %v5020
  %v5022 = vpop.f32.mrb[0].mxu0
  %v5023 = vadd.f32 %v3966, %v5022
  %v5024 = vpop.f32.mrb[0].mxu0
  %v5025 = vadd.f32 %v3970, %v5024
  %5026 = vmatprep.mubr.bf16.mxu0 %v3796
  %5027 = vmatmul.mubr.bf16.gmra.mrb[0].mxu0 %v3795
  %v5028 = vpop.f32.mrb[0].mxu0
  %v5029 = vadd.f32 %v3966, %v5028
  %v5030 = vpop.f32.mrb[0].mxu0
  %v5031 = vadd.f32 %v3970, %v5030
  %v5032 = vpop.f32.mrb[0].mxu0
  %v5033 = vadd.f32 %v3966, %v5032
  %v5034 = vpop.f32.mrb[0].mxu0
  %v5035 = vadd.f32 %v3970, %v5034
  %5036 = vmatprep.mubr.bf16.mxu0 %v3798
  %5037 = vmatmul.mubr.bf16.gmra.mrb[0].mxu0 %v3797
  %v5038 = vpop.f32.mrb[0].mxu0
  %v5039 = vadd.f32 %v3966, %v5038
  %v5040 = vpop.f32.mrb[0].mxu0
  %v5041 = vadd.f32 %v3970, %v5040
  %v5042 = vpop.f32.mrb[0].mxu0
  %v5043 = vadd.f32 %v3966, %v5042
  %v5044 = vpop.f32.mrb[0].mxu0
  %v5045 = vadd.f32 %v3970, %v5044
  %5046 = vmatprep.mubr.bf16.mxu0 %v3800
  %5047 = vmatmul.mubr.bf16.gmra.mrb[0].mxu0 %v3799
  %v5048 = vpop.f32.mrb[0].mxu0
  %v5049 = vadd.f32 %v3966, %v5048
  %v5050 = vpop.f32.mrb[0].mxu0
  %v5051 = vadd.f32 %v3970, %v5050
  %v5052 = vpop.f32.mrb[0].mxu0
  %v5053 = vadd.f32 %v3966, %v5052
  %v5054 = vpop.f32.mrb[0].mxu0
  %v5055 = vadd.f32 %v3970, %v5054
  %5056 = vmatprep.mubr.bf16.mxu0 %v3802
  %5057 = vmatmul.mubr.bf16.gmra.mrb[0].mxu0 %v3801
  %v5058 = vpop.f32.mrb[0].mxu0
  %v5059 = vadd.f32 %v3966, %v5058
  %v5060 = vpop.f32.mrb[0].mxu0
  %v5061 = vadd.f32 %v3970, %v5060
  %v5062 = vpop.f32.mrb[0].mxu0
  %v5063 = vadd.f32 %v3966, %v5062
  %v5064 = vpop.f32.mrb[0].mxu0
  %v5065 = vadd.f32 %v3970, %v5064
  %5066 = vmatprep.mubr.bf16.mxu0 %v3804
  %5067 = vmatmul.mubr.bf16.gmra.mrb[0].mxu0 %v3803
  %v5068 = vpop.f32.mrb[0].mxu0
  %v5069 = vadd.f32 %v3966, %v5068
  %v5070 = vpop.f32.mrb[0].mxu0
  %v5071 = vadd.f32 %v3970, %v5070
  %v5072 = vpop.f32.mrb[0].mxu0
  %v5073 = vadd.f32 %v3966, %v5072
  %v5074 = vpop.f32.mrb[0].mxu0
  %v5075 = vadd.f32 %v3970, %v5074
  %5076 = vmatprep.mubr.bf16.mxu0 %v3806
  %5077 = vmatmul.mubr.bf16.gmra.mrb[0].mxu0 %v3805
  %v5078 = vpop.f32.mrb[0].mxu0
  %v5079 = vadd.f32 %v3966, %v5078
  %v5080 = vpop.f32.mrb[0].mxu0
  %v5081 = vadd.f32 %v3970, %v5080
  %v5082 = vpop.f32.mrb[0].mxu0
  %v5083 = vadd.f32 %v3966, %v5082
  %v5084 = vpop.f32.mrb[0].mxu0
  %v5085 = vadd.f32 %v3970, %v5084
  %5086 = vmatprep.mubr.bf16.mxu0 %v3808
  %5087 = vmatmul.mubr.bf16.gmra.mrb[0].mxu0 %v3807
  %v5088 = vpop.f32.mrb[0].mxu0
  %v5089 = vadd.f32 %v3966, %v5088
  %v5090 = vpop.f32.mrb[0].mxu0
  %v5091 = vadd.f32 %v3970, %v5090
  %v5092 = vpop.f32.mrb[0].mxu0
  %v5093 = vadd.f32 %v3966, %v5092
  %v5094 = vpop.f32.mrb[0].mxu0
  %v5095 = vadd.f32 %v3970, %v5094
  %5096 = vmatprep.mubr.bf16.mxu0 %v3810
  %5097 = vmatmul.mubr.bf16.gmra.mrb[0].mxu0 %v3809
  %v5098 = vpop.f32.mrb[0].mxu0
  %v5099 = vadd.f32 %v3966, %v5098
  %v5100 = vpop.f32.mrb[0].mxu0
  %v5101 = vadd.f32 %v3970, %v5100
  %v5102 = vpop.f32.mrb[0].mxu0
  %v5103 = vadd.f32 %v3966, %v5102
  %v5104 = vpop.f32.mrb[0].mxu0
  %v5105 = vadd.f32 %v3970, %v5104
  %5106 = vmatprep.mubr.bf16.mxu0 %v3812
  %5107 = vmatmul.mubr.bf16.gmra.mrb[0].mxu0 %v3811
  %v5108 = vpop.f32.mrb[0].mxu0
  %v5109 = vadd.f32 %v3966, %v5108
  %v5110 = vpop.f32.mrb[0].mxu0
  %v5111 = vadd.f32 %v3970, %v5110
  %v5112 = vpop.f32.mrb[0].mxu0
  %v5113 = vadd.f32 %v3966, %v5112
  %v5114 = vpop.f32.mrb[0].mxu0
  %v5115 = vadd.f32 %v3970, %v5114
  %5116 = vmatprep.mubr.bf16.mxu0 %v3814
  %5117 = vmatmul.mubr.bf16.gmra.mrb[0].mxu0 %v3813
  %v5118 = vpop.f32.mrb[0].mxu0
  %v5119 = vadd.f32 %v3966, %v5118
  %v5120 = vpop.f32.mrb[0].mxu0
  %v5121 = vadd.f32 %v3970, %v5120
  %v5122 = vpop.f32.mrb[0].mxu0
  %v5123 = vadd.f32 %v3966, %v5122
  %v5124 = vpop.f32.mrb[0].mxu0
  %v5125 = vadd.f32 %v3970, %v5124
  %5126 = vmatprep.mubr.bf16.mxu0 %v3816
  %5127 = vmatmul.mubr.bf16.gmra.mrb[0].mxu0 %v3815
  %v5128 = vpop.f32.mrb[0].mxu0
  %v5129 = vadd.f32 %v3966, %v5128
  %v5130 = vpop.f32.mrb[0].mxu0
  %v5131 = vadd.f32 %v3970, %v5130
  %v5132 = vpop.f32.mrb[0].mxu0
  %v5133 = vadd.f32 %v3966, %v5132
  %v5134 = vpop.f32.mrb[0].mxu0
  %v5135 = vadd.f32 %v3970, %v5134
  %5136 = vdwg.mxu0
  %5137 = vmatprep.subr.bf16.mxu0 0
  %5138 = vmatpush1.bf16.msra.mxu0 %v4340
  %5139 = vmatprep.subr.bf16.mxu0 0
  %5140 = vmatpush1.bf16.msra.mxu0 %v4347
  %5141 = vmatprep.subr.bf16.mxu0 0
  %5142 = vmatpush1.bf16.msra.mxu0 %v4354
  %5143 = vmatprep.subr.bf16.mxu0 0
  %5144 = vmatpush1.bf16.msra.mxu0 %v4361
  %5145 = vmatprep.subr.bf16.mxu0 0
  %5146 = vmatpush1.bf16.msra.mxu0 %v4368
  %5147 = vmatprep.subr.bf16.mxu0 0
  %5148 = vmatpush1.bf16.msra.mxu0 %v4375
  %5149 = vmatprep.subr.bf16.mxu0 0
  %5150 = vmatpush1.bf16.msra.mxu0 %v4382
  %5151 = vmatprep.subr.bf16.mxu0 0
  %5152 = vmatpush1.bf16.msra.mxu0 %v4389
  %5153 = vmatprep.subr.bf16.mxu0 0
  %5154 = vmatpush1.bf16.msra.mxu0 %v4396
  %5155 = vmatprep.subr.bf16.mxu0 0
  %5156 = vmatpush1.bf16.msra.mxu0 %v4403
  %5157 = vmatprep.subr.bf16.mxu0 0
  %5158 = vmatpush1.bf16.msra.mxu0 %v4410
  %5159 = vmatprep.subr.bf16.mxu0 0
  %5160 = vmatpush1.bf16.msra.mxu0 %v4417
  %5161 = vmatprep.subr.bf16.mxu0 0
  %5162 = vmatpush1.bf16.msra.mxu0 %v4424
  %5163 = vmatprep.subr.bf16.mxu0 0
  %5164 = vmatpush1.bf16.msra.mxu0 %v4431
  %5165 = vmatprep.subr.bf16.mxu0 0
  %5166 = vmatpush1.bf16.msra.mxu0 %v4438
  %5167 = vmatprep.subr.bf16.mxu0 0
  %5168 = vmatpush1.bf16.msra.mxu0 %v4445
  %5169 = vmatprep.mubr.bf16.mxu0 %v3786
  %5170 = vmatmul.mubr.bf16.gmra.mrb[0].mxu0 %v3785
  %v5171 = vpop.f32.mrb[0].mxu0
  %v5172 = vadd.f32 %v3974, %v5171
  %v5173 = vpop.f32.mrb[0].mxu0
  %v5174 = vpop.f32.mrb[0].mxu0
  %v5175 = vadd.f32 %v3974, %v5174
  %v5176 = vpop.f32.mrb[0].mxu0
  %5177 = vmatprep.mubr.bf16.mxu0 %v3788
  %5178 = vmatmul.mubr.bf16.gmra.mrb[0].mxu0 %v3787
  %v5179 = vpop.f32.mrb[0].mxu0
  %v5180 = vadd.f32 %v3974, %v5179
  %v5181 = vpop.f32.mrb[0].mxu0
  %v5182 = vpop.f32.mrb[0].mxu0
  %v5183 = vadd.f32 %v3974, %v5182
  %v5184 = vpop.f32.mrb[0].mxu0
  %5185 = vmatprep.mubr.bf16.mxu0 %v3790
  %5186 = vmatmul.mubr.bf16.gmra.mrb[0].mxu0 %v3789
  %v5187 = vpop.f32.mrb[0].mxu0
  %v5188 = vadd.f32 %v3974, %v5187
  %v5189 = vpop.f32.mrb[0].mxu0
  %v5190 = vpop.f32.mrb[0].mxu0
  %v5191 = vadd.f32 %v3974, %v5190
  %v5192 = vpop.f32.mrb[0].mxu0
  %5193 = vmatprep.mubr.bf16.mxu0 %v3792
  %5194 = vmatmul.mubr.bf16.gmra.mrb[0].mxu0 %v3791
  %v5195 = vpop.f32.mrb[0].mxu0
  %v5196 = vadd.f32 %v3974, %v5195
  %v5197 = vpop.f32.mrb[0].mxu0
  %v5198 = vpop.f32.mrb[0].mxu0
  %v5199 = vadd.f32 %v3974, %v5198
  %v5200 = vpop.f32.mrb[0].mxu0
  %5201 = vmatprep.mubr.bf16.mxu0 %v3794
  %5202 = vmatmul.mubr.bf16.gmra.mrb[0].mxu0 %v3793
  %v5203 = vpop.f32.mrb[0].mxu0
  %v5204 = vadd.f32 %v3974, %v5203
  %v5205 = vpop.f32.mrb[0].mxu0
  %v5206 = vpop.f32.mrb[0].mxu0
  %v5207 = vadd.f32 %v3974, %v5206
  %v5208 = vpop.f32.mrb[0].mxu0
  %5209 = vmatprep.mubr.bf16.mxu0 %v3796
  %5210 = vmatmul.mubr.bf16.gmra.mrb[0].mxu0 %v3795
  %v5211 = vpop.f32.mrb[0].mxu0
  %v5212 = vadd.f32 %v3974, %v5211
  %v5213 = vpop.f32.mrb[0].mxu0
  %v5214 = vpop.f32.mrb[0].mxu0
  %v5215 = vadd.f32 %v3974, %v5214
  %v5216 = vpop.f32.mrb[0].mxu0
  %5217 = vmatprep.mubr.bf16.mxu0 %v3798
  %5218 = vmatmul.mubr.bf16.gmra.mrb[0].mxu0 %v3797
  %v5219 = vpop.f32.mrb[0].mxu0
  %v5220 = vadd.f32 %v3974, %v5219
  %v5221 = vpop.f32.mrb[0].mxu0
  %v5222 = vpop.f32.mrb[0].mxu0
  %v5223 = vadd.f32 %v3974, %v5222
  %v5224 = vpop.f32.mrb[0].mxu0
  %5225 = vmatprep.mubr.bf16.mxu0 %v3800
  %5226 = vmatmul.mubr.bf16.gmra.mrb[0].mxu0 %v3799
  %v5227 = vpop.f32.mrb[0].mxu0
  %v5228 = vadd.f32 %v3974, %v5227
  %v5229 = vpop.f32.mrb[0].mxu0
  %v5230 = vpop.f32.mrb[0].mxu0
  %v5231 = vadd.f32 %v3974, %v5230
  %v5232 = vpop.f32.mrb[0].mxu0
  %5233 = vmatprep.mubr.bf16.mxu0 %v3802
  %5234 = vmatmul.mubr.bf16.gmra.mrb[0].mxu0 %v3801
  %v5235 = vpop.f32.mrb[0].mxu0
  %v5236 = vadd.f32 %v3974, %v5235
  %v5237 = vpop.f32.mrb[0].mxu0
  %v5238 = vpop.f32.mrb[0].mxu0
  %v5239 = vadd.f32 %v3974, %v5238
  %v5240 = vpop.f32.mrb[0].mxu0
  %5241 = vmatprep.mubr.bf16.mxu0 %v3804
  %5242 = vmatmul.mubr.bf16.gmra.mrb[0].mxu0 %v3803
  %v5243 = vpop.f32.mrb[0].mxu0
  %v5244 = vadd.f32 %v3974, %v5243
  %v5245 = vpop.f32.mrb[0].mxu0
  %v5246 = vpop.f32.mrb[0].mxu0
  %v5247 = vadd.f32 %v3974, %v5246
  %v5248 = vpop.f32.mrb[0].mxu0
  %5249 = vmatprep.mubr.bf16.mxu0 %v3806
  %5250 = vmatmul.mubr.bf16.gmra.mrb[0].mxu0 %v3805
  %v5251 = vpop.f32.mrb[0].mxu0
  %v5252 = vadd.f32 %v3974, %v5251
  %v5253 = vpop.f32.mrb[0].mxu0
  %v5254 = vpop.f32.mrb[0].mxu0
  %v5255 = vadd.f32 %v3974, %v5254
  %v5256 = vpop.f32.mrb[0].mxu0
  %5257 = vmatprep.mubr.bf16.mxu0 %v3808
  %5258 = vmatmul.mubr.bf16.gmra.mrb[0].mxu0 %v3807
  %v5259 = vpop.f32.mrb[0].mxu0
  %v5260 = vadd.f32 %v3974, %v5259
  %v5261 = vpop.f32.mrb[0].mxu0
  %v5262 = vpop.f32.mrb[0].mxu0
  %v5263 = vadd.f32 %v3974, %v5262
  %v5264 = vpop.f32.mrb[0].mxu0
  %5265 = vmatprep.mubr.bf16.mxu0 %v3810
  %5266 = vmatmul.mubr.bf16.gmra.mrb[0].mxu0 %v3809
  %v5267 = vpop.f32.mrb[0].mxu0
  %v5268 = vadd.f32 %v3974, %v5267
  %v5269 = vpop.f32.mrb[0].mxu0
  %v5270 = vpop.f32.mrb[0].mxu0
  %v5271 = vadd.f32 %v3974, %v5270
  %v5272 = vpop.f32.mrb[0].mxu0
  %5273 = vmatprep.mubr.bf16.mxu0 %v3812
  %5274 = vmatmul.mubr.bf16.gmra.mrb[0].mxu0 %v3811
  %v5275 = vpop.f32.mrb[0].mxu0
  %v5276 = vadd.f32 %v3974, %v5275
  %v5277 = vpop.f32.mrb[0].mxu0
  %v5278 = vpop.f32.mrb[0].mxu0
  %v5279 = vadd.f32 %v3974, %v5278
  %v5280 = vpop.f32.mrb[0].mxu0
  %5281 = vmatprep.mubr.bf16.mxu0 %v3814
  %5282 = vmatmul.mubr.bf16.gmra.mrb[0].mxu0 %v3813
  %v5283 = vpop.f32.mrb[0].mxu0
  %v5284 = vadd.f32 %v3974, %v5283
  %v5285 = vpop.f32.mrb[0].mxu0
  %v5286 = vpop.f32.mrb[0].mxu0
  %v5287 = vadd.f32 %v3974, %v5286
  %v5288 = vpop.f32.mrb[0].mxu0
  %5289 = vmatprep.mubr.bf16.mxu0 %v3816
  %5290 = vmatmul.mubr.bf16.gmra.mrb[0].mxu0 %v3815
  %v5291 = vpop.f32.mrb[0].mxu0
  %v5292 = vadd.f32 %v3974, %v5291
  %v5293 = vpop.f32.mrb[0].mxu0
  %v5294 = vpop.f32.mrb[0].mxu0
  %v5295 = vadd.f32 %v3974, %v5294
  %v5296 = vpop.f32.mrb[0].mxu0
  %5297 = vdwg.mxu0
  %v5298 = vsub.f32 0.0, %v4593
  %v5299 = vsub.f32 0.0, %v4595
  %v5300 = vsub.f32 0.0, %v4786
  %v5301 = vsub.f32 0.0, %v4788
  %v5302 = vsub.f32 0.0, %v4979
  %v5303 = vsub.f32 0.0, %v4981
  %v5304 = vsub.f32 0.0, %v5172
  %v5305 = vsub.f32 0.0, %v4597
  %v5306 = vsub.f32 0.0, %v4599
  %v5307 = vsub.f32 0.0, %v4790
  %v5308 = vsub.f32 0.0, %v4792
  %v5309 = vsub.f32 0.0, %v4983
  %v5310 = vsub.f32 0.0, %v4985
  %v5311 = vsub.f32 0.0, %v5175
  %v5312 = vsub.f32 0.0, %v4603
  %v5313 = vsub.f32 0.0, %v4605
  %v5314 = vsub.f32 0.0, %v4796
  %v5315 = vsub.f32 0.0, %v4798
  %v5316 = vsub.f32 0.0, %v4989
  %v5317 = vsub.f32 0.0, %v4991
  %v5318 = vsub.f32 0.0, %v5180
  %v5319 = vsub.f32 0.0, %v4607
  %v5320 = vsub.f32 0.0, %v4609
  %v5321 = vsub.f32 0.0, %v4800
  %v5322 = vsub.f32 0.0, %v4802
  %v5323 = vsub.f32 0.0, %v4993
  %v5324 = vsub.f32 0.0, %v4995
  %v5325 = vsub.f32 0.0, %v5183
  %v5326 = vsub.f32 0.0, %v4613
  %v5327 = vsub.f32 0.0, %v4615
  %v5328 = vsub.f32 0.0, %v4806
  %v5329 = vsub.f32 0.0, %v4808
  %v5330 = vsub.f32 0.0, %v4999
  %v5331 = vsub.f32 0.0, %v5001
  %v5332 = vsub.f32 0.0, %v5188
  %v5333 = vsub.f32 0.0, %v4617
  %v5334 = vsub.f32 0.0, %v4619
  %v5335 = vsub.f32 0.0, %v4810
  %v5336 = vsub.f32 0.0, %v4812
  %v5337 = vsub.f32 0.0, %v5003
  %v5338 = vsub.f32 0.0, %v5005
  %v5339 = vsub.f32 0.0, %v5191
  %v5340 = vsub.f32 0.0, %v4623
  %v5341 = vsub.f32 0.0, %v4625
  %v5342 = vsub.f32 0.0, %v4816
  %v5343 = vsub.f32 0.0, %v4818
  %v5344 = vsub.f32 0.0, %v5009
  %v5345 = vsub.f32 0.0, %v5011
  %v5346 = vsub.f32 0.0, %v5196
  %v5347 = vsub.f32 0.0, %v4627
  %v5348 = vsub.f32 0.0, %v4629
  %v5349 = vsub.f32 0.0, %v4820
  %v5350 = vsub.f32 0.0, %v4822
  %v5351 = vsub.f32 0.0, %v5013
  %v5352 = vsub.f32 0.0, %v5015
  %v5353 = vsub.f32 0.0, %v5199
  %v5354 = vsub.f32 0.0, %v4633
  %v5355 = vsub.f32 0.0, %v4635
  %v5356 = vsub.f32 0.0, %v4826
  %v5357 = vsub.f32 0.0, %v4828
  %v5358 = vsub.f32 0.0, %v5019
  %v5359 = vsub.f32 0.0, %v5021
  %v5360 = vsub.f32 0.0, %v5204
  %v5361 = vsub.f32 0.0, %v4637
  %v5362 = vsub.f32 0.0, %v4639
  %v5363 = vsub.f32 0.0, %v4830
  %v5364 = vsub.f32 0.0, %v4832
  %v5365 = vsub.f32 0.0, %v5023
  %v5366 = vsub.f32 0.0, %v5025
  %v5367 = vsub.f32 0.0, %v5207
  %v5368 = vsub.f32 0.0, %v4643
  %v5369 = vsub.f32 0.0, %v4645
  %v5370 = vsub.f32 0.0, %v4836
  %v5371 = vsub.f32 0.0, %v4838
  %v5372 = vsub.f32 0.0, %v5029
  %v5373 = vsub.f32 0.0, %v5031
  %v5374 = vsub.f32 0.0, %v5212
  %v5375 = vsub.f32 0.0, %v4647
  %v5376 = vsub.f32 0.0, %v4649
  %v5377 = vsub.f32 0.0, %v4840
  %v5378 = vsub.f32 0.0, %v4842
  %v5379 = vsub.f32 0.0, %v5033
  %v5380 = vsub.f32 0.0, %v5035
  %v5381 = vsub.f32 0.0, %v5215
  %v5382 = vsub.f32 0.0, %v4653
  %v5383 = vsub.f32 0.0, %v4655
  %v5384 = vsub.f32 0.0, %v4846
  %v5385 = vsub.f32 0.0, %v4848
  %v5386 = vsub.f32 0.0, %v5039
  %v5387 = vsub.f32 0.0, %v5041
  %v5388 = vsub.f32 0.0, %v5220
  %v5389 = vsub.f32 0.0, %v4657
  %v5390 = vsub.f32 0.0, %v4659
  %v5391 = vsub.f32 0.0, %v4850
  %v5392 = vsub.f32 0.0, %v4852
  %v5393 = vsub.f32 0.0, %v5043
  %v5394 = vsub.f32 0.0, %v5045
  %v5395 = vsub.f32 0.0, %v5223
  %v5396 = vsub.f32 0.0, %v4663
  %v5397 = vsub.f32 0.0, %v4665
  %v5398 = vsub.f32 0.0, %v4856
  %v5399 = vsub.f32 0.0, %v4858
  %v5400 = vsub.f32 0.0, %v5049
  %v5401 = vsub.f32 0.0, %v5051
  %v5402 = vsub.f32 0.0, %v5228
  %v5403 = vsub.f32 0.0, %v4667
  %v5404 = vsub.f32 0.0, %v4669
  %v5405 = vsub.f32 0.0, %v4860
  %v5406 = vsub.f32 0.0, %v4862
  %v5407 = vsub.f32 0.0, %v5053
  %v5408 = vsub.f32 0.0, %v5055
  %v5409 = vsub.f32 0.0, %v5231
  %v5410 = vsub.f32 0.0, %v4673
  %v5411 = vsub.f32 0.0, %v4675
  %v5412 = vsub.f32 0.0, %v4866
  %v5413 = vsub.f32 0.0, %v4868
  %v5414 = vsub.f32 0.0, %v5059
  %v5415 = vsub.f32 0.0, %v5061
  %v5416 = vsub.f32 0.0, %v5236
  %v5417 = vsub.f32 0.0, %v4677
  %v5418 = vsub.f32 0.0, %v4679
  %v5419 = vsub.f32 0.0, %v4870
  %v5420 = vsub.f32 0.0, %v4872
  %v5421 = vsub.f32 0.0, %v5063
  %v5422 = vsub.f32 0.0, %v5065
  %v5423 = vsub.f32 0.0, %v5239
  %v5424 = vsub.f32 0.0, %v4683
  %v5425 = vsub.f32 0.0, %v4685
  %v5426 = vsub.f32 0.0, %v4876
  %v5427 = vsub.f32 0.0, %v4878
  %v5428 = vsub.f32 0.0, %v5069
  %v5429 = vsub.f32 0.0, %v5071
  %v5430 = vsub.f32 0.0, %v5244
  %v5431 = vsub.f32 0.0, %v4687
  %v5432 = vsub.f32 0.0, %v4689
  %v5433 = vsub.f32 0.0, %v4880
  %v5434 = vsub.f32 0.0, %v4882
  %v5435 = vsub.f32 0.0, %v5073
  %v5436 = vsub.f32 0.0, %v5075
  %v5437 = vsub.f32 0.0, %v5247
  %v5438 = vsub.f32 0.0, %v4693
  %v5439 = vsub.f32 0.0, %v4695
  %v5440 = vsub.f32 0.0, %v4886
  %v5441 = vsub.f32 0.0, %v4888
  %v5442 = vsub.f32 0.0, %v5079
  %v5443 = vsub.f32 0.0, %v5081
  %v5444 = vsub.f32 0.0, %v5252
  %v5445 = vsub.f32 0.0, %v4697
  %v5446 = vsub.f32 0.0, %v4699
  %v5447 = vsub.f32 0.0, %v4890
  %v5448 = vsub.f32 0.0, %v4892
  %v5449 = vsub.f32 0.0, %v5083
  %v5450 = vsub.f32 0.0, %v5085
  %v5451 = vsub.f32 0.0, %v5255
  %v5452 = vsub.f32 0.0, %v4703
  %v5453 = vsub.f32 0.0, %v4705
  %v5454 = vsub.f32 0.0, %v4896
  %v5455 = vsub.f32 0.0, %v4898
  %v5456 = vsub.f32 0.0, %v5089
  %v5457 = vsub.f32 0.0, %v5091
  %v5458 = vsub.f32 0.0, %v5260
  %v5459 = vsub.f32 0.0, %v4707
  %v5460 = vsub.f32 0.0, %v4709
  %v5461 = vsub.f32 0.0, %v4900
  %v5462 = vsub.f32 0.0, %v4902
  %v5463 = vsub.f32 0.0, %v5093
  %v5464 = vsub.f32 0.0, %v5095
  %v5465 = vsub.f32 0.0, %v5263
  %v5466 = vsub.f32 0.0, %v4713
  %v5467 = vsub.f32 0.0, %v4715
  %v5468 = vsub.f32 0.0, %v4906
  %v5469 = vsub.f32 0.0, %v4908
  %v5470 = vsub.f32 0.0, %v5099
  %v5471 = vsub.f32 0.0, %v5101
  %v5472 = vsub.f32 0.0, %v5268
  %v5473 = vsub.f32 0.0, %v4717
  %v5474 = vsub.f32 0.0, %v4719
  %v5475 = vsub.f32 0.0, %v4910
  %v5476 = vsub.f32 0.0, %v4912
  %v5477 = vsub.f32 0.0, %v5103
  %v5478 = vsub.f32 0.0, %v5105
  %v5479 = vsub.f32 0.0, %v5271
  %v5480 = vsub.f32 0.0, %v4723
  %v5481 = vsub.f32 0.0, %v4725
  %v5482 = vsub.f32 0.0, %v4916
  %v5483 = vsub.f32 0.0, %v4918
  %v5484 = vsub.f32 0.0, %v5109
  %v5485 = vsub.f32 0.0, %v5111
  %v5486 = vsub.f32 0.0, %v5276
  %v5487 = vsub.f32 0.0, %v4727
  %v5488 = vsub.f32 0.0, %v4729
  %v5489 = vsub.f32 0.0, %v4920
  %v5490 = vsub.f32 0.0, %v4922
  %v5491 = vsub.f32 0.0, %v5113
  %v5492 = vsub.f32 0.0, %v5115
  %v5493 = vsub.f32 0.0, %v5279
  %v5494 = vsub.f32 0.0, %v4733
  %v5495 = vsub.f32 0.0, %v4735
  %v5496 = vsub.f32 0.0, %v4926
  %v5497 = vsub.f32 0.0, %v4928
  %v5498 = vsub.f32 0.0, %v5119
  %v5499 = vsub.f32 0.0, %v5121
  %v5500 = vsub.f32 0.0, %v5284
  %v5501 = vsub.f32 0.0, %v4737
  %v5502 = vsub.f32 0.0, %v4739
  %v5503 = vsub.f32 0.0, %v4930
  %v5504 = vsub.f32 0.0, %v4932
  %v5505 = vsub.f32 0.0, %v5123
  %v5506 = vsub.f32 0.0, %v5125
  %v5507 = vsub.f32 0.0, %v5287
  %v5508 = vsub.f32 0.0, %v4743
  %v5509 = vsub.f32 0.0, %v4745
  %v5510 = vsub.f32 0.0, %v4936
  %v5511 = vsub.f32 0.0, %v4938
  %v5512 = vsub.f32 0.0, %v5129
  %v5513 = vsub.f32 0.0, %v5131
  %v5514 = vsub.f32 0.0, %v5292
  %v5515 = vsub.f32 0.0, %v4747
  %v5516 = vsub.f32 0.0, %v4749
  %v5517 = vsub.f32 0.0, %v4940
  %v5518 = vsub.f32 0.0, %v4942
  %v5519 = vsub.f32 0.0, %v5133
  %v5520 = vsub.f32 0.0, %v5135
  %v5521 = vsub.f32 0.0, %v5295
  %v5522 = vmul.f32 %v5298, 1.442695
  %v5523 = vpow.pop %v5522
  %v5524 = vmul.f32 %v5299, 1.442695
  %v5525 = vpow.pop %v5524
  %v5526 = vmul.f32 %v5300, 1.442695
  %v5527 = vpow.pop %v5526
  %v5528 = vmul.f32 %v5301, 1.442695
  %v5529 = vpow.pop %v5528
  %v5530 = vmul.f32 %v5302, 1.442695
  %v5531 = vpow.pop %v5530
  %v5532 = vmul.f32 %v5303, 1.442695
  %v5533 = vpow.pop %v5532
  %v5534 = vmul.f32 %v5304, 1.442695
  %v5535 = vpow.pop %v5534
  %v5536 = vmul.f32 %v5305, 1.442695
  %v5537 = vpow.pop %v5536
  %v5538 = vmul.f32 %v5306, 1.442695
  %v5539 = vpow.pop %v5538
  %v5540 = vmul.f32 %v5307, 1.442695
  %v5541 = vpow.pop %v5540
  %v5542 = vmul.f32 %v5308, 1.442695
  %v5543 = vpow.pop %v5542
  %v5544 = vmul.f32 %v5309, 1.442695
  %v5545 = vpow.pop %v5544
  %v5546 = vmul.f32 %v5310, 1.442695
  %v5547 = vpow.pop %v5546
  %v5548 = vmul.f32 %v5311, 1.442695
  %v5549 = vpow.pop %v5548
  %v5550 = vmul.f32 %v5312, 1.442695
  %v5551 = vpow.pop %v5550
  %v5552 = vmul.f32 %v5313, 1.442695
  %v5553 = vpow.pop %v5552
  %v5554 = vmul.f32 %v5314, 1.442695
  %v5555 = vpow.pop %v5554
  %v5556 = vmul.f32 %v5315, 1.442695
  %v5557 = vpow.pop %v5556
  %v5558 = vmul.f32 %v5316, 1.442695
  %v5559 = vpow.pop %v5558
  %v5560 = vmul.f32 %v5317, 1.442695
  %v5561 = vpow.pop %v5560
  %v5562 = vmul.f32 %v5318, 1.442695
  %v5563 = vpow.pop %v5562
  %v5564 = vmul.f32 %v5319, 1.442695
  %v5565 = vpow.pop %v5564
  %v5566 = vmul.f32 %v5320, 1.442695
  %v5567 = vpow.pop %v5566
  %v5568 = vmul.f32 %v5321, 1.442695
  %v5569 = vpow.pop %v5568
  %v5570 = vmul.f32 %v5322, 1.442695
  %v5571 = vpow.pop %v5570
  %v5572 = vmul.f32 %v5323, 1.442695
  %v5573 = vpow.pop %v5572
  %v5574 = vmul.f32 %v5324, 1.442695
  %v5575 = vpow.pop %v5574
  %v5576 = vmul.f32 %v5325, 1.442695
  %v5577 = vpow.pop %v5576
  %v5578 = vmul.f32 %v5326, 1.442695
  %v5579 = vpow.pop %v5578
  %v5580 = vmul.f32 %v5327, 1.442695
  %v5581 = vpow.pop %v5580
  %v5582 = vmul.f32 %v5328, 1.442695
  %v5583 = vpow.pop %v5582
  %v5584 = vmul.f32 %v5329, 1.442695
  %v5585 = vpow.pop %v5584
  %v5586 = vmul.f32 %v5330, 1.442695
  %v5587 = vpow.pop %v5586
  %v5588 = vmul.f32 %v5331, 1.442695
  %v5589 = vpow.pop %v5588
  %v5590 = vmul.f32 %v5332, 1.442695
  %v5591 = vpow.pop %v5590
  %v5592 = vmul.f32 %v5333, 1.442695
  %v5593 = vpow.pop %v5592
  %v5594 = vmul.f32 %v5334, 1.442695
  %v5595 = vpow.pop %v5594
  %v5596 = vmul.f32 %v5335, 1.442695
  %v5597 = vpow.pop %v5596
  %v5598 = vmul.f32 %v5336, 1.442695
  %v5599 = vpow.pop %v5598
  %v5600 = vmul.f32 %v5337, 1.442695
  %v5601 = vpow.pop %v5600
  %v5602 = vmul.f32 %v5338, 1.442695
  %v5603 = vpow.pop %v5602
  %v5604 = vmul.f32 %v5339, 1.442695
  %v5605 = vpow.pop %v5604
  %v5606 = vmul.f32 %v5340, 1.442695
  %v5607 = vpow.pop %v5606
  %v5608 = vmul.f32 %v5341, 1.442695
  %v5609 = vpow.pop %v5608
  %v5610 = vmul.f32 %v5342, 1.442695
  %v5611 = vpow.pop %v5610
  %v5612 = vmul.f32 %v5343, 1.442695
  %v5613 = vpow.pop %v5612
  %v5614 = vmul.f32 %v5344, 1.442695
  %v5615 = vpow.pop %v5614
  %v5616 = vmul.f32 %v5345, 1.442695
  %v5617 = vpow.pop %v5616
  %v5618 = vmul.f32 %v5346, 1.442695
  %v5619 = vpow.pop %v5618
  %v5620 = vmul.f32 %v5347, 1.442695
  %v5621 = vpow.pop %v5620
  %v5622 = vmul.f32 %v5348, 1.442695
  %v5623 = vpow.pop %v5622
  %v5624 = vmul.f32 %v5349, 1.442695
  %v5625 = vpow.pop %v5624
  %v5626 = vmul.f32 %v5350, 1.442695
  %v5627 = vpow.pop %v5626
  %v5628 = vmul.f32 %v5351, 1.442695
  %v5629 = vpow.pop %v5628
  %v5630 = vmul.f32 %v5352, 1.442695
  %v5631 = vpow.pop %v5630
  %v5632 = vmul.f32 %v5353, 1.442695
  %v5633 = vpow.pop %v5632
  %v5634 = vmul.f32 %v5354, 1.442695
  %v5635 = vpow.pop %v5634
  %v5636 = vmul.f32 %v5355, 1.442695
  %v5637 = vpow.pop %v5636
  %v5638 = vmul.f32 %v5356, 1.442695
  %v5639 = vpow.pop %v5638
  %v5640 = vmul.f32 %v5357, 1.442695
  %v5641 = vpow.pop %v5640
  %v5642 = vmul.f32 %v5358, 1.442695
  %v5643 = vpow.pop %v5642
  %v5644 = vmul.f32 %v5359, 1.442695
  %v5645 = vpow.pop %v5644
  %v5646 = vmul.f32 %v5360, 1.442695
  %v5647 = vpow.pop %v5646
  %v5648 = vmul.f32 %v5361, 1.442695
  %v5649 = vpow.pop %v5648
  %v5650 = vmul.f32 %v5362, 1.442695
  %v5651 = vpow.pop %v5650
  %v5652 = vmul.f32 %v5363, 1.442695
  %v5653 = vpow.pop %v5652
  %v5654 = vmul.f32 %v5364, 1.442695
  %v5655 = vpow.pop %v5654
  %v5656 = vmul.f32 %v5365, 1.442695
  %v5657 = vpow.pop %v5656
  %v5658 = vmul.f32 %v5366, 1.442695
  %v5659 = vpow.pop %v5658
  %v5660 = vmul.f32 %v5367, 1.442695
  %v5661 = vpow.pop %v5660
  %v5662 = vmul.f32 %v5368, 1.442695
  %v5663 = vpow.pop %v5662
  %v5664 = vmul.f32 %v5369, 1.442695
  %v5665 = vpow.pop %v5664
  %v5666 = vmul.f32 %v5370, 1.442695
  %v5667 = vpow.pop %v5666
  %v5668 = vmul.f32 %v5371, 1.442695
  %v5669 = vpow.pop %v5668
  %v5670 = vmul.f32 %v5372, 1.442695
  %v5671 = vpow.pop %v5670
  %v5672 = vmul.f32 %v5373, 1.442695
  %v5673 = vpow.pop %v5672
  %v5674 = vmul.f32 %v5374, 1.442695
  %v5675 = vpow.pop %v5674
  %v5676 = vmul.f32 %v5375, 1.442695
  %v5677 = vpow.pop %v5676
  %v5678 = vmul.f32 %v5376, 1.442695
  %v5679 = vpow.pop %v5678
  %v5680 = vmul.f32 %v5377, 1.442695
  %v5681 = vpow.pop %v5680
  %v5682 = vmul.f32 %v5378, 1.442695
  %v5683 = vpow.pop %v5682
  %v5684 = vmul.f32 %v5379, 1.442695
  %v5685 = vpow.pop %v5684
  %v5686 = vmul.f32 %v5380, 1.442695
  %v5687 = vpow.pop %v5686
  %v5688 = vmul.f32 %v5381, 1.442695
  %v5689 = vpow.pop %v5688
  %v5690 = vmul.f32 %v5382, 1.442695
  %v5691 = vpow.pop %v5690
  %v5692 = vmul.f32 %v5383, 1.442695
  %v5693 = vpow.pop %v5692
  %v5694 = vmul.f32 %v5384, 1.442695
  %v5695 = vpow.pop %v5694
  %v5696 = vmul.f32 %v5385, 1.442695
  %v5697 = vpow.pop %v5696
  %v5698 = vmul.f32 %v5386, 1.442695
  %v5699 = vpow.pop %v5698
  %v5700 = vmul.f32 %v5387, 1.442695
  %v5701 = vpow.pop %v5700
  %v5702 = vmul.f32 %v5388, 1.442695
  %v5703 = vpow.pop %v5702
  %v5704 = vmul.f32 %v5389, 1.442695
  %v5705 = vpow.pop %v5704
  %v5706 = vmul.f32 %v5390, 1.442695
  %v5707 = vpow.pop %v5706
  %v5708 = vmul.f32 %v5391, 1.442695
  %v5709 = vpow.pop %v5708
  %v5710 = vmul.f32 %v5392, 1.442695
  %v5711 = vpow.pop %v5710
  %v5712 = vmul.f32 %v5393, 1.442695
  %v5713 = vpow.pop %v5712
  %v5714 = vmul.f32 %v5394, 1.442695
  %v5715 = vpow.pop %v5714
  %v5716 = vmul.f32 %v5395, 1.442695
  %v5717 = vpow.pop %v5716
  %v5718 = vmul.f32 %v5396, 1.442695
  %v5719 = vpow.pop %v5718
  %v5720 = vmul.f32 %v5397, 1.442695
  %v5721 = vpow.pop %v5720
  %v5722 = vmul.f32 %v5398, 1.442695
  %v5723 = vpow.pop %v5722
  %v5724 = vmul.f32 %v5399, 1.442695
  %v5725 = vpow.pop %v5724
  %v5726 = vmul.f32 %v5400, 1.442695
  %v5727 = vpow.pop %v5726
  %v5728 = vmul.f32 %v5401, 1.442695
  %v5729 = vpow.pop %v5728
  %v5730 = vmul.f32 %v5402, 1.442695
  %v5731 = vpow.pop %v5730
  %v5732 = vmul.f32 %v5403, 1.442695
  %v5733 = vpow.pop %v5732
  %v5734 = vmul.f32 %v5404, 1.442695
  %v5735 = vpow.pop %v5734
  %v5736 = vmul.f32 %v5405, 1.442695
  %v5737 = vpow.pop %v5736
  %v5738 = vmul.f32 %v5406, 1.442695
  %v5739 = vpow.pop %v5738
  %v5740 = vmul.f32 %v5407, 1.442695
  %v5741 = vpow.pop %v5740
  %v5742 = vmul.f32 %v5408, 1.442695
  %v5743 = vpow.pop %v5742
  %v5744 = vmul.f32 %v5409, 1.442695
  %v5745 = vpow.pop %v5744
  %v5746 = vmul.f32 %v5410, 1.442695
  %v5747 = vpow.pop %v5746
  %v5748 = vmul.f32 %v5411, 1.442695
  %v5749 = vpow.pop %v5748
  %v5750 = vmul.f32 %v5412, 1.442695
  %v5751 = vpow.pop %v5750
  %v5752 = vmul.f32 %v5413, 1.442695
  %v5753 = vpow.pop %v5752
  %v5754 = vmul.f32 %v5414, 1.442695
  %v5755 = vpow.pop %v5754
  %v5756 = vmul.f32 %v5415, 1.442695
  %v5757 = vpow.pop %v5756
  %v5758 = vmul.f32 %v5416, 1.442695
  %v5759 = vpow.pop %v5758
  %v5760 = vmul.f32 %v5417, 1.442695
  %v5761 = vpow.pop %v5760
  %v5762 = vmul.f32 %v5418, 1.442695
  %v5763 = vpow.pop %v5762
  %v5764 = vmul.f32 %v5419, 1.442695
  %v5765 = vpow.pop %v5764
  %v5766 = vmul.f32 %v5420, 1.442695
  %v5767 = vpow.pop %v5766
  %v5768 = vmul.f32 %v5421, 1.442695
  %v5769 = vpow.pop %v5768
  %v5770 = vmul.f32 %v5422, 1.442695
  %v5771 = vpow.pop %v5770
  %v5772 = vmul.f32 %v5423, 1.442695
  %v5773 = vpow.pop %v5772
  %v5774 = vmul.f32 %v5424, 1.442695
  %v5775 = vpow.pop %v5774
  %v5776 = vmul.f32 %v5425, 1.442695
  %v5777 = vpow.pop %v5776
  %v5778 = vmul.f32 %v5426, 1.442695
  %v5779 = vpow.pop %v5778
  %v5780 = vmul.f32 %v5427, 1.442695
  %v5781 = vpow.pop %v5780
  %v5782 = vmul.f32 %v5428, 1.442695
  %v5783 = vpow.pop %v5782
  %v5784 = vmul.f32 %v5429, 1.442695
  %v5785 = vpow.pop %v5784
  %v5786 = vmul.f32 %v5430, 1.442695
  %v5787 = vpow.pop %v5786
  %v5788 = vmul.f32 %v5431, 1.442695
  %v5789 = vpow.pop %v5788
  %v5790 = vmul.f32 %v5432, 1.442695
  %v5791 = vpow.pop %v5790
  %v5792 = vmul.f32 %v5433, 1.442695
  %v5793 = vpow.pop %v5792
  %v5794 = vmul.f32 %v5434, 1.442695
  %v5795 = vpow.pop %v5794
  %v5796 = vmul.f32 %v5435, 1.442695
  %v5797 = vpow.pop %v5796
  %v5798 = vmul.f32 %v5436, 1.442695
  %v5799 = vpow.pop %v5798
  %v5800 = vmul.f32 %v5437, 1.442695
  %v5801 = vpow.pop %v5800
  %v5802 = vmul.f32 %v5438, 1.442695
  %v5803 = vpow.pop %v5802
  %v5804 = vmul.f32 %v5439, 1.442695
  %v5805 = vpow.pop %v5804
  %v5806 = vmul.f32 %v5440, 1.442695
  %v5807 = vpow.pop %v5806
  %v5808 = vmul.f32 %v5441, 1.442695
  %v5809 = vpow.pop %v5808
  %v5810 = vmul.f32 %v5442, 1.442695
  %v5811 = vpow.pop %v5810
  %v5812 = vmul.f32 %v5443, 1.442695
  %v5813 = vpow.pop %v5812
  %v5814 = vmul.f32 %v5444, 1.442695
  %v5815 = vpow.pop %v5814
  %v5816 = vmul.f32 %v5445, 1.442695
  %v5817 = vpow.pop %v5816
  %v5818 = vmul.f32 %v5446, 1.442695
  %v5819 = vpow.pop %v5818
  %v5820 = vmul.f32 %v5447, 1.442695
  %v5821 = vpow.pop %v5820
  %v5822 = vmul.f32 %v5448, 1.442695
  %v5823 = vpow.pop %v5822
  %v5824 = vmul.f32 %v5449, 1.442695
  %v5825 = vpow.pop %v5824
  %v5826 = vmul.f32 %v5450, 1.442695
  %v5827 = vpow.pop %v5826
  %v5828 = vmul.f32 %v5451, 1.442695
  %v5829 = vpow.pop %v5828
  %v5830 = vmul.f32 %v5452, 1.442695
  %v5831 = vpow.pop %v5830
  %v5832 = vmul.f32 %v5453, 1.442695
  %v5833 = vpow.pop %v5832
  %v5834 = vmul.f32 %v5454, 1.442695
  %v5835 = vpow.pop %v5834
  %v5836 = vmul.f32 %v5455, 1.442695
  %v5837 = vpow.pop %v5836
  %v5838 = vmul.f32 %v5456, 1.442695
  %v5839 = vpow.pop %v5838
  %v5840 = vmul.f32 %v5457, 1.442695
  %v5841 = vpow.pop %v5840
  %v5842 = vmul.f32 %v5458, 1.442695
  %v5843 = vpow.pop %v5842
  %v5844 = vmul.f32 %v5459, 1.442695
  %v5845 = vpow.pop %v5844
  %v5846 = vmul.f32 %v5460, 1.442695
  %v5847 = vpow.pop %v5846
  %v5848 = vmul.f32 %v5461, 1.442695
  %v5849 = vpow.pop %v5848
  %v5850 = vmul.f32 %v5462, 1.442695
  %v5851 = vpow.pop %v5850
  %v5852 = vmul.f32 %v5463, 1.442695
  %v5853 = vpow.pop %v5852
  %v5854 = vmul.f32 %v5464, 1.442695
  %v5855 = vpow.pop %v5854
  %v5856 = vmul.f32 %v5465, 1.442695
  %v5857 = vpow.pop %v5856
  %v5858 = vmul.f32 %v5466, 1.442695
  %v5859 = vpow.pop %v5858
  %v5860 = vmul.f32 %v5467, 1.442695
  %v5861 = vpow.pop %v5860
  %v5862 = vmul.f32 %v5468, 1.442695
  %v5863 = vpow.pop %v5862
  %v5864 = vmul.f32 %v5469, 1.442695
  %v5865 = vpow.pop %v5864
  %v5866 = vmul.f32 %v5470, 1.442695
  %v5867 = vpow.pop %v5866
  %v5868 = vmul.f32 %v5471, 1.442695
  %v5869 = vpow.pop %v5868
  %v5870 = vmul.f32 %v5472, 1.442695
  %v5871 = vpow.pop %v5870
  %v5872 = vmul.f32 %v5473, 1.442695
  %v5873 = vpow.pop %v5872
  %v5874 = vmul.f32 %v5474, 1.442695
  %v5875 = vpow.pop %v5874
  %v5876 = vmul.f32 %v5475, 1.442695
  %v5877 = vpow.pop %v5876
  %v5878 = vmul.f32 %v5476, 1.442695
  %v5879 = vpow.pop %v5878
  %v5880 = vmul.f32 %v5477, 1.442695
  %v5881 = vpow.pop %v5880
  %v5882 = vmul.f32 %v5478, 1.442695
  %v5883 = vpow.pop %v5882
  %v5884 = vmul.f32 %v5479, 1.442695
  %v5885 = vpow.pop %v5884
  %v5886 = vmul.f32 %v5480, 1.442695
  %v5887 = vpow.pop %v5886
  %v5888 = vmul.f32 %v5481, 1.442695
  %v5889 = vpow.pop %v5888
  %v5890 = vmul.f32 %v5482, 1.442695
  %v5891 = vpow.pop %v5890
  %v5892 = vmul.f32 %v5483, 1.442695
  %v5893 = vpow.pop %v5892
  %v5894 = vmul.f32 %v5484, 1.442695
  %v5895 = vpow.pop %v5894
  %v5896 = vmul.f32 %v5485, 1.442695
  %v5897 = vpow.pop %v5896
  %v5898 = vmul.f32 %v5486, 1.442695
  %v5899 = vpow.pop %v5898
  %v5900 = vmul.f32 %v5487, 1.442695
  %v5901 = vpow.pop %v5900
  %v5902 = vmul.f32 %v5488, 1.442695
  %v5903 = vpow.pop %v5902
  %v5904 = vmul.f32 %v5489, 1.442695
  %v5905 = vpow.pop %v5904
  %v5906 = vmul.f32 %v5490, 1.442695
  %v5907 = vpow.pop %v5906
  %v5908 = vmul.f32 %v5491, 1.442695
  %v5909 = vpow.pop %v5908
  %v5910 = vmul.f32 %v5492, 1.442695
  %v5911 = vpow.pop %v5910
  %v5912 = vmul.f32 %v5493, 1.442695
  %v5913 = vpow.pop %v5912
  %v5914 = vmul.f32 %v5494, 1.442695
  %v5915 = vpow.pop %v5914
  %v5916 = vmul.f32 %v5495, 1.442695
  %v5917 = vpow.pop %v5916
  %v5918 = vmul.f32 %v5496, 1.442695
  %v5919 = vpow.pop %v5918
  %v5920 = vmul.f32 %v5497, 1.442695
  %v5921 = vpow.pop %v5920
  %v5922 = vmul.f32 %v5498, 1.442695
  %v5923 = vpow.pop %v5922
  %v5924 = vmul.f32 %v5499, 1.442695
  %v5925 = vpow.pop %v5924
  %v5926 = vmul.f32 %v5500, 1.442695
  %v5927 = vpow.pop %v5926
  %v5928 = vmul.f32 %v5501, 1.442695
  %v5929 = vpow.pop %v5928
  %v5930 = vmul.f32 %v5502, 1.442695
  %v5931 = vpow.pop %v5930
  %v5932 = vmul.f32 %v5503, 1.442695
  %v5933 = vpow.pop %v5932
  %v5934 = vmul.f32 %v5504, 1.442695
  %v5935 = vpow.pop %v5934
  %v5936 = vmul.f32 %v5505, 1.442695
  %v5937 = vpow.pop %v5936
  %v5938 = vmul.f32 %v5506, 1.442695
  %v5939 = vpow.pop %v5938
  %v5940 = vmul.f32 %v5507, 1.442695
  %v5941 = vpow.pop %v5940
  %v5942 = vmul.f32 %v5508, 1.442695
  %v5943 = vpow.pop %v5942
  %v5944 = vmul.f32 %v5509, 1.442695
  %v5945 = vpow.pop %v5944
  %v5946 = vmul.f32 %v5510, 1.442695
  %v5947 = vpow.pop %v5946
  %v5948 = vmul.f32 %v5511, 1.442695
  %v5949 = vpow.pop %v5948
  %v5950 = vmul.f32 %v5512, 1.442695
  %v5951 = vpow.pop %v5950
  %v5952 = vmul.f32 %v5513, 1.442695
  %v5953 = vpow.pop %v5952
  %v5954 = vmul.f32 %v5514, 1.442695
  %v5955 = vpow.pop %v5954
  %v5956 = vmul.f32 %v5515, 1.442695
  %v5957 = vpow.pop %v5956
  %v5958 = vmul.f32 %v5516, 1.442695
  %v5959 = vpow.pop %v5958
  %v5960 = vmul.f32 %v5517, 1.442695
  %v5961 = vpow.pop %v5960
  %v5962 = vmul.f32 %v5518, 1.442695
  %v5963 = vpow.pop %v5962
  %v5964 = vmul.f32 %v5519, 1.442695
  %v5965 = vpow.pop %v5964
  %v5966 = vmul.f32 %v5520, 1.442695
  %v5967 = vpow.pop %v5966
  %v5968 = vmul.f32 %v5521, 1.442695
  %v5969 = vpow.pop %v5968
  %v5970 = vadd.f32 %v5523, 1.0
  %v5971 = vadd.f32 %v5525, 1.0
  %v5972 = vadd.f32 %v5527, 1.0
  %v5973 = vadd.f32 %v5529, 1.0
  %v5974 = vadd.f32 %v5531, 1.0
  %v5975 = vadd.f32 %v5533, 1.0
  %v5976 = vadd.f32 %v5535, 1.0
  %v5977 = vadd.f32 %v5537, 1.0
  %v5978 = vadd.f32 %v5539, 1.0
  %v5979 = vadd.f32 %v5541, 1.0
  %v5980 = vadd.f32 %v5543, 1.0
  %v5981 = vadd.f32 %v5545, 1.0
  %v5982 = vadd.f32 %v5547, 1.0
  %v5983 = vadd.f32 %v5549, 1.0
  %v5984 = vadd.f32 %v5551, 1.0
  %v5985 = vadd.f32 %v5553, 1.0
  %v5986 = vadd.f32 %v5555, 1.0
  %v5987 = vadd.f32 %v5557, 1.0
  %v5988 = vadd.f32 %v5559, 1.0
  %v5989 = vadd.f32 %v5561, 1.0
  %v5990 = vadd.f32 %v5563, 1.0
  %v5991 = vadd.f32 %v5565, 1.0
  %v5992 = vadd.f32 %v5567, 1.0
  %v5993 = vadd.f32 %v5569, 1.0
  %v5994 = vadd.f32 %v5571, 1.0
  %v5995 = vadd.f32 %v5573, 1.0
  %v5996 = vadd.f32 %v5575, 1.0
  %v5997 = vadd.f32 %v5577, 1.0
  %v5998 = vadd.f32 %v5579, 1.0
  %v5999 = vadd.f32 %v5581, 1.0
  %v6000 = vadd.f32 %v5583, 1.0
  %v6001 = vadd.f32 %v5585, 1.0
  %v6002 = vadd.f32 %v5587, 1.0
  %v6003 = vadd.f32 %v5589, 1.0
  %v6004 = vadd.f32 %v5591, 1.0
  %v6005 = vadd.f32 %v5593, 1.0
  %v6006 = vadd.f32 %v5595, 1.0
  %v6007 = vadd.f32 %v5597, 1.0
  %v6008 = vadd.f32 %v5599, 1.0
  %v6009 = vadd.f32 %v5601, 1.0
  %v6010 = vadd.f32 %v5603, 1.0
  %v6011 = vadd.f32 %v5605, 1.0
  %v6012 = vadd.f32 %v5607, 1.0
  %v6013 = vadd.f32 %v5609, 1.0
  %v6014 = vadd.f32 %v5611, 1.0
  %v6015 = vadd.f32 %v5613, 1.0
  %v6016 = vadd.f32 %v5615, 1.0
  %v6017 = vadd.f32 %v5617, 1.0
  %v6018 = vadd.f32 %v5619, 1.0
  %v6019 = vadd.f32 %v5621, 1.0
  %v6020 = vadd.f32 %v5623, 1.0
  %v6021 = vadd.f32 %v5625, 1.0
  %v6022 = vadd.f32 %v5627, 1.0
  %v6023 = vadd.f32 %v5629, 1.0
  %v6024 = vadd.f32 %v5631, 1.0
  %v6025 = vadd.f32 %v5633, 1.0
  %v6026 = vadd.f32 %v5635, 1.0
  %v6027 = vadd.f32 %v5637, 1.0
  %v6028 = vadd.f32 %v5639, 1.0
  %v6029 = vadd.f32 %v5641, 1.0
  %v6030 = vadd.f32 %v5643, 1.0
  %v6031 = vadd.f32 %v5645, 1.0
  %v6032 = vadd.f32 %v5647, 1.0
  %v6033 = vadd.f32 %v5649, 1.0
  %v6034 = vadd.f32 %v5651, 1.0
  %v6035 = vadd.f32 %v5653, 1.0
  %v6036 = vadd.f32 %v5655, 1.0
  %v6037 = vadd.f32 %v5657, 1.0
  %v6038 = vadd.f32 %v5659, 1.0
  %v6039 = vadd.f32 %v5661, 1.0
  %v6040 = vadd.f32 %v5663, 1.0
  %v6041 = vadd.f32 %v5665, 1.0
  %v6042 = vadd.f32 %v5667, 1.0
  %v6043 = vadd.f32 %v5669, 1.0
  %v6044 = vadd.f32 %v5671, 1.0
  %v6045 = vadd.f32 %v5673, 1.0
  %v6046 = vadd.f32 %v5675, 1.0
  %v6047 = vadd.f32 %v5677, 1.0
  %v6048 = vadd.f32 %v5679, 1.0
  %v6049 = vadd.f32 %v5681, 1.0
  %v6050 = vadd.f32 %v5683, 1.0
  %v6051 = vadd.f32 %v5685, 1.0
  %v6052 = vadd.f32 %v5687, 1.0
  %v6053 = vadd.f32 %v5689, 1.0
  %v6054 = vadd.f32 %v5691, 1.0
  %v6055 = vadd.f32 %v5693, 1.0
  %v6056 = vadd.f32 %v5695, 1.0
  %v6057 = vadd.f32 %v5697, 1.0
  %v6058 = vadd.f32 %v5699, 1.0
  %v6059 = vadd.f32 %v5701, 1.0
  %v6060 = vadd.f32 %v5703, 1.0
  %v6061 = vadd.f32 %v5705, 1.0
  %v6062 = vadd.f32 %v5707, 1.0
  %v6063 = vadd.f32 %v5709, 1.0
  %v6064 = vadd.f32 %v5711, 1.0
  %v6065 = vadd.f32 %v5713, 1.0
  %v6066 = vadd.f32 %v5715, 1.0
  %v6067 = vadd.f32 %v5717, 1.0
  %v6068 = vadd.f32 %v5719, 1.0
  %v6069 = vadd.f32 %v5721, 1.0
  %v6070 = vadd.f32 %v5723, 1.0
  %v6071 = vadd.f32 %v5725, 1.0
  %v6072 = vadd.f32 %v5727, 1.0
  %v6073 = vadd.f32 %v5729, 1.0
  %v6074 = vadd.f32 %v5731, 1.0
  %v6075 = vadd.f32 %v5733, 1.0
  %v6076 = vadd.f32 %v5735, 1.0
  %v6077 = vadd.f32 %v5737, 1.0
  %v6078 = vadd.f32 %v5739, 1.0
  %v6079 = vadd.f32 %v5741, 1.0
  %v6080 = vadd.f32 %v5743, 1.0
  %v6081 = vadd.f32 %v5745, 1.0
  %v6082 = vadd.f32 %v5747, 1.0
  %v6083 = vadd.f32 %v5749, 1.0
  %v6084 = vadd.f32 %v5751, 1.0
  %v6085 = vadd.f32 %v5753, 1.0
  %v6086 = vadd.f32 %v5755, 1.0
  %v6087 = vadd.f32 %v5757, 1.0
  %v6088 = vadd.f32 %v5759, 1.0
  %v6089 = vadd.f32 %v5761, 1.0
  %v6090 = vadd.f32 %v5763, 1.0
  %v6091 = vadd.f32 %v5765, 1.0
  %v6092 = vadd.f32 %v5767, 1.0
  %v6093 = vadd.f32 %v5769, 1.0
  %v6094 = vadd.f32 %v5771, 1.0
  %v6095 = vadd.f32 %v5773, 1.0
  %v6096 = vadd.f32 %v5775, 1.0
  %v6097 = vadd.f32 %v5777, 1.0
  %v6098 = vadd.f32 %v5779, 1.0
  %v6099 = vadd.f32 %v5781, 1.0
  %v6100 = vadd.f32 %v5783, 1.0
  %v6101 = vadd.f32 %v5785, 1.0
  %v6102 = vadd.f32 %v5787, 1.0
  %v6103 = vadd.f32 %v5789, 1.0
  %v6104 = vadd.f32 %v5791, 1.0
  %v6105 = vadd.f32 %v5793, 1.0
  %v6106 = vadd.f32 %v5795, 1.0
  %v6107 = vadd.f32 %v5797, 1.0
  %v6108 = vadd.f32 %v5799, 1.0
  %v6109 = vadd.f32 %v5801, 1.0
  %v6110 = vadd.f32 %v5803, 1.0
  %v6111 = vadd.f32 %v5805, 1.0
  %v6112 = vadd.f32 %v5807, 1.0
  %v6113 = vadd.f32 %v5809, 1.0
  %v6114 = vadd.f32 %v5811, 1.0
  %v6115 = vadd.f32 %v5813, 1.0
  %v6116 = vadd.f32 %v5815, 1.0
  %v6117 = vadd.f32 %v5817, 1.0
  %v6118 = vadd.f32 %v5819, 1.0
  %v6119 = vadd.f32 %v5821, 1.0
  %v6120 = vadd.f32 %v5823, 1.0
  %v6121 = vadd.f32 %v5825, 1.0
  %v6122 = vadd.f32 %v5827, 1.0
  %v6123 = vadd.f32 %v5829, 1.0
  %v6124 = vadd.f32 %v5831, 1.0
  %v6125 = vadd.f32 %v5833, 1.0
  %v6126 = vadd.f32 %v5835, 1.0
  %v6127 = vadd.f32 %v5837, 1.0
  %v6128 = vadd.f32 %v5839, 1.0
  %v6129 = vadd.f32 %v5841, 1.0
  %v6130 = vadd.f32 %v5843, 1.0
  %v6131 = vadd.f32 %v5845, 1.0
  %v6132 = vadd.f32 %v5847, 1.0
  %v6133 = vadd.f32 %v5849, 1.0
  %v6134 = vadd.f32 %v5851, 1.0
  %v6135 = vadd.f32 %v5853, 1.0
  %v6136 = vadd.f32 %v5855, 1.0
  %v6137 = vadd.f32 %v5857, 1.0
  %v6138 = vadd.f32 %v5859, 1.0
  %v6139 = vadd.f32 %v5861, 1.0
  %v6140 = vadd.f32 %v5863, 1.0
  %v6141 = vadd.f32 %v5865, 1.0
  %v6142 = vadd.f32 %v5867, 1.0
  %v6143 = vadd.f32 %v5869, 1.0
  %v6144 = vadd.f32 %v5871, 1.0
  %v6145 = vadd.f32 %v5873, 1.0
  %v6146 = vadd.f32 %v5875, 1.0
  %v6147 = vadd.f32 %v5877, 1.0
  %v6148 = vadd.f32 %v5879, 1.0
  %v6149 = vadd.f32 %v5881, 1.0
  %v6150 = vadd.f32 %v5883, 1.0
  %v6151 = vadd.f32 %v5885, 1.0
  %v6152 = vadd.f32 %v5887, 1.0
  %v6153 = vadd.f32 %v5889, 1.0
  %v6154 = vadd.f32 %v5891, 1.0
  %v6155 = vadd.f32 %v5893, 1.0
  %v6156 = vadd.f32 %v5895, 1.0
  %v6157 = vadd.f32 %v5897, 1.0
  %v6158 = vadd.f32 %v5899, 1.0
  %v6159 = vadd.f32 %v5901, 1.0
  %v6160 = vadd.f32 %v5903, 1.0
  %v6161 = vadd.f32 %v5905, 1.0
  %v6162 = vadd.f32 %v5907, 1.0
  %v6163 = vadd.f32 %v5909, 1.0
  %v6164 = vadd.f32 %v5911, 1.0
  %v6165 = vadd.f32 %v5913, 1.0
  %v6166 = vadd.f32 %v5915, 1.0
  %v6167 = vadd.f32 %v5917, 1.0
  %v6168 = vadd.f32 %v5919, 1.0
  %v6169 = vadd.f32 %v5921, 1.0
  %v6170 = vadd.f32 %v5923, 1.0
  %v6171 = vadd.f32 %v5925, 1.0
  %v6172 = vadd.f32 %v5927, 1.0
  %v6173 = vadd.f32 %v5929, 1.0
  %v6174 = vadd.f32 %v5931, 1.0
  %v6175 = vadd.f32 %v5933, 1.0
  %v6176 = vadd.f32 %v5935, 1.0
  %v6177 = vadd.f32 %v5937, 1.0
  %v6178 = vadd.f32 %v5939, 1.0
  %v6179 = vadd.f32 %v5941, 1.0
  %v6180 = vadd.f32 %v5943, 1.0
  %v6181 = vadd.f32 %v5945, 1.0
  %v6182 = vadd.f32 %v5947, 1.0
  %v6183 = vadd.f32 %v5949, 1.0
  %v6184 = vadd.f32 %v5951, 1.0
  %v6185 = vadd.f32 %v5953, 1.0
  %v6186 = vadd.f32 %v5955, 1.0
  %v6187 = vadd.f32 %v5957, 1.0
  %v6188 = vadd.f32 %v5959, 1.0
  %v6189 = vadd.f32 %v5961, 1.0
  %v6190 = vadd.f32 %v5963, 1.0
  %v6191 = vadd.f32 %v5965, 1.0
  %v6192 = vadd.f32 %v5967, 1.0
  %v6193 = vadd.f32 %v5969, 1.0
  %v6194 = vrcp.pop %v5970
  %v6195 = vrcp.pop %v5971
  %v6196 = vrcp.pop %v5972
  %v6197 = vrcp.pop %v5973
  %v6198 = vrcp.pop %v5974
  %v6199 = vrcp.pop %v5975
  %v6200 = vrcp.pop %v5976
  %v6201 = vrcp.pop %v5977
  %v6202 = vrcp.pop %v5978
  %v6203 = vrcp.pop %v5979
  %v6204 = vrcp.pop %v5980
  %v6205 = vrcp.pop %v5981
  %v6206 = vrcp.pop %v5982
  %v6207 = vrcp.pop %v5983
  %v6208 = vrcp.pop %v5984
  %v6209 = vrcp.pop %v5985
  %v6210 = vrcp.pop %v5986
  %v6211 = vrcp.pop %v5987
  %v6212 = vrcp.pop %v5988
  %v6213 = vrcp.pop %v5989
  %v6214 = vrcp.pop %v5990
  %v6215 = vrcp.pop %v5991
  %v6216 = vrcp.pop %v5992
  %v6217 = vrcp.pop %v5993
  %v6218 = vrcp.pop %v5994
  %v6219 = vrcp.pop %v5995
  %v6220 = vrcp.pop %v5996
  %v6221 = vrcp.pop %v5997
  %v6222 = vrcp.pop %v5998
  %v6223 = vrcp.pop %v5999
  %v6224 = vrcp.pop %v6000
  %v6225 = vrcp.pop %v6001
  %v6226 = vrcp.pop %v6002
  %v6227 = vrcp.pop %v6003
  %v6228 = vrcp.pop %v6004
  %v6229 = vrcp.pop %v6005
  %v6230 = vrcp.pop %v6006
  %v6231 = vrcp.pop %v6007
  %v6232 = vrcp.pop %v6008
  %v6233 = vrcp.pop %v6009
  %v6234 = vrcp.pop %v6010
  %v6235 = vrcp.pop %v6011
  %v6236 = vrcp.pop %v6012
  %v6237 = vrcp.pop %v6013
  %v6238 = vrcp.pop %v6014
  %v6239 = vrcp.pop %v6015
  %v6240 = vrcp.pop %v6016
  %v6241 = vrcp.pop %v6017
  %v6242 = vrcp.pop %v6018
  %v6243 = vrcp.pop %v6019
  %v6244 = vrcp.pop %v6020
  %v6245 = vrcp.pop %v6021
  %v6246 = vrcp.pop %v6022
  %v6247 = vrcp.pop %v6023
  %v6248 = vrcp.pop %v6024
  %v6249 = vrcp.pop %v6025
  %v6250 = vrcp.pop %v6026
  %v6251 = vrcp.pop %v6027
  %v6252 = vrcp.pop %v6028
  %v6253 = vrcp.pop %v6029
  %v6254 = vrcp.pop %v6030
  %v6255 = vrcp.pop %v6031
  %v6256 = vrcp.pop %v6032
  %v6257 = vrcp.pop %v6033
  %v6258 = vrcp.pop %v6034
  %v6259 = vrcp.pop %v6035
  %v6260 = vrcp.pop %v6036
  %v6261 = vrcp.pop %v6037
  %v6262 = vrcp.pop %v6038
  %v6263 = vrcp.pop %v6039
  %v6264 = vrcp.pop %v6040
  %v6265 = vrcp.pop %v6041
  %v6266 = vrcp.pop %v6042
  %v6267 = vrcp.pop %v6043
  %v6268 = vrcp.pop %v6044
  %v6269 = vrcp.pop %v6045
  %v6270 = vrcp.pop %v6046
  %v6271 = vrcp.pop %v6047
  %v6272 = vrcp.pop %v6048
  %v6273 = vrcp.pop %v6049
  %v6274 = vrcp.pop %v6050
  %v6275 = vrcp.pop %v6051
  %v6276 = vrcp.pop %v6052
  %v6277 = vrcp.pop %v6053
  %v6278 = vrcp.pop %v6054
  %v6279 = vrcp.pop %v6055
  %v6280 = vrcp.pop %v6056
  %v6281 = vrcp.pop %v6057
  %v6282 = vrcp.pop %v6058
  %v6283 = vrcp.pop %v6059
  %v6284 = vrcp.pop %v6060
  %v6285 = vrcp.pop %v6061
  %v6286 = vrcp.pop %v6062
  %v6287 = vrcp.pop %v6063
  %v6288 = vrcp.pop %v6064
  %v6289 = vrcp.pop %v6065
  %v6290 = vrcp.pop %v6066
  %v6291 = vrcp.pop %v6067
  %v6292 = vrcp.pop %v6068
  %v6293 = vrcp.pop %v6069
  %v6294 = vrcp.pop %v6070
  %v6295 = vrcp.pop %v6071
  %v6296 = vrcp.pop %v6072
  %v6297 = vrcp.pop %v6073
  %v6298 = vrcp.pop %v6074
  %v6299 = vrcp.pop %v6075
  %v6300 = vrcp.pop %v6076
  %v6301 = vrcp.pop %v6077
  %v6302 = vrcp.pop %v6078
  %v6303 = vrcp.pop %v6079
  %v6304 = vrcp.pop %v6080
  %v6305 = vrcp.pop %v6081
  %v6306 = vrcp.pop %v6082
  %v6307 = vrcp.pop %v6083
  %v6308 = vrcp.pop %v6084
  %v6309 = vrcp.pop %v6085
  %v6310 = vrcp.pop %v6086
  %v6311 = vrcp.pop %v6087
  %v6312 = vrcp.pop %v6088
  %v6313 = vrcp.pop %v6089
  %v6314 = vrcp.pop %v6090
  %v6315 = vrcp.pop %v6091
  %v6316 = vrcp.pop %v6092
  %v6317 = vrcp.pop %v6093
  %v6318 = vrcp.pop %v6094
  %v6319 = vrcp.pop %v6095
  %v6320 = vrcp.pop %v6096
  %v6321 = vrcp.pop %v6097
  %v6322 = vrcp.pop %v6098
  %v6323 = vrcp.pop %v6099
  %v6324 = vrcp.pop %v6100
  %v6325 = vrcp.pop %v6101
  %v6326 = vrcp.pop %v6102
  %v6327 = vrcp.pop %v6103
  %v6328 = vrcp.pop %v6104
  %v6329 = vrcp.pop %v6105
  %v6330 = vrcp.pop %v6106
  %v6331 = vrcp.pop %v6107
  %v6332 = vrcp.pop %v6108
  %v6333 = vrcp.pop %v6109
  %v6334 = vrcp.pop %v6110
  %v6335 = vrcp.pop %v6111
  %v6336 = vrcp.pop %v6112
  %v6337 = vrcp.pop %v6113
  %v6338 = vrcp.pop %v6114
  %v6339 = vrcp.pop %v6115
  %v6340 = vrcp.pop %v6116
  %v6341 = vrcp.pop %v6117
  %v6342 = vrcp.pop %v6118
  %v6343 = vrcp.pop %v6119
  %v6344 = vrcp.pop %v6120
  %v6345 = vrcp.pop %v6121
  %v6346 = vrcp.pop %v6122
  %v6347 = vrcp.pop %v6123
  %v6348 = vrcp.pop %v6124
  %v6349 = vrcp.pop %v6125
  %v6350 = vrcp.pop %v6126
  %v6351 = vrcp.pop %v6127
  %v6352 = vrcp.pop %v6128
  %v6353 = vrcp.pop %v6129
  %v6354 = vrcp.pop %v6130
  %v6355 = vrcp.pop %v6131
  %v6356 = vrcp.pop %v6132
  %v6357 = vrcp.pop %v6133
  %v6358 = vrcp.pop %v6134
  %v6359 = vrcp.pop %v6135
  %v6360 = vrcp.pop %v6136
  %v6361 = vrcp.pop %v6137
  %v6362 = vrcp.pop %v6138
  %v6363 = vrcp.pop %v6139
  %v6364 = vrcp.pop %v6140
  %v6365 = vrcp.pop %v6141
  %v6366 = vrcp.pop %v6142
  %v6367 = vrcp.pop %v6143
  %v6368 = vrcp.pop %v6144
  %v6369 = vrcp.pop %v6145
  %v6370 = vrcp.pop %v6146
  %v6371 = vrcp.pop %v6147
  %v6372 = vrcp.pop %v6148
  %v6373 = vrcp.pop %v6149
  %v6374 = vrcp.pop %v6150
  %v6375 = vrcp.pop %v6151
  %v6376 = vrcp.pop %v6152
  %v6377 = vrcp.pop %v6153
  %v6378 = vrcp.pop %v6154
  %v6379 = vrcp.pop %v6155
  %v6380 = vrcp.pop %v6156
  %v6381 = vrcp.pop %v6157
  %v6382 = vrcp.pop %v6158
  %v6383 = vrcp.pop %v6159
  %v6384 = vrcp.pop %v6160
  %v6385 = vrcp.pop %v6161
  %v6386 = vrcp.pop %v6162
  %v6387 = vrcp.pop %v6163
  %v6388 = vrcp.pop %v6164
  %v6389 = vrcp.pop %v6165
  %v6390 = vrcp.pop %v6166
  %v6391 = vrcp.pop %v6167
  %v6392 = vrcp.pop %v6168
  %v6393 = vrcp.pop %v6169
  %v6394 = vrcp.pop %v6170
  %v6395 = vrcp.pop %v6171
  %v6396 = vrcp.pop %v6172
  %v6397 = vrcp.pop %v6173
  %v6398 = vrcp.pop %v6174
  %v6399 = vrcp.pop %v6175
  %v6400 = vrcp.pop %v6176
  %v6401 = vrcp.pop %v6177
  %v6402 = vrcp.pop %v6178
  %v6403 = vrcp.pop %v6179
  %v6404 = vrcp.pop %v6180
  %v6405 = vrcp.pop %v6181
  %v6406 = vrcp.pop %v6182
  %v6407 = vrcp.pop %v6183
  %v6408 = vrcp.pop %v6184
  %v6409 = vrcp.pop %v6185
  %v6410 = vrcp.pop %v6186
  %v6411 = vrcp.pop %v6187
  %v6412 = vrcp.pop %v6188
  %v6413 = vrcp.pop %v6189
  %v6414 = vrcp.pop %v6190
  %v6415 = vrcp.pop %v6191
  %v6416 = vrcp.pop %v6192
  %v6417 = vrcp.pop %v6193
  %v6418 = vpack.c.bf16 %v6201, %v6194
  %v6419 = vpack.c.bf16 %v6202, %v6195
  %v6420 = vpack.c.bf16 %v6203, %v6196
  %v6421 = vpack.c.bf16 %v6204, %v6197
  %v6422 = vpack.c.bf16 %v6205, %v6198
  %v6423 = vpack.c.bf16 %v6206, %v6199
  %v6424 = vpack.c.bf16 %v6207, %v6200
  %v6425 = vpack.c.bf16 %v6215, %v6208
  %v6426 = vpack.c.bf16 %v6216, %v6209
  %v6427 = vpack.c.bf16 %v6217, %v6210
  %v6428 = vpack.c.bf16 %v6218, %v6211
  %v6429 = vpack.c.bf16 %v6219, %v6212
  %v6430 = vpack.c.bf16 %v6220, %v6213
  %v6431 = vpack.c.bf16 %v6221, %v6214
  %v6432 = vpack.c.bf16 %v6229, %v6222
  %v6433 = vpack.c.bf16 %v6230, %v6223
  %v6434 = vpack.c.bf16 %v6231, %v6224
  %v6435 = vpack.c.bf16 %v6232, %v6225
  %v6436 = vpack.c.bf16 %v6233, %v6226
  %v6437 = vpack.c.bf16 %v6234, %v6227
  %v6438 = vpack.c.bf16 %v6235, %v6228
  %v6439 = vpack.c.bf16 %v6243, %v6236
  %v6440 = vpack.c.bf16 %v6244, %v6237
  %v6441 = vpack.c.bf16 %v6245, %v6238
  %v6442 = vpack.c.bf16 %v6246, %v6239
  %v6443 = vpack.c.bf16 %v6247, %v6240
  %v6444 = vpack.c.bf16 %v6248, %v6241
  %v6445 = vpack.c.bf16 %v6249, %v6242
  %v6446 = vpack.c.bf16 %v6257, %v6250
  %v6447 = vpack.c.bf16 %v6258, %v6251
  %v6448 = vpack.c.bf16 %v6259, %v6252
  %v6449 = vpack.c.bf16 %v6260, %v6253
  %v6450 = vpack.c.bf16 %v6261, %v6254
  %v6451 = vpack.c.bf16 %v6262, %v6255
  %v6452 = vpack.c.bf16 %v6263, %v6256
  %v6453 = vpack.c.bf16 %v6271, %v6264
  %v6454 = vpack.c.bf16 %v6272, %v6265
  %v6455 = vpack.c.bf16 %v6273, %v6266
  %v6456 = vpack.c.bf16 %v6274, %v6267
  %v6457 = vpack.c.bf16 %v6275, %v6268
  %v6458 = vpack.c.bf16 %v6276, %v6269
  %v6459 = vpack.c.bf16 %v6277, %v6270
  %v6460 = vpack.c.bf16 %v6285, %v6278
  %v6461 = vpack.c.bf16 %v6286, %v6279
  %v6462 = vpack.c.bf16 %v6287, %v6280
  %v6463 = vpack.c.bf16 %v6288, %v6281
  %v6464 = vpack.c.bf16 %v6289, %v6282
  %v6465 = vpack.c.bf16 %v6290, %v6283
  %v6466 = vpack.c.bf16 %v6291, %v6284
  %v6467 = vpack.c.bf16 %v6299, %v6292
  %v6468 = vpack.c.bf16 %v6300, %v6293
  %v6469 = vpack.c.bf16 %v6301, %v6294
  %v6470 = vpack.c.bf16 %v6302, %v6295
  %v6471 = vpack.c.bf16 %v6303, %v6296
  %v6472 = vpack.c.bf16 %v6304, %v6297
  %v6473 = vpack.c.bf16 %v6305, %v6298
  %v6474 = vpack.c.bf16 %v6313, %v6306
  %v6475 = vpack.c.bf16 %v6314, %v6307
  %v6476 = vpack.c.bf16 %v6315, %v6308
  %v6477 = vpack.c.bf16 %v6316, %v6309
  %v6478 = vpack.c.bf16 %v6317, %v6310
  %v6479 = vpack.c.bf16 %v6318, %v6311
  %v6480 = vpack.c.bf16 %v6319, %v6312
  %v6481 = vpack.c.bf16 %v6327, %v6320
  %v6482 = vpack.c.bf16 %v6328, %v6321
  %v6483 = vpack.c.bf16 %v6329, %v6322
  %v6484 = vpack.c.bf16 %v6330, %v6323
  %v6485 = vpack.c.bf16 %v6331, %v6324
  %v6486 = vpack.c.bf16 %v6332, %v6325
  %v6487 = vpack.c.bf16 %v6333, %v6326
  %v6488 = vpack.c.bf16 %v6341, %v6334
  %v6489 = vpack.c.bf16 %v6342, %v6335
  %v6490 = vpack.c.bf16 %v6343, %v6336
  %v6491 = vpack.c.bf16 %v6344, %v6337
  %v6492 = vpack.c.bf16 %v6345, %v6338
  %v6493 = vpack.c.bf16 %v6346, %v6339
  %v6494 = vpack.c.bf16 %v6347, %v6340
  %v6495 = vpack.c.bf16 %v6355, %v6348
  %v6496 = vpack.c.bf16 %v6356, %v6349
  %v6497 = vpack.c.bf16 %v6357, %v6350
  %v6498 = vpack.c.bf16 %v6358, %v6351
  %v6499 = vpack.c.bf16 %v6359, %v6352
  %v6500 = vpack.c.bf16 %v6360, %v6353
  %v6501 = vpack.c.bf16 %v6361, %v6354
  %v6502 = vpack.c.bf16 %v6369, %v6362
  %v6503 = vpack.c.bf16 %v6370, %v6363
  %v6504 = vpack.c.bf16 %v6371, %v6364
  %v6505 = vpack.c.bf16 %v6372, %v6365
  %v6506 = vpack.c.bf16 %v6373, %v6366
  %v6507 = vpack.c.bf16 %v6374, %v6367
  %v6508 = vpack.c.bf16 %v6375, %v6368
  %v6509 = vpack.c.bf16 %v6383, %v6376
  %v6510 = vpack.c.bf16 %v6384, %v6377
  %v6511 = vpack.c.bf16 %v6385, %v6378
  %v6512 = vpack.c.bf16 %v6386, %v6379
  %v6513 = vpack.c.bf16 %v6387, %v6380
  %v6514 = vpack.c.bf16 %v6388, %v6381
  %v6515 = vpack.c.bf16 %v6389, %v6382
  %v6516 = vpack.c.bf16 %v6397, %v6390
  %v6517 = vpack.c.bf16 %v6398, %v6391
  %v6518 = vpack.c.bf16 %v6399, %v6392
  %v6519 = vpack.c.bf16 %v6400, %v6393
  %v6520 = vpack.c.bf16 %v6401, %v6394
  %v6521 = vpack.c.bf16 %v6402, %v6395
  %v6522 = vpack.c.bf16 %v6403, %v6396
  %v6523 = vpack.c.bf16 %v6411, %v6404
  %v6524 = vpack.c.bf16 %v6412, %v6405
  %v6525 = vpack.c.bf16 %v6413, %v6406
  %v6526 = vpack.c.bf16 %v6414, %v6407
  %v6527 = vpack.c.bf16 %v6415, %v6408
  %v6528 = vpack.c.bf16 %v6416, %v6409
  %v6529 = vpack.c.bf16 %v6417, %v6410
  %v6642 = vunpack.c.l.b16 %v6418
  %v6643 = vunpack.c.l.b16 %v6419
  %v6644 = vunpack.c.l.b16 %v6420
  %v6645 = vunpack.c.l.b16 %v6421
  %v6646 = vunpack.c.l.b16 %v6422
  %v6647 = vunpack.c.l.b16 %v6423
  %v6648 = vunpack.c.l.b16 %v6424
  %v6649 = vunpack.c.h.b16 %v6418
  %v6650 = vunpack.c.h.b16 %v6419
  %v6651 = vunpack.c.h.b16 %v6420
  %v6652 = vunpack.c.h.b16 %v6421
  %v6653 = vunpack.c.h.b16 %v6422
  %v6654 = vunpack.c.h.b16 %v6423
  %v6655 = vunpack.c.h.b16 %v6424
  %v6656 = vunpack.c.l.b16 %v6425
  %v6657 = vunpack.c.l.b16 %v6426
  %v6658 = vunpack.c.l.b16 %v6427
  %v6659 = vunpack.c.l.b16 %v6428
  %v6660 = vunpack.c.l.b16 %v6429
  %v6661 = vunpack.c.l.b16 %v6430
  %v6662 = vunpack.c.l.b16 %v6431
  %v6663 = vunpack.c.h.b16 %v6425
  %v6664 = vunpack.c.h.b16 %v6426
  %v6665 = vunpack.c.h.b16 %v6427
  %v6666 = vunpack.c.h.b16 %v6428
  %v6667 = vunpack.c.h.b16 %v6429
  %v6668 = vunpack.c.h.b16 %v6430
  %v6669 = vunpack.c.h.b16 %v6431
  %v6670 = vunpack.c.l.b16 %v6432
  %v6671 = vunpack.c.l.b16 %v6433
  %v6672 = vunpack.c.l.b16 %v6434
  %v6673 = vunpack.c.l.b16 %v6435
  %v6674 = vunpack.c.l.b16 %v6436
  %v6675 = vunpack.c.l.b16 %v6437
  %v6676 = vunpack.c.l.b16 %v6438
  %v6677 = vunpack.c.h.b16 %v6432
  %v6678 = vunpack.c.h.b16 %v6433
  %v6679 = vunpack.c.h.b16 %v6434
  %v6680 = vunpack.c.h.b16 %v6435
  %v6681 = vunpack.c.h.b16 %v6436
  %v6682 = vunpack.c.h.b16 %v6437
  %v6683 = vunpack.c.h.b16 %v6438
  %v6684 = vunpack.c.l.b16 %v6439
  %v6685 = vunpack.c.l.b16 %v6440
  %v6686 = vunpack.c.l.b16 %v6441
  %v6687 = vunpack.c.l.b16 %v6442
  %v6688 = vunpack.c.l.b16 %v6443
  %v6689 = vunpack.c.l.b16 %v6444
  %v6690 = vunpack.c.l.b16 %v6445
  %v6691 = vunpack.c.h.b16 %v6439
  %v6692 = vunpack.c.h.b16 %v6440
  %v6693 = vunpack.c.h.b16 %v6441
  %v6694 = vunpack.c.h.b16 %v6442
  %v6695 = vunpack.c.h.b16 %v6443
  %v6696 = vunpack.c.h.b16 %v6444
  %v6697 = vunpack.c.h.b16 %v6445
  %v6698 = vunpack.c.l.b16 %v6446
  %v6699 = vunpack.c.l.b16 %v6447
  %v6700 = vunpack.c.l.b16 %v6448
  %v6701 = vunpack.c.l.b16 %v6449
  %v6702 = vunpack.c.l.b16 %v6450
  %v6703 = vunpack.c.l.b16 %v6451
  %v6704 = vunpack.c.l.b16 %v6452
  %v6705 = vunpack.c.h.b16 %v6446
  %v6706 = vunpack.c.h.b16 %v6447
  %v6707 = vunpack.c.h.b16 %v6448
  %v6708 = vunpack.c.h.b16 %v6449
  %v6709 = vunpack.c.h.b16 %v6450
  %v6710 = vunpack.c.h.b16 %v6451
  %v6711 = vunpack.c.h.b16 %v6452
  %v6712 = vunpack.c.l.b16 %v6453
  %v6713 = vunpack.c.l.b16 %v6454
  %v6714 = vunpack.c.l.b16 %v6455
  %v6715 = vunpack.c.l.b16 %v6456
  %v6716 = vunpack.c.l.b16 %v6457
  %v6717 = vunpack.c.l.b16 %v6458
  %v6718 = vunpack.c.l.b16 %v6459
  %v6719 = vunpack.c.h.b16 %v6453
  %v6720 = vunpack.c.h.b16 %v6454
  %v6721 = vunpack.c.h.b16 %v6455
  %v6722 = vunpack.c.h.b16 %v6456
  %v6723 = vunpack.c.h.b16 %v6457
  %v6724 = vunpack.c.h.b16 %v6458
  %v6725 = vunpack.c.h.b16 %v6459
  %v6726 = vunpack.c.l.b16 %v6460
  %v6727 = vunpack.c.l.b16 %v6461
  %v6728 = vunpack.c.l.b16 %v6462
  %v6729 = vunpack.c.l.b16 %v6463
  %v6730 = vunpack.c.l.b16 %v6464
  %v6731 = vunpack.c.l.b16 %v6465
  %v6732 = vunpack.c.l.b16 %v6466
  %v6733 = vunpack.c.h.b16 %v6460
  %v6734 = vunpack.c.h.b16 %v6461
  %v6735 = vunpack.c.h.b16 %v6462
  %v6736 = vunpack.c.h.b16 %v6463
  %v6737 = vunpack.c.h.b16 %v6464
  %v6738 = vunpack.c.h.b16 %v6465
  %v6739 = vunpack.c.h.b16 %v6466
  %v6740 = vunpack.c.l.b16 %v6467
  %v6741 = vunpack.c.l.b16 %v6468
  %v6742 = vunpack.c.l.b16 %v6469
  %v6743 = vunpack.c.l.b16 %v6470
  %v6744 = vunpack.c.l.b16 %v6471
  %v6745 = vunpack.c.l.b16 %v6472
  %v6746 = vunpack.c.l.b16 %v6473
  %v6747 = vunpack.c.h.b16 %v6467
  %v6748 = vunpack.c.h.b16 %v6468
  %v6749 = vunpack.c.h.b16 %v6469
  %v6750 = vunpack.c.h.b16 %v6470
  %v6751 = vunpack.c.h.b16 %v6471
  %v6752 = vunpack.c.h.b16 %v6472
  %v6753 = vunpack.c.h.b16 %v6473
  %v6754 = vunpack.c.l.b16 %v6474
  %v6755 = vunpack.c.l.b16 %v6475
  %v6756 = vunpack.c.l.b16 %v6476
  %v6757 = vunpack.c.l.b16 %v6477
  %v6758 = vunpack.c.l.b16 %v6478
  %v6759 = vunpack.c.l.b16 %v6479
  %v6760 = vunpack.c.l.b16 %v6480
  %v6761 = vunpack.c.h.b16 %v6474
  %v6762 = vunpack.c.h.b16 %v6475
  %v6763 = vunpack.c.h.b16 %v6476
  %v6764 = vunpack.c.h.b16 %v6477
  %v6765 = vunpack.c.h.b16 %v6478
  %v6766 = vunpack.c.h.b16 %v6479
  %v6767 = vunpack.c.h.b16 %v6480
  %v6768 = vunpack.c.l.b16 %v6481
  %v6769 = vunpack.c.l.b16 %v6482
  %v6770 = vunpack.c.l.b16 %v6483
  %v6771 = vunpack.c.l.b16 %v6484
  %v6772 = vunpack.c.l.b16 %v6485
  %v6773 = vunpack.c.l.b16 %v6486
  %v6774 = vunpack.c.l.b16 %v6487
  %v6775 = vunpack.c.h.b16 %v6481
  %v6776 = vunpack.c.h.b16 %v6482
  %v6777 = vunpack.c.h.b16 %v6483
  %v6778 = vunpack.c.h.b16 %v6484
  %v6779 = vunpack.c.h.b16 %v6485
  %v6780 = vunpack.c.h.b16 %v6486
  %v6781 = vunpack.c.h.b16 %v6487
  %v6782 = vunpack.c.l.b16 %v6488
  %v6783 = vunpack.c.l.b16 %v6489
  %v6784 = vunpack.c.l.b16 %v6490
  %v6785 = vunpack.c.l.b16 %v6491
  %v6786 = vunpack.c.l.b16 %v6492
  %v6787 = vunpack.c.l.b16 %v6493
  %v6788 = vunpack.c.l.b16 %v6494
  %v6789 = vunpack.c.h.b16 %v6488
  %v6790 = vunpack.c.h.b16 %v6489
  %v6791 = vunpack.c.h.b16 %v6490
  %v6792 = vunpack.c.h.b16 %v6491
  %v6793 = vunpack.c.h.b16 %v6492
  %v6794 = vunpack.c.h.b16 %v6493
  %v6795 = vunpack.c.h.b16 %v6494
  %v6796 = vunpack.c.l.b16 %v6495
  %v6797 = vunpack.c.l.b16 %v6496
  %v6798 = vunpack.c.l.b16 %v6497
  %v6799 = vunpack.c.l.b16 %v6498
  %v6800 = vunpack.c.l.b16 %v6499
  %v6801 = vunpack.c.l.b16 %v6500
  %v6802 = vunpack.c.l.b16 %v6501
  %v6803 = vunpack.c.h.b16 %v6495
  %v6804 = vunpack.c.h.b16 %v6496
  %v6805 = vunpack.c.h.b16 %v6497
  %v6806 = vunpack.c.h.b16 %v6498
  %v6807 = vunpack.c.h.b16 %v6499
  %v6808 = vunpack.c.h.b16 %v6500
  %v6809 = vunpack.c.h.b16 %v6501
  %v6810 = vunpack.c.l.b16 %v6502
  %v6811 = vunpack.c.l.b16 %v6503
  %v6812 = vunpack.c.l.b16 %v6504
  %v6813 = vunpack.c.l.b16 %v6505
  %v6814 = vunpack.c.l.b16 %v6506
  %v6815 = vunpack.c.l.b16 %v6507
  %v6816 = vunpack.c.l.b16 %v6508
  %v6817 = vunpack.c.h.b16 %v6502
  %v6818 = vunpack.c.h.b16 %v6503
  %v6819 = vunpack.c.h.b16 %v6504
  %v6820 = vunpack.c.h.b16 %v6505
  %v6821 = vunpack.c.h.b16 %v6506
  %v6822 = vunpack.c.h.b16 %v6507
  %v6823 = vunpack.c.h.b16 %v6508
  %v6824 = vunpack.c.l.b16 %v6509
  %v6825 = vunpack.c.l.b16 %v6510
  %v6826 = vunpack.c.l.b16 %v6511
  %v6827 = vunpack.c.l.b16 %v6512
  %v6828 = vunpack.c.l.b16 %v6513
  %v6829 = vunpack.c.l.b16 %v6514
  %v6830 = vunpack.c.l.b16 %v6515
  %v6831 = vunpack.c.h.b16 %v6509
  %v6832 = vunpack.c.h.b16 %v6510
  %v6833 = vunpack.c.h.b16 %v6511
  %v6834 = vunpack.c.h.b16 %v6512
  %v6835 = vunpack.c.h.b16 %v6513
  %v6836 = vunpack.c.h.b16 %v6514
  %v6837 = vunpack.c.h.b16 %v6515
  %v6838 = vunpack.c.l.b16 %v6516
  %v6839 = vunpack.c.l.b16 %v6517
  %v6840 = vunpack.c.l.b16 %v6518
  %v6841 = vunpack.c.l.b16 %v6519
  %v6842 = vunpack.c.l.b16 %v6520
  %v6843 = vunpack.c.l.b16 %v6521
  %v6844 = vunpack.c.l.b16 %v6522
  %v6845 = vunpack.c.h.b16 %v6516
  %v6846 = vunpack.c.h.b16 %v6517
  %v6847 = vunpack.c.h.b16 %v6518
  %v6848 = vunpack.c.h.b16 %v6519
  %v6849 = vunpack.c.h.b16 %v6520
  %v6850 = vunpack.c.h.b16 %v6521
  %v6851 = vunpack.c.h.b16 %v6522
  %v6852 = vunpack.c.l.b16 %v6523
  %v6853 = vunpack.c.l.b16 %v6524
  %v6854 = vunpack.c.l.b16 %v6525
  %v6855 = vunpack.c.l.b16 %v6526
  %v6856 = vunpack.c.l.b16 %v6527
  %v6857 = vunpack.c.l.b16 %v6528
  %v6858 = vunpack.c.l.b16 %v6529
  %v6859 = vunpack.c.h.b16 %v6523
  %v6860 = vunpack.c.h.b16 %v6524
  %v6861 = vunpack.c.h.b16 %v6525
  %v6862 = vunpack.c.h.b16 %v6526
  %v6863 = vunpack.c.h.b16 %v6527
  %v6864 = vunpack.c.h.b16 %v6528
  %v6865 = vunpack.c.h.b16 %v6529
  %v6866 = vpack.c.b16 %v6643, %v6642
  %v6867 = vpack.c.b16 %v6645, %v6644
  %v6868 = vpack.c.b16 %v6647, %v6646
  %v6869 = vpack.c.b16 %v6648, %v6648
  %v6870 = vpack.c.b16 %v6650, %v6649
  %v6871 = vpack.c.b16 %v6652, %v6651
  %v6872 = vpack.c.b16 %v6654, %v6653
  %v6873 = vpack.c.b16 %v6655, %v6655
  %v6874 = vpack.c.b16 %v6657, %v6656
  %v6875 = vpack.c.b16 %v6659, %v6658
  %v6876 = vpack.c.b16 %v6661, %v6660
  %v6877 = vpack.c.b16 %v6662, %v6662
  %v6878 = vpack.c.b16 %v6664, %v6663
  %v6879 = vpack.c.b16 %v6666, %v6665
  %v6880 = vpack.c.b16 %v6668, %v6667
  %v6881 = vpack.c.b16 %v6669, %v6669
  %v6882 = vpack.c.b16 %v6671, %v6670
  %v6883 = vpack.c.b16 %v6673, %v6672
  %v6884 = vpack.c.b16 %v6675, %v6674
  %v6885 = vpack.c.b16 %v6676, %v6676
  %v6886 = vpack.c.b16 %v6678, %v6677
  %v6887 = vpack.c.b16 %v6680, %v6679
  %v6888 = vpack.c.b16 %v6682, %v6681
  %v6889 = vpack.c.b16 %v6683, %v6683
  %v6890 = vpack.c.b16 %v6685, %v6684
  %v6891 = vpack.c.b16 %v6687, %v6686
  %v6892 = vpack.c.b16 %v6689, %v6688
  %v6893 = vpack.c.b16 %v6690, %v6690
  %v6894 = vpack.c.b16 %v6692, %v6691
  %v6895 = vpack.c.b16 %v6694, %v6693
  %v6896 = vpack.c.b16 %v6696, %v6695
  %v6897 = vpack.c.b16 %v6697, %v6697
  %v6898 = vpack.c.b16 %v6699, %v6698
  %v6899 = vpack.c.b16 %v6701, %v6700
  %v6900 = vpack.c.b16 %v6703, %v6702
  %v6901 = vpack.c.b16 %v6704, %v6704
  %v6902 = vpack.c.b16 %v6706, %v6705
  %v6903 = vpack.c.b16 %v6708, %v6707
  %v6904 = vpack.c.b16 %v6710, %v6709
  %v6905 = vpack.c.b16 %v6711, %v6711
  %v6906 = vpack.c.b16 %v6713, %v6712
  %v6907 = vpack.c.b16 %v6715, %v6714
  %v6908 = vpack.c.b16 %v6717, %v6716
  %v6909 = vpack.c.b16 %v6718, %v6718
  %v6910 = vpack.c.b16 %v6720, %v6719
  %v6911 = vpack.c.b16 %v6722, %v6721
  %v6912 = vpack.c.b16 %v6724, %v6723
  %v6913 = vpack.c.b16 %v6725, %v6725
  %v6914 = vpack.c.b16 %v6727, %v6726
  %v6915 = vpack.c.b16 %v6729, %v6728
  %v6916 = vpack.c.b16 %v6731, %v6730
  %v6917 = vpack.c.b16 %v6732, %v6732
  %v6918 = vpack.c.b16 %v6734, %v6733
  %v6919 = vpack.c.b16 %v6736, %v6735
  %v6920 = vpack.c.b16 %v6738, %v6737
  %v6921 = vpack.c.b16 %v6739, %v6739
  %v6922 = vpack.c.b16 %v6741, %v6740
  %v6923 = vpack.c.b16 %v6743, %v6742
  %v6924 = vpack.c.b16 %v6745, %v6744
  %v6925 = vpack.c.b16 %v6746, %v6746
  %v6926 = vpack.c.b16 %v6748, %v6747
  %v6927 = vpack.c.b16 %v6750, %v6749
  %v6928 = vpack.c.b16 %v6752, %v6751
  %v6929 = vpack.c.b16 %v6753, %v6753
  %v6930 = vpack.c.b16 %v6755, %v6754
  %v6931 = vpack.c.b16 %v6757, %v6756
  %v6932 = vpack.c.b16 %v6759, %v6758
  %v6933 = vpack.c.b16 %v6760, %v6760
  %v6934 = vpack.c.b16 %v6762, %v6761
  %v6935 = vpack.c.b16 %v6764, %v6763
  %v6936 = vpack.c.b16 %v6766, %v6765
  %v6937 = vpack.c.b16 %v6767, %v6767
  %v6938 = vpack.c.b16 %v6769, %v6768
  %v6939 = vpack.c.b16 %v6771, %v6770
  %v6940 = vpack.c.b16 %v6773, %v6772
  %v6941 = vpack.c.b16 %v6774, %v6774
  %v6942 = vpack.c.b16 %v6776, %v6775
  %v6943 = vpack.c.b16 %v6778, %v6777
  %v6944 = vpack.c.b16 %v6780, %v6779
  %v6945 = vpack.c.b16 %v6781, %v6781
  %v6946 = vpack.c.b16 %v6783, %v6782
  %v6947 = vpack.c.b16 %v6785, %v6784
  %v6948 = vpack.c.b16 %v6787, %v6786
  %v6949 = vpack.c.b16 %v6788, %v6788
  %v6950 = vpack.c.b16 %v6790, %v6789
  %v6951 = vpack.c.b16 %v6792, %v6791
  %v6952 = vpack.c.b16 %v6794, %v6793
  %v6953 = vpack.c.b16 %v6795, %v6795
  %v6954 = vpack.c.b16 %v6797, %v6796
  %v6955 = vpack.c.b16 %v6799, %v6798
  %v6956 = vpack.c.b16 %v6801, %v6800
  %v6957 = vpack.c.b16 %v6802, %v6802
  %v6958 = vpack.c.b16 %v6804, %v6803
  %v6959 = vpack.c.b16 %v6806, %v6805
  %v6960 = vpack.c.b16 %v6808, %v6807
  %v6961 = vpack.c.b16 %v6809, %v6809
  %v6962 = vpack.c.b16 %v6811, %v6810
  %v6963 = vpack.c.b16 %v6813, %v6812
  %v6964 = vpack.c.b16 %v6815, %v6814
  %v6965 = vpack.c.b16 %v6816, %v6816
  %v6966 = vpack.c.b16 %v6818, %v6817
  %v6967 = vpack.c.b16 %v6820, %v6819
  %v6968 = vpack.c.b16 %v6822, %v6821
  %v6969 = vpack.c.b16 %v6823, %v6823
  %v6970 = vpack.c.b16 %v6825, %v6824
  %v6971 = vpack.c.b16 %v6827, %v6826
  %v6972 = vpack.c.b16 %v6829, %v6828
  %v6973 = vpack.c.b16 %v6830, %v6830
  %v6974 = vpack.c.b16 %v6832, %v6831
  %v6975 = vpack.c.b16 %v6834, %v6833
  %v6976 = vpack.c.b16 %v6836, %v6835
  %v6977 = vpack.c.b16 %v6837, %v6837
  %v6978 = vpack.c.b16 %v6839, %v6838
  %v6979 = vpack.c.b16 %v6841, %v6840
  %v6980 = vpack.c.b16 %v6843, %v6842
  %v6981 = vpack.c.b16 %v6844, %v6844
  %v6982 = vpack.c.b16 %v6846, %v6845
  %v6983 = vpack.c.b16 %v6848, %v6847
  %v6984 = vpack.c.b16 %v6850, %v6849
  %v6985 = vpack.c.b16 %v6851, %v6851
  %v6986 = vpack.c.b16 %v6853, %v6852
  %v6987 = vpack.c.b16 %v6855, %v6854
  %v6988 = vpack.c.b16 %v6857, %v6856
  %v6989 = vpack.c.b16 %v6858, %v6858
  %v6990 = vpack.c.b16 %v6860, %v6859
  %v6991 = vpack.c.b16 %v6862, %v6861
  %v6992 = vpack.c.b16 %v6864, %v6863
  %v6993 = vpack.c.b16 %v6865, %v6865
  %7122 = vst [vmem:[%s14] sm:$0xff] %v6866
  %7123 = vst [vmem:[%s14 + $0x8] sm:$0xff] %v6867
  %7124 = vst [vmem:[%s14 + $0x10] sm:$0xff] %v6868
  %vm7125 = vcmask 125952
  %7126 = vst.msk [vmem:[%s14 + $0x18] sm:$0xf] %vm7125, %v6869
  %7127 = vst [vmem:[%s14 + $0x1c] sm:$0xff] %v6870
  %7128 = vst [vmem:[%s14 + $0x24] sm:$0xff] %v6871
  %7129 = vst [vmem:[%s14 + $0x2c] sm:$0xff] %v6872
  %7130 = vst.msk [vmem:[%s14 + $0x34] sm:$0xf] %vm7125, %v6873
  %7131 = vst [vmem:[%s14 + $0x38] sm:$0xff] %v6874
  %7132 = vst [vmem:[%s14 + $0x40] sm:$0xff] %v6875
  %7133 = vst [vmem:[%s14 + $0x48] sm:$0xff] %v6876
  %7134 = vst.msk [vmem:[%s14 + $0x50] sm:$0xf] %vm7125, %v6877
  %7135 = vst [vmem:[%s14 + $0x54] sm:$0xff] %v6878
  %7136 = vst [vmem:[%s14 + $0x5c] sm:$0xff] %v6879
  %7137 = vst [vmem:[%s14 + $0x64] sm:$0xff] %v6880
  %7138 = vst.msk [vmem:[%s14 + $0x6c] sm:$0xf] %vm7125, %v6881
  %7139 = vst [vmem:[%s14 + $0x70] sm:$0xff] %v6882
  %7140 = vst [vmem:[%s14 + $0x78] sm:$0xff] %v6883
  %7141 = vst [vmem:[%s14 + $0x80] sm:$0xff] %v6884
  %7142 = vst.msk [vmem:[%s14 + $0x88] sm:$0xf] %vm7125, %v6885
  %7143 = vst [vmem:[%s14 + $0x8c] sm:$0xff] %v6886
  %7144 = vst [vmem:[%s14 + $0x94] sm:$0xff] %v6887
  %7145 = vst [vmem:[%s14 + $0x9c] sm:$0xff] %v6888
  %7146 = vst.msk [vmem:[%s14 + $0xa4] sm:$0xf] %vm7125, %v6889
  %7147 = vst [vmem:[%s14 + $0xa8] sm:$0xff] %v6890
  %7148 = vst [vmem:[%s14 + $0xb0] sm:$0xff] %v6891
  %7149 = vst [vmem:[%s14 + $0xb8] sm:$0xff] %v6892
  %7150 = vst.msk [vmem:[%s14 + $0xc0] sm:$0xf] %vm7125, %v6893
  %7151 = vst [vmem:[%s14 + $0xc4] sm:$0xff] %v6894
  %7152 = vst [vmem:[%s14 + $0xcc] sm:$0xff] %v6895
  %7153 = vst [vmem:[%s14 + $0xd4] sm:$0xff] %v6896
  %7154 = vst.msk [vmem:[%s14 + $0xdc] sm:$0xf] %vm7125, %v6897
  %7155 = vst [vmem:[%s14 + $0xe0] sm:$0xff] %v6898
  %7156 = vst [vmem:[%s14 + $0xe8] sm:$0xff] %v6899
  %7157 = vst [vmem:[%s14 + $0xf0] sm:$0xff] %v6900
  %7158 = vst.msk [vmem:[%s14 + $0xf8] sm:$0xf] %vm7125, %v6901
  %7159 = vst [vmem:[%s14 + $0xfc] sm:$0xff] %v6902
  %7160 = vst [vmem:[%s14 + $0x104] sm:$0xff] %v6903
  %7161 = vst [vmem:[%s14 + $0x10c] sm:$0xff] %v6904
  %7162 = vst.msk [vmem:[%s14 + $0x114] sm:$0xf] %vm7125, %v6905
  %7163 = vst [vmem:[%s14 + $0x118] sm:$0xff] %v6906
  %7164 = vst [vmem:[%s14 + $0x120] sm:$0xff] %v6907
  %7165 = vst [vmem:[%s14 + $0x128] sm:$0xff] %v6908
  %7166 = vst.msk [vmem:[%s14 + $0x130] sm:$0xf] %vm7125, %v6909
  %7167 = vst [vmem:[%s14 + $0x134] sm:$0xff] %v6910
  %7168 = vst [vmem:[%s14 + $0x13c] sm:$0xff] %v6911
  %7169 = vst [vmem:[%s14 + $0x144] sm:$0xff] %v6912
  %7170 = vst.msk [vmem:[%s14 + $0x14c] sm:$0xf] %vm7125, %v6913
  %7171 = vst [vmem:[%s14 + $0x150] sm:$0xff] %v6914
  %7172 = vst [vmem:[%s14 + $0x158] sm:$0xff] %v6915
  %7173 = vst [vmem:[%s14 + $0x160] sm:$0xff] %v6916
  %7174 = vst.msk [vmem:[%s14 + $0x168] sm:$0xf] %vm7125, %v6917
  %7175 = vst [vmem:[%s14 + $0x16c] sm:$0xff] %v6918
  %7176 = vst [vmem:[%s14 + $0x174] sm:$0xff] %v6919
  %7177 = vst [vmem:[%s14 + $0x17c] sm:$0xff] %v6920
  %7178 = vst.msk [vmem:[%s14 + $0x184] sm:$0xf] %vm7125, %v6921
  %7179 = vst [vmem:[%s14 + $0x188] sm:$0xff] %v6922
  %7180 = vst [vmem:[%s14 + $0x190] sm:$0xff] %v6923
  %7181 = vst [vmem:[%s14 + $0x198] sm:$0xff] %v6924
  %7182 = vst.msk [vmem:[%s14 + $0x1a0] sm:$0xf] %vm7125, %v6925
  %7183 = vst [vmem:[%s14 + $0x1a4] sm:$0xff] %v6926
  %7184 = vst [vmem:[%s14 + $0x1ac] sm:$0xff] %v6927
  %7185 = vst [vmem:[%s14 + $0x1b4] sm:$0xff] %v6928
  %7186 = vst.msk [vmem:[%s14 + $0x1bc] sm:$0xf] %vm7125, %v6929
  %7187 = vst [vmem:[%s14 + $0x1c0] sm:$0xff] %v6930
  %7188 = vst [vmem:[%s14 + $0x1c8] sm:$0xff] %v6931
  %7189 = vst [vmem:[%s14 + $0x1d0] sm:$0xff] %v6932
  %7190 = vst.msk [vmem:[%s14 + $0x1d8] sm:$0xf] %vm7125, %v6933
  %7191 = vst [vmem:[%s14 + $0x1dc] sm:$0xff] %v6934
  %7192 = vst [vmem:[%s14 + $0x1e4] sm:$0xff] %v6935
  %7193 = vst [vmem:[%s14 + $0x1ec] sm:$0xff] %v6936
  %7194 = vst.msk [vmem:[%s14 + $0x1f4] sm:$0xf] %vm7125, %v6937
  %7195 = vst [vmem:[%s14 + $0x1f8] sm:$0xff] %v6938
  %7196 = vst [vmem:[%s14 + $0x200] sm:$0xff] %v6939
  %7197 = vst [vmem:[%s14 + $0x208] sm:$0xff] %v6940
  %7198 = vst.msk [vmem:[%s14 + $0x210] sm:$0xf] %vm7125, %v6941
  %7199 = vst [vmem:[%s14 + $0x214] sm:$0xff] %v6942
  %7200 = vst [vmem:[%s14 + $0x21c] sm:$0xff] %v6943
  %7201 = vst [vmem:[%s14 + $0x224] sm:$0xff] %v6944
  %7202 = vst.msk [vmem:[%s14 + $0x22c] sm:$0xf] %vm7125, %v6945
  %7203 = vst [vmem:[%s14 + $0x230] sm:$0xff] %v6946
  %7204 = vst [vmem:[%s14 + $0x238] sm:$0xff] %v6947
  %7205 = vst [vmem:[%s14 + $0x240] sm:$0xff] %v6948
  %7206 = vst.msk [vmem:[%s14 + $0x248] sm:$0xf] %vm7125, %v6949
  %7207 = vst [vmem:[%s14 + $0x24c] sm:$0xff] %v6950
  %7208 = vst [vmem:[%s14 + $0x254] sm:$0xff] %v6951
  %7209 = vst [vmem:[%s14 + $0x25c] sm:$0xff] %v6952
  %7210 = vst.msk [vmem:[%s14 + $0x264] sm:$0xf] %vm7125, %v6953
  %7211 = vst [vmem:[%s14 + $0x268] sm:$0xff] %v6954
  %7212 = vst [vmem:[%s14 + $0x270] sm:$0xff] %v6955
  %7213 = vst [vmem:[%s14 + $0x278] sm:$0xff] %v6956
  %7214 = vst.msk [vmem:[%s14 + $0x280] sm:$0xf] %vm7125, %v6957
  %7215 = vst [vmem:[%s14 + $0x284] sm:$0xff] %v6958
  %7216 = vst [vmem:[%s14 + $0x28c] sm:$0xff] %v6959
  %7217 = vst [vmem:[%s14 + $0x294] sm:$0xff] %v6960
  %7218 = vst.msk [vmem:[%s14 + $0x29c] sm:$0xf] %vm7125, %v6961
  %7219 = vst [vmem:[%s14 + $0x2a0] sm:$0xff] %v6962
  %7220 = vst [vmem:[%s14 + $0x2a8] sm:$0xff] %v6963
  %7221 = vst [vmem:[%s14 + $0x2b0] sm:$0xff] %v6964
  %7222 = vst.msk [vmem:[%s14 + $0x2b8] sm:$0xf] %vm7125, %v6965
  %7223 = vst [vmem:[%s14 + $0x2bc] sm:$0xff] %v6966
  %7224 = vst [vmem:[%s14 + $0x2c4] sm:$0xff] %v6967
  %7225 = vst [vmem:[%s14 + $0x2cc] sm:$0xff] %v6968
  %7226 = vst.msk [vmem:[%s14 + $0x2d4] sm:$0xf] %vm7125, %v6969
  %7227 = vst [vmem:[%s14 + $0x2d8] sm:$0xff] %v6970
  %7228 = vst [vmem:[%s14 + $0x2e0] sm:$0xff] %v6971
  %7229 = vst [vmem:[%s14 + $0x2e8] sm:$0xff] %v6972
  %7230 = vst.msk [vmem:[%s14 + $0x2f0] sm:$0xf] %vm7125, %v6973
  %7231 = vst [vmem:[%s14 + $0x2f4] sm:$0xff] %v6974
  %7232 = vst [vmem:[%s14 + $0x2fc] sm:$0xff] %v6975
  %7233 = vst [vmem:[%s14 + $0x304] sm:$0xff] %v6976
  %7234 = vst.msk [vmem:[%s14 + $0x30c] sm:$0xf] %vm7125, %v6977
  %7235 = vst [vmem:[%s14 + $0x310] sm:$0xff] %v6978
  %7236 = vst [vmem:[%s14 + $0x318] sm:$0xff] %v6979
  %7237 = vst [vmem:[%s14 + $0x320] sm:$0xff] %v6980
  %7238 = vst.msk [vmem:[%s14 + $0x328] sm:$0xf] %vm7125, %v6981
  %7239 = vst [vmem:[%s14 + $0x32c] sm:$0xff] %v6982
  %7240 = vst [vmem:[%s14 + $0x334] sm:$0xff] %v6983
  %7241 = vst [vmem:[%s14 + $0x33c] sm:$0xff] %v6984
  %7242 = vst.msk [vmem:[%s14 + $0x344] sm:$0xf] %vm7125, %v6985
  %7243 = vst [vmem:[%s14 + $0x348] sm:$0xff] %v6986
  %7244 = vst [vmem:[%s14 + $0x350] sm:$0xff] %v6987
  %7245 = vst [vmem:[%s14 + $0x358] sm:$0xff] %v6988
  %7246 = vst.msk [vmem:[%s14 + $0x360] sm:$0xf] %vm7125, %v6989
  %7247 = vst [vmem:[%s14 + $0x364] sm:$0xff] %v6990
  %7248 = vst [vmem:[%s14 + $0x36c] sm:$0xff] %v6991
  %7249 = vst [vmem:[%s14 + $0x374] sm:$0xff] %v6992
  %7250 = vst.msk [vmem:[%s14 + $0x37c] sm:$0xf] %vm7125, %v6993
  // Predicated region
  $region58: #{_lambda_.1} parent=0 // pred_check
    _
  $region59: #{_lambda_.1} parent=0 // pred_check_branch
    %7252 = sbr.rel (0) target = $region61
  $region60: #{_lambda_.1} parent=0 // pred_region
    _
  $region61: #{_lambda_.1} parent=0 // pred_fallthru
    _
  // Predicated region
  $region62: #{_lambda_.1} parent=0 // pred_check
    _
  $region63: #{_lambda_.1} parent=0 // pred_check_branch
    %7254 = sbr.rel (0) target = $region65
  $region64: #{_lambda_.1} parent=0 // pred_region
    _
  $region65: #{_lambda_.1} parent=0 // pred_fallthru
    _
  // Predicated region
  $region66: #{_lambda_.1} parent=0 // pred_check
    _
  $region67: #{_lambda_.1} parent=0 // pred_check_branch
    %7256 = sbr.rel (0) target = $region69
  $region68: #{_lambda_.1} parent=0 // pred_region
    _
  $region69: #{_lambda_.1} parent=0 // pred_fallthru
    _
  // Predicated region
  $region70: #{_lambda_.1} parent=0 // pred_check
    _
  $region71: #{_lambda_.1} parent=0 // pred_check_branch
    %7258 = sbr.rel (0) target = $region73
  $region72: #{_lambda_.1} parent=0 // pred_region
    _
  $region73: #{_lambda_.1} parent=0 // pred_fallthru
    _

</llo_original>
